<compile_context>
chip_gen: v6e
topology: v6e:2x2x1
jax: 0.10.0
libtpu: 0.0.40
codegen_flags: <defaults>
</compile_context>

<pallas_src>
import functools

import numpy as np
import jax
import jax.numpy as jnp
from jax import lax
from jax.experimental import pallas as pl
from jax.experimental.pallas import tpu as pltpu


# ----------------------------------------------------------------------------
# Host-side static helpers (selection / interpolation operators)
# ----------------------------------------------------------------------------
def _sel_1d(in_size, k, stride, pad):
    """Per-tap 1-D selection matrices S[t, o, i] = 1 iff i == o*stride + t - pad."""
    out_size = (in_size + 2 * pad - k) // stride + 1
    S = np.zeros((k, out_size, in_size), np.float32)
    for t in range(k):
        for o in range(out_size):
            i = o * stride + t - pad
            if 0 <= i < in_size:
                S[t, o, i] = 1.0
    return S


def _bilinear_mat(out_size, in_size):
    """PyTorch F.interpolate(mode='bilinear', align_corners=False) weights."""
    B = np.zeros((out_size, in_size), np.float32)
    scale = in_size / out_size
    for i in range(out_size):
        src = max((i + 0.5) * scale - 0.5, 0.0)
        i0 = min(int(np.floor(src)), in_size - 1)
        i1 = min(i0 + 1, in_size - 1)
        lam = src - i0
        B[i, i0] += 1.0 - lam
        B[i, i1] += lam
    return B


# ----------------------------------------------------------------------------
# Pallas kernel: whole batch in (rows, spatial) lane-dense layout.
# Grid axis t = conv2 tap index (0..8), g2 streamed one tap per step.
# ----------------------------------------------------------------------------
def _esa_kernel(x_ref, w1_ref, wf_ref, w2s_ref, w3s_ref, w4_ref, b_ref,
                g2_ref, pkx_ref, pky_ref, g3_ref, ut_ref,
                o_ref, cf_s, mix_s, acc2_s, *, mce, m_in):
    t = pl.program_id(0)
    last = pl.num_programs(0) - 1
    dot = functools.partial(jnp.dot, preferred_element_type=jnp.float32)

    # ---- step 0: 1x1 convs + stacked conv2 channel mix ("mix then gather") --
    @pl.when(t == 0)
    def _():
        b1 = b_ref[0:mce]
        bf = b_ref[mce:2 * mce]
        c1 = dot(w1_ref[...], x_ref[...]) + b1            # (mce, HW)
        cf_s[...] = dot(wf_ref[...], c1) + bf             # conv_f branch
        mix_s[...] = dot(w2s_ref[...], c1)                # (9*mce, HW) all taps
        acc2_s[...] = jnp.zeros_like(acc2_s)

    # ---- every step: spatial gather for conv2 tap t (g2 block streamed) -----
    row0 = t * mce
    if mce % 8 == 0:
        row0 = pl.multiple_of(row0, 8)
    mix_t = mix_s[pl.ds(row0, mce), :].astype(jnp.bfloat16)
    acc2_s[...] += dot(mix_t, g2_ref[0])                  # (mce, H2*W2) f32 acc

    # ---- last step: pool -> conv3 -> upsample -> conv4 -> sigmoid gate ------
    @pl.when(t == last)
    def _():
        b2 = b_ref[2 * mce:3 * mce]
        b3 = b_ref[3 * mce:4 * mce]
        b4 = b_ref[4 * mce:4 * mce + m_in]

        c2 = (acc2_s[...] + b2).astype(jnp.bfloat16)      # (mce, H2*W2)

        # max_pool2d 7x7 / stride 3, separable (cols then rows), 0/1 selection
        colm = dot(c2, pkx_ref[0])
        for k in range(1, 7):
            colm = jnp.maximum(colm, dot(c2, pkx_ref[k])) # (mce, H2*Wp)
        colm = colm.astype(jnp.bfloat16)
        vm = dot(colm, pky_ref[0])
        for k in range(1, 7):
            vm = jnp.maximum(vm, dot(colm, pky_ref[k]))   # (mce, Hp*Wp)

        # conv3 (3x3, pad 1): one stacked channel-mix matmul, then 9 gathers
        mix3 = dot(w3s_ref[...], vm)                      # (9*mce, Hp*Wp)
        acc3 = dot(mix3[0:mce], g3_ref[0])
        for k in range(1, 9):
            acc3 = acc3 + dot(mix3[k * mce:(k + 1) * mce], g3_ref[k])
        c3 = acc3 + b3                                    # (mce, Hp*Wp)

        # bilinear upsample back to (H, W) as one matmul, add conv_f branch
        up = dot(c3, ut_ref[...])                         # (mce, HW)

        # conv4 (1x1), sigmoid gate, multiply with the input
        c4 = dot(w4_ref[...], up + cf_s[...]) + b4        # (m_in, HW)
        o_ref[...] = (x_ref[...] * jax.nn.sigmoid(c4)).astype(o_ref.dtype)


# ----------------------------------------------------------------------------
# Cached builder: static operators + pallas_call + jitted wrapper per shape.
# ----------------------------------------------------------------------------
@functools.lru_cache(maxsize=8)
def _build_esa_forward(N, c_in, c_esa, H, W):
    HW = H * W
    mce = N * c_esa
    m_in = N * c_in

    # ---- static spatial operators (numpy, 0/1 selections + interp weights) --
    s2r = _sel_1d(H, 3, 2, 0)                    # (3, H2, H)
    s2c = _sel_1d(W, 3, 2, 0)                    # (3, W2, W)
    H2, W2 = s2r.shape[1], s2c.shape[1]
    g2 = np.stack([np.kron(s2r[ky], s2c[kx]).T
                   for ky in range(3) for kx in range(3)])        # (9, HW, H2W2)

    pr = _sel_1d(H2, 7, 3, 0)                    # (7, Hp, H2)
    pc = _sel_1d(W2, 7, 3, 0)                    # (7, Wp, W2)
    Hp, Wp = pr.shape[1], pc.shape[1]
    eyeH2 = np.eye(H2, dtype=np.float32)
    eyeWp = np.eye(Wp, dtype=np.float32)
    pkx = np.stack([np.kron(eyeH2, pc[t].T) for t in range(7)])   # (7, H2W2, H2*Wp)
    pky = np.stack([np.kron(pr[t].T, eyeWp) for t in range(7)])   # (7, H2*Wp, HpWp)

    s3r = _sel_1d(Hp, 3, 1, 1)
    s3c = _sel_1d(Wp, 3, 1, 1)
    g3 = np.stack([np.kron(s3r[ky], s3c[kx]).T
                   for ky in range(3) for kx in range(3)])        # (9, HpWp, HpWp)

    ut = np.kron(_bilinear_mat(H, Hp), _bilinear_mat(W, Wp)).T    # (HpWp, HW)

    H2W2, HWp, HpWp = H2 * W2, H2 * Wp, Hp * Wp

    # device-resident constants (bf16 where exact / large, f32 for tiny ones)
    g2_d = jnp.asarray(g2, jnp.bfloat16)
    pkx_d = jnp.asarray(pkx, jnp.bfloat16)
    pky_d = jnp.asarray(pky, jnp.bfloat16)
    g3_d = jnp.asarray(g3, jnp.float32)
    ut_d = jnp.asarray(ut, jnp.float32)

    kernel = functools.partial(_esa_kernel, mce=mce, m_in=m_in)

    grid_spec = pltpu.PrefetchScalarGridSpec(
        num_scalar_prefetch=0,
        grid=(9,),                                        # conv2 taps
        in_specs=[
            pl.BlockSpec((m_in, HW), lambda t: (0, 0)),           # x
            pl.BlockSpec((mce, m_in), lambda t: (0, 0)),          # w1 kron
            pl.BlockSpec((mce, mce), lambda t: (0, 0)),           # wf kron
            pl.BlockSpec((9 * mce, mce), lambda t: (0, 0)),       # w2 stacked
            pl.BlockSpec((9 * mce, mce), lambda t: (0, 0)),       # w3 stacked
            pl.BlockSpec((m_in, mce), lambda t: (0, 0)),          # w4 kron
            pl.BlockSpec((4 * mce + m_in, 1), lambda t: (0, 0)),  # packed biases
            pl.BlockSpec((1, HW, H2W2), lambda t: (t, 0, 0)),     # g2 (streamed)
            pl.BlockSpec((7, H2W2, HWp), lambda t: (0, 0, 0)),    # pool cols
            pl.BlockSpec((7, HWp, HpWp), lambda t: (0, 0, 0)),    # pool rows
            pl.BlockSpec((9, HpWp, HpWp), lambda t: (0, 0, 0)),   # g3
            pl.BlockSpec((HpWp, HW), lambda t: (0, 0)),           # upsample
        ],
        out_specs=pl.BlockSpec((m_in, HW), lambda t: (0, 0)),
        scratch_shapes=[
            pltpu.VMEM((mce, HW), jnp.float32),       # conv_f branch
            pltpu.VMEM((9 * mce, HW), jnp.float32),   # stacked conv2 mix
            pltpu.VMEM((mce, H2W2), jnp.float32),     # conv2 accumulator
        ],
    )

    call = pl.pallas_call(
        kernel,
        out_shape=jax.ShapeDtypeStruct((m_in, HW), jnp.float32),
        grid_spec=grid_spec,
        compiler_params=pltpu.CompilerParams(
            dimension_semantics=("arbitrary",),
            vmem_limit_bytes=48 * 1024 * 1024),
    )

    def fwd(x, params):
        eyeN = jnp.eye(N, dtype=jnp.float32)

        def bd(w2d):                               # (co, ci) -> (N*co, N*ci)
            return jnp.kron(eyeN, w2d.astype(jnp.float32))

        def bcol(b):                               # (c,) -> (N*c, 1)
            return jnp.tile(b.astype(jnp.float32), N).reshape(-1, 1)

        w1k = bd(params["w1"].reshape(c_esa, c_in))
        wfk = bd(params["wf"].reshape(c_esa, c_esa))
        w4k = bd(params["w4"].reshape(c_in, c_esa))
        w2s = jnp.concatenate([bd(params["w2"][:, :, ky, kx])
                               for ky in range(3) for kx in range(3)], axis=0)
        w3s = jnp.concatenate([bd(params["w3"][:, :, ky, kx])
                               for ky in range(3) for kx in range(3)], axis=0)
        bcat = jnp.concatenate([bcol(params["b1"]), bcol(params["bf"]),
                                bcol(params["b2"]), bcol(params["b3"]),
                                bcol(params["b4"])], axis=0)

        x_flat = x.reshape(m_in, HW).astype(jnp.float32)   # lane-dense
        out = call(x_flat, w1k, wfk, w2s, w3s, w4k, bcat,
                   g2_d, pkx_d, pky_d, g3_d, ut_d)
        return out.reshape(N, c_in, H, W).astype(x.dtype)

    return jax.jit(fwd)


def esa_forward(x, params):
    N, c_in, H, W = x.shape
    c_esa = params["b2"].shape[0]
    return _build_esa_forward(int(N), int(c_in), int(c_esa), int(H), int(W))(x, params)


# ----------------------------------------------------------------------------
# Pure-JAX reference (sanity check)
# ----------------------------------------------------------------------------
def esa_reference(x, params):
    hi = lax.Precision.HIGHEST

    def conv2d(inp, w, b, stride, pad):
        out = lax.conv_general_dilated(
            inp, w, window_strides=(stride, stride),
            padding=[(pad, pad), (pad, pad)],
            dimension_numbers=("NCHW", "OIHW", "NCHW"),
            precision=hi)
        return out + b[None, :, None, None]

    H, W = x.shape[2], x.shape[3]
    c1_ = conv2d(x, params["w1"], params["b1"], 1, 0)
    c1 = conv2d(c1_, params["w2"], params["b2"], 2, 0)
    v_max = lax.reduce_window(
        c1, jnp.array(-jnp.inf, x.dtype), lax.max,
        (1, 1, 7, 7), (1, 1, 3, 3), "VALID")
    c3 = conv2d(v_max, params["w3"], params["b3"], 1, 1)
    by = jnp.asarray(_bilinear_mat(H, c3.shape[2]))
    bx = jnp.asarray(_bilinear_mat(W, c3.shape[3]))
    c3u = jnp.einsum("oy,ncyx,px->ncop", by, c3, bx, precision=hi)
    cf = conv2d(c1_, params["wf"], params["bf"], 1, 0)
    c4 = conv2d(c3u + cf, params["w4"], params["b4"], 1, 0)
    return x * jax.nn.sigmoid(c4)


# ----------------------------------------------------------------------------
if __name__ == "__main__":
    # Small demo shapes (raise N to fill the MXU further at production sizes).
    N, C_IN, C_ESA, H, W = 4, 8, 4, 32, 32

    key = jax.random.PRNGKey(0)
    ks = jax.random.split(key, 11)

    def rnd(k, shape, scale=0.1):
        return scale * jax.random.normal(k, shape, jnp.float32)

    params = {
        "w1": rnd(ks[0], (C_ESA, C_IN, 1, 1)), "b1": rnd(ks[1], (C_ESA,)),
        "wf": rnd(ks[2], (C_ESA, C_ESA, 1, 1)), "bf": rnd(ks[3], (C_ESA,)),
        "w2": rnd(ks[4], (C_ESA, C_ESA, 3, 3)), "b2": rnd(ks[5], (C_ESA,)),
        "w3": rnd(ks[6], (C_ESA, C_ESA, 3, 3)), "b3": rnd(ks[7], (C_ESA,)),
        "w4": rnd(ks[8], (C_IN, C_ESA, 1, 1)), "b4": rnd(ks[9], (C_IN,)),
    }
    x = jax.random.normal(ks[10], (N, C_IN, H, W), jnp.float32)

    out = jax.block_until_ready(esa_forward(x, params))

    ref = jax.block_until_ready(esa_reference(x, params))
    np.testing.assert_allclose(np.asarray(out), np.asarray(ref),
                               rtol=3e-3, atol=3e-3)
    print("KERNEL_OK")
</pallas_src>

<mosaic_0001>
module attributes {stable_mosaic.version = 11 : i64} {
  func.func @_esa_kernel(%arg0: i32, %arg1: memref<32x1024xf32, #tpu.memory_space<vmem>>, %arg2: memref<16x32xf32, #tpu.memory_space<vmem>>, %arg3: memref<16x16xf32, #tpu.memory_space<vmem>>, %arg4: memref<144x16xf32, #tpu.memory_space<vmem>>, %arg5: memref<144x16xf32, #tpu.memory_space<vmem>>, %arg6: memref<32x16xf32, #tpu.memory_space<vmem>>, %arg7: memref<96x1xf32, #tpu.memory_space<vmem>>, %arg8: memref<1x1024x225xbf16, #tpu.memory_space<vmem>>, %arg9: memref<7x225x45xbf16, #tpu.memory_space<vmem>>, %arg10: memref<7x45x9xbf16, #tpu.memory_space<vmem>>, %arg11: memref<9x9x9xf32, #tpu.memory_space<vmem>>, %arg12: memref<9x1024xf32, #tpu.memory_space<vmem>>, %arg13: memref<32x1024xf32, #tpu.memory_space<vmem>>, %arg14: memref<16x1024xf32, #tpu.memory_space<vmem>>, %arg15: memref<144x1024xf32, #tpu.memory_space<vmem>>, %arg16: memref<16x225xf32, #tpu.memory_space<vmem>>) attributes {dimension_semantics = [#tpu.dimension_semantics<arbitrary>], iteration_bounds = array<i64: 9>, scalar_prefetch = 0 : i64, scratch_operands = 3 : i64, tpu.core_type = #tpu.core_type<tc>, window_params = [{pipeline_mode = #tpu.pipeline_mode<synchronous>, transform_indices = @transform_0, window_bounds = array<i64: 32, 1024>}, {pipeline_mode = #tpu.pipeline_mode<synchronous>, transform_indices = @transform_1, window_bounds = array<i64: 16, 32>}, {pipeline_mode = #tpu.pipeline_mode<synchronous>, transform_indices = @transform_2, window_bounds = array<i64: 16, 16>}, {pipeline_mode = #tpu.pipeline_mode<synchronous>, transform_indices = @transform_3, window_bounds = array<i64: 144, 16>}, {pipeline_mode = #tpu.pipeline_mode<synchronous>, transform_indices = @transform_4, window_bounds = array<i64: 144, 16>}, {pipeline_mode = #tpu.pipeline_mode<synchronous>, transform_indices = @transform_5, window_bounds = array<i64: 32, 16>}, {pipeline_mode = #tpu.pipeline_mode<synchronous>, transform_indices = @transform_6, window_bounds = array<i64: 96, 1>}, {transform_indices = @transform_7, window_bounds = array<i64: 1, 1024, 225>}, {pipeline_mode = #tpu.pipeline_mode<synchronous>, transform_indices = @transform_8, window_bounds = array<i64: 7, 225, 45>}, {pipeline_mode = #tpu.pipeline_mode<synchronous>, transform_indices = @transform_9, window_bounds = array<i64: 7, 45, 9>}, {pipeline_mode = #tpu.pipeline_mode<synchronous>, transform_indices = @transform_10, window_bounds = array<i64: 9, 9, 9>}, {pipeline_mode = #tpu.pipeline_mode<synchronous>, transform_indices = @transform_11, window_bounds = array<i64: 9, 1024>}, {pipeline_mode = #tpu.pipeline_mode<synchronous>, transform_indices = @transform_12, window_bounds = array<i64: 32, 1024>}]} {
    %c0_i32 = arith.constant 0 : i32
    %0 = arith.cmpi eq, %arg0, %c0_i32 : i32
    %1 = arith.extui %0 : i1 to i32
    %c0_i32_0 = arith.constant 0 : i32
    %2 = arith.cmpi ne, %1, %c0_i32_0 : i32
    scf.if %2 {
      %c0_9 = arith.constant 0 : index
      %c0_10 = arith.constant 0 : index
      %17 = vector.load %arg7[%c0_9, %c0_10] : memref<96x1xf32, #tpu.memory_space<vmem>>, vector<16x1xf32>
      %c16 = arith.constant 16 : index
      %c0_11 = arith.constant 0 : index
      %18 = vector.load %arg7[%c16, %c0_11] : memref<96x1xf32, #tpu.memory_space<vmem>>, vector<16x1xf32>
      %c0_12 = arith.constant 0 : index
      %c0_13 = arith.constant 0 : index
      %19 = vector.load %arg2[%c0_12, %c0_13] : memref<16x32xf32, #tpu.memory_space<vmem>>, vector<16x32xf32>
      %c0_14 = arith.constant 0 : index
      %c0_15 = arith.constant 0 : index
      %20 = vector.load %arg1[%c0_14, %c0_15] : memref<32x1024xf32, #tpu.memory_space<vmem>>, vector<32x1024xf32>
      %cst_16 = arith.constant dense<0.000000e+00> : vector<16x1024xf32>
      %21 = tpu.matmul %19, %20, %cst_16 {dimension_numbers = #tpu.dot_dimension_numbers<[1], [0], [0], [1], [0, 0, 1, 1], [], []>} : vector<16x32xf32>, vector<32x1024xf32>, vector<16x1024xf32> -> vector<16x1024xf32>
      %22 = vector.broadcast %17 : vector<16x1xf32> to vector<16x1024xf32>
      %23 = arith.addf %21, %22 : vector<16x1024xf32>
      %c0_17 = arith.constant 0 : index
      %c0_18 = arith.constant 0 : index
      %24 = vector.load %arg3[%c0_17, %c0_18] : memref<16x16xf32, #tpu.memory_space<vmem>>, vector<16x16xf32>
      %cst_19 = arith.constant dense<0.000000e+00> : vector<16x1024xf32>
      %25 = tpu.matmul %24, %23, %cst_19 {dimension_numbers = #tpu.dot_dimension_numbers<[1], [0], [0], [1], [0, 0, 1, 1], [], []>} : vector<16x16xf32>, vector<16x1024xf32>, vector<16x1024xf32> -> vector<16x1024xf32>
      %26 = vector.broadcast %18 : vector<16x1xf32> to vector<16x1024xf32>
      %27 = arith.addf %25, %26 : vector<16x1024xf32>
      %c0_20 = arith.constant 0 : index
      %c0_21 = arith.constant 0 : index
      %28 = vector.load %arg14[%c0_20, %c0_21] : memref<16x1024xf32, #tpu.memory_space<vmem>>, vector<16x1024xf32>
      tpu.vector_store %arg14[%c0_20, %c0_21], %27 {strides = array<i32>} : memref<16x1024xf32, #tpu.memory_space<vmem>>, vector<16x1024xf32>,
      %c0_22 = arith.constant 0 : index
      %c0_23 = arith.constant 0 : index
      %29 = vector.load %arg4[%c0_22, %c0_23] : memref<144x16xf32, #tpu.memory_space<vmem>>, vector<144x16xf32>
      %cst_24 = arith.constant dense<0.000000e+00> : vector<144x1024xf32>
      %30 = tpu.matmul %29, %23, %cst_24 {dimension_numbers = #tpu.dot_dimension_numbers<[1], [0], [0], [1], [0, 0, 1, 1], [], []>} : vector<144x16xf32>, vector<16x1024xf32>, vector<144x1024xf32> -> vector<144x1024xf32>
      %c0_25 = arith.constant 0 : index
      %c0_26 = arith.constant 0 : index
      %31 = vector.load %arg15[%c0_25, %c0_26] : memref<144x1024xf32, #tpu.memory_space<vmem>>, vector<144x1024xf32>
      tpu.vector_store %arg15[%c0_25, %c0_26], %30 {strides = array<i32>} : memref<144x1024xf32, #tpu.memory_space<vmem>>, vector<144x1024xf32>,
      %cst_27 = arith.constant 0.000000e+00 : f32
      %32 = vector.broadcast %cst_27 : f32 to vector<16x225xf32>
      %c0_28 = arith.constant 0 : index
      %c0_29 = arith.constant 0 : index
      %33 = vector.load %arg16[%c0_28, %c0_29] : memref<16x225xf32, #tpu.memory_space<vmem>>, vector<16x225xf32>
      tpu.vector_store %arg16[%c0_28, %c0_29], %32 {strides = array<i32>} : memref<16x225xf32, #tpu.memory_space<vmem>>, vector<16x225xf32>,
    } else {
    }
    %c16_i32 = arith.constant 16 : i32
    %3 = arith.muli %arg0, %c16_i32 : i32
    %4 = tpu.assume_multiple %3, 8 : i32
    %5 = arith.index_cast %4 : i32 to index
    %c0 = arith.constant 0 : index
    %6 = vector.load %arg15[%5, %c0] : memref<144x1024xf32, #tpu.memory_space<vmem>>, vector<16x1024xf32>
    %7 = arith.truncf %6 : vector<16x1024xf32> to vector<16x1024xbf16>
    %c0_1 = arith.constant 0 : index
    %c0_2 = arith.constant 0 : index
    %8 = vector.load %arg16[%c0_1, %c0_2] : memref<16x225xf32, #tpu.memory_space<vmem>>, vector<16x225xf32>
    %c0_3 = arith.constant 0 : index
    %c0_4 = arith.constant 0 : index
    %c0_5 = arith.constant 0 : index
    %9 = vector.load %arg8[%c0_3, %c0_4, %c0_5] : memref<1x1024x225xbf16, #tpu.memory_space<vmem>>, vector<1x1024x225xbf16>
    %10 = vector.shape_cast %9 : vector<1x1024x225xbf16> to vector<1024x225xbf16>
    %cst = arith.constant dense<0.000000e+00> : vector<16x225xf32>
    %11 = tpu.matmul %7, %10, %cst {dimension_numbers = #tpu.dot_dimension_numbers<[1], [0], [0], [1], [0, 0, 1, 1], [], []>} : vector<16x1024xbf16>, vector<1024x225xbf16>, vector<16x225xf32> -> vector<16x225xf32>
    %12 = arith.addf %8, %11 : vector<16x225xf32>
    %c0_6 = arith.constant 0 : index
    %c0_7 = arith.constant 0 : index
    %13 = vector.load %arg16[%c0_6, %c0_7] : memref<16x225xf32, #tpu.memory_space<vmem>>, vector<16x225xf32>
    tpu.vector_store %arg16[%c0_6, %c0_7], %12 {strides = array<i32>} : memref<16x225xf32, #tpu.memory_space<vmem>>, vector<16x225xf32>,
    %c8_i32 = arith.constant 8 : i32
    %14 = arith.cmpi eq, %arg0, %c8_i32 : i32
    %15 = arith.extui %14 : i1 to i32
    %c0_i32_8 = arith.constant 0 : i32
    %16 = arith.cmpi ne, %15, %c0_i32_8 : i32
    scf.if %16 {
      %c32 = arith.constant 32 : index
      %c0_9 = arith.constant 0 : index
      %17 = vector.load %arg7[%c32, %c0_9] : memref<96x1xf32, #tpu.memory_space<vmem>>, vector<16x1xf32>
      %c48 = arith.constant 48 : index
      %c0_10 = arith.constant 0 : index
      %18 = vector.load %arg7[%c48, %c0_10] : memref<96x1xf32, #tpu.memory_space<vmem>>, vector<16x1xf32>
      %c64 = arith.constant 64 : index
      %c0_11 = arith.constant 0 : index
      %19 = vector.load %arg7[%c64, %c0_11] : memref<96x1xf32, #tpu.memory_space<vmem>>, vector<32x1xf32>
      %c0_12 = arith.constant 0 : index
      %c0_13 = arith.constant 0 : index
      %20 = vector.load %arg16[%c0_12, %c0_13] : memref<16x225xf32, #tpu.memory_space<vmem>>, vector<16x225xf32>
      %21 = vector.broadcast %17 : vector<16x1xf32> to vector<16x225xf32>
      %22 = arith.addf %20, %21 : vector<16x225xf32>
      %23 = arith.truncf %22 : vector<16x225xf32> to vector<16x225xbf16>
      %c0_14 = arith.constant 0 : index
      %c0_15 = arith.constant 0 : index
      %c0_16 = arith.constant 0 : index
      %24 = vector.load %arg9[%c0_14, %c0_15, %c0_16] : memref<7x225x45xbf16, #tpu.memory_space<vmem>>, vector<1x225x45xbf16>
      %25 = vector.shape_cast %24 : vector<1x225x45xbf16> to vector<225x45xbf16>
      %cst_17 = arith.constant dense<0.000000e+00> : vector<16x45xf32>
      %26 = tpu.matmul %23, %25, %cst_17 {dimension_numbers = #tpu.dot_dimension_numbers<[1], [0], [0], [1], [0, 0, 1, 1], [], []>} : vector<16x225xbf16>, vector<225x45xbf16>, vector<16x45xf32> -> vector<16x45xf32>
      %c1 = arith.constant 1 : index
      %c0_18 = arith.constant 0 : index
      %c0_19 = arith.constant 0 : index
      %27 = vector.load %arg9[%c1, %c0_18, %c0_19] : memref<7x225x45xbf16, #tpu.memory_space<vmem>>, vector<1x225x45xbf16>
      %28 = vector.shape_cast %27 : vector<1x225x45xbf16> to vector<225x45xbf16>
      %cst_20 = arith.constant dense<0.000000e+00> : vector<16x45xf32>
      %29 = tpu.matmul %23, %28, %cst_20 {dimension_numbers = #tpu.dot_dimension_numbers<[1], [0], [0], [1], [0, 0, 1, 1], [], []>} : vector<16x225xbf16>, vector<225x45xbf16>, vector<16x45xf32> -> vector<16x45xf32>
      %30 = arith.maximumf %26, %29 : vector<16x45xf32>
      %c2 = arith.constant 2 : index
      %c0_21 = arith.constant 0 : index
      %c0_22 = arith.constant 0 : index
      %31 = vector.load %arg9[%c2, %c0_21, %c0_22] : memref<7x225x45xbf16, #tpu.memory_space<vmem>>, vector<1x225x45xbf16>
      %32 = vector.shape_cast %31 : vector<1x225x45xbf16> to vector<225x45xbf16>
      %cst_23 = arith.constant dense<0.000000e+00> : vector<16x45xf32>
      %33 = tpu.matmul %23, %32, %cst_23 {dimension_numbers = #tpu.dot_dimension_numbers<[1], [0], [0], [1], [0, 0, 1, 1], [], []>} : vector<16x225xbf16>, vector<225x45xbf16>, vector<16x45xf32> -> vector<16x45xf32>
      %34 = arith.maximumf %30, %33 : vector<16x45xf32>
      %c3 = arith.constant 3 : index
      %c0_24 = arith.constant 0 : index
      %c0_25 = arith.constant 0 : index
      %35 = vector.load %arg9[%c3, %c0_24, %c0_25] : memref<7x225x45xbf16, #tpu.memory_space<vmem>>, vector<1x225x45xbf16>
      %36 = vector.shape_cast %35 : vector<1x225x45xbf16> to vector<225x45xbf16>
      %cst_26 = arith.constant dense<0.000000e+00> : vector<16x45xf32>
      %37 = tpu.matmul %23, %36, %cst_26 {dimension_numbers = #tpu.dot_dimension_numbers<[1], [0], [0], [1], [0, 0, 1, 1], [], []>} : vector<16x225xbf16>, vector<225x45xbf16>, vector<16x45xf32> -> vector<16x45xf32>
      %38 = arith.maximumf %34, %37 : vector<16x45xf32>
      %c4 = arith.constant 4 : index
      %c0_27 = arith.constant 0 : index
      %c0_28 = arith.constant 0 : index
      %39 = vector.load %arg9[%c4, %c0_27, %c0_28] : memref<7x225x45xbf16, #tpu.memory_space<vmem>>, vector<1x225x45xbf16>
      %40 = vector.shape_cast %39 : vector<1x225x45xbf16> to vector<225x45xbf16>
      %cst_29 = arith.constant dense<0.000000e+00> : vector<16x45xf32>
      %41 = tpu.matmul %23, %40, %cst_29 {dimension_numbers = #tpu.dot_dimension_numbers<[1], [0], [0], [1], [0, 0, 1, 1], [], []>} : vector<16x225xbf16>, vector<225x45xbf16>, vector<16x45xf32> -> vector<16x45xf32>
      %42 = arith.maximumf %38, %41 : vector<16x45xf32>
      %c5 = arith.constant 5 : index
      %c0_30 = arith.constant 0 : index
      %c0_31 = arith.constant 0 : index
      %43 = vector.load %arg9[%c5, %c0_30, %c0_31] : memref<7x225x45xbf16, #tpu.memory_space<vmem>>, vector<1x225x45xbf16>
      %44 = vector.shape_cast %43 : vector<1x225x45xbf16> to vector<225x45xbf16>
      %cst_32 = arith.constant dense<0.000000e+00> : vector<16x45xf32>
      %45 = tpu.matmul %23, %44, %cst_32 {dimension_numbers = #tpu.dot_dimension_numbers<[1], [0], [0], [1], [0, 0, 1, 1], [], []>} : vector<16x225xbf16>, vector<225x45xbf16>, vector<16x45xf32> -> vector<16x45xf32>
      %46 = arith.maximumf %42, %45 : vector<16x45xf32>
      %c6 = arith.constant 6 : index
      %c0_33 = arith.constant 0 : index
      %c0_34 = arith.constant 0 : index
      %47 = vector.load %arg9[%c6, %c0_33, %c0_34] : memref<7x225x45xbf16, #tpu.memory_space<vmem>>, vector<1x225x45xbf16>
      %48 = vector.shape_cast %47 : vector<1x225x45xbf16> to vector<225x45xbf16>
      %cst_35 = arith.constant dense<0.000000e+00> : vector<16x45xf32>
      %49 = tpu.matmul %23, %48, %cst_35 {dimension_numbers = #tpu.dot_dimension_numbers<[1], [0], [0], [1], [0, 0, 1, 1], [], []>} : vector<16x225xbf16>, vector<225x45xbf16>, vector<16x45xf32> -> vector<16x45xf32>
      %50 = arith.maximumf %46, %49 : vector<16x45xf32>
      %51 = arith.truncf %50 : vector<16x45xf32> to vector<16x45xbf16>
      %c0_36 = arith.constant 0 : index
      %c0_37 = arith.constant 0 : index
      %c0_38 = arith.constant 0 : index
      %52 = vector.load %arg10[%c0_36, %c0_37, %c0_38] : memref<7x45x9xbf16, #tpu.memory_space<vmem>>, vector<1x45x9xbf16>
      %53 = vector.shape_cast %52 : vector<1x45x9xbf16> to vector<45x9xbf16>
      %cst_39 = arith.constant dense<0.000000e+00> : vector<16x9xf32>
      %54 = tpu.matmul %51, %53, %cst_39 {dimension_numbers = #tpu.dot_dimension_numbers<[1], [0], [0], [1], [0, 0, 1, 1], [], []>} : vector<16x45xbf16>, vector<45x9xbf16>, vector<16x9xf32> -> vector<16x9xf32>
      %c1_40 = arith.constant 1 : index
      %c0_41 = arith.constant 0 : index
      %c0_42 = arith.constant 0 : index
      %55 = vector.load %arg10[%c1_40, %c0_41, %c0_42] : memref<7x45x9xbf16, #tpu.memory_space<vmem>>, vector<1x45x9xbf16>
      %56 = vector.shape_cast %55 : vector<1x45x9xbf16> to vector<45x9xbf16>
      %cst_43 = arith.constant dense<0.000000e+00> : vector<16x9xf32>
      %57 = tpu.matmul %51, %56, %cst_43 {dimension_numbers = #tpu.dot_dimension_numbers<[1], [0], [0], [1], [0, 0, 1, 1], [], []>} : vector<16x45xbf16>, vector<45x9xbf16>, vector<16x9xf32> -> vector<16x9xf32>
      %58 = arith.maximumf %54, %57 : vector<16x9xf32>
      %c2_44 = arith.constant 2 : index
      %c0_45 = arith.constant 0 : index
      %c0_46 = arith.constant 0 : index
      %59 = vector.load %arg10[%c2_44, %c0_45, %c0_46] : memref<7x45x9xbf16, #tpu.memory_space<vmem>>, vector<1x45x9xbf16>
      %60 = vector.shape_cast %59 : vector<1x45x9xbf16> to vector<45x9xbf16>
      %cst_47 = arith.constant dense<0.000000e+00> : vector<16x9xf32>
      %61 = tpu.matmul %51, %60, %cst_47 {dimension_numbers = #tpu.dot_dimension_numbers<[1], [0], [0], [1], [0, 0, 1, 1], [], []>} : vector<16x45xbf16>, vector<45x9xbf16>, vector<16x9xf32> -> vector<16x9xf32>
      %62 = arith.maximumf %58, %61 : vector<16x9xf32>
      %c3_48 = arith.constant 3 : index
      %c0_49 = arith.constant 0 : index
      %c0_50 = arith.constant 0 : index
      %63 = vector.load %arg10[%c3_48, %c0_49, %c0_50] : memref<7x45x9xbf16, #tpu.memory_space<vmem>>, vector<1x45x9xbf16>
      %64 = vector.shape_cast %63 : vector<1x45x9xbf16> to vector<45x9xbf16>
      %cst_51 = arith.constant dense<0.000000e+00> : vector<16x9xf32>
      %65 = tpu.matmul %51, %64, %cst_51 {dimension_numbers = #tpu.dot_dimension_numbers<[1], [0], [0], [1], [0, 0, 1, 1], [], []>} : vector<16x45xbf16>, vector<45x9xbf16>, vector<16x9xf32> -> vector<16x9xf32>
      %66 = arith.maximumf %62, %65 : vector<16x9xf32>
      %c4_52 = arith.constant 4 : index
      %c0_53 = arith.constant 0 : index
      %c0_54 = arith.constant 0 : index
      %67 = vector.load %arg10[%c4_52, %c0_53, %c0_54] : memref<7x45x9xbf16, #tpu.memory_space<vmem>>, vector<1x45x9xbf16>
      %68 = vector.shape_cast %67 : vector<1x45x9xbf16> to vector<45x9xbf16>
      %cst_55 = arith.constant dense<0.000000e+00> : vector<16x9xf32>
      %69 = tpu.matmul %51, %68, %cst_55 {dimension_numbers = #tpu.dot_dimension_numbers<[1], [0], [0], [1], [0, 0, 1, 1], [], []>} : vector<16x45xbf16>, vector<45x9xbf16>, vector<16x9xf32> -> vector<16x9xf32>
      %70 = arith.maximumf %66, %69 : vector<16x9xf32>
      %c5_56 = arith.constant 5 : index
      %c0_57 = arith.constant 0 : index
      %c0_58 = arith.constant 0 : index
      %71 = vector.load %arg10[%c5_56, %c0_57, %c0_58] : memref<7x45x9xbf16, #tpu.memory_space<vmem>>, vector<1x45x9xbf16>
      %72 = vector.shape_cast %71 : vector<1x45x9xbf16> to vector<45x9xbf16>
      %cst_59 = arith.constant dense<0.000000e+00> : vector<16x9xf32>
      %73 = tpu.matmul %51, %72, %cst_59 {dimension_numbers = #tpu.dot_dimension_numbers<[1], [0], [0], [1], [0, 0, 1, 1], [], []>} : vector<16x45xbf16>, vector<45x9xbf16>, vector<16x9xf32> -> vector<16x9xf32>
      %74 = arith.maximumf %70, %73 : vector<16x9xf32>
      %c6_60 = arith.constant 6 : index
      %c0_61 = arith.constant 0 : index
      %c0_62 = arith.constant 0 : index
      %75 = vector.load %arg10[%c6_60, %c0_61, %c0_62] : memref<7x45x9xbf16, #tpu.memory_space<vmem>>, vector<1x45x9xbf16>
      %76 = vector.shape_cast %75 : vector<1x45x9xbf16> to vector<45x9xbf16>
      %cst_63 = arith.constant dense<0.000000e+00> : vector<16x9xf32>
      %77 = tpu.matmul %51, %76, %cst_63 {dimension_numbers = #tpu.dot_dimension_numbers<[1], [0], [0], [1], [0, 0, 1, 1], [], []>} : vector<16x45xbf16>, vector<45x9xbf16>, vector<16x9xf32> -> vector<16x9xf32>
      %78 = arith.maximumf %74, %77 : vector<16x9xf32>
      %c0_64 = arith.constant 0 : index
      %c0_65 = arith.constant 0 : index
      %79 = vector.load %arg5[%c0_64, %c0_65] : memref<144x16xf32, #tpu.memory_space<vmem>>, vector<144x16xf32>
      %cst_66 = arith.constant dense<0.000000e+00> : vector<144x9xf32>
      %80 = tpu.matmul %79, %78, %cst_66 {dimension_numbers = #tpu.dot_dimension_numbers<[1], [0], [0], [1], [0, 0, 1, 1], [], []>} : vector<144x16xf32>, vector<16x9xf32>, vector<144x9xf32> -> vector<144x9xf32>
      %81 = vector.extract_strided_slice %80 {offsets = [0, 0], sizes = [16, 9], strides = [1, 1]} : vector<144x9xf32> to vector<16x9xf32>
      %c0_67 = arith.constant 0 : index
      %c0_68 = arith.constant 0 : index
      %c0_69 = arith.constant 0 : index
      %82 = vector.load %arg11[%c0_67, %c0_68, %c0_69] : memref<9x9x9xf32, #tpu.memory_space<vmem>>, vector<1x9x9xf32>
      %83 = vector.shape_cast %82 : vector<1x9x9xf32> to vector<9x9xf32>
      %cst_70 = arith.constant dense<0.000000e+00> : vector<16x9xf32>
      %84 = tpu.matmul %81, %83, %cst_70 {dimension_numbers = #tpu.dot_dimension_numbers<[1], [0], [0], [1], [0, 0, 1, 1], [], []>} : vector<16x9xf32>, vector<9x9xf32>, vector<16x9xf32> -> vector<16x9xf32>
      %85 = vector.extract_strided_slice %80 {offsets = [16, 0], sizes = [16, 9], strides = [1, 1]} : vector<144x9xf32> to vector<16x9xf32>
      %c1_71 = arith.constant 1 : index
      %c0_72 = arith.constant 0 : index
      %c0_73 = arith.constant 0 : index
      %86 = vector.load %arg11[%c1_71, %c0_72, %c0_73] : memref<9x9x9xf32, #tpu.memory_space<vmem>>, vector<1x9x9xf32>
      %87 = vector.shape_cast %86 : vector<1x9x9xf32> to vector<9x9xf32>
      %cst_74 = arith.constant dense<0.000000e+00> : vector<16x9xf32>
      %88 = tpu.matmul %85, %87, %cst_74 {dimension_numbers = #tpu.dot_dimension_numbers<[1], [0], [0], [1], [0, 0, 1, 1], [], []>} : vector<16x9xf32>, vector<9x9xf32>, vector<16x9xf32> -> vector<16x9xf32>
      %89 = arith.addf %84, %88 : vector<16x9xf32>
      %90 = vector.extract_strided_slice %80 {offsets = [32, 0], sizes = [16, 9], strides = [1, 1]} : vector<144x9xf32> to vector<16x9xf32>
      %c2_75 = arith.constant 2 : index
      %c0_76 = arith.constant 0 : index
      %c0_77 = arith.constant 0 : index
      %91 = vector.load %arg11[%c2_75, %c0_76, %c0_77] : memref<9x9x9xf32, #tpu.memory_space<vmem>>, vector<1x9x9xf32>
      %92 = vector.shape_cast %91 : vector<1x9x9xf32> to vector<9x9xf32>
      %cst_78 = arith.constant dense<0.000000e+00> : vector<16x9xf32>
      %93 = tpu.matmul %90, %92, %cst_78 {dimension_numbers = #tpu.dot_dimension_numbers<[1], [0], [0], [1], [0, 0, 1, 1], [], []>} : vector<16x9xf32>, vector<9x9xf32>, vector<16x9xf32> -> vector<16x9xf32>
      %94 = arith.addf %89, %93 : vector<16x9xf32>
      %95 = vector.extract_strided_slice %80 {offsets = [48, 0], sizes = [16, 9], strides = [1, 1]} : vector<144x9xf32> to vector<16x9xf32>
      %c3_79 = arith.constant 3 : index
      %c0_80 = arith.constant 0 : index
      %c0_81 = arith.constant 0 : index
      %96 = vector.load %arg11[%c3_79, %c0_80, %c0_81] : memref<9x9x9xf32, #tpu.memory_space<vmem>>, vector<1x9x9xf32>
      %97 = vector.shape_cast %96 : vector<1x9x9xf32> to vector<9x9xf32>
      %cst_82 = arith.constant dense<0.000000e+00> : vector<16x9xf32>
      %98 = tpu.matmul %95, %97, %cst_82 {dimension_numbers = #tpu.dot_dimension_numbers<[1], [0], [0], [1], [0, 0, 1, 1], [], []>} : vector<16x9xf32>, vector<9x9xf32>, vector<16x9xf32> -> vector<16x9xf32>
      %99 = arith.addf %94, %98 : vector<16x9xf32>
      %100 = vector.extract_strided_slice %80 {offsets = [64, 0], sizes = [16, 9], strides = [1, 1]} : vector<144x9xf32> to vector<16x9xf32>
      %c4_83 = arith.constant 4 : index
      %c0_84 = arith.constant 0 : index
      %c0_85 = arith.constant 0 : index
      %101 = vector.load %arg11[%c4_83, %c0_84, %c0_85] : memref<9x9x9xf32, #tpu.memory_space<vmem>>, vector<1x9x9xf32>
      %102 = vector.shape_cast %101 : vector<1x9x9xf32> to vector<9x9xf32>
      %cst_86 = arith.constant dense<0.000000e+00> : vector<16x9xf32>
      %103 = tpu.matmul %100, %102, %cst_86 {dimension_numbers = #tpu.dot_dimension_numbers<[1], [0], [0], [1], [0, 0, 1, 1], [], []>} : vector<16x9xf32>, vector<9x9xf32>, vector<16x9xf32> -> vector<16x9xf32>
      %104 = arith.addf %99, %103 : vector<16x9xf32>
      %105 = vector.extract_strided_slice %80 {offsets = [80, 0], sizes = [16, 9], strides = [1, 1]} : vector<144x9xf32> to vector<16x9xf32>
      %c5_87 = arith.constant 5 : index
      %c0_88 = arith.constant 0 : index
      %c0_89 = arith.constant 0 : index
      %106 = vector.load %arg11[%c5_87, %c0_88, %c0_89] : memref<9x9x9xf32, #tpu.memory_space<vmem>>, vector<1x9x9xf32>
      %107 = vector.shape_cast %106 : vector<1x9x9xf32> to vector<9x9xf32>
      %cst_90 = arith.constant dense<0.000000e+00> : vector<16x9xf32>
      %108 = tpu.matmul %105, %107, %cst_90 {dimension_numbers = #tpu.dot_dimension_numbers<[1], [0], [0], [1], [0, 0, 1, 1], [], []>} : vector<16x9xf32>, vector<9x9xf32>, vector<16x9xf32> -> vector<16x9xf32>
      %109 = arith.addf %104, %108 : vector<16x9xf32>
      %110 = vector.extract_strided_slice %80 {offsets = [96, 0], sizes = [16, 9], strides = [1, 1]} : vector<144x9xf32> to vector<16x9xf32>
      %c6_91 = arith.constant 6 : index
      %c0_92 = arith.constant 0 : index
      %c0_93 = arith.constant 0 : index
      %111 = vector.load %arg11[%c6_91, %c0_92, %c0_93] : memref<9x9x9xf32, #tpu.memory_space<vmem>>, vector<1x9x9xf32>
      %112 = vector.shape_cast %111 : vector<1x9x9xf32> to vector<9x9xf32>
      %cst_94 = arith.constant dense<0.000000e+00> : vector<16x9xf32>
      %113 = tpu.matmul %110, %112, %cst_94 {dimension_numbers = #tpu.dot_dimension_numbers<[1], [0], [0], [1], [0, 0, 1, 1], [], []>} : vector<16x9xf32>, vector<9x9xf32>, vector<16x9xf32> -> vector<16x9xf32>
      %114 = arith.addf %109, %113 : vector<16x9xf32>
      %115 = vector.extract_strided_slice %80 {offsets = [112, 0], sizes = [16, 9], strides = [1, 1]} : vector<144x9xf32> to vector<16x9xf32>
      %c7 = arith.constant 7 : index
      %c0_95 = arith.constant 0 : index
      %c0_96 = arith.constant 0 : index
      %116 = vector.load %arg11[%c7, %c0_95, %c0_96] : memref<9x9x9xf32, #tpu.memory_space<vmem>>, vector<1x9x9xf32>
      %117 = vector.shape_cast %116 : vector<1x9x9xf32> to vector<9x9xf32>
      %cst_97 = arith.constant dense<0.000000e+00> : vector<16x9xf32>
      %118 = tpu.matmul %115, %117, %cst_97 {dimension_numbers = #tpu.dot_dimension_numbers<[1], [0], [0], [1], [0, 0, 1, 1], [], []>} : vector<16x9xf32>, vector<9x9xf32>, vector<16x9xf32> -> vector<16x9xf32>
      %119 = arith.addf %114, %118 : vector<16x9xf32>
      %120 = vector.extract_strided_slice %80 {offsets = [128, 0], sizes = [16, 9], strides = [1, 1]} : vector<144x9xf32> to vector<16x9xf32>
      %c8 = arith.constant 8 : index
      %c0_98 = arith.constant 0 : index
      %c0_99 = arith.constant 0 : index
      %121 = vector.load %arg11[%c8, %c0_98, %c0_99] : memref<9x9x9xf32, #tpu.memory_space<vmem>>, vector<1x9x9xf32>
      %122 = vector.shape_cast %121 : vector<1x9x9xf32> to vector<9x9xf32>
      %cst_100 = arith.constant dense<0.000000e+00> : vector<16x9xf32>
      %123 = tpu.matmul %120, %122, %cst_100 {dimension_numbers = #tpu.dot_dimension_numbers<[1], [0], [0], [1], [0, 0, 1, 1], [], []>} : vector<16x9xf32>, vector<9x9xf32>, vector<16x9xf32> -> vector<16x9xf32>
      %124 = arith.addf %119, %123 : vector<16x9xf32>
      %125 = vector.broadcast %18 : vector<16x1xf32> to vector<16x9xf32>
      %126 = arith.addf %124, %125 : vector<16x9xf32>
      %c0_101 = arith.constant 0 : index
      %c0_102 = arith.constant 0 : index
      %127 = vector.load %arg12[%c0_101, %c0_102] : memref<9x1024xf32, #tpu.memory_space<vmem>>, vector<9x1024xf32>
      %cst_103 = arith.constant dense<0.000000e+00> : vector<16x1024xf32>
      %128 = tpu.matmul %126, %127, %cst_103 {dimension_numbers = #tpu.dot_dimension_numbers<[1], [0], [0], [1], [0, 0, 1, 1], [], []>} : vector<16x9xf32>, vector<9x1024xf32>, vector<16x1024xf32> -> vector<16x1024xf32>
      %c0_104 = arith.constant 0 : index
      %c0_105 = arith.constant 0 : index
      %129 = vector.load %arg6[%c0_104, %c0_105] : memref<32x16xf32, #tpu.memory_space<vmem>>, vector<32x16xf32>
      %c0_106 = arith.constant 0 : index
      %c0_107 = arith.constant 0 : index
      %130 = vector.load %arg14[%c0_106, %c0_107] : memref<16x1024xf32, #tpu.memory_space<vmem>>, vector<16x1024xf32>
      %131 = arith.addf %128, %130 : vector<16x1024xf32>
      %cst_108 = arith.constant dense<0.000000e+00> : vector<32x1024xf32>
      %132 = tpu.matmul %129, %131, %cst_108 {dimension_numbers = #tpu.dot_dimension_numbers<[1], [0], [0], [1], [0, 0, 1, 1], [], []>} : vector<32x16xf32>, vector<16x1024xf32>, vector<32x1024xf32> -> vector<32x1024xf32>
      %133 = vector.broadcast %19 : vector<32x1xf32> to vector<32x1024xf32>
      %134 = arith.addf %132, %133 : vector<32x1024xf32>
      %c0_109 = arith.constant 0 : index
      %c0_110 = arith.constant 0 : index
      %135 = vector.load %arg1[%c0_109, %c0_110] : memref<32x1024xf32, #tpu.memory_space<vmem>>, vector<32x1024xf32>
      %136 = arith.negf %134 : vector<32x1024xf32>
      %137 = math.exp %136 : vector<32x1024xf32>
      %cst_111 = arith.constant 1.000000e+00 : f32
      %138 = vector.broadcast %cst_111 : f32 to vector<32x1024xf32>
      %139 = arith.addf %138, %137 : vector<32x1024xf32>
      %140 = arith.divf %138, %139 : vector<32x1024xf32>
      %141 = arith.mulf %135, %140 : vector<32x1024xf32>
      %c0_112 = arith.constant 0 : index
      %c0_113 = arith.constant 0 : index
      %142 = vector.load %arg13[%c0_112, %c0_113] : memref<32x1024xf32, #tpu.memory_space<vmem>>, vector<32x1024xf32>
      tpu.vector_store %arg13[%c0_112, %c0_113], %141 {strides = array<i32>} : memref<32x1024xf32, #tpu.memory_space<vmem>>, vector<32x1024xf32>,
    } else {
    }
    return
  }
  func.func @transform_0(%arg0: i32) -> (i32, i32) {
    %c0_i32 = arith.constant 0 : i32
    %c0_i32_0 = arith.constant 0 : i32
    %c0_i32_1 = arith.constant 0 : i32
    return %c0_i32, %c0_i32_0 : i32, i32
  }
  func.func @transform_1(%arg0: i32) -> (i32, i32) {
    %c0_i32 = arith.constant 0 : i32
    %c0_i32_0 = arith.constant 0 : i32
    %c0_i32_1 = arith.constant 0 : i32
    return %c0_i32, %c0_i32_0 : i32, i32
  }
  func.func @transform_2(%arg0: i32) -> (i32, i32) {
    %c0_i32 = arith.constant 0 : i32
    %c0_i32_0 = arith.constant 0 : i32
    %c0_i32_1 = arith.constant 0 : i32
    return %c0_i32, %c0_i32_0 : i32, i32
  }
  func.func @transform_3(%arg0: i32) -> (i32, i32) {
    %c0_i32 = arith.constant 0 : i32
    %c0_i32_0 = arith.constant 0 : i32
    %c0_i32_1 = arith.constant 0 : i32
    return %c0_i32, %c0_i32_0 : i32, i32
  }
  func.func @transform_4(%arg0: i32) -> (i32, i32) {
    %c0_i32 = arith.constant 0 : i32
    %c0_i32_0 = arith.constant 0 : i32
    %c0_i32_1 = arith.constant 0 : i32
    return %c0_i32, %c0_i32_0 : i32, i32
  }
  func.func @transform_5(%arg0: i32) -> (i32, i32) {
    %c0_i32 = arith.constant 0 : i32
    %c0_i32_0 = arith.constant 0 : i32
    %c0_i32_1 = arith.constant 0 : i32
    return %c0_i32, %c0_i32_0 : i32, i32
  }
  func.func @transform_6(%arg0: i32) -> (i32, i32) {
    %c0_i32 = arith.constant 0 : i32
    %c0_i32_0 = arith.constant 0 : i32
    %c0_i32_1 = arith.constant 0 : i32
    return %c0_i32, %c0_i32_0 : i32, i32
  }
  func.func @transform_7(%arg0: i32) -> (i32, i32, i32) {
    %c0_i32 = arith.constant 0 : i32
    %c0_i32_0 = arith.constant 0 : i32
    %c0_i32_1 = arith.constant 0 : i32
    return %arg0, %c0_i32, %c0_i32_0 : i32, i32, i32
  }
  func.func @transform_8(%arg0: i32) -> (i32, i32, i32) {
    %c0_i32 = arith.constant 0 : i32
    %c0_i32_0 = arith.constant 0 : i32
    %c0_i32_1 = arith.constant 0 : i32
    %c0_i32_2 = arith.constant 0 : i32
    return %c0_i32, %c0_i32_0, %c0_i32_1 : i32, i32, i32
  }
  func.func @transform_9(%arg0: i32) -> (i32, i32, i32) {
    %c0_i32 = arith.constant 0 : i32
    %c0_i32_0 = arith.constant 0 : i32
    %c0_i32_1 = arith.constant 0 : i32
    %c0_i32_2 = arith.constant 0 : i32
    return %c0_i32, %c0_i32_0, %c0_i32_1 : i32, i32, i32
  }
  func.func @transform_10(%arg0: i32) -> (i32, i32, i32) {
    %c0_i32 = arith.constant 0 : i32
    %c0_i32_0 = arith.constant 0 : i32
    %c0_i32_1 = arith.constant 0 : i32
    %c0_i32_2 = arith.constant 0 : i32
    return %c0_i32, %c0_i32_0, %c0_i32_1 : i32, i32, i32
  }
  func.func @transform_11(%arg0: i32) -> (i32, i32) {
    %c0_i32 = arith.constant 0 : i32
    %c0_i32_0 = arith.constant 0 : i32
    %c0_i32_1 = arith.constant 0 : i32
    return %c0_i32, %c0_i32_0 : i32, i32
  }
  func.func @transform_12(%arg0: i32) -> (i32, i32) {
    %c0_i32 = arith.constant 0 : i32
    %c0_i32_0 = arith.constant 0 : i32
    %c0_i32_1 = arith.constant 0 : i32
    return %c0_i32, %c0_i32_0 : i32, i32
  }
}

</mosaic_0001>

<llo_original>
// kernel: tile.28
$region0: #{tile.28}
  #allocation2 [shape = 's32[1]{0}', space=sflag, size = 0x4, scoped, tag = 'scoped memory for tile.28']
  %s0 = inlined_call_operand.hbm [shape: f32[4], index: 0, kind: input, shape index: {}]
  %s1 = inlined_call_operand.vmem [shape: f32[4,4], index: 1, kind: output, shape index: {}]
  $region1: #{tile.28} parent=0
    #allocation0 [shape = 'u8[512]{0}', space=vmem, size = 0x400, scoped, tag = 'operand span for operand 0']
    #allocation1 [shape = 's32[1]{0}', space=sflag, size = 0x4, scoped, tag = 'scoped memory for tile.28']
    %2 = vsyncpa [#allocation1], 0
    // Predicated region
    $region2: #{tile.28} parent=1 // pred_check
      _
    $region3: #{tile.28} parent=1 // pred_check_branch
      %4 = sbr.rel (0) target = $region5
    $region4: #{tile.28} parent=1 // pred_region
      %s6 = ssub.s32 16, 16
      %7 = vsyncadd [#allocation1], %s6
      %s9 = sshll.u32 [#allocation0], 4
      %s10 = int_to_ptr.vmem [resolvable:$true] %s9
      %12 = dma.hbm_to_vmem [thread:$0]  %s0, 16, %s10, [#allocation1]
    $region5: #{tile.28} parent=1 // pred_fallthru
      _
    // Predicated region
    $region6: #{tile.28} parent=1 // pred_check
      _
    $region7: #{tile.28} parent=1 // pred_check_branch
      %14 = sbr.rel (0) target = $region9
    $region8: #{tile.28} parent=1 // pred_region
      %15 = dma.done [#allocation1], 16
    $region9: #{tile.28} parent=1 // pred_fallthru
      _
    %v16 = vld [vmem:[#allocation0] ss:$0 sm:$0xff]
    %17 = vst [vmem:[%s1] sm:$0xf] %v16
    %18 = vsyncpa [#allocation1], 1

// kernel: tile.29
$region0: #{tile.29}
  %s0 = inlined_call_operand.vmem [shape: f32[4,4], index: 0, kind: input, shape index: {}]
  %s1 = inlined_call_operand.vmem [shape: f32[16,1], index: 1, kind: output, shape index: {}]
  $region1: #{tile.29} parent=0
    #allocation0 [shape = 'u8[4096]{0}', space=vmem, size = 0x1000, scoped, tag = 'scoped mem for output reshape']
    #allocation1 [shape = 'u8[4096]{0}', space=vmem, size = 0x1000, scoped, tag = 'scoped mem for input reshape']
    %s3 = sshll.u32 1, 4
    %s4 = ssub.s32 %s3, 1
    %v5 = vld [vmem:[%s0] sm:%s4]
    %6 = vst [vmem:[#allocation1] sm:%s4] %v5
    %v7 = vld [vmem:[#allocation1] sm:$0x1]
    %vm8 = vcmask 31744
    %9 = vst.msk [vmem:[#allocation0] sm:$0x1] %vm8, %v7
    %s10 = scalar_lea.vmem [#allocation1], 3
    %v11 = vld [vmem:[%s10] sm:$0x1]
    %12 = vrot.lane.b32.xlu0 %v11, 12
    %v13 = vpop.permute.xlu0 %12
    %vm14 = vcmask 130144
    %15 = vst.msk [vmem:[#allocation0] sm:$0x1] %vm14, %v13
    %s16 = scalar_lea.vmem [#allocation1], 2
    %v17 = vld [vmem:[%s16] sm:$0x1]
    %18 = vrot.lane.b32.xlu0 %v17, 8
    %v19 = vpop.permute.xlu0 %18
    %vm20 = vcmask 97344
    %21 = vst.msk [vmem:[#allocation0] sm:$0x1] %vm20, %v19
    %s22 = scalar_lea.vmem [#allocation1], 1
    %v23 = vld [vmem:[%s22] sm:$0x1]
    %24 = vrot.lane.b32.xlu0 %v23, 4
    %v25 = vpop.permute.xlu0 %24
    %vm26 = vcmask 64544
    %27 = vst.msk [vmem:[#allocation0] sm:$0x1] %vm26, %v25
    %s29 = sshll.u32 1, 1
    %s30 = ssub.s32 %s29, 1
    %v32 = vld [vmem:[#allocation0] sm:%s30]
    %s33 = sshll.u32 1, 1
    %s34 = ssub.s32 %s33, 1
    %35 = vst [vmem:[%s1] sm:%s34] %v32

// kernel: tile.48
$region0: #{tile.48}
  #allocation2 [shape = 's32[1]{0}', space=sflag, size = 0x4, scoped, tag = 'scoped memory for tile.48']
  %s0 = inlined_call_operand.hbm [shape: f32[8], index: 0, kind: input, shape index: {}]
  %s1 = inlined_call_operand.vmem [shape: f32[4,8], index: 1, kind: output, shape index: {}]
  $region1: #{tile.48} parent=0
    #allocation0 [shape = 'u8[512]{0}', space=vmem, size = 0x400, scoped, tag = 'operand span for operand 0']
    #allocation1 [shape = 's32[1]{0}', space=sflag, size = 0x4, scoped, tag = 'scoped memory for tile.48']
    %2 = vsyncpa [#allocation1], 0
    // Predicated region
    $region2: #{tile.48} parent=1 // pred_check
      _
    $region3: #{tile.48} parent=1 // pred_check_branch
      %4 = sbr.rel (0) target = $region5
    $region4: #{tile.48} parent=1 // pred_region
      %s6 = ssub.s32 16, 16
      %7 = vsyncadd [#allocation1], %s6
      %s9 = sshll.u32 [#allocation0], 4
      %s10 = int_to_ptr.vmem [resolvable:$true] %s9
      %12 = dma.hbm_to_vmem [thread:$0]  %s0, 16, %s10, [#allocation1]
    $region5: #{tile.48} parent=1 // pred_fallthru
      _
    // Predicated region
    $region6: #{tile.48} parent=1 // pred_check
      _
    $region7: #{tile.48} parent=1 // pred_check_branch
      %14 = sbr.rel (0) target = $region9
    $region8: #{tile.48} parent=1 // pred_region
      %15 = dma.done [#allocation1], 16
    $region9: #{tile.48} parent=1 // pred_fallthru
      _
    %v16 = vld [vmem:[#allocation0] ss:$0 sm:$0xff]
    %17 = vst [vmem:[%s1] sm:$0xf] %v16
    %18 = vsyncpa [#allocation1], 1

// kernel: tile.49
$region0: #{tile.49}
  %s0 = inlined_call_operand.vmem [shape: f32[4,8], index: 0, kind: input, shape index: {}]
  %s1 = inlined_call_operand.vmem [shape: f32[32,1], index: 1, kind: output, shape index: {}]
  $region1: #{tile.49} parent=0
    #allocation0 [shape = 'u8[4096]{0}', space=vmem, size = 0x1000, scoped, tag = 'scoped mem for output reshape']
    #allocation1 [shape = 'u8[4096]{0}', space=vmem, size = 0x1000, scoped, tag = 'scoped mem for input reshape']
    %s3 = sshll.u32 1, 4
    %s4 = ssub.s32 %s3, 1
    %v5 = vld [vmem:[%s0] sm:%s4]
    %6 = vst [vmem:[#allocation1] sm:%s4] %v5
    %v7 = vld [vmem:[#allocation1] sm:$0x1]
    %vm8 = vcmask 64512
    %9 = vst.msk [vmem:[#allocation0] sm:$0x1] %vm8, %v7
    %s10 = scalar_lea.vmem [#allocation1], 3
    %v11 = vld [vmem:[%s10] sm:$0x1]
    %12 = vrot.lane.b32.xlu0 %v11, 24
    %v13 = vpop.permute.xlu0 %12
    %vm14 = vcmask 261312
    %15 = vst.msk [vmem:[#allocation0] sm:$0x1] %vm14, %v13
    %s16 = scalar_lea.vmem [#allocation1], 2
    %v17 = vld [vmem:[%s16] sm:$0x1]
    %18 = vrot.lane.b32.xlu0 %v17, 16
    %v19 = vpop.permute.xlu0 %18
    %vm20 = vcmask 195712
    %21 = vst.msk [vmem:[#allocation0] sm:$0x1] %vm20, %v19
    %s22 = scalar_lea.vmem [#allocation1], 1
    %v23 = vld [vmem:[%s22] sm:$0x1]
    %24 = vrot.lane.b32.xlu0 %v23, 8
    %v25 = vpop.permute.xlu0 %24
    %vm26 = vcmask 130112
    %27 = vst.msk [vmem:[#allocation0] sm:$0x1] %vm26, %v25
    %s29 = sshll.u32 1, 1
    %s30 = ssub.s32 %s29, 1
    %v32 = vld [vmem:[#allocation0] sm:%s30]
    %s33 = sshll.u32 1, 1
    %s34 = ssub.s32 %s33, 1
    %35 = vst [vmem:[%s1] sm:%s34] %v32

// kernel: fwd.1
$region0: #{fwd.1}
  #allocation0 [shape = 'u32[]', space=smem, size = 0x4, offset = 0x4, fixed_abs, tag = 'smem constant byte address 0x4 - core index']
  #allocation1 [shape = 'u32[144,128]{1,0:T(1,128)}', space=vmem, size = 0x12000, scoped, tag = 'internal scratch']
  #allocation2 [shape = 'f32[16,1024]{1,0:T(8,128)}', space=vmem, size = 0x10000, scoped, tag = 'scratch operand']
  #allocation3 [shape = 'f32[144,1024]{1,0:T(8,128)}', space=vmem, size = 0x90000, scoped, tag = 'scratch operand']
  #allocation4 [shape = 'f32[16,225]{1,0:T(8,128)}', space=vmem, size = 0x4000, scoped, tag = 'scratch operand']
  %s0 = inlined_call_operand.vmem [shape: f32[32,1024], index: 0, kind: input, shape index: {}]
  %s1 = inlined_call_operand.vmem [shape: f32[16,32], index: 1, kind: input, shape index: {}]
  %s2 = inlined_call_operand.vmem [shape: f32[16,16], index: 2, kind: input, shape index: {}]
  %s3 = inlined_call_operand.vmem [shape: f32[144,16], index: 3, kind: input, shape index: {}]
  %s4 = inlined_call_operand.vmem [shape: f32[144,16], index: 4, kind: input, shape index: {}]
  %s5 = inlined_call_operand.vmem [shape: f32[32,16], index: 5, kind: input, shape index: {}]
  %s6 = inlined_call_operand.vmem [shape: f32[96,1], index: 6, kind: input, shape index: {}]
  %s7 = inlined_call_operand.hbm [shape: bf16[9,1024,225], index: 7, kind: input, shape index: {}]
  %s8 = inlined_call_operand.hbm [shape: bf16[7,225,45], index: 8, kind: input, shape index: {}]
  %s9 = inlined_call_operand.hbm [shape: bf16[7,45,9], index: 9, kind: input, shape index: {}]
  %s10 = inlined_call_operand.hbm [shape: f32[9,9,9], index: 10, kind: input, shape index: {}]
  %s11 = inlined_call_operand.hbm [shape: f32[9,1024], index: 11, kind: input, shape index: {}]
  %s12 = inlined_call_operand.vmem [shape: f32[32,1024], index: 12, kind: output, shape index: {}]
  %s13 = sld [smem:[#allocation0]]
  $region109: #{fwd.1} parent=0
    _
  %s15 = ssub.s32 1, %s13
  %s16 = scalar_select 0, %s15, %s13
  $region1: #{fwd.1} parent=0
    #allocation5 [shape = 'u8[1048576]{0}', space=vmem, size = 0x100000, scoped, tag = 'input window, operand 7']
    #allocation6 [shape = 's32[2]{0}', space=sflag, size = 0x8, scoped, tag = 'scoped memory for fwd.1']
    #allocation7 [shape = 'u8[415744]{0}', space=vmem, size = 0x65800, scoped, tag = 'input window, operand 8, single buffered']
    #allocation8 [shape = 's32[1]{0}', space=sflag, size = 0x4, scoped, tag = 'scoped memory for fwd.1']
    #allocation9 [shape = 'u8[86016]{0}', space=vmem, size = 0x15000, scoped, tag = 'input window, operand 9, single buffered']
    #allocation10 [shape = 'u8[73728]{0}', space=vmem, size = 0x12000, scoped, tag = 'input window, operand 10, single buffered']
    #allocation11 [shape = 's32[1]{0}', space=sflag, size = 0x4, scoped, tag = 'scoped memory for fwd.1']
    #allocation12 [shape = 'u8[65536]{0}', space=vmem, size = 0x10000, scoped, tag = 'input window, operand 11, single buffered']
    %17 = vsyncpa [#allocation6], 0
    %s18 = scalar_lea.sflag [#allocation6], 1
    %19 = vsyncpa %s18, 0
    %20 = vsyncpa [#allocation8], 0
    %21 = vsyncpa [#allocation11], 0
    loop: start=0, step=1, limit=11
    $region2: #{fwd.1} parent=1 // loop_pre_header
      _
    $region3: #{fwd.1} parent=1 // loop_header
      %s23 = sphi 0, %s27
      %p24 = scmp.ge.s32.totalorder %s23, 11
      %s31 = sphi 0, %s31
      %s33 = sphi 0, %s31
      %s34 = sphi 0, %s33
      %s48 = sphi 0, %s34
      %s52 = sphi 0, %s52
      %s54 = sphi 0, %s52
      %s55 = sphi 0, %s54
      %s69 = sphi 0, %s55
      %s73 = sphi 0, %s73
      %s75 = sphi 0, %s73
      %s76 = sphi 0, %s75
      %s90 = sphi 0, %s76
      %s94 = sphi 0, %s94
      %s96 = sphi 0, %s94
      %s97 = sphi 0, %s96
      %s111 = sphi 0, %s97
      %s115 = sphi 0, %s115
      %s117 = sphi 0, %s115
      %s118 = sphi 0, %s117
      %s132 = sphi 0, %s118
      %s136 = sphi 0, %s136
      %s138 = sphi 0, %s136
      %s139 = sphi 0, %s138
      %s153 = sphi 0, %s139
      %s157 = sphi 0, %s157
      %s159 = sphi 0, %s157
      %s160 = sphi 0, %s159
      %s174 = sphi 0, %s160
      %s180 = sphi 0, %s182
      %s183 = sphi 0, %s180
      %s184 = sphi 0, %s183
      %s200 = sphi 0, %s184
      %s204 = sphi 0, %s204
      %s206 = sphi 0, %s204
      %s207 = sphi 0, %s206
      %s221 = sphi 0, %s207
      %s225 = sphi 0, %s225
      %s227 = sphi 0, %s225
      %s228 = sphi 0, %s227
      %s242 = sphi 0, %s228
      %s246 = sphi 0, %s246
      %s248 = sphi 0, %s246
      %s249 = sphi 0, %s248
      %s263 = sphi 0, %s249
      %s267 = sphi 0, %s267
      %s269 = sphi 0, %s267
      %s270 = sphi 0, %s269
      %s284 = sphi 0, %s270
      %s288 = sphi 0, %s288
      %s290 = sphi 0, %s288
      %s291 = sphi 0, %s290
      %s305 = sphi 0, %s291
    $region4: #{fwd.1} parent=1 // loop_header_branch
      %26 = sbr.rel (%p24) target = $region8
    $region5: #{fwd.1} parent=1 // loop_body
      %s28 = ssub.s32 %s23, 1
      %s29 = ssub.s32 %s23, 2
      %s30 = sadd.s32 %s23, 1
      %s32 = sadd.s32 %s31, 1
      %p35 = scmp.eq.s32.totalorder %s23, 8
      %p36 = scmp.ne.s32.totalorder %s31, %s33
      %p37 = scmp.eq.s32.totalorder %s23, 0
      %p38 = por %p36, %p37
      %p39 = scmp.ne.s32.totalorder %s31, %s33
      %p40 = scmp.eq.s32.totalorder %s28, 8
      %p41 = por %p39, %p40
      %p42 = scmp.ne.s32.totalorder %s33, %s34
      %p43 = scmp.eq.s32.totalorder %s28, 0
      %p44 = por %p42, %p43
      %p45 = scmp.ne.s32.totalorder %s33, %s34
      %p46 = scmp.eq.s32.totalorder %s29, 8
      %p47 = por %p45, %p46
      %p49 = scmp.ne.s32.totalorder %s34, %s48
      %p50 = scmp.eq.s32.totalorder %s29, 0
      %p51 = por %p49, %p50
      %s53 = sadd.s32 %s52, 1
      %p56 = scmp.eq.s32.totalorder %s23, 8
      %p57 = scmp.ne.s32.totalorder %s52, %s54
      %p58 = scmp.eq.s32.totalorder %s23, 0
      %p59 = por %p57, %p58
      %p60 = scmp.ne.s32.totalorder %s52, %s54
      %p61 = scmp.eq.s32.totalorder %s28, 8
      %p62 = por %p60, %p61
      %p63 = scmp.ne.s32.totalorder %s54, %s55
      %p64 = scmp.eq.s32.totalorder %s28, 0
      %p65 = por %p63, %p64
      %p66 = scmp.ne.s32.totalorder %s54, %s55
      %p67 = scmp.eq.s32.totalorder %s29, 8
      %p68 = por %p66, %p67
      %p70 = scmp.ne.s32.totalorder %s55, %s69
      %p71 = scmp.eq.s32.totalorder %s29, 0
      %p72 = por %p70, %p71
      %s74 = sadd.s32 %s73, 1
      %p77 = scmp.eq.s32.totalorder %s23, 8
      %p78 = scmp.ne.s32.totalorder %s73, %s75
      %p79 = scmp.eq.s32.totalorder %s23, 0
      %p80 = por %p78, %p79
      %p81 = scmp.ne.s32.totalorder %s73, %s75
      %p82 = scmp.eq.s32.totalorder %s28, 8
      %p83 = por %p81, %p82
      %p84 = scmp.ne.s32.totalorder %s75, %s76
      %p85 = scmp.eq.s32.totalorder %s28, 0
      %p86 = por %p84, %p85
      %p87 = scmp.ne.s32.totalorder %s75, %s76
      %p88 = scmp.eq.s32.totalorder %s29, 8
      %p89 = por %p87, %p88
      %p91 = scmp.ne.s32.totalorder %s76, %s90
      %p92 = scmp.eq.s32.totalorder %s29, 0
      %p93 = por %p91, %p92
      %s95 = sadd.s32 %s94, 1
      %p98 = scmp.eq.s32.totalorder %s23, 8
      %p99 = scmp.ne.s32.totalorder %s94, %s96
      %p100 = scmp.eq.s32.totalorder %s23, 0
      %p101 = por %p99, %p100
      %p102 = scmp.ne.s32.totalorder %s94, %s96
      %p103 = scmp.eq.s32.totalorder %s28, 8
      %p104 = por %p102, %p103
      %p105 = scmp.ne.s32.totalorder %s96, %s97
      %p106 = scmp.eq.s32.totalorder %s28, 0
      %p107 = por %p105, %p106
      %p108 = scmp.ne.s32.totalorder %s96, %s97
      %p109 = scmp.eq.s32.totalorder %s29, 8
      %p110 = por %p108, %p109
      %p112 = scmp.ne.s32.totalorder %s97, %s111
      %p113 = scmp.eq.s32.totalorder %s29, 0
      %p114 = por %p112, %p113
      %s116 = sadd.s32 %s115, 1
      %p119 = scmp.eq.s32.totalorder %s23, 8
      %p120 = scmp.ne.s32.totalorder %s115, %s117
      %p121 = scmp.eq.s32.totalorder %s23, 0
      %p122 = por %p120, %p121
      %p123 = scmp.ne.s32.totalorder %s115, %s117
      %p124 = scmp.eq.s32.totalorder %s28, 8
      %p125 = por %p123, %p124
      %p126 = scmp.ne.s32.totalorder %s117, %s118
      %p127 = scmp.eq.s32.totalorder %s28, 0
      %p128 = por %p126, %p127
      %p129 = scmp.ne.s32.totalorder %s117, %s118
      %p130 = scmp.eq.s32.totalorder %s29, 8
      %p131 = por %p129, %p130
      %p133 = scmp.ne.s32.totalorder %s118, %s132
      %p134 = scmp.eq.s32.totalorder %s29, 0
      %p135 = por %p133, %p134
      %s137 = sadd.s32 %s136, 1
      %p140 = scmp.eq.s32.totalorder %s23, 8
      %p141 = scmp.ne.s32.totalorder %s136, %s138
      %p142 = scmp.eq.s32.totalorder %s23, 0
      %p143 = por %p141, %p142
      %p144 = scmp.ne.s32.totalorder %s136, %s138
      %p145 = scmp.eq.s32.totalorder %s28, 8
      %p146 = por %p144, %p145
      %p147 = scmp.ne.s32.totalorder %s138, %s139
      %p148 = scmp.eq.s32.totalorder %s28, 0
      %p149 = por %p147, %p148
      %p150 = scmp.ne.s32.totalorder %s138, %s139
      %p151 = scmp.eq.s32.totalorder %s29, 8
      %p152 = por %p150, %p151
      %p154 = scmp.ne.s32.totalorder %s139, %s153
      %p155 = scmp.eq.s32.totalorder %s29, 0
      %p156 = por %p154, %p155
      %s158 = sadd.s32 %s157, 1
      %p161 = scmp.eq.s32.totalorder %s23, 8
      %p162 = scmp.ne.s32.totalorder %s157, %s159
      %p163 = scmp.eq.s32.totalorder %s23, 0
      %p164 = por %p162, %p163
      %p165 = scmp.ne.s32.totalorder %s157, %s159
      %p166 = scmp.eq.s32.totalorder %s28, 8
      %p167 = por %p165, %p166
      %p168 = scmp.ne.s32.totalorder %s159, %s160
      %p169 = scmp.eq.s32.totalorder %s28, 0
      %p170 = por %p168, %p169
      %p171 = scmp.ne.s32.totalorder %s159, %s160
      %p172 = scmp.eq.s32.totalorder %s29, 8
      %p173 = por %p171, %p172
      %p175 = scmp.ne.s32.totalorder %s160, %s174
      %p176 = scmp.eq.s32.totalorder %s29, 0
      %p177 = por %p175, %p176
      %s178 = ssub.s32 %s23, %s30
      %p179 = scmp.eq.s32.totalorder %s178, 0
      %s181 = sadd.s32 %s180, 1
      %s182 = scalar_select %p179, %s180, %s181
      %p185 = pneg %p179
      %p186 = scmp.eq.s32.totalorder %s23, 8
      %p187 = por %p185, %p186
      %p188 = scmp.ne.s32.totalorder %s180, %s183
      %p189 = scmp.eq.s32.totalorder %s23, 0
      %p190 = por %p188, %p189
      %p191 = scmp.ne.s32.totalorder %s180, %s183
      %p192 = scmp.eq.s32.totalorder %s28, 8
      %p193 = por %p191, %p192
      %p194 = scmp.ne.s32.totalorder %s183, %s184
      %p195 = scmp.eq.s32.totalorder %s28, 0
      %p196 = por %p194, %p195
      %p197 = scmp.ne.s32.totalorder %s183, %s184
      %p198 = scmp.eq.s32.totalorder %s29, 8
      %p199 = por %p197, %p198
      %p201 = scmp.ne.s32.totalorder %s184, %s200
      %p202 = scmp.eq.s32.totalorder %s29, 0
      %p203 = por %p201, %p202
      %s205 = sadd.s32 %s204, 1
      %p208 = scmp.eq.s32.totalorder %s23, 8
      %p209 = scmp.ne.s32.totalorder %s204, %s206
      %p210 = scmp.eq.s32.totalorder %s23, 0
      %p211 = por %p209, %p210
      %p212 = scmp.ne.s32.totalorder %s204, %s206
      %p213 = scmp.eq.s32.totalorder %s28, 8
      %p214 = por %p212, %p213
      %p215 = scmp.ne.s32.totalorder %s206, %s207
      %p216 = scmp.eq.s32.totalorder %s28, 0
      %p217 = por %p215, %p216
      %p218 = scmp.ne.s32.totalorder %s206, %s207
      %p219 = scmp.eq.s32.totalorder %s29, 8
      %p220 = por %p218, %p219
      %p222 = scmp.ne.s32.totalorder %s207, %s221
      %p223 = scmp.eq.s32.totalorder %s29, 0
      %p224 = por %p222, %p223
      %s226 = sadd.s32 %s225, 1
      %p229 = scmp.eq.s32.totalorder %s23, 8
      %p230 = scmp.ne.s32.totalorder %s225, %s227
      %p231 = scmp.eq.s32.totalorder %s23, 0
      %p232 = por %p230, %p231
      %p233 = scmp.ne.s32.totalorder %s225, %s227
      %p234 = scmp.eq.s32.totalorder %s28, 8
      %p235 = por %p233, %p234
      %p236 = scmp.ne.s32.totalorder %s227, %s228
      %p237 = scmp.eq.s32.totalorder %s28, 0
      %p238 = por %p236, %p237
      %p239 = scmp.ne.s32.totalorder %s227, %s228
      %p240 = scmp.eq.s32.totalorder %s29, 8
      %p241 = por %p239, %p240
      %p243 = scmp.ne.s32.totalorder %s228, %s242
      %p244 = scmp.eq.s32.totalorder %s29, 0
      %p245 = por %p243, %p244
      %s247 = sadd.s32 %s246, 1
      %p250 = scmp.eq.s32.totalorder %s23, 8
      %p251 = scmp.ne.s32.totalorder %s246, %s248
      %p252 = scmp.eq.s32.totalorder %s23, 0
      %p253 = por %p251, %p252
      %p254 = scmp.ne.s32.totalorder %s246, %s248
      %p255 = scmp.eq.s32.totalorder %s28, 8
      %p256 = por %p254, %p255
      %p257 = scmp.ne.s32.totalorder %s248, %s249
      %p258 = scmp.eq.s32.totalorder %s28, 0
      %p259 = por %p257, %p258
      %p260 = scmp.ne.s32.totalorder %s248, %s249
      %p261 = scmp.eq.s32.totalorder %s29, 8
      %p262 = por %p260, %p261
      %p264 = scmp.ne.s32.totalorder %s249, %s263
      %p265 = scmp.eq.s32.totalorder %s29, 0
      %p266 = por %p264, %p265
      %s268 = sadd.s32 %s267, 1
      %p271 = scmp.eq.s32.totalorder %s23, 8
      %p272 = scmp.ne.s32.totalorder %s267, %s269
      %p273 = scmp.eq.s32.totalorder %s23, 0
      %p274 = por %p272, %p273
      %p275 = scmp.ne.s32.totalorder %s267, %s269
      %p276 = scmp.eq.s32.totalorder %s28, 8
      %p277 = por %p275, %p276
      %p278 = scmp.ne.s32.totalorder %s269, %s270
      %p279 = scmp.eq.s32.totalorder %s28, 0
      %p280 = por %p278, %p279
      %p281 = scmp.ne.s32.totalorder %s269, %s270
      %p282 = scmp.eq.s32.totalorder %s29, 8
      %p283 = por %p281, %p282
      %p285 = scmp.ne.s32.totalorder %s270, %s284
      %p286 = scmp.eq.s32.totalorder %s29, 0
      %p287 = por %p285, %p286
      %s289 = sadd.s32 %s288, 1
      %p292 = scmp.eq.s32.totalorder %s23, 8
      %p293 = scmp.ne.s32.totalorder %s288, %s290
      %p294 = scmp.eq.s32.totalorder %s23, 0
      %p295 = por %p293, %p294
      %p296 = scmp.ne.s32.totalorder %s288, %s290
      %p297 = scmp.eq.s32.totalorder %s28, 8
      %p298 = por %p296, %p297
      %p299 = scmp.ne.s32.totalorder %s290, %s291
      %p300 = scmp.eq.s32.totalorder %s28, 0
      %p301 = por %p299, %p300
      %p302 = scmp.ne.s32.totalorder %s290, %s291
      %p303 = scmp.eq.s32.totalorder %s29, 8
      %p304 = por %p302, %p303
      %p306 = scmp.ne.s32.totalorder %s291, %s305
      %p307 = scmp.eq.s32.totalorder %s29, 0
      %p308 = por %p306, %p307
      %p309 = scmp.le.s32.totalorder 1, %s23
      %p310 = scmp.lt.s32.totalorder %s23, 10
      %p311 = pnand %p309, %p310
      %p312 = pneg %p311
      // Predicated region
      $region9: #{fwd.1} parent=5 // pred_check
        _
      $region10: #{fwd.1} parent=5 // pred_check_branch
        %314 = sbr.rel (%p311) target = $region12
      $region11: #{fwd.1} parent=5 // pred_region
        %s315 = ssub.s32 %s23, 1
        // Predicated region
        $region13: #{fwd.1} parent=11 // pred_check
          %p316 = pneg %p44
        $region14: #{fwd.1} parent=11 // pred_check_branch
          %318 = sbr.rel (%p316) target = $region16
        $region15: #{fwd.1} parent=11 // pred_region
          _
        $region16: #{fwd.1} parent=11 // pred_fallthru
          _
        // Predicated region
        $region17: #{fwd.1} parent=11 // pred_check
          %p319 = pneg %p65
        $region18: #{fwd.1} parent=11 // pred_check_branch
          %321 = sbr.rel (%p319) target = $region20
        $region19: #{fwd.1} parent=11 // pred_region
          _
        $region20: #{fwd.1} parent=11 // pred_fallthru
          _
        // Predicated region
        $region21: #{fwd.1} parent=11 // pred_check
          %p322 = pneg %p86
        $region22: #{fwd.1} parent=11 // pred_check_branch
          %324 = sbr.rel (%p322) target = $region24
        $region23: #{fwd.1} parent=11 // pred_region
          _
        $region24: #{fwd.1} parent=11 // pred_fallthru
          _
        // Predicated region
        $region25: #{fwd.1} parent=11 // pred_check
          %p325 = pneg %p107
        $region26: #{fwd.1} parent=11 // pred_check_branch
          %327 = sbr.rel (%p325) target = $region28
        $region27: #{fwd.1} parent=11 // pred_region
          _
        $region28: #{fwd.1} parent=11 // pred_fallthru
          _
        // Predicated region
        $region29: #{fwd.1} parent=11 // pred_check
          %p328 = pneg %p128
        $region30: #{fwd.1} parent=11 // pred_check_branch
          %330 = sbr.rel (%p328) target = $region32
        $region31: #{fwd.1} parent=11 // pred_region
          _
        $region32: #{fwd.1} parent=11 // pred_fallthru
          _
        // Predicated region
        $region33: #{fwd.1} parent=11 // pred_check
          %p331 = pneg %p149
        $region34: #{fwd.1} parent=11 // pred_check_branch
          %333 = sbr.rel (%p331) target = $region36
        $region35: #{fwd.1} parent=11 // pred_region
          _
        $region36: #{fwd.1} parent=11 // pred_fallthru
          _
        // Predicated region
        $region37: #{fwd.1} parent=11 // pred_check
          %p334 = pneg %p170
        $region38: #{fwd.1} parent=11 // pred_check_branch
          %336 = sbr.rel (%p334) target = $region40
        $region39: #{fwd.1} parent=11 // pred_region
          _
        $region40: #{fwd.1} parent=11 // pred_fallthru
          _
        // Predicated region
        $region41: #{fwd.1} parent=11 // pred_check
          %p337 = pneg %p217
        $region42: #{fwd.1} parent=11 // pred_check_branch
          %339 = sbr.rel (%p337) target = $region44
        $region43: #{fwd.1} parent=11 // pred_region
          %s341 = ssub.s32 12992, 12992
          %342 = vsyncadd [#allocation8], %s341
          %s343 = sshll.u32 [#allocation7], 4
          %s344 = int_to_ptr.vmem [resolvable:$true] %s343
          %349 = dma.hbm_to_vmem [thread:$0]  %s8, 12992, %s344, [#allocation8], 64, 64, 4
        $region44: #{fwd.1} parent=11 // pred_fallthru
          _
        // Predicated region
        $region45: #{fwd.1} parent=11 // pred_check
          %p350 = pneg %p238
        $region46: #{fwd.1} parent=11 // pred_check_branch
          %352 = sbr.rel (%p350) target = $region48
        $region47: #{fwd.1} parent=11 // pred_region
          %s354 = ssub.s32 2688, 2688
          %355 = vsyncadd [#allocation8], %s354
          %s356 = sshll.u32 [#allocation9], 4
          %s357 = int_to_ptr.vmem [resolvable:$true] %s356
          %362 = dma.hbm_to_vmem [thread:$0]  %s9, 2688, %s357, [#allocation8], 64, 64, 4
        $region48: #{fwd.1} parent=11 // pred_fallthru
          _
        // Predicated region
        $region49: #{fwd.1} parent=11 // pred_check
          %p363 = pneg %p259
        $region50: #{fwd.1} parent=11 // pred_check_branch
          %365 = sbr.rel (%p363) target = $region52
        $region51: #{fwd.1} parent=11 // pred_region
          %s367 = ssub.s32 2304, 2304
          %368 = vsyncadd [#allocation11], %s367
          %s369 = sshll.u32 [#allocation10], 4
          %s370 = int_to_ptr.vmem [resolvable:$true] %s369
          %375 = dma.hbm_to_vmem [thread:$0]  %s10, 2304, %s370, [#allocation11], 128, 128, 8
        $region52: #{fwd.1} parent=11 // pred_fallthru
          _
        // Predicated region
        $region53: #{fwd.1} parent=11 // pred_check
          %p376 = pneg %p280
        $region54: #{fwd.1} parent=11 // pred_check_branch
          %378 = sbr.rel (%p376) target = $region56
        $region55: #{fwd.1} parent=11 // pred_region
          %s380 = ssub.s32 2048, 2048
          %381 = vsyncadd [#allocation11], %s380
          %s382 = sshll.u32 [#allocation12], 4
          %s383 = int_to_ptr.vmem [resolvable:$true] %s382
          %388 = dma.hbm_to_vmem [thread:$0]  %s11, 2048, %s383, [#allocation11], 1024, 1024, 64
        $region56: #{fwd.1} parent=11 // pred_fallthru
          _
      $region12: #{fwd.1} parent=5 // pred_fallthru
        _
      %p389 = scmp.lt.s32.totalorder %s23, 9
      // Predicated region
      $region57: #{fwd.1} parent=5 // pred_check
        %p390 = pneg %p389
      $region58: #{fwd.1} parent=5 // pred_check_branch
        %392 = sbr.rel (%p390) target = $region60
      $region59: #{fwd.1} parent=5 // pred_region
        // Predicated region
        $region61: #{fwd.1} parent=59 // pred_check
          %p393 = pneg %p190
        $region62: #{fwd.1} parent=59 // pred_check_branch
          %395 = sbr.rel (%p393) target = $region64
        $region63: #{fwd.1} parent=59 // pred_region
          %s396 = sand.u32 %s180, 1
          %s397 = scalar_lea.sflag [#allocation6], %s396
          %s398 = sand.u32 %s180, 1
          %s399 = smul.addr %s398, 1024
          %s400 = scalar_lea.vmem [#allocation5], %s399
          %s402 = ssub.s32 16384, 16384
          %403 = vsyncadd %s397, %s402
          %s404 = smul.addr %s23, 256
          %s405 = smul.addr %s404, 64
          %s406 = scalar_lea.hbm %s7, %s405
          %s407 = sshll.u32 %s400, 4
          %s408 = int_to_ptr.vmem [resolvable:$true] %s407
          %413 = dma.hbm_to_vmem [thread:$0]  %s406, 16384, %s408, %s397, 128, 128, 8
        $region64: #{fwd.1} parent=59 // pred_fallthru
          _
      $region60: #{fwd.1} parent=5 // pred_fallthru
        _
      %p414 = scmp.le.s32.totalorder 1, %s23
      %p415 = scmp.lt.s32.totalorder %s23, 10
      %p416 = pnand %p414, %p415
      %p417 = pneg %p416
      // Predicated region
      $region65: #{fwd.1} parent=5 // pred_check
        _
      $region66: #{fwd.1} parent=5 // pred_check_branch
        %419 = sbr.rel (%p416) target = $region68
      $region67: #{fwd.1} parent=5 // pred_region
        %s420 = ssub.s32 %s23, 1
        %s421 = sand.u32 %s183, 1
        %s422 = scalar_lea.sflag [#allocation6], %s421
        %s423 = sand.u32 %s183, 1
        %s424 = smul.addr %s423, 1024
        %s425 = scalar_lea.vmem [#allocation5], %s424
        // Predicated region
        $region69: #{fwd.1} parent=67 // pred_check
          %p426 = pneg %p196
        $region70: #{fwd.1} parent=67 // pred_check_branch
          %428 = sbr.rel (%p426) target = $region72
        $region71: #{fwd.1} parent=67 // pred_region
          %429 = dma.done %s422, 16384
        $region72: #{fwd.1} parent=67 // pred_fallthru
          _
        // Predicated region
        $region73: #{fwd.1} parent=67 // pred_check
          %p430 = pneg %p217
        $region74: #{fwd.1} parent=67 // pred_check_branch
          %432 = sbr.rel (%p430) target = $region76
        $region75: #{fwd.1} parent=67 // pred_region
          %433 = dma.done [#allocation8], 12992
        $region76: #{fwd.1} parent=67 // pred_fallthru
          _
        // Predicated region
        $region77: #{fwd.1} parent=67 // pred_check
          %p434 = pneg %p238
        $region78: #{fwd.1} parent=67 // pred_check_branch
          %436 = sbr.rel (%p434) target = $region80
        $region79: #{fwd.1} parent=67 // pred_region
          %437 = dma.done [#allocation8], 2688
        $region80: #{fwd.1} parent=67 // pred_fallthru
          _
        // Predicated region
        $region81: #{fwd.1} parent=67 // pred_check
          %p438 = pneg %p259
        $region82: #{fwd.1} parent=67 // pred_check_branch
          %440 = sbr.rel (%p438) target = $region84
        $region83: #{fwd.1} parent=67 // pred_region
          %441 = dma.done [#allocation11], 2304
        $region84: #{fwd.1} parent=67 // pred_fallthru
          _
        // Predicated region
        $region85: #{fwd.1} parent=67 // pred_check
          %p442 = pneg %p280
        $region86: #{fwd.1} parent=67 // pred_check_branch
          %444 = sbr.rel (%p442) target = $region88
        $region87: #{fwd.1} parent=67 // pred_region
          %445 = dma.done [#allocation11], 2048
        $region88: #{fwd.1} parent=67 // pred_fallthru
          _
        %p446 = pneg %p44
        %p447 = pneg %p41
        %p448 = pneg %p65
        %p449 = pneg %p62
        %p450 = pneg %p86
        %p451 = pneg %p83
        %p452 = pneg %p107
        %p453 = pneg %p104
        %p454 = pneg %p128
        %p455 = pneg %p125
        %p456 = pneg %p149
        %p457 = pneg %p146
        %p458 = pneg %p170
        %p459 = pneg %p167
        %s460 = sand.u32 %s183, 1
        %s461 = scalar_lea.sflag [#allocation6], %s460
        %s462 = sand.u32 %s183, 1
        %s463 = smul.addr %s462, 1024
        %s464 = scalar_lea.vmem [#allocation5], %s463
        %p465 = pneg %p196
        %p466 = pneg %p193
        %p467 = pneg %p217
        %p468 = pneg %p214
        %p469 = pneg %p238
        %p470 = pneg %p235
        %p471 = pneg %p259
        %p472 = pneg %p256
        %p473 = pneg %p280
        %p474 = pneg %p277
        %p475 = pneg %p301
        %p476 = pneg %p298
        %p478 = scmp.eq.s32.totalorder %s28, 0
        // Predicated region
        $region89: #{fwd.1} parent=67 // pred_check
          %p479 = pneg %p478
        $region90: #{fwd.1} parent=67 // pred_check_branch
          %481 = sbr.rel (%p479) target = $region92
        $region91: #{fwd.1} parent=67 // pred_region
          %v482 = vld [vmem:[%s6] sm:$0xff]
          %v483 = vld [vmem:[%s6 + $0x8] sm:$0xff]
          %v484 = vld [vmem:[%s6 + $0x10] sm:$0xff]
          %v485 = vld [vmem:[%s6 + $0x18] sm:$0xff]
          %v486 = vld [vmem:[%s1] sm:$0xff]
          %v487 = vld [vmem:[%s1 + $0x8] sm:$0xff]
          %v488 = vld [vmem:[%s0] sm:$0xff]
          %v489 = vld [vmem:[%s0 + $0x8] sm:$0xff]
          %v490 = vld [vmem:[%s0 + $0x10] sm:$0xff]
          %v491 = vld [vmem:[%s0 + $0x18] sm:$0xff]
          %v492 = vld [vmem:[%s0 + $0x20] sm:$0xff]
          %v493 = vld [vmem:[%s0 + $0x28] sm:$0xff]
          %v494 = vld [vmem:[%s0 + $0x30] sm:$0xff]
          %v495 = vld [vmem:[%s0 + $0x38] sm:$0xff]
          %v496 = vld [vmem:[%s0 + $0x40] sm:$0xff]
          %v497 = vld [vmem:[%s0 + $0x48] sm:$0xff]
          %v498 = vld [vmem:[%s0 + $0x50] sm:$0xff]
          %v499 = vld [vmem:[%s0 + $0x58] sm:$0xff]
          %v500 = vld [vmem:[%s0 + $0x60] sm:$0xff]
          %v501 = vld [vmem:[%s0 + $0x68] sm:$0xff]
          %v502 = vld [vmem:[%s0 + $0x70] sm:$0xff]
          %v503 = vld [vmem:[%s0 + $0x78] sm:$0xff]
          %v504 = vld [vmem:[%s0 + $0x80] sm:$0xff]
          %v505 = vld [vmem:[%s0 + $0x88] sm:$0xff]
          %v506 = vld [vmem:[%s0 + $0x90] sm:$0xff]
          %v507 = vld [vmem:[%s0 + $0x98] sm:$0xff]
          %v508 = vld [vmem:[%s0 + $0xa0] sm:$0xff]
          %v509 = vld [vmem:[%s0 + $0xa8] sm:$0xff]
          %v510 = vld [vmem:[%s0 + $0xb0] sm:$0xff]
          %v511 = vld [vmem:[%s0 + $0xb8] sm:$0xff]
          %v512 = vld [vmem:[%s0 + $0xc0] sm:$0xff]
          %v513 = vld [vmem:[%s0 + $0xc8] sm:$0xff]
          %v514 = vld [vmem:[%s0 + $0xd0] sm:$0xff]
          %v515 = vld [vmem:[%s0 + $0xd8] sm:$0xff]
          %v516 = vld [vmem:[%s0 + $0xe0] sm:$0xff]
          %v517 = vld [vmem:[%s0 + $0xe8] sm:$0xff]
          %v518 = vld [vmem:[%s0 + $0xf0] sm:$0xff]
          %v519 = vld [vmem:[%s0 + $0xf8] sm:$0xff]
          %521 = vset.pattern.permute.xlu0 0
          %522 = vperm.xlu0 %521, %v482
          %v523 = vpop.permute.xlu0 %522
          %526 = vset.pattern.permute.xlu0 0
          %527 = vperm.xlu0 %526, %v483
          %v528 = vpop.permute.xlu0 %527
          %vm530 = vcmask 261120
          %v532 = vsel %vm530, %v486, 0
          %v535 = vsel %vm530, %v487, 0
          %537 = vmatprep.subr.mxu0 0.0
          %538 = vmatpush1.msra.mxu0 0.0
          %539 = vmatprep.subr.mxu0 0.0
          %540 = vmatpush1.msra.mxu0 0.0
          %541 = vmatprep.subr.mxu0 0.0
          %542 = vmatpush1.msra.mxu0 0.0
          %543 = vmatprep.subr.mxu0 0.0
          %544 = vmatpush1.msra.mxu0 0.0
          %545 = vmatprep.subr.mxu0 0.0
          %546 = vmatpush1.msra.mxu0 0.0
          %547 = vmatprep.subr.mxu0 0.0
          %548 = vmatpush1.msra.mxu0 0.0
          %549 = vmatprep.subr.mxu0 0.0
          %550 = vmatpush1.msra.mxu0 0.0
          %551 = vmatprep.subr.mxu0 0.0
          %552 = vmatpush1.msra.mxu0 0.0
          %553 = vmatprep.subr.mxu0 0.0
          %554 = vmatpush1.msra.mxu0 0.0
          %555 = vmatprep.subr.mxu0 0.0
          %556 = vmatpush1.msra.mxu0 0.0
          %557 = vmatprep.subr.mxu0 0.0
          %558 = vmatpush1.msra.mxu0 0.0
          %559 = vmatprep.subr.mxu0 0.0
          %560 = vmatpush1.msra.mxu0 0.0
          %561 = vmatprep.subr.mxu0 %v513
          %562 = vmatpush1.msra.mxu0 %v512
          %563 = vmatprep.subr.mxu0 %v505
          %564 = vmatpush1.msra.mxu0 %v504
          %565 = vmatprep.subr.mxu0 %v497
          %566 = vmatpush1.msra.mxu0 %v496
          %567 = vmatprep.subr.mxu0 %v489
          %568 = vmatpush1.msra.mxu0 %v488
          %569 = vmatprep.subr.mxu0 0.0
          %570 = vmatpush2.msra.mxu0 0.0
          %571 = vmatprep.subr.mxu0 0.0
          %572 = vmatpush2.msra.mxu0 0.0
          %573 = vmatprep.subr.mxu0 0.0
          %574 = vmatpush2.msra.mxu0 0.0
          %575 = vmatprep.subr.mxu0 0.0
          %576 = vmatpush2.msra.mxu0 0.0
          %577 = vmatprep.subr.mxu0 0.0
          %578 = vmatpush2.msra.mxu0 0.0
          %579 = vmatprep.subr.mxu0 0.0
          %580 = vmatpush2.msra.mxu0 0.0
          %581 = vmatprep.subr.mxu0 0.0
          %582 = vmatpush2.msra.mxu0 0.0
          %583 = vmatprep.subr.mxu0 0.0
          %584 = vmatpush2.msra.mxu0 0.0
          %585 = vmatprep.subr.mxu0 0.0
          %586 = vmatpush2.msra.mxu0 0.0
          %587 = vmatprep.subr.mxu0 0.0
          %588 = vmatpush2.msra.mxu0 0.0
          %589 = vmatprep.subr.mxu0 0.0
          %590 = vmatpush2.msra.mxu0 0.0
          %591 = vmatprep.subr.mxu0 0.0
          %592 = vmatpush2.msra.mxu0 0.0
          %593 = vmatprep.subr.mxu0 0.0
          %594 = vmatpush2.msra.mxu0 0.0
          %595 = vmatprep.subr.mxu0 0.0
          %596 = vmatpush2.msra.mxu0 0.0
          %597 = vmatprep.subr.mxu0 0.0
          %598 = vmatpush2.msra.mxu0 0.0
          %599 = vmatprep.subr.mxu0 0.0
          %600 = vmatpush2.msra.mxu0 0.0
          %601 = vmatprep.mubr.f32.mxu0 0.0
          %602 = vmatmul.mubr.f32.gmra.mxu0 %v532
          %v603 = vpop.f32.mrf.mxu0
          %v604 = vadd.f32 %v523, %v603
          %v605 = vpop.f32.mrf.mxu0
          %v606 = vadd.f32 %v523, %v605
          %607 = vmatprep.mubr.f32.mxu0 0.0
          %608 = vmatmul.mubr.f32.gmra.mxu0 %v535
          %v609 = vpop.f32.mrf.mxu0
          %v610 = vadd.f32 %v528, %v609
          %v611 = vpop.f32.mrf.mxu0
          %v612 = vadd.f32 %v528, %v611
          %613 = vdwg.mxu0
          %614 = vmatprep.subr.mxu0 0.0
          %615 = vmatpush1.msra.mxu0 0.0
          %616 = vmatprep.subr.mxu0 0.0
          %617 = vmatpush1.msra.mxu0 0.0
          %618 = vmatprep.subr.mxu0 0.0
          %619 = vmatpush1.msra.mxu0 0.0
          %620 = vmatprep.subr.mxu0 0.0
          %621 = vmatpush1.msra.mxu0 0.0
          %622 = vmatprep.subr.mxu0 0.0
          %623 = vmatpush1.msra.mxu0 0.0
          %624 = vmatprep.subr.mxu0 0.0
          %625 = vmatpush1.msra.mxu0 0.0
          %626 = vmatprep.subr.mxu0 0.0
          %627 = vmatpush1.msra.mxu0 0.0
          %628 = vmatprep.subr.mxu0 0.0
          %629 = vmatpush1.msra.mxu0 0.0
          %630 = vmatprep.subr.mxu0 0.0
          %631 = vmatpush1.msra.mxu0 0.0
          %632 = vmatprep.subr.mxu0 0.0
          %633 = vmatpush1.msra.mxu0 0.0
          %634 = vmatprep.subr.mxu0 0.0
          %635 = vmatpush1.msra.mxu0 0.0
          %636 = vmatprep.subr.mxu0 0.0
          %637 = vmatpush1.msra.mxu0 0.0
          %638 = vmatprep.subr.mxu0 %v515
          %639 = vmatpush1.msra.mxu0 %v514
          %640 = vmatprep.subr.mxu0 %v507
          %641 = vmatpush1.msra.mxu0 %v506
          %642 = vmatprep.subr.mxu0 %v499
          %643 = vmatpush1.msra.mxu0 %v498
          %644 = vmatprep.subr.mxu0 %v491
          %645 = vmatpush1.msra.mxu0 %v490
          %646 = vmatprep.subr.mxu0 0.0
          %647 = vmatpush2.msra.mxu0 0.0
          %648 = vmatprep.subr.mxu0 0.0
          %649 = vmatpush2.msra.mxu0 0.0
          %650 = vmatprep.subr.mxu0 0.0
          %651 = vmatpush2.msra.mxu0 0.0
          %652 = vmatprep.subr.mxu0 0.0
          %653 = vmatpush2.msra.mxu0 0.0
          %654 = vmatprep.subr.mxu0 0.0
          %655 = vmatpush2.msra.mxu0 0.0
          %656 = vmatprep.subr.mxu0 0.0
          %657 = vmatpush2.msra.mxu0 0.0
          %658 = vmatprep.subr.mxu0 0.0
          %659 = vmatpush2.msra.mxu0 0.0
          %660 = vmatprep.subr.mxu0 0.0
          %661 = vmatpush2.msra.mxu0 0.0
          %662 = vmatprep.subr.mxu0 0.0
          %663 = vmatpush2.msra.mxu0 0.0
          %664 = vmatprep.subr.mxu0 0.0
          %665 = vmatpush2.msra.mxu0 0.0
          %666 = vmatprep.subr.mxu0 0.0
          %667 = vmatpush2.msra.mxu0 0.0
          %668 = vmatprep.subr.mxu0 0.0
          %669 = vmatpush2.msra.mxu0 0.0
          %670 = vmatprep.subr.mxu0 0.0
          %671 = vmatpush2.msra.mxu0 0.0
          %672 = vmatprep.subr.mxu0 0.0
          %673 = vmatpush2.msra.mxu0 0.0
          %674 = vmatprep.subr.mxu0 0.0
          %675 = vmatpush2.msra.mxu0 0.0
          %676 = vmatprep.subr.mxu0 0.0
          %677 = vmatpush2.msra.mxu0 0.0
          %678 = vmatprep.mubr.f32.mxu0 0.0
          %679 = vmatmul.mubr.f32.gmra.mxu0 %v532
          %v680 = vpop.f32.mrf.mxu0
          %v681 = vadd.f32 %v523, %v680
          %v682 = vpop.f32.mrf.mxu0
          %v683 = vadd.f32 %v523, %v682
          %684 = vmatprep.mubr.f32.mxu0 0.0
          %685 = vmatmul.mubr.f32.gmra.mxu0 %v535
          %v686 = vpop.f32.mrf.mxu0
          %v687 = vadd.f32 %v528, %v686
          %v688 = vpop.f32.mrf.mxu0
          %v689 = vadd.f32 %v528, %v688
          %690 = vdwg.mxu0
          %691 = vmatprep.subr.mxu0 0.0
          %692 = vmatpush1.msra.mxu0 0.0
          %693 = vmatprep.subr.mxu0 0.0
          %694 = vmatpush1.msra.mxu0 0.0
          %695 = vmatprep.subr.mxu0 0.0
          %696 = vmatpush1.msra.mxu0 0.0
          %697 = vmatprep.subr.mxu0 0.0
          %698 = vmatpush1.msra.mxu0 0.0
          %699 = vmatprep.subr.mxu0 0.0
          %700 = vmatpush1.msra.mxu0 0.0
          %701 = vmatprep.subr.mxu0 0.0
          %702 = vmatpush1.msra.mxu0 0.0
          %703 = vmatprep.subr.mxu0 0.0
          %704 = vmatpush1.msra.mxu0 0.0
          %705 = vmatprep.subr.mxu0 0.0
          %706 = vmatpush1.msra.mxu0 0.0
          %707 = vmatprep.subr.mxu0 0.0
          %708 = vmatpush1.msra.mxu0 0.0
          %709 = vmatprep.subr.mxu0 0.0
          %710 = vmatpush1.msra.mxu0 0.0
          %711 = vmatprep.subr.mxu0 0.0
          %712 = vmatpush1.msra.mxu0 0.0
          %713 = vmatprep.subr.mxu0 0.0
          %714 = vmatpush1.msra.mxu0 0.0
          %715 = vmatprep.subr.mxu0 %v517
          %716 = vmatpush1.msra.mxu0 %v516
          %717 = vmatprep.subr.mxu0 %v509
          %718 = vmatpush1.msra.mxu0 %v508
          %719 = vmatprep.subr.mxu0 %v501
          %720 = vmatpush1.msra.mxu0 %v500
          %721 = vmatprep.subr.mxu0 %v493
          %722 = vmatpush1.msra.mxu0 %v492
          %723 = vmatprep.subr.mxu0 0.0
          %724 = vmatpush2.msra.mxu0 0.0
          %725 = vmatprep.subr.mxu0 0.0
          %726 = vmatpush2.msra.mxu0 0.0
          %727 = vmatprep.subr.mxu0 0.0
          %728 = vmatpush2.msra.mxu0 0.0
          %729 = vmatprep.subr.mxu0 0.0
          %730 = vmatpush2.msra.mxu0 0.0
          %731 = vmatprep.subr.mxu0 0.0
          %732 = vmatpush2.msra.mxu0 0.0
          %733 = vmatprep.subr.mxu0 0.0
          %734 = vmatpush2.msra.mxu0 0.0
          %735 = vmatprep.subr.mxu0 0.0
          %736 = vmatpush2.msra.mxu0 0.0
          %737 = vmatprep.subr.mxu0 0.0
          %738 = vmatpush2.msra.mxu0 0.0
          %739 = vmatprep.subr.mxu0 0.0
          %740 = vmatpush2.msra.mxu0 0.0
          %741 = vmatprep.subr.mxu0 0.0
          %742 = vmatpush2.msra.mxu0 0.0
          %743 = vmatprep.subr.mxu0 0.0
          %744 = vmatpush2.msra.mxu0 0.0
          %745 = vmatprep.subr.mxu0 0.0
          %746 = vmatpush2.msra.mxu0 0.0
          %747 = vmatprep.subr.mxu0 0.0
          %748 = vmatpush2.msra.mxu0 0.0
          %749 = vmatprep.subr.mxu0 0.0
          %750 = vmatpush2.msra.mxu0 0.0
          %751 = vmatprep.subr.mxu0 0.0
          %752 = vmatpush2.msra.mxu0 0.0
          %753 = vmatprep.subr.mxu0 0.0
          %754 = vmatpush2.msra.mxu0 0.0
          %755 = vmatprep.mubr.f32.mxu0 0.0
          %756 = vmatmul.mubr.f32.gmra.mxu0 %v532
          %v757 = vpop.f32.mrf.mxu0
          %v758 = vadd.f32 %v523, %v757
          %v759 = vpop.f32.mrf.mxu0
          %v760 = vadd.f32 %v523, %v759
          %761 = vmatprep.mubr.f32.mxu0 0.0
          %762 = vmatmul.mubr.f32.gmra.mxu0 %v535
          %v763 = vpop.f32.mrf.mxu0
          %v764 = vadd.f32 %v528, %v763
          %v765 = vpop.f32.mrf.mxu0
          %v766 = vadd.f32 %v528, %v765
          %767 = vdwg.mxu0
          %768 = vmatprep.subr.mxu0 0.0
          %769 = vmatpush1.msra.mxu0 0.0
          %770 = vmatprep.subr.mxu0 0.0
          %771 = vmatpush1.msra.mxu0 0.0
          %772 = vmatprep.subr.mxu0 0.0
          %773 = vmatpush1.msra.mxu0 0.0
          %774 = vmatprep.subr.mxu0 0.0
          %775 = vmatpush1.msra.mxu0 0.0
          %776 = vmatprep.subr.mxu0 0.0
          %777 = vmatpush1.msra.mxu0 0.0
          %778 = vmatprep.subr.mxu0 0.0
          %779 = vmatpush1.msra.mxu0 0.0
          %780 = vmatprep.subr.mxu0 0.0
          %781 = vmatpush1.msra.mxu0 0.0
          %782 = vmatprep.subr.mxu0 0.0
          %783 = vmatpush1.msra.mxu0 0.0
          %784 = vmatprep.subr.mxu0 0.0
          %785 = vmatpush1.msra.mxu0 0.0
          %786 = vmatprep.subr.mxu0 0.0
          %787 = vmatpush1.msra.mxu0 0.0
          %788 = vmatprep.subr.mxu0 0.0
          %789 = vmatpush1.msra.mxu0 0.0
          %790 = vmatprep.subr.mxu0 0.0
          %791 = vmatpush1.msra.mxu0 0.0
          %792 = vmatprep.subr.mxu0 %v519
          %793 = vmatpush1.msra.mxu0 %v518
          %794 = vmatprep.subr.mxu0 %v511
          %795 = vmatpush1.msra.mxu0 %v510
          %796 = vmatprep.subr.mxu0 %v503
          %797 = vmatpush1.msra.mxu0 %v502
          %798 = vmatprep.subr.mxu0 %v495
          %799 = vmatpush1.msra.mxu0 %v494
          %800 = vmatprep.subr.mxu0 0.0
          %801 = vmatpush2.msra.mxu0 0.0
          %802 = vmatprep.subr.mxu0 0.0
          %803 = vmatpush2.msra.mxu0 0.0
          %804 = vmatprep.subr.mxu0 0.0
          %805 = vmatpush2.msra.mxu0 0.0
          %806 = vmatprep.subr.mxu0 0.0
          %807 = vmatpush2.msra.mxu0 0.0
          %808 = vmatprep.subr.mxu0 0.0
          %809 = vmatpush2.msra.mxu0 0.0
          %810 = vmatprep.subr.mxu0 0.0
          %811 = vmatpush2.msra.mxu0 0.0
          %812 = vmatprep.subr.mxu0 0.0
          %813 = vmatpush2.msra.mxu0 0.0
          %814 = vmatprep.subr.mxu0 0.0
          %815 = vmatpush2.msra.mxu0 0.0
          %816 = vmatprep.subr.mxu0 0.0
          %817 = vmatpush2.msra.mxu0 0.0
          %818 = vmatprep.subr.mxu0 0.0
          %819 = vmatpush2.msra.mxu0 0.0
          %820 = vmatprep.subr.mxu0 0.0
          %821 = vmatpush2.msra.mxu0 0.0
          %822 = vmatprep.subr.mxu0 0.0
          %823 = vmatpush2.msra.mxu0 0.0
          %824 = vmatprep.subr.mxu0 0.0
          %825 = vmatpush2.msra.mxu0 0.0
          %826 = vmatprep.subr.mxu0 0.0
          %827 = vmatpush2.msra.mxu0 0.0
          %828 = vmatprep.subr.mxu0 0.0
          %829 = vmatpush2.msra.mxu0 0.0
          %830 = vmatprep.subr.mxu0 0.0
          %831 = vmatpush2.msra.mxu0 0.0
          %832 = vmatprep.mubr.f32.mxu0 0.0
          %833 = vmatmul.mubr.f32.gmra.mxu0 %v532
          %v834 = vpop.f32.mrf.mxu0
          %v835 = vadd.f32 %v523, %v834
          %v836 = vpop.f32.mrf.mxu0
          %v837 = vadd.f32 %v523, %v836
          %838 = vmatprep.mubr.f32.mxu0 0.0
          %839 = vmatmul.mubr.f32.gmra.mxu0 %v535
          %v840 = vpop.f32.mrf.mxu0
          %v841 = vadd.f32 %v528, %v840
          %v842 = vpop.f32.mrf.mxu0
          %v843 = vadd.f32 %v528, %v842
          %844 = vdwg.mxu0
          %v845 = vld [vmem:[%s2] sm:$0xff]
          %v846 = vld [vmem:[%s2 + $0x8] sm:$0xff]
          %848 = vset.pattern.permute.xlu0 0
          %849 = vperm.xlu0 %848, %v484
          %v850 = vpop.permute.xlu0 %849
          %853 = vset.pattern.permute.xlu0 0
          %854 = vperm.xlu0 %853, %v485
          %v855 = vpop.permute.xlu0 %854
          %vm857 = vcmask 130048
          %v859 = vsel %vm857, %v845, 0
          %v862 = vsel %vm857, %v846, 0
          %864 = vmatprep.subr.mxu0 0.0
          %865 = vmatpush1.msra.mxu0 0.0
          %866 = vmatprep.subr.mxu0 0.0
          %867 = vmatpush1.msra.mxu0 0.0
          %868 = vmatprep.subr.mxu0 0.0
          %869 = vmatpush1.msra.mxu0 0.0
          %870 = vmatprep.subr.mxu0 0.0
          %871 = vmatpush1.msra.mxu0 0.0
          %872 = vmatprep.subr.mxu0 0.0
          %873 = vmatpush1.msra.mxu0 0.0
          %874 = vmatprep.subr.mxu0 0.0
          %875 = vmatpush1.msra.mxu0 0.0
          %876 = vmatprep.subr.mxu0 0.0
          %877 = vmatpush1.msra.mxu0 0.0
          %878 = vmatprep.subr.mxu0 0.0
          %879 = vmatpush1.msra.mxu0 0.0
          %880 = vmatprep.subr.mxu0 0.0
          %881 = vmatpush1.msra.mxu0 0.0
          %882 = vmatprep.subr.mxu0 0.0
          %883 = vmatpush1.msra.mxu0 0.0
          %884 = vmatprep.subr.mxu0 0.0
          %885 = vmatpush1.msra.mxu0 0.0
          %886 = vmatprep.subr.mxu0 0.0
          %887 = vmatpush1.msra.mxu0 0.0
          %888 = vmatprep.subr.mxu0 0.0
          %889 = vmatpush1.msra.mxu0 0.0
          %890 = vmatprep.subr.mxu0 0.0
          %891 = vmatpush1.msra.mxu0 0.0
          %892 = vmatprep.subr.mxu0 %v612
          %893 = vmatpush1.msra.mxu0 %v610
          %894 = vmatprep.subr.mxu0 %v606
          %895 = vmatpush1.msra.mxu0 %v604
          %896 = vmatprep.subr.mxu0 0.0
          %897 = vmatpush2.msra.mxu0 0.0
          %898 = vmatprep.subr.mxu0 0.0
          %899 = vmatpush2.msra.mxu0 0.0
          %900 = vmatprep.subr.mxu0 0.0
          %901 = vmatpush2.msra.mxu0 0.0
          %902 = vmatprep.subr.mxu0 0.0
          %903 = vmatpush2.msra.mxu0 0.0
          %904 = vmatprep.subr.mxu0 0.0
          %905 = vmatpush2.msra.mxu0 0.0
          %906 = vmatprep.subr.mxu0 0.0
          %907 = vmatpush2.msra.mxu0 0.0
          %908 = vmatprep.subr.mxu0 0.0
          %909 = vmatpush2.msra.mxu0 0.0
          %910 = vmatprep.subr.mxu0 0.0
          %911 = vmatpush2.msra.mxu0 0.0
          %912 = vmatprep.subr.mxu0 0.0
          %913 = vmatpush2.msra.mxu0 0.0
          %914 = vmatprep.subr.mxu0 0.0
          %915 = vmatpush2.msra.mxu0 0.0
          %916 = vmatprep.subr.mxu0 0.0
          %917 = vmatpush2.msra.mxu0 0.0
          %918 = vmatprep.subr.mxu0 0.0
          %919 = vmatpush2.msra.mxu0 0.0
          %920 = vmatprep.subr.mxu0 0.0
          %921 = vmatpush2.msra.mxu0 0.0
          %922 = vmatprep.subr.mxu0 0.0
          %923 = vmatpush2.msra.mxu0 0.0
          %924 = vmatprep.subr.mxu0 0.0
          %925 = vmatpush2.msra.mxu0 0.0
          %926 = vmatprep.subr.mxu0 0.0
          %927 = vmatpush2.msra.mxu0 0.0
          %928 = vmatprep.mubr.f32.mxu0 0.0
          %929 = vmatmul.mubr.f32.gmra.mxu0 %v859
          %v930 = vpop.f32.mrf.mxu0
          %v931 = vadd.f32 %v850, %v930
          %v932 = vpop.f32.mrf.mxu0
          %v933 = vadd.f32 %v850, %v932
          %934 = vmatprep.mubr.f32.mxu0 0.0
          %935 = vmatmul.mubr.f32.gmra.mxu0 %v862
          %v936 = vpop.f32.mrf.mxu0
          %v937 = vadd.f32 %v855, %v936
          %v938 = vpop.f32.mrf.mxu0
          %v939 = vadd.f32 %v855, %v938
          %940 = vdwg.mxu0
          %941 = vmatprep.subr.mxu0 0.0
          %942 = vmatpush1.msra.mxu0 0.0
          %943 = vmatprep.subr.mxu0 0.0
          %944 = vmatpush1.msra.mxu0 0.0
          %945 = vmatprep.subr.mxu0 0.0
          %946 = vmatpush1.msra.mxu0 0.0
          %947 = vmatprep.subr.mxu0 0.0
          %948 = vmatpush1.msra.mxu0 0.0
          %949 = vmatprep.subr.mxu0 0.0
          %950 = vmatpush1.msra.mxu0 0.0
          %951 = vmatprep.subr.mxu0 0.0
          %952 = vmatpush1.msra.mxu0 0.0
          %953 = vmatprep.subr.mxu0 0.0
          %954 = vmatpush1.msra.mxu0 0.0
          %955 = vmatprep.subr.mxu0 0.0
          %956 = vmatpush1.msra.mxu0 0.0
          %957 = vmatprep.subr.mxu0 0.0
          %958 = vmatpush1.msra.mxu0 0.0
          %959 = vmatprep.subr.mxu0 0.0
          %960 = vmatpush1.msra.mxu0 0.0
          %961 = vmatprep.subr.mxu0 0.0
          %962 = vmatpush1.msra.mxu0 0.0
          %963 = vmatprep.subr.mxu0 0.0
          %964 = vmatpush1.msra.mxu0 0.0
          %965 = vmatprep.subr.mxu0 0.0
          %966 = vmatpush1.msra.mxu0 0.0
          %967 = vmatprep.subr.mxu0 0.0
          %968 = vmatpush1.msra.mxu0 0.0
          %969 = vmatprep.subr.mxu0 %v689
          %970 = vmatpush1.msra.mxu0 %v687
          %971 = vmatprep.subr.mxu0 %v683
          %972 = vmatpush1.msra.mxu0 %v681
          %973 = vmatprep.subr.mxu0 0.0
          %974 = vmatpush2.msra.mxu0 0.0
          %975 = vmatprep.subr.mxu0 0.0
          %976 = vmatpush2.msra.mxu0 0.0
          %977 = vmatprep.subr.mxu0 0.0
          %978 = vmatpush2.msra.mxu0 0.0
          %979 = vmatprep.subr.mxu0 0.0
          %980 = vmatpush2.msra.mxu0 0.0
          %981 = vmatprep.subr.mxu0 0.0
          %982 = vmatpush2.msra.mxu0 0.0
          %983 = vmatprep.subr.mxu0 0.0
          %984 = vmatpush2.msra.mxu0 0.0
          %985 = vmatprep.subr.mxu0 0.0
          %986 = vmatpush2.msra.mxu0 0.0
          %987 = vmatprep.subr.mxu0 0.0
          %988 = vmatpush2.msra.mxu0 0.0
          %989 = vmatprep.subr.mxu0 0.0
          %990 = vmatpush2.msra.mxu0 0.0
          %991 = vmatprep.subr.mxu0 0.0
          %992 = vmatpush2.msra.mxu0 0.0
          %993 = vmatprep.subr.mxu0 0.0
          %994 = vmatpush2.msra.mxu0 0.0
          %995 = vmatprep.subr.mxu0 0.0
          %996 = vmatpush2.msra.mxu0 0.0
          %997 = vmatprep.subr.mxu0 0.0
          %998 = vmatpush2.msra.mxu0 0.0
          %999 = vmatprep.subr.mxu0 0.0
          %1000 = vmatpush2.msra.mxu0 0.0
          %1001 = vmatprep.subr.mxu0 0.0
          %1002 = vmatpush2.msra.mxu0 0.0
          %1003 = vmatprep.subr.mxu0 0.0
          %1004 = vmatpush2.msra.mxu0 0.0
          %1005 = vmatprep.mubr.f32.mxu0 0.0
          %1006 = vmatmul.mubr.f32.gmra.mxu0 %v859
          %v1007 = vpop.f32.mrf.mxu0
          %v1008 = vadd.f32 %v850, %v1007
          %v1009 = vpop.f32.mrf.mxu0
          %v1010 = vadd.f32 %v850, %v1009
          %1011 = vmatprep.mubr.f32.mxu0 0.0
          %1012 = vmatmul.mubr.f32.gmra.mxu0 %v862
          %v1013 = vpop.f32.mrf.mxu0
          %v1014 = vadd.f32 %v855, %v1013
          %v1015 = vpop.f32.mrf.mxu0
          %v1016 = vadd.f32 %v855, %v1015
          %1017 = vdwg.mxu0
          %1018 = vmatprep.subr.mxu0 0.0
          %1019 = vmatpush1.msra.mxu0 0.0
          %1020 = vmatprep.subr.mxu0 0.0
          %1021 = vmatpush1.msra.mxu0 0.0
          %1022 = vmatprep.subr.mxu0 0.0
          %1023 = vmatpush1.msra.mxu0 0.0
          %1024 = vmatprep.subr.mxu0 0.0
          %1025 = vmatpush1.msra.mxu0 0.0
          %1026 = vmatprep.subr.mxu0 0.0
          %1027 = vmatpush1.msra.mxu0 0.0
          %1028 = vmatprep.subr.mxu0 0.0
          %1029 = vmatpush1.msra.mxu0 0.0
          %1030 = vmatprep.subr.mxu0 0.0
          %1031 = vmatpush1.msra.mxu0 0.0
          %1032 = vmatprep.subr.mxu0 0.0
          %1033 = vmatpush1.msra.mxu0 0.0
          %1034 = vmatprep.subr.mxu0 0.0
          %1035 = vmatpush1.msra.mxu0 0.0
          %1036 = vmatprep.subr.mxu0 0.0
          %1037 = vmatpush1.msra.mxu0 0.0
          %1038 = vmatprep.subr.mxu0 0.0
          %1039 = vmatpush1.msra.mxu0 0.0
          %1040 = vmatprep.subr.mxu0 0.0
          %1041 = vmatpush1.msra.mxu0 0.0
          %1042 = vmatprep.subr.mxu0 0.0
          %1043 = vmatpush1.msra.mxu0 0.0
          %1044 = vmatprep.subr.mxu0 0.0
          %1045 = vmatpush1.msra.mxu0 0.0
          %1046 = vmatprep.subr.mxu0 %v766
          %1047 = vmatpush1.msra.mxu0 %v764
          %1048 = vmatprep.subr.mxu0 %v760
          %1049 = vmatpush1.msra.mxu0 %v758
          %1050 = vmatprep.subr.mxu0 0.0
          %1051 = vmatpush2.msra.mxu0 0.0
          %1052 = vmatprep.subr.mxu0 0.0
          %1053 = vmatpush2.msra.mxu0 0.0
          %1054 = vmatprep.subr.mxu0 0.0
          %1055 = vmatpush2.msra.mxu0 0.0
          %1056 = vmatprep.subr.mxu0 0.0
          %1057 = vmatpush2.msra.mxu0 0.0
          %1058 = vmatprep.subr.mxu0 0.0
          %1059 = vmatpush2.msra.mxu0 0.0
          %1060 = vmatprep.subr.mxu0 0.0
          %1061 = vmatpush2.msra.mxu0 0.0
          %1062 = vmatprep.subr.mxu0 0.0
          %1063 = vmatpush2.msra.mxu0 0.0
          %1064 = vmatprep.subr.mxu0 0.0
          %1065 = vmatpush2.msra.mxu0 0.0
          %1066 = vmatprep.subr.mxu0 0.0
          %1067 = vmatpush2.msra.mxu0 0.0
          %1068 = vmatprep.subr.mxu0 0.0
          %1069 = vmatpush2.msra.mxu0 0.0
          %1070 = vmatprep.subr.mxu0 0.0
          %1071 = vmatpush2.msra.mxu0 0.0
          %1072 = vmatprep.subr.mxu0 0.0
          %1073 = vmatpush2.msra.mxu0 0.0
          %1074 = vmatprep.subr.mxu0 0.0
          %1075 = vmatpush2.msra.mxu0 0.0
          %1076 = vmatprep.subr.mxu0 0.0
          %1077 = vmatpush2.msra.mxu0 0.0
          %1078 = vmatprep.subr.mxu0 0.0
          %1079 = vmatpush2.msra.mxu0 0.0
          %1080 = vmatprep.subr.mxu0 0.0
          %1081 = vmatpush2.msra.mxu0 0.0
          %1082 = vmatprep.mubr.f32.mxu0 0.0
          %1083 = vmatmul.mubr.f32.gmra.mxu0 %v859
          %v1084 = vpop.f32.mrf.mxu0
          %v1085 = vadd.f32 %v850, %v1084
          %v1086 = vpop.f32.mrf.mxu0
          %v1087 = vadd.f32 %v850, %v1086
          %1088 = vmatprep.mubr.f32.mxu0 0.0
          %1089 = vmatmul.mubr.f32.gmra.mxu0 %v862
          %v1090 = vpop.f32.mrf.mxu0
          %v1091 = vadd.f32 %v855, %v1090
          %v1092 = vpop.f32.mrf.mxu0
          %v1093 = vadd.f32 %v855, %v1092
          %1094 = vdwg.mxu0
          %1095 = vmatprep.subr.mxu0 0.0
          %1096 = vmatpush1.msra.mxu0 0.0
          %1097 = vmatprep.subr.mxu0 0.0
          %1098 = vmatpush1.msra.mxu0 0.0
          %1099 = vmatprep.subr.mxu0 0.0
          %1100 = vmatpush1.msra.mxu0 0.0
          %1101 = vmatprep.subr.mxu0 0.0
          %1102 = vmatpush1.msra.mxu0 0.0
          %1103 = vmatprep.subr.mxu0 0.0
          %1104 = vmatpush1.msra.mxu0 0.0
          %1105 = vmatprep.subr.mxu0 0.0
          %1106 = vmatpush1.msra.mxu0 0.0
          %1107 = vmatprep.subr.mxu0 0.0
          %1108 = vmatpush1.msra.mxu0 0.0
          %1109 = vmatprep.subr.mxu0 0.0
          %1110 = vmatpush1.msra.mxu0 0.0
          %1111 = vmatprep.subr.mxu0 0.0
          %1112 = vmatpush1.msra.mxu0 0.0
          %1113 = vmatprep.subr.mxu0 0.0
          %1114 = vmatpush1.msra.mxu0 0.0
          %1115 = vmatprep.subr.mxu0 0.0
          %1116 = vmatpush1.msra.mxu0 0.0
          %1117 = vmatprep.subr.mxu0 0.0
          %1118 = vmatpush1.msra.mxu0 0.0
          %1119 = vmatprep.subr.mxu0 0.0
          %1120 = vmatpush1.msra.mxu0 0.0
          %1121 = vmatprep.subr.mxu0 0.0
          %1122 = vmatpush1.msra.mxu0 0.0
          %1123 = vmatprep.subr.mxu0 %v843
          %1124 = vmatpush1.msra.mxu0 %v841
          %1125 = vmatprep.subr.mxu0 %v837
          %1126 = vmatpush1.msra.mxu0 %v835
          %1127 = vmatprep.subr.mxu0 0.0
          %1128 = vmatpush2.msra.mxu0 0.0
          %1129 = vmatprep.subr.mxu0 0.0
          %1130 = vmatpush2.msra.mxu0 0.0
          %1131 = vmatprep.subr.mxu0 0.0
          %1132 = vmatpush2.msra.mxu0 0.0
          %1133 = vmatprep.subr.mxu0 0.0
          %1134 = vmatpush2.msra.mxu0 0.0
          %1135 = vmatprep.subr.mxu0 0.0
          %1136 = vmatpush2.msra.mxu0 0.0
          %1137 = vmatprep.subr.mxu0 0.0
          %1138 = vmatpush2.msra.mxu0 0.0
          %1139 = vmatprep.subr.mxu0 0.0
          %1140 = vmatpush2.msra.mxu0 0.0
          %1141 = vmatprep.subr.mxu0 0.0
          %1142 = vmatpush2.msra.mxu0 0.0
          %1143 = vmatprep.subr.mxu0 0.0
          %1144 = vmatpush2.msra.mxu0 0.0
          %1145 = vmatprep.subr.mxu0 0.0
          %1146 = vmatpush2.msra.mxu0 0.0
          %1147 = vmatprep.subr.mxu0 0.0
          %1148 = vmatpush2.msra.mxu0 0.0
          %1149 = vmatprep.subr.mxu0 0.0
          %1150 = vmatpush2.msra.mxu0 0.0
          %1151 = vmatprep.subr.mxu0 0.0
          %1152 = vmatpush2.msra.mxu0 0.0
          %1153 = vmatprep.subr.mxu0 0.0
          %1154 = vmatpush2.msra.mxu0 0.0
          %1155 = vmatprep.subr.mxu0 0.0
          %1156 = vmatpush2.msra.mxu0 0.0
          %1157 = vmatprep.subr.mxu0 0.0
          %1158 = vmatpush2.msra.mxu0 0.0
          %1159 = vmatprep.mubr.f32.mxu0 0.0
          %1160 = vmatmul.mubr.f32.gmra.mxu0 %v859
          %v1161 = vpop.f32.mrf.mxu0
          %v1162 = vadd.f32 %v850, %v1161
          %v1163 = vpop.f32.mrf.mxu0
          %v1164 = vadd.f32 %v850, %v1163
          %1165 = vmatprep.mubr.f32.mxu0 0.0
          %1166 = vmatmul.mubr.f32.gmra.mxu0 %v862
          %v1167 = vpop.f32.mrf.mxu0
          %v1168 = vadd.f32 %v855, %v1167
          %v1169 = vpop.f32.mrf.mxu0
          %v1170 = vadd.f32 %v855, %v1169
          %1171 = vdwg.mxu0
          %1172 = vst [vmem:[#allocation2] sm:$0xff] %v931
          %1173 = vst [vmem:[#allocation2 + $0x8] sm:$0xff] %v933
          %1174 = vst [vmem:[#allocation2 + $0x10] sm:$0xff] %v1008
          %1175 = vst [vmem:[#allocation2 + $0x18] sm:$0xff] %v1010
          %1176 = vst [vmem:[#allocation2 + $0x20] sm:$0xff] %v1085
          %1177 = vst [vmem:[#allocation2 + $0x28] sm:$0xff] %v1087
          %1178 = vst [vmem:[#allocation2 + $0x30] sm:$0xff] %v1162
          %1179 = vst [vmem:[#allocation2 + $0x38] sm:$0xff] %v1164
          %1180 = vst [vmem:[#allocation2 + $0x40] sm:$0xff] %v937
          %1181 = vst [vmem:[#allocation2 + $0x48] sm:$0xff] %v939
          %1182 = vst [vmem:[#allocation2 + $0x50] sm:$0xff] %v1014
          %1183 = vst [vmem:[#allocation2 + $0x58] sm:$0xff] %v1016
          %1184 = vst [vmem:[#allocation2 + $0x60] sm:$0xff] %v1091
          %1185 = vst [vmem:[#allocation2 + $0x68] sm:$0xff] %v1093
          %1186 = vst [vmem:[#allocation2 + $0x70] sm:$0xff] %v1168
          %1187 = vst [vmem:[#allocation2 + $0x78] sm:$0xff] %v1170
          %v1188 = vld [vmem:[%s3] sm:$0xff]
          %v1189 = vld [vmem:[%s3 + $0x8] sm:$0xff]
          %v1190 = vld [vmem:[%s3 + $0x10] sm:$0xff]
          %v1191 = vld [vmem:[%s3 + $0x18] sm:$0xff]
          %v1192 = vld [vmem:[%s3 + $0x20] sm:$0xff]
          %v1193 = vld [vmem:[%s3 + $0x28] sm:$0xff]
          %v1194 = vld [vmem:[%s3 + $0x30] sm:$0xff]
          %v1195 = vld [vmem:[%s3 + $0x38] sm:$0xff]
          %v1196 = vld [vmem:[%s3 + $0x40] sm:$0xff]
          %v1197 = vld [vmem:[%s3 + $0x48] sm:$0xff]
          %v1198 = vld [vmem:[%s3 + $0x50] sm:$0xff]
          %v1199 = vld [vmem:[%s3 + $0x58] sm:$0xff]
          %v1200 = vld [vmem:[%s3 + $0x60] sm:$0xff]
          %v1201 = vld [vmem:[%s3 + $0x68] sm:$0xff]
          %v1202 = vld [vmem:[%s3 + $0x70] sm:$0xff]
          %v1203 = vld [vmem:[%s3 + $0x78] sm:$0xff]
          %v1204 = vld [vmem:[%s3 + $0x80] sm:$0xff]
          %v1205 = vld [vmem:[%s3 + $0x88] sm:$0xff]
          %v1207 = vsel %vm857, %v1188, 0
          %v1210 = vsel %vm857, %v1189, 0
          %v1213 = vsel %vm857, %v1190, 0
          %v1216 = vsel %vm857, %v1191, 0
          %v1219 = vsel %vm857, %v1192, 0
          %v1222 = vsel %vm857, %v1193, 0
          %v1225 = vsel %vm857, %v1194, 0
          %v1228 = vsel %vm857, %v1195, 0
          %v1231 = vsel %vm857, %v1196, 0
          %v1234 = vsel %vm857, %v1197, 0
          %v1237 = vsel %vm857, %v1198, 0
          %v1240 = vsel %vm857, %v1199, 0
          %v1243 = vsel %vm857, %v1200, 0
          %v1246 = vsel %vm857, %v1201, 0
          %v1249 = vsel %vm857, %v1202, 0
          %v1252 = vsel %vm857, %v1203, 0
          %v1255 = vsel %vm857, %v1204, 0
          %v1258 = vsel %vm857, %v1205, 0
          %1260 = vmatprep.subr.mxu0 0.0
          %1261 = vmatpush1.msra.mxu0 0.0
          %1262 = vmatprep.subr.mxu0 0.0
          %1263 = vmatpush1.msra.mxu0 0.0
          %1264 = vmatprep.subr.mxu0 0.0
          %1265 = vmatpush1.msra.mxu0 0.0
          %1266 = vmatprep.subr.mxu0 0.0
          %1267 = vmatpush1.msra.mxu0 0.0
          %1268 = vmatprep.subr.mxu0 0.0
          %1269 = vmatpush1.msra.mxu0 0.0
          %1270 = vmatprep.subr.mxu0 0.0
          %1271 = vmatpush1.msra.mxu0 0.0
          %1272 = vmatprep.subr.mxu0 0.0
          %1273 = vmatpush1.msra.mxu0 0.0
          %1274 = vmatprep.subr.mxu0 0.0
          %1275 = vmatpush1.msra.mxu0 0.0
          %1276 = vmatprep.subr.mxu0 0.0
          %1277 = vmatpush1.msra.mxu0 0.0
          %1278 = vmatprep.subr.mxu0 0.0
          %1279 = vmatpush1.msra.mxu0 0.0
          %1280 = vmatprep.subr.mxu0 0.0
          %1281 = vmatpush1.msra.mxu0 0.0
          %1282 = vmatprep.subr.mxu0 0.0
          %1283 = vmatpush1.msra.mxu0 0.0
          %1284 = vmatprep.subr.mxu0 0.0
          %1285 = vmatpush1.msra.mxu0 0.0
          %1286 = vmatprep.subr.mxu0 0.0
          %1287 = vmatpush1.msra.mxu0 0.0
          %1288 = vmatprep.subr.mxu0 %v612
          %1289 = vmatpush1.msra.mxu0 %v610
          %1290 = vmatprep.subr.mxu0 %v606
          %1291 = vmatpush1.msra.mxu0 %v604
          %1292 = vmatprep.subr.mxu0 0.0
          %1293 = vmatpush2.msra.mxu0 0.0
          %1294 = vmatprep.subr.mxu0 0.0
          %1295 = vmatpush2.msra.mxu0 0.0
          %1296 = vmatprep.subr.mxu0 0.0
          %1297 = vmatpush2.msra.mxu0 0.0
          %1298 = vmatprep.subr.mxu0 0.0
          %1299 = vmatpush2.msra.mxu0 0.0
          %1300 = vmatprep.subr.mxu0 0.0
          %1301 = vmatpush2.msra.mxu0 0.0
          %1302 = vmatprep.subr.mxu0 0.0
          %1303 = vmatpush2.msra.mxu0 0.0
          %1304 = vmatprep.subr.mxu0 0.0
          %1305 = vmatpush2.msra.mxu0 0.0
          %1306 = vmatprep.subr.mxu0 0.0
          %1307 = vmatpush2.msra.mxu0 0.0
          %1308 = vmatprep.subr.mxu0 0.0
          %1309 = vmatpush2.msra.mxu0 0.0
          %1310 = vmatprep.subr.mxu0 0.0
          %1311 = vmatpush2.msra.mxu0 0.0
          %1312 = vmatprep.subr.mxu0 0.0
          %1313 = vmatpush2.msra.mxu0 0.0
          %1314 = vmatprep.subr.mxu0 0.0
          %1315 = vmatpush2.msra.mxu0 0.0
          %1316 = vmatprep.subr.mxu0 0.0
          %1317 = vmatpush2.msra.mxu0 0.0
          %1318 = vmatprep.subr.mxu0 0.0
          %1319 = vmatpush2.msra.mxu0 0.0
          %1320 = vmatprep.subr.mxu0 0.0
          %1321 = vmatpush2.msra.mxu0 0.0
          %1322 = vmatprep.subr.mxu0 0.0
          %1323 = vmatpush2.msra.mxu0 0.0
          %1324 = vmatprep.mubr.f32.mxu0 0.0
          %1325 = vmatmul.mubr.f32.gmra.mxu0 %v1207
          %v1326 = vpop.f32.mrf.mxu0
          %v1327 = vadd.f32 0.0, %v1326
          %v1328 = vpop.f32.mrf.mxu0
          %v1329 = vadd.f32 0.0, %v1328
          %1330 = vmatprep.mubr.f32.mxu0 0.0
          %1331 = vmatmul.mubr.f32.gmra.mxu0 %v1210
          %v1332 = vpop.f32.mrf.mxu0
          %v1333 = vadd.f32 0.0, %v1332
          %v1334 = vpop.f32.mrf.mxu0
          %v1335 = vadd.f32 0.0, %v1334
          %1336 = vmatprep.mubr.f32.mxu0 0.0
          %1337 = vmatmul.mubr.f32.gmra.mxu0 %v1213
          %v1338 = vpop.f32.mrf.mxu0
          %v1339 = vadd.f32 0.0, %v1338
          %v1340 = vpop.f32.mrf.mxu0
          %v1341 = vadd.f32 0.0, %v1340
          %1342 = vmatprep.mubr.f32.mxu0 0.0
          %1343 = vmatmul.mubr.f32.gmra.mxu0 %v1216
          %v1344 = vpop.f32.mrf.mxu0
          %v1345 = vadd.f32 0.0, %v1344
          %v1346 = vpop.f32.mrf.mxu0
          %v1347 = vadd.f32 0.0, %v1346
          %1348 = vmatprep.mubr.f32.mxu0 0.0
          %1349 = vmatmul.mubr.f32.gmra.mxu0 %v1219
          %v1350 = vpop.f32.mrf.mxu0
          %v1351 = vadd.f32 0.0, %v1350
          %v1352 = vpop.f32.mrf.mxu0
          %v1353 = vadd.f32 0.0, %v1352
          %1354 = vmatprep.mubr.f32.mxu0 0.0
          %1355 = vmatmul.mubr.f32.gmra.mxu0 %v1222
          %v1356 = vpop.f32.mrf.mxu0
          %v1357 = vadd.f32 0.0, %v1356
          %v1358 = vpop.f32.mrf.mxu0
          %v1359 = vadd.f32 0.0, %v1358
          %1360 = vmatprep.mubr.f32.mxu0 0.0
          %1361 = vmatmul.mubr.f32.gmra.mxu0 %v1225
          %v1362 = vpop.f32.mrf.mxu0
          %v1363 = vadd.f32 0.0, %v1362
          %v1364 = vpop.f32.mrf.mxu0
          %v1365 = vadd.f32 0.0, %v1364
          %1366 = vmatprep.mubr.f32.mxu0 0.0
          %1367 = vmatmul.mubr.f32.gmra.mxu0 %v1228
          %v1368 = vpop.f32.mrf.mxu0
          %v1369 = vadd.f32 0.0, %v1368
          %v1370 = vpop.f32.mrf.mxu0
          %v1371 = vadd.f32 0.0, %v1370
          %1372 = vmatprep.mubr.f32.mxu0 0.0
          %1373 = vmatmul.mubr.f32.gmra.mxu0 %v1231
          %v1374 = vpop.f32.mrf.mxu0
          %v1375 = vadd.f32 0.0, %v1374
          %v1376 = vpop.f32.mrf.mxu0
          %v1377 = vadd.f32 0.0, %v1376
          %1378 = vmatprep.mubr.f32.mxu0 0.0
          %1379 = vmatmul.mubr.f32.gmra.mxu0 %v1234
          %v1380 = vpop.f32.mrf.mxu0
          %v1381 = vadd.f32 0.0, %v1380
          %v1382 = vpop.f32.mrf.mxu0
          %v1383 = vadd.f32 0.0, %v1382
          %1384 = vmatprep.mubr.f32.mxu0 0.0
          %1385 = vmatmul.mubr.f32.gmra.mxu0 %v1237
          %v1386 = vpop.f32.mrf.mxu0
          %v1387 = vadd.f32 0.0, %v1386
          %v1388 = vpop.f32.mrf.mxu0
          %v1389 = vadd.f32 0.0, %v1388
          %1390 = vmatprep.mubr.f32.mxu0 0.0
          %1391 = vmatmul.mubr.f32.gmra.mxu0 %v1240
          %v1392 = vpop.f32.mrf.mxu0
          %v1393 = vadd.f32 0.0, %v1392
          %v1394 = vpop.f32.mrf.mxu0
          %v1395 = vadd.f32 0.0, %v1394
          %1396 = vmatprep.mubr.f32.mxu0 0.0
          %1397 = vmatmul.mubr.f32.gmra.mxu0 %v1243
          %v1398 = vpop.f32.mrf.mxu0
          %v1399 = vadd.f32 0.0, %v1398
          %v1400 = vpop.f32.mrf.mxu0
          %v1401 = vadd.f32 0.0, %v1400
          %1402 = vmatprep.mubr.f32.mxu0 0.0
          %1403 = vmatmul.mubr.f32.gmra.mxu0 %v1246
          %v1404 = vpop.f32.mrf.mxu0
          %v1405 = vadd.f32 0.0, %v1404
          %v1406 = vpop.f32.mrf.mxu0
          %v1407 = vadd.f32 0.0, %v1406
          %1408 = vmatprep.mubr.f32.mxu0 0.0
          %1409 = vmatmul.mubr.f32.gmra.mxu0 %v1249
          %v1410 = vpop.f32.mrf.mxu0
          %v1411 = vadd.f32 0.0, %v1410
          %v1412 = vpop.f32.mrf.mxu0
          %v1413 = vadd.f32 0.0, %v1412
          %1414 = vmatprep.mubr.f32.mxu0 0.0
          %1415 = vmatmul.mubr.f32.gmra.mxu0 %v1252
          %v1416 = vpop.f32.mrf.mxu0
          %v1417 = vadd.f32 0.0, %v1416
          %v1418 = vpop.f32.mrf.mxu0
          %v1419 = vadd.f32 0.0, %v1418
          %1420 = vmatprep.mubr.f32.mxu0 0.0
          %1421 = vmatmul.mubr.f32.gmra.mxu0 %v1255
          %v1422 = vpop.f32.mrf.mxu0
          %v1423 = vadd.f32 0.0, %v1422
          %v1424 = vpop.f32.mrf.mxu0
          %v1425 = vadd.f32 0.0, %v1424
          %1426 = vmatprep.mubr.f32.mxu0 0.0
          %1427 = vmatmul.mubr.f32.gmra.mxu0 %v1258
          %v1428 = vpop.f32.mrf.mxu0
          %v1429 = vadd.f32 0.0, %v1428
          %v1430 = vpop.f32.mrf.mxu0
          %v1431 = vadd.f32 0.0, %v1430
          %1432 = vdwg.mxu0
          %1433 = vmatprep.subr.mxu0 0.0
          %1434 = vmatpush1.msra.mxu0 0.0
          %1435 = vmatprep.subr.mxu0 0.0
          %1436 = vmatpush1.msra.mxu0 0.0
          %1437 = vmatprep.subr.mxu0 0.0
          %1438 = vmatpush1.msra.mxu0 0.0
          %1439 = vmatprep.subr.mxu0 0.0
          %1440 = vmatpush1.msra.mxu0 0.0
          %1441 = vmatprep.subr.mxu0 0.0
          %1442 = vmatpush1.msra.mxu0 0.0
          %1443 = vmatprep.subr.mxu0 0.0
          %1444 = vmatpush1.msra.mxu0 0.0
          %1445 = vmatprep.subr.mxu0 0.0
          %1446 = vmatpush1.msra.mxu0 0.0
          %1447 = vmatprep.subr.mxu0 0.0
          %1448 = vmatpush1.msra.mxu0 0.0
          %1449 = vmatprep.subr.mxu0 0.0
          %1450 = vmatpush1.msra.mxu0 0.0
          %1451 = vmatprep.subr.mxu0 0.0
          %1452 = vmatpush1.msra.mxu0 0.0
          %1453 = vmatprep.subr.mxu0 0.0
          %1454 = vmatpush1.msra.mxu0 0.0
          %1455 = vmatprep.subr.mxu0 0.0
          %1456 = vmatpush1.msra.mxu0 0.0
          %1457 = vmatprep.subr.mxu0 0.0
          %1458 = vmatpush1.msra.mxu0 0.0
          %1459 = vmatprep.subr.mxu0 0.0
          %1460 = vmatpush1.msra.mxu0 0.0
          %1461 = vmatprep.subr.mxu0 %v689
          %1462 = vmatpush1.msra.mxu0 %v687
          %1463 = vmatprep.subr.mxu0 %v683
          %1464 = vmatpush1.msra.mxu0 %v681
          %1465 = vmatprep.subr.mxu0 0.0
          %1466 = vmatpush2.msra.mxu0 0.0
          %1467 = vmatprep.subr.mxu0 0.0
          %1468 = vmatpush2.msra.mxu0 0.0
          %1469 = vmatprep.subr.mxu0 0.0
          %1470 = vmatpush2.msra.mxu0 0.0
          %1471 = vmatprep.subr.mxu0 0.0
          %1472 = vmatpush2.msra.mxu0 0.0
          %1473 = vmatprep.subr.mxu0 0.0
          %1474 = vmatpush2.msra.mxu0 0.0
          %1475 = vmatprep.subr.mxu0 0.0
          %1476 = vmatpush2.msra.mxu0 0.0
          %1477 = vmatprep.subr.mxu0 0.0
          %1478 = vmatpush2.msra.mxu0 0.0
          %1479 = vmatprep.subr.mxu0 0.0
          %1480 = vmatpush2.msra.mxu0 0.0
          %1481 = vmatprep.subr.mxu0 0.0
          %1482 = vmatpush2.msra.mxu0 0.0
          %1483 = vmatprep.subr.mxu0 0.0
          %1484 = vmatpush2.msra.mxu0 0.0
          %1485 = vmatprep.subr.mxu0 0.0
          %1486 = vmatpush2.msra.mxu0 0.0
          %1487 = vmatprep.subr.mxu0 0.0
          %1488 = vmatpush2.msra.mxu0 0.0
          %1489 = vmatprep.subr.mxu0 0.0
          %1490 = vmatpush2.msra.mxu0 0.0
          %1491 = vmatprep.subr.mxu0 0.0
          %1492 = vmatpush2.msra.mxu0 0.0
          %1493 = vmatprep.subr.mxu0 0.0
          %1494 = vmatpush2.msra.mxu0 0.0
          %1495 = vmatprep.subr.mxu0 0.0
          %1496 = vmatpush2.msra.mxu0 0.0
          %1497 = vmatprep.mubr.f32.mxu0 0.0
          %1498 = vmatmul.mubr.f32.gmra.mxu0 %v1207
          %v1499 = vpop.f32.mrf.mxu0
          %v1500 = vadd.f32 0.0, %v1499
          %v1501 = vpop.f32.mrf.mxu0
          %v1502 = vadd.f32 0.0, %v1501
          %1503 = vmatprep.mubr.f32.mxu0 0.0
          %1504 = vmatmul.mubr.f32.gmra.mxu0 %v1210
          %v1505 = vpop.f32.mrf.mxu0
          %v1506 = vadd.f32 0.0, %v1505
          %v1507 = vpop.f32.mrf.mxu0
          %v1508 = vadd.f32 0.0, %v1507
          %1509 = vmatprep.mubr.f32.mxu0 0.0
          %1510 = vmatmul.mubr.f32.gmra.mxu0 %v1213
          %v1511 = vpop.f32.mrf.mxu0
          %v1512 = vadd.f32 0.0, %v1511
          %v1513 = vpop.f32.mrf.mxu0
          %v1514 = vadd.f32 0.0, %v1513
          %1515 = vmatprep.mubr.f32.mxu0 0.0
          %1516 = vmatmul.mubr.f32.gmra.mxu0 %v1216
          %v1517 = vpop.f32.mrf.mxu0
          %v1518 = vadd.f32 0.0, %v1517
          %v1519 = vpop.f32.mrf.mxu0
          %v1520 = vadd.f32 0.0, %v1519
          %1521 = vmatprep.mubr.f32.mxu0 0.0
          %1522 = vmatmul.mubr.f32.gmra.mxu0 %v1219
          %v1523 = vpop.f32.mrf.mxu0
          %v1524 = vadd.f32 0.0, %v1523
          %v1525 = vpop.f32.mrf.mxu0
          %v1526 = vadd.f32 0.0, %v1525
          %1527 = vmatprep.mubr.f32.mxu0 0.0
          %1528 = vmatmul.mubr.f32.gmra.mxu0 %v1222
          %v1529 = vpop.f32.mrf.mxu0
          %v1530 = vadd.f32 0.0, %v1529
          %v1531 = vpop.f32.mrf.mxu0
          %v1532 = vadd.f32 0.0, %v1531
          %1533 = vmatprep.mubr.f32.mxu0 0.0
          %1534 = vmatmul.mubr.f32.gmra.mxu0 %v1225
          %v1535 = vpop.f32.mrf.mxu0
          %v1536 = vadd.f32 0.0, %v1535
          %v1537 = vpop.f32.mrf.mxu0
          %v1538 = vadd.f32 0.0, %v1537
          %1539 = vmatprep.mubr.f32.mxu0 0.0
          %1540 = vmatmul.mubr.f32.gmra.mxu0 %v1228
          %v1541 = vpop.f32.mrf.mxu0
          %v1542 = vadd.f32 0.0, %v1541
          %v1543 = vpop.f32.mrf.mxu0
          %v1544 = vadd.f32 0.0, %v1543
          %1545 = vmatprep.mubr.f32.mxu0 0.0
          %1546 = vmatmul.mubr.f32.gmra.mxu0 %v1231
          %v1547 = vpop.f32.mrf.mxu0
          %v1548 = vadd.f32 0.0, %v1547
          %v1549 = vpop.f32.mrf.mxu0
          %v1550 = vadd.f32 0.0, %v1549
          %1551 = vmatprep.mubr.f32.mxu0 0.0
          %1552 = vmatmul.mubr.f32.gmra.mxu0 %v1234
          %v1553 = vpop.f32.mrf.mxu0
          %v1554 = vadd.f32 0.0, %v1553
          %v1555 = vpop.f32.mrf.mxu0
          %v1556 = vadd.f32 0.0, %v1555
          %1557 = vmatprep.mubr.f32.mxu0 0.0
          %1558 = vmatmul.mubr.f32.gmra.mxu0 %v1237
          %v1559 = vpop.f32.mrf.mxu0
          %v1560 = vadd.f32 0.0, %v1559
          %v1561 = vpop.f32.mrf.mxu0
          %v1562 = vadd.f32 0.0, %v1561
          %1563 = vmatprep.mubr.f32.mxu0 0.0
          %1564 = vmatmul.mubr.f32.gmra.mxu0 %v1240
          %v1565 = vpop.f32.mrf.mxu0
          %v1566 = vadd.f32 0.0, %v1565
          %v1567 = vpop.f32.mrf.mxu0
          %v1568 = vadd.f32 0.0, %v1567
          %1569 = vmatprep.mubr.f32.mxu0 0.0
          %1570 = vmatmul.mubr.f32.gmra.mxu0 %v1243
          %v1571 = vpop.f32.mrf.mxu0
          %v1572 = vadd.f32 0.0, %v1571
          %v1573 = vpop.f32.mrf.mxu0
          %v1574 = vadd.f32 0.0, %v1573
          %1575 = vmatprep.mubr.f32.mxu0 0.0
          %1576 = vmatmul.mubr.f32.gmra.mxu0 %v1246
          %v1577 = vpop.f32.mrf.mxu0
          %v1578 = vadd.f32 0.0, %v1577
          %v1579 = vpop.f32.mrf.mxu0
          %v1580 = vadd.f32 0.0, %v1579
          %1581 = vmatprep.mubr.f32.mxu0 0.0
          %1582 = vmatmul.mubr.f32.gmra.mxu0 %v1249
          %v1583 = vpop.f32.mrf.mxu0
          %v1584 = vadd.f32 0.0, %v1583
          %v1585 = vpop.f32.mrf.mxu0
          %v1586 = vadd.f32 0.0, %v1585
          %1587 = vmatprep.mubr.f32.mxu0 0.0
          %1588 = vmatmul.mubr.f32.gmra.mxu0 %v1252
          %v1589 = vpop.f32.mrf.mxu0
          %v1590 = vadd.f32 0.0, %v1589
          %v1591 = vpop.f32.mrf.mxu0
          %v1592 = vadd.f32 0.0, %v1591
          %1593 = vmatprep.mubr.f32.mxu0 0.0
          %1594 = vmatmul.mubr.f32.gmra.mxu0 %v1255
          %v1595 = vpop.f32.mrf.mxu0
          %v1596 = vadd.f32 0.0, %v1595
          %v1597 = vpop.f32.mrf.mxu0
          %v1598 = vadd.f32 0.0, %v1597
          %1599 = vmatprep.mubr.f32.mxu0 0.0
          %1600 = vmatmul.mubr.f32.gmra.mxu0 %v1258
          %v1601 = vpop.f32.mrf.mxu0
          %v1602 = vadd.f32 0.0, %v1601
          %v1603 = vpop.f32.mrf.mxu0
          %v1604 = vadd.f32 0.0, %v1603
          %1605 = vdwg.mxu0
          %1606 = vmatprep.subr.mxu0 0.0
          %1607 = vmatpush1.msra.mxu0 0.0
          %1608 = vmatprep.subr.mxu0 0.0
          %1609 = vmatpush1.msra.mxu0 0.0
          %1610 = vmatprep.subr.mxu0 0.0
          %1611 = vmatpush1.msra.mxu0 0.0
          %1612 = vmatprep.subr.mxu0 0.0
          %1613 = vmatpush1.msra.mxu0 0.0
          %1614 = vmatprep.subr.mxu0 0.0
          %1615 = vmatpush1.msra.mxu0 0.0
          %1616 = vmatprep.subr.mxu0 0.0
          %1617 = vmatpush1.msra.mxu0 0.0
          %1618 = vmatprep.subr.mxu0 0.0
          %1619 = vmatpush1.msra.mxu0 0.0
          %1620 = vmatprep.subr.mxu0 0.0
          %1621 = vmatpush1.msra.mxu0 0.0
          %1622 = vmatprep.subr.mxu0 0.0
          %1623 = vmatpush1.msra.mxu0 0.0
          %1624 = vmatprep.subr.mxu0 0.0
          %1625 = vmatpush1.msra.mxu0 0.0
          %1626 = vmatprep.subr.mxu0 0.0
          %1627 = vmatpush1.msra.mxu0 0.0
          %1628 = vmatprep.subr.mxu0 0.0
          %1629 = vmatpush1.msra.mxu0 0.0
          %1630 = vmatprep.subr.mxu0 0.0
          %1631 = vmatpush1.msra.mxu0 0.0
          %1632 = vmatprep.subr.mxu0 0.0
          %1633 = vmatpush1.msra.mxu0 0.0
          %1634 = vmatprep.subr.mxu0 %v766
          %1635 = vmatpush1.msra.mxu0 %v764
          %1636 = vmatprep.subr.mxu0 %v760
          %1637 = vmatpush1.msra.mxu0 %v758
          %1638 = vmatprep.subr.mxu0 0.0
          %1639 = vmatpush2.msra.mxu0 0.0
          %1640 = vmatprep.subr.mxu0 0.0
          %1641 = vmatpush2.msra.mxu0 0.0
          %1642 = vmatprep.subr.mxu0 0.0
          %1643 = vmatpush2.msra.mxu0 0.0
          %1644 = vmatprep.subr.mxu0 0.0
          %1645 = vmatpush2.msra.mxu0 0.0
          %1646 = vmatprep.subr.mxu0 0.0
          %1647 = vmatpush2.msra.mxu0 0.0
          %1648 = vmatprep.subr.mxu0 0.0
          %1649 = vmatpush2.msra.mxu0 0.0
          %1650 = vmatprep.subr.mxu0 0.0
          %1651 = vmatpush2.msra.mxu0 0.0
          %1652 = vmatprep.subr.mxu0 0.0
          %1653 = vmatpush2.msra.mxu0 0.0
          %1654 = vmatprep.subr.mxu0 0.0
          %1655 = vmatpush2.msra.mxu0 0.0
          %1656 = vmatprep.subr.mxu0 0.0
          %1657 = vmatpush2.msra.mxu0 0.0
          %1658 = vmatprep.subr.mxu0 0.0
          %1659 = vmatpush2.msra.mxu0 0.0
          %1660 = vmatprep.subr.mxu0 0.0
          %1661 = vmatpush2.msra.mxu0 0.0
          %1662 = vmatprep.subr.mxu0 0.0
          %1663 = vmatpush2.msra.mxu0 0.0
          %1664 = vmatprep.subr.mxu0 0.0
          %1665 = vmatpush2.msra.mxu0 0.0
          %1666 = vmatprep.subr.mxu0 0.0
          %1667 = vmatpush2.msra.mxu0 0.0
          %1668 = vmatprep.subr.mxu0 0.0
          %1669 = vmatpush2.msra.mxu0 0.0
          %1670 = vmatprep.mubr.f32.mxu0 0.0
          %1671 = vmatmul.mubr.f32.gmra.mxu0 %v1207
          %v1672 = vpop.f32.mrf.mxu0
          %v1673 = vadd.f32 0.0, %v1672
          %v1674 = vpop.f32.mrf.mxu0
          %v1675 = vadd.f32 0.0, %v1674
          %1676 = vmatprep.mubr.f32.mxu0 0.0
          %1677 = vmatmul.mubr.f32.gmra.mxu0 %v1210
          %v1678 = vpop.f32.mrf.mxu0
          %v1679 = vadd.f32 0.0, %v1678
          %v1680 = vpop.f32.mrf.mxu0
          %v1681 = vadd.f32 0.0, %v1680
          %1682 = vmatprep.mubr.f32.mxu0 0.0
          %1683 = vmatmul.mubr.f32.gmra.mxu0 %v1213
          %v1684 = vpop.f32.mrf.mxu0
          %v1685 = vadd.f32 0.0, %v1684
          %v1686 = vpop.f32.mrf.mxu0
          %v1687 = vadd.f32 0.0, %v1686
          %1688 = vmatprep.mubr.f32.mxu0 0.0
          %1689 = vmatmul.mubr.f32.gmra.mxu0 %v1216
          %v1690 = vpop.f32.mrf.mxu0
          %v1691 = vadd.f32 0.0, %v1690
          %v1692 = vpop.f32.mrf.mxu0
          %v1693 = vadd.f32 0.0, %v1692
          %1694 = vmatprep.mubr.f32.mxu0 0.0
          %1695 = vmatmul.mubr.f32.gmra.mxu0 %v1219
          %v1696 = vpop.f32.mrf.mxu0
          %v1697 = vadd.f32 0.0, %v1696
          %v1698 = vpop.f32.mrf.mxu0
          %v1699 = vadd.f32 0.0, %v1698
          %1700 = vmatprep.mubr.f32.mxu0 0.0
          %1701 = vmatmul.mubr.f32.gmra.mxu0 %v1222
          %v1702 = vpop.f32.mrf.mxu0
          %v1703 = vadd.f32 0.0, %v1702
          %v1704 = vpop.f32.mrf.mxu0
          %v1705 = vadd.f32 0.0, %v1704
          %1706 = vmatprep.mubr.f32.mxu0 0.0
          %1707 = vmatmul.mubr.f32.gmra.mxu0 %v1225
          %v1708 = vpop.f32.mrf.mxu0
          %v1709 = vadd.f32 0.0, %v1708
          %v1710 = vpop.f32.mrf.mxu0
          %v1711 = vadd.f32 0.0, %v1710
          %1712 = vmatprep.mubr.f32.mxu0 0.0
          %1713 = vmatmul.mubr.f32.gmra.mxu0 %v1228
          %v1714 = vpop.f32.mrf.mxu0
          %v1715 = vadd.f32 0.0, %v1714
          %v1716 = vpop.f32.mrf.mxu0
          %v1717 = vadd.f32 0.0, %v1716
          %1718 = vmatprep.mubr.f32.mxu0 0.0
          %1719 = vmatmul.mubr.f32.gmra.mxu0 %v1231
          %v1720 = vpop.f32.mrf.mxu0
          %v1721 = vadd.f32 0.0, %v1720
          %v1722 = vpop.f32.mrf.mxu0
          %v1723 = vadd.f32 0.0, %v1722
          %1724 = vmatprep.mubr.f32.mxu0 0.0
          %1725 = vmatmul.mubr.f32.gmra.mxu0 %v1234
          %v1726 = vpop.f32.mrf.mxu0
          %v1727 = vadd.f32 0.0, %v1726
          %v1728 = vpop.f32.mrf.mxu0
          %v1729 = vadd.f32 0.0, %v1728
          %1730 = vmatprep.mubr.f32.mxu0 0.0
          %1731 = vmatmul.mubr.f32.gmra.mxu0 %v1237
          %v1732 = vpop.f32.mrf.mxu0
          %v1733 = vadd.f32 0.0, %v1732
          %v1734 = vpop.f32.mrf.mxu0
          %v1735 = vadd.f32 0.0, %v1734
          %1736 = vmatprep.mubr.f32.mxu0 0.0
          %1737 = vmatmul.mubr.f32.gmra.mxu0 %v1240
          %v1738 = vpop.f32.mrf.mxu0
          %v1739 = vadd.f32 0.0, %v1738
          %v1740 = vpop.f32.mrf.mxu0
          %v1741 = vadd.f32 0.0, %v1740
          %1742 = vmatprep.mubr.f32.mxu0 0.0
          %1743 = vmatmul.mubr.f32.gmra.mxu0 %v1243
          %v1744 = vpop.f32.mrf.mxu0
          %v1745 = vadd.f32 0.0, %v1744
          %v1746 = vpop.f32.mrf.mxu0
          %v1747 = vadd.f32 0.0, %v1746
          %1748 = vmatprep.mubr.f32.mxu0 0.0
          %1749 = vmatmul.mubr.f32.gmra.mxu0 %v1246
          %v1750 = vpop.f32.mrf.mxu0
          %v1751 = vadd.f32 0.0, %v1750
          %v1752 = vpop.f32.mrf.mxu0
          %v1753 = vadd.f32 0.0, %v1752
          %1754 = vmatprep.mubr.f32.mxu0 0.0
          %1755 = vmatmul.mubr.f32.gmra.mxu0 %v1249
          %v1756 = vpop.f32.mrf.mxu0
          %v1757 = vadd.f32 0.0, %v1756
          %v1758 = vpop.f32.mrf.mxu0
          %v1759 = vadd.f32 0.0, %v1758
          %1760 = vmatprep.mubr.f32.mxu0 0.0
          %1761 = vmatmul.mubr.f32.gmra.mxu0 %v1252
          %v1762 = vpop.f32.mrf.mxu0
          %v1763 = vadd.f32 0.0, %v1762
          %v1764 = vpop.f32.mrf.mxu0
          %v1765 = vadd.f32 0.0, %v1764
          %1766 = vmatprep.mubr.f32.mxu0 0.0
          %1767 = vmatmul.mubr.f32.gmra.mxu0 %v1255
          %v1768 = vpop.f32.mrf.mxu0
          %v1769 = vadd.f32 0.0, %v1768
          %v1770 = vpop.f32.mrf.mxu0
          %v1771 = vadd.f32 0.0, %v1770
          %1772 = vmatprep.mubr.f32.mxu0 0.0
          %1773 = vmatmul.mubr.f32.gmra.mxu0 %v1258
          %v1774 = vpop.f32.mrf.mxu0
          %v1775 = vadd.f32 0.0, %v1774
          %v1776 = vpop.f32.mrf.mxu0
          %v1777 = vadd.f32 0.0, %v1776
          %1778 = vdwg.mxu0
          %1779 = vmatprep.subr.mxu0 0.0
          %1780 = vmatpush1.msra.mxu0 0.0
          %1781 = vmatprep.subr.mxu0 0.0
          %1782 = vmatpush1.msra.mxu0 0.0
          %1783 = vmatprep.subr.mxu0 0.0
          %1784 = vmatpush1.msra.mxu0 0.0
          %1785 = vmatprep.subr.mxu0 0.0
          %1786 = vmatpush1.msra.mxu0 0.0
          %1787 = vmatprep.subr.mxu0 0.0
          %1788 = vmatpush1.msra.mxu0 0.0
          %1789 = vmatprep.subr.mxu0 0.0
          %1790 = vmatpush1.msra.mxu0 0.0
          %1791 = vmatprep.subr.mxu0 0.0
          %1792 = vmatpush1.msra.mxu0 0.0
          %1793 = vmatprep.subr.mxu0 0.0
          %1794 = vmatpush1.msra.mxu0 0.0
          %1795 = vmatprep.subr.mxu0 0.0
          %1796 = vmatpush1.msra.mxu0 0.0
          %1797 = vmatprep.subr.mxu0 0.0
          %1798 = vmatpush1.msra.mxu0 0.0
          %1799 = vmatprep.subr.mxu0 0.0
          %1800 = vmatpush1.msra.mxu0 0.0
          %1801 = vmatprep.subr.mxu0 0.0
          %1802 = vmatpush1.msra.mxu0 0.0
          %1803 = vmatprep.subr.mxu0 0.0
          %1804 = vmatpush1.msra.mxu0 0.0
          %1805 = vmatprep.subr.mxu0 0.0
          %1806 = vmatpush1.msra.mxu0 0.0
          %1807 = vmatprep.subr.mxu0 %v843
          %1808 = vmatpush1.msra.mxu0 %v841
          %1809 = vmatprep.subr.mxu0 %v837
          %1810 = vmatpush1.msra.mxu0 %v835
          %1811 = vmatprep.subr.mxu0 0.0
          %1812 = vmatpush2.msra.mxu0 0.0
          %1813 = vmatprep.subr.mxu0 0.0
          %1814 = vmatpush2.msra.mxu0 0.0
          %1815 = vmatprep.subr.mxu0 0.0
          %1816 = vmatpush2.msra.mxu0 0.0
          %1817 = vmatprep.subr.mxu0 0.0
          %1818 = vmatpush2.msra.mxu0 0.0
          %1819 = vmatprep.subr.mxu0 0.0
          %1820 = vmatpush2.msra.mxu0 0.0
          %1821 = vmatprep.subr.mxu0 0.0
          %1822 = vmatpush2.msra.mxu0 0.0
          %1823 = vmatprep.subr.mxu0 0.0
          %1824 = vmatpush2.msra.mxu0 0.0
          %1825 = vmatprep.subr.mxu0 0.0
          %1826 = vmatpush2.msra.mxu0 0.0
          %1827 = vmatprep.subr.mxu0 0.0
          %1828 = vmatpush2.msra.mxu0 0.0
          %1829 = vmatprep.subr.mxu0 0.0
          %1830 = vmatpush2.msra.mxu0 0.0
          %1831 = vmatprep.subr.mxu0 0.0
          %1832 = vmatpush2.msra.mxu0 0.0
          %1833 = vmatprep.subr.mxu0 0.0
          %1834 = vmatpush2.msra.mxu0 0.0
          %1835 = vmatprep.subr.mxu0 0.0
          %1836 = vmatpush2.msra.mxu0 0.0
          %1837 = vmatprep.subr.mxu0 0.0
          %1838 = vmatpush2.msra.mxu0 0.0
          %1839 = vmatprep.subr.mxu0 0.0
          %1840 = vmatpush2.msra.mxu0 0.0
          %1841 = vmatprep.subr.mxu0 0.0
          %1842 = vmatpush2.msra.mxu0 0.0
          %1843 = vmatprep.mubr.f32.mxu0 0.0
          %1844 = vmatmul.mubr.f32.gmra.mxu0 %v1207
          %v1845 = vpop.f32.mrf.mxu0
          %v1846 = vadd.f32 0.0, %v1845
          %v1847 = vpop.f32.mrf.mxu0
          %v1848 = vadd.f32 0.0, %v1847
          %1849 = vmatprep.mubr.f32.mxu0 0.0
          %1850 = vmatmul.mubr.f32.gmra.mxu0 %v1210
          %v1851 = vpop.f32.mrf.mxu0
          %v1852 = vadd.f32 0.0, %v1851
          %v1853 = vpop.f32.mrf.mxu0
          %v1854 = vadd.f32 0.0, %v1853
          %1855 = vmatprep.mubr.f32.mxu0 0.0
          %1856 = vmatmul.mubr.f32.gmra.mxu0 %v1213
          %v1857 = vpop.f32.mrf.mxu0
          %v1858 = vadd.f32 0.0, %v1857
          %v1859 = vpop.f32.mrf.mxu0
          %v1860 = vadd.f32 0.0, %v1859
          %1861 = vmatprep.mubr.f32.mxu0 0.0
          %1862 = vmatmul.mubr.f32.gmra.mxu0 %v1216
          %v1863 = vpop.f32.mrf.mxu0
          %v1864 = vadd.f32 0.0, %v1863
          %v1865 = vpop.f32.mrf.mxu0
          %v1866 = vadd.f32 0.0, %v1865
          %1867 = vmatprep.mubr.f32.mxu0 0.0
          %1868 = vmatmul.mubr.f32.gmra.mxu0 %v1219
          %v1869 = vpop.f32.mrf.mxu0
          %v1870 = vadd.f32 0.0, %v1869
          %v1871 = vpop.f32.mrf.mxu0
          %v1872 = vadd.f32 0.0, %v1871
          %1873 = vmatprep.mubr.f32.mxu0 0.0
          %1874 = vmatmul.mubr.f32.gmra.mxu0 %v1222
          %v1875 = vpop.f32.mrf.mxu0
          %v1876 = vadd.f32 0.0, %v1875
          %v1877 = vpop.f32.mrf.mxu0
          %v1878 = vadd.f32 0.0, %v1877
          %1879 = vmatprep.mubr.f32.mxu0 0.0
          %1880 = vmatmul.mubr.f32.gmra.mxu0 %v1225
          %v1881 = vpop.f32.mrf.mxu0
          %v1882 = vadd.f32 0.0, %v1881
          %v1883 = vpop.f32.mrf.mxu0
          %v1884 = vadd.f32 0.0, %v1883
          %1885 = vmatprep.mubr.f32.mxu0 0.0
          %1886 = vmatmul.mubr.f32.gmra.mxu0 %v1228
          %v1887 = vpop.f32.mrf.mxu0
          %v1888 = vadd.f32 0.0, %v1887
          %v1889 = vpop.f32.mrf.mxu0
          %v1890 = vadd.f32 0.0, %v1889
          %1891 = vmatprep.mubr.f32.mxu0 0.0
          %1892 = vmatmul.mubr.f32.gmra.mxu0 %v1231
          %v1893 = vpop.f32.mrf.mxu0
          %v1894 = vadd.f32 0.0, %v1893
          %v1895 = vpop.f32.mrf.mxu0
          %v1896 = vadd.f32 0.0, %v1895
          %1897 = vmatprep.mubr.f32.mxu0 0.0
          %1898 = vmatmul.mubr.f32.gmra.mxu0 %v1234
          %v1899 = vpop.f32.mrf.mxu0
          %v1900 = vadd.f32 0.0, %v1899
          %v1901 = vpop.f32.mrf.mxu0
          %v1902 = vadd.f32 0.0, %v1901
          %1903 = vmatprep.mubr.f32.mxu0 0.0
          %1904 = vmatmul.mubr.f32.gmra.mxu0 %v1237
          %v1905 = vpop.f32.mrf.mxu0
          %v1906 = vadd.f32 0.0, %v1905
          %v1907 = vpop.f32.mrf.mxu0
          %v1908 = vadd.f32 0.0, %v1907
          %1909 = vmatprep.mubr.f32.mxu0 0.0
          %1910 = vmatmul.mubr.f32.gmra.mxu0 %v1240
          %v1911 = vpop.f32.mrf.mxu0
          %v1912 = vadd.f32 0.0, %v1911
          %v1913 = vpop.f32.mrf.mxu0
          %v1914 = vadd.f32 0.0, %v1913
          %1915 = vmatprep.mubr.f32.mxu0 0.0
          %1916 = vmatmul.mubr.f32.gmra.mxu0 %v1243
          %v1917 = vpop.f32.mrf.mxu0
          %v1918 = vadd.f32 0.0, %v1917
          %v1919 = vpop.f32.mrf.mxu0
          %v1920 = vadd.f32 0.0, %v1919
          %1921 = vmatprep.mubr.f32.mxu0 0.0
          %1922 = vmatmul.mubr.f32.gmra.mxu0 %v1246
          %v1923 = vpop.f32.mrf.mxu0
          %v1924 = vadd.f32 0.0, %v1923
          %v1925 = vpop.f32.mrf.mxu0
          %v1926 = vadd.f32 0.0, %v1925
          %1927 = vmatprep.mubr.f32.mxu0 0.0
          %1928 = vmatmul.mubr.f32.gmra.mxu0 %v1249
          %v1929 = vpop.f32.mrf.mxu0
          %v1930 = vadd.f32 0.0, %v1929
          %v1931 = vpop.f32.mrf.mxu0
          %v1932 = vadd.f32 0.0, %v1931
          %1933 = vmatprep.mubr.f32.mxu0 0.0
          %1934 = vmatmul.mubr.f32.gmra.mxu0 %v1252
          %v1935 = vpop.f32.mrf.mxu0
          %v1936 = vadd.f32 0.0, %v1935
          %v1937 = vpop.f32.mrf.mxu0
          %v1938 = vadd.f32 0.0, %v1937
          %1939 = vmatprep.mubr.f32.mxu0 0.0
          %1940 = vmatmul.mubr.f32.gmra.mxu0 %v1255
          %v1941 = vpop.f32.mrf.mxu0
          %v1942 = vadd.f32 0.0, %v1941
          %v1943 = vpop.f32.mrf.mxu0
          %v1944 = vadd.f32 0.0, %v1943
          %1945 = vmatprep.mubr.f32.mxu0 0.0
          %1946 = vmatmul.mubr.f32.gmra.mxu0 %v1258
          %v1947 = vpop.f32.mrf.mxu0
          %v1948 = vadd.f32 0.0, %v1947
          %v1949 = vpop.f32.mrf.mxu0
          %v1950 = vadd.f32 0.0, %v1949
          %1951 = vdwg.mxu0
          %1952 = vst [vmem:[#allocation3] sm:$0xff] %v1327
          %1953 = vst [vmem:[#allocation3 + $0x8] sm:$0xff] %v1329
          %1954 = vst [vmem:[#allocation3 + $0x10] sm:$0xff] %v1500
          %1955 = vst [vmem:[#allocation3 + $0x18] sm:$0xff] %v1502
          %1956 = vst [vmem:[#allocation3 + $0x20] sm:$0xff] %v1673
          %1957 = vst [vmem:[#allocation3 + $0x28] sm:$0xff] %v1675
          %1958 = vst [vmem:[#allocation3 + $0x30] sm:$0xff] %v1846
          %1959 = vst [vmem:[#allocation3 + $0x38] sm:$0xff] %v1848
          %1960 = vst [vmem:[#allocation3 + $0x40] sm:$0xff] %v1333
          %1961 = vst [vmem:[#allocation3 + $0x48] sm:$0xff] %v1335
          %1962 = vst [vmem:[#allocation3 + $0x50] sm:$0xff] %v1506
          %1963 = vst [vmem:[#allocation3 + $0x58] sm:$0xff] %v1508
          %1964 = vst [vmem:[#allocation3 + $0x60] sm:$0xff] %v1679
          %1965 = vst [vmem:[#allocation3 + $0x68] sm:$0xff] %v1681
          %1966 = vst [vmem:[#allocation3 + $0x70] sm:$0xff] %v1852
          %1967 = vst [vmem:[#allocation3 + $0x78] sm:$0xff] %v1854
          %1968 = vst [vmem:[#allocation3 + $0x80] sm:$0xff] %v1339
          %1969 = vst [vmem:[#allocation3 + $0x88] sm:$0xff] %v1341
          %1970 = vst [vmem:[#allocation3 + $0x90] sm:$0xff] %v1512
          %1971 = vst [vmem:[#allocation3 + $0x98] sm:$0xff] %v1514
          %1972 = vst [vmem:[#allocation3 + $0xa0] sm:$0xff] %v1685
          %1973 = vst [vmem:[#allocation3 + $0xa8] sm:$0xff] %v1687
          %1974 = vst [vmem:[#allocation3 + $0xb0] sm:$0xff] %v1858
          %1975 = vst [vmem:[#allocation3 + $0xb8] sm:$0xff] %v1860
          %1976 = vst [vmem:[#allocation3 + $0xc0] sm:$0xff] %v1345
          %1977 = vst [vmem:[#allocation3 + $0xc8] sm:$0xff] %v1347
          %1978 = vst [vmem:[#allocation3 + $0xd0] sm:$0xff] %v1518
          %1979 = vst [vmem:[#allocation3 + $0xd8] sm:$0xff] %v1520
          %1980 = vst [vmem:[#allocation3 + $0xe0] sm:$0xff] %v1691
          %1981 = vst [vmem:[#allocation3 + $0xe8] sm:$0xff] %v1693
          %1982 = vst [vmem:[#allocation3 + $0xf0] sm:$0xff] %v1864
          %1983 = vst [vmem:[#allocation3 + $0xf8] sm:$0xff] %v1866
          %1984 = vst [vmem:[#allocation3 + $0x100] sm:$0xff] %v1351
          %1985 = vst [vmem:[#allocation3 + $0x108] sm:$0xff] %v1353
          %1986 = vst [vmem:[#allocation3 + $0x110] sm:$0xff] %v1524
          %1987 = vst [vmem:[#allocation3 + $0x118] sm:$0xff] %v1526
          %1988 = vst [vmem:[#allocation3 + $0x120] sm:$0xff] %v1697
          %1989 = vst [vmem:[#allocation3 + $0x128] sm:$0xff] %v1699
          %1990 = vst [vmem:[#allocation3 + $0x130] sm:$0xff] %v1870
          %1991 = vst [vmem:[#allocation3 + $0x138] sm:$0xff] %v1872
          %1992 = vst [vmem:[#allocation3 + $0x140] sm:$0xff] %v1357
          %1993 = vst [vmem:[#allocation3 + $0x148] sm:$0xff] %v1359
          %1994 = vst [vmem:[#allocation3 + $0x150] sm:$0xff] %v1530
          %1995 = vst [vmem:[#allocation3 + $0x158] sm:$0xff] %v1532
          %1996 = vst [vmem:[#allocation3 + $0x160] sm:$0xff] %v1703
          %1997 = vst [vmem:[#allocation3 + $0x168] sm:$0xff] %v1705
          %1998 = vst [vmem:[#allocation3 + $0x170] sm:$0xff] %v1876
          %1999 = vst [vmem:[#allocation3 + $0x178] sm:$0xff] %v1878
          %2000 = vst [vmem:[#allocation3 + $0x180] sm:$0xff] %v1363
          %2001 = vst [vmem:[#allocation3 + $0x188] sm:$0xff] %v1365
          %2002 = vst [vmem:[#allocation3 + $0x190] sm:$0xff] %v1536
          %2003 = vst [vmem:[#allocation3 + $0x198] sm:$0xff] %v1538
          %2004 = vst [vmem:[#allocation3 + $0x1a0] sm:$0xff] %v1709
          %2005 = vst [vmem:[#allocation3 + $0x1a8] sm:$0xff] %v1711
          %2006 = vst [vmem:[#allocation3 + $0x1b0] sm:$0xff] %v1882
          %2007 = vst [vmem:[#allocation3 + $0x1b8] sm:$0xff] %v1884
          %2008 = vst [vmem:[#allocation3 + $0x1c0] sm:$0xff] %v1369
          %2009 = vst [vmem:[#allocation3 + $0x1c8] sm:$0xff] %v1371
          %2010 = vst [vmem:[#allocation3 + $0x1d0] sm:$0xff] %v1542
          %2011 = vst [vmem:[#allocation3 + $0x1d8] sm:$0xff] %v1544
          %2012 = vst [vmem:[#allocation3 + $0x1e0] sm:$0xff] %v1715
          %2013 = vst [vmem:[#allocation3 + $0x1e8] sm:$0xff] %v1717
          %2014 = vst [vmem:[#allocation3 + $0x1f0] sm:$0xff] %v1888
          %2015 = vst [vmem:[#allocation3 + $0x1f8] sm:$0xff] %v1890
          %2016 = vst [vmem:[#allocation3 + $0x200] sm:$0xff] %v1375
          %2017 = vst [vmem:[#allocation3 + $0x208] sm:$0xff] %v1377
          %2018 = vst [vmem:[#allocation3 + $0x210] sm:$0xff] %v1548
          %2019 = vst [vmem:[#allocation3 + $0x218] sm:$0xff] %v1550
          %2020 = vst [vmem:[#allocation3 + $0x220] sm:$0xff] %v1721
          %2021 = vst [vmem:[#allocation3 + $0x228] sm:$0xff] %v1723
          %2022 = vst [vmem:[#allocation3 + $0x230] sm:$0xff] %v1894
          %2023 = vst [vmem:[#allocation3 + $0x238] sm:$0xff] %v1896
          %2024 = vst [vmem:[#allocation3 + $0x240] sm:$0xff] %v1381
          %2025 = vst [vmem:[#allocation3 + $0x248] sm:$0xff] %v1383
          %2026 = vst [vmem:[#allocation3 + $0x250] sm:$0xff] %v1554
          %2027 = vst [vmem:[#allocation3 + $0x258] sm:$0xff] %v1556
          %2028 = vst [vmem:[#allocation3 + $0x260] sm:$0xff] %v1727
          %2029 = vst [vmem:[#allocation3 + $0x268] sm:$0xff] %v1729
          %2030 = vst [vmem:[#allocation3 + $0x270] sm:$0xff] %v1900
          %2031 = vst [vmem:[#allocation3 + $0x278] sm:$0xff] %v1902
          %2032 = vst [vmem:[#allocation3 + $0x280] sm:$0xff] %v1387
          %2033 = vst [vmem:[#allocation3 + $0x288] sm:$0xff] %v1389
          %2034 = vst [vmem:[#allocation3 + $0x290] sm:$0xff] %v1560
          %2035 = vst [vmem:[#allocation3 + $0x298] sm:$0xff] %v1562
          %2036 = vst [vmem:[#allocation3 + $0x2a0] sm:$0xff] %v1733
          %2037 = vst [vmem:[#allocation3 + $0x2a8] sm:$0xff] %v1735
          %2038 = vst [vmem:[#allocation3 + $0x2b0] sm:$0xff] %v1906
          %2039 = vst [vmem:[#allocation3 + $0x2b8] sm:$0xff] %v1908
          %2040 = vst [vmem:[#allocation3 + $0x2c0] sm:$0xff] %v1393
          %2041 = vst [vmem:[#allocation3 + $0x2c8] sm:$0xff] %v1395
          %2042 = vst [vmem:[#allocation3 + $0x2d0] sm:$0xff] %v1566
          %2043 = vst [vmem:[#allocation3 + $0x2d8] sm:$0xff] %v1568
          %2044 = vst [vmem:[#allocation3 + $0x2e0] sm:$0xff] %v1739
          %2045 = vst [vmem:[#allocation3 + $0x2e8] sm:$0xff] %v1741
          %2046 = vst [vmem:[#allocation3 + $0x2f0] sm:$0xff] %v1912
          %2047 = vst [vmem:[#allocation3 + $0x2f8] sm:$0xff] %v1914
          %2048 = vst [vmem:[#allocation3 + $0x300] sm:$0xff] %v1399
          %2049 = vst [vmem:[#allocation3 + $0x308] sm:$0xff] %v1401
          %2050 = vst [vmem:[#allocation3 + $0x310] sm:$0xff] %v1572
          %2051 = vst [vmem:[#allocation3 + $0x318] sm:$0xff] %v1574
          %2052 = vst [vmem:[#allocation3 + $0x320] sm:$0xff] %v1745
          %2053 = vst [vmem:[#allocation3 + $0x328] sm:$0xff] %v1747
          %2054 = vst [vmem:[#allocation3 + $0x330] sm:$0xff] %v1918
          %2055 = vst [vmem:[#allocation3 + $0x338] sm:$0xff] %v1920
          %2056 = vst [vmem:[#allocation3 + $0x340] sm:$0xff] %v1405
          %2057 = vst [vmem:[#allocation3 + $0x348] sm:$0xff] %v1407
          %2058 = vst [vmem:[#allocation3 + $0x350] sm:$0xff] %v1578
          %2059 = vst [vmem:[#allocation3 + $0x358] sm:$0xff] %v1580
          %2060 = vst [vmem:[#allocation3 + $0x360] sm:$0xff] %v1751
          %2061 = vst [vmem:[#allocation3 + $0x368] sm:$0xff] %v1753
          %2062 = vst [vmem:[#allocation3 + $0x370] sm:$0xff] %v1924
          %2063 = vst [vmem:[#allocation3 + $0x378] sm:$0xff] %v1926
          %2064 = vst [vmem:[#allocation3 + $0x380] sm:$0xff] %v1411
          %2065 = vst [vmem:[#allocation3 + $0x388] sm:$0xff] %v1413
          %2066 = vst [vmem:[#allocation3 + $0x390] sm:$0xff] %v1584
          %2067 = vst [vmem:[#allocation3 + $0x398] sm:$0xff] %v1586
          %2068 = vst [vmem:[#allocation3 + $0x3a0] sm:$0xff] %v1757
          %2069 = vst [vmem:[#allocation3 + $0x3a8] sm:$0xff] %v1759
          %2070 = vst [vmem:[#allocation3 + $0x3b0] sm:$0xff] %v1930
          %2071 = vst [vmem:[#allocation3 + $0x3b8] sm:$0xff] %v1932
          %2072 = vst [vmem:[#allocation3 + $0x3c0] sm:$0xff] %v1417
          %2073 = vst [vmem:[#allocation3 + $0x3c8] sm:$0xff] %v1419
          %2074 = vst [vmem:[#allocation3 + $0x3d0] sm:$0xff] %v1590
          %2075 = vst [vmem:[#allocation3 + $0x3d8] sm:$0xff] %v1592
          %2076 = vst [vmem:[#allocation3 + $0x3e0] sm:$0xff] %v1763
          %2077 = vst [vmem:[#allocation3 + $0x3e8] sm:$0xff] %v1765
          %2078 = vst [vmem:[#allocation3 + $0x3f0] sm:$0xff] %v1936
          %2079 = vst [vmem:[#allocation3 + $0x3f8] sm:$0xff] %v1938
          %2080 = vst [vmem:[#allocation3 + $0x400] sm:$0xff] %v1423
          %2081 = vst [vmem:[#allocation3 + $0x408] sm:$0xff] %v1425
          %2082 = vst [vmem:[#allocation3 + $0x410] sm:$0xff] %v1596
          %2083 = vst [vmem:[#allocation3 + $0x418] sm:$0xff] %v1598
          %2084 = vst [vmem:[#allocation3 + $0x420] sm:$0xff] %v1769
          %2085 = vst [vmem:[#allocation3 + $0x428] sm:$0xff] %v1771
          %2086 = vst [vmem:[#allocation3 + $0x430] sm:$0xff] %v1942
          %2087 = vst [vmem:[#allocation3 + $0x438] sm:$0xff] %v1944
          %2088 = vst [vmem:[#allocation3 + $0x440] sm:$0xff] %v1429
          %2089 = vst [vmem:[#allocation3 + $0x448] sm:$0xff] %v1431
          %2090 = vst [vmem:[#allocation3 + $0x450] sm:$0xff] %v1602
          %2091 = vst [vmem:[#allocation3 + $0x458] sm:$0xff] %v1604
          %2092 = vst [vmem:[#allocation3 + $0x460] sm:$0xff] %v1775
          %2093 = vst [vmem:[#allocation3 + $0x468] sm:$0xff] %v1777
          %2094 = vst [vmem:[#allocation3 + $0x470] sm:$0xff] %v1948
          %2095 = vst [vmem:[#allocation3 + $0x478] sm:$0xff] %v1950
          %2096 = vst [vmem:[#allocation4] sm:$0xff] 0.0
          %vm2097 = vcmask 793600
          %2098 = vst.msk [vmem:[#allocation4 + $0x8] sm:$0xff] %vm2097, 0.0
          %2099 = vst [vmem:[#allocation4 + $0x10] sm:$0xff] 0.0
          %2100 = vst.msk [vmem:[#allocation4 + $0x18] sm:$0xff] %vm2097, 0.0
        $region92: #{fwd.1} parent=67 // pred_fallthru
          _
        %s2101 = smul.u32 %s28, 16
        %s2102 = sshra.s32 %s2101, 3
        %s2103 = sand.u32 %s2101, 7
        %s2104 = smul.u32 %s2102, 8
        %s2105 = smul.addr %s2104, 8
        %s2106 = scalar_lea.vmem [#allocation3], %s2105
        %v2107 = vld [vmem:[%s2106] sm:$0xff]
        %v2108 = vld [vmem:[%s2106 + $0x8] sm:$0xff]
        %v2109 = vld [vmem:[%s2106 + $0x10] sm:$0xff]
        %v2110 = vld [vmem:[%s2106 + $0x18] sm:$0xff]
        %v2111 = vld [vmem:[%s2106 + $0x20] sm:$0xff]
        %v2112 = vld [vmem:[%s2106 + $0x28] sm:$0xff]
        %v2113 = vld [vmem:[%s2106 + $0x30] sm:$0xff]
        %v2114 = vld [vmem:[%s2106 + $0x38] sm:$0xff]
        %v2115 = vld [vmem:[%s2106 + $0x40] sm:$0xff]
        %v2116 = vld [vmem:[%s2106 + $0x48] sm:$0xff]
        %v2117 = vld [vmem:[%s2106 + $0x50] sm:$0xff]
        %v2118 = vld [vmem:[%s2106 + $0x58] sm:$0xff]
        %v2119 = vld [vmem:[%s2106 + $0x60] sm:$0xff]
        %v2120 = vld [vmem:[%s2106 + $0x68] sm:$0xff]
        %v2121 = vld [vmem:[%s2106 + $0x70] sm:$0xff]
        %v2122 = vld [vmem:[%s2106 + $0x78] sm:$0xff]
        %v2123 = vpack.c.bf16 %v2115, %v2107
        %v2124 = vpack.c.bf16 %v2116, %v2108
        %v2125 = vpack.c.bf16 %v2117, %v2109
        %v2126 = vpack.c.bf16 %v2118, %v2110
        %v2127 = vpack.c.bf16 %v2119, %v2111
        %v2128 = vpack.c.bf16 %v2120, %v2112
        %v2129 = vpack.c.bf16 %v2121, %v2113
        %v2130 = vpack.c.bf16 %v2122, %v2114
        %v2131 = vld [vmem:[#allocation4] sm:$0xff]
        %v2132 = vld [vmem:[#allocation4 + $0x8] sm:$0xff]
        %v2133 = vld [vmem:[#allocation4 + $0x10] sm:$0xff]
        %v2134 = vld [vmem:[#allocation4 + $0x18] sm:$0xff]
        %v2135 = vld [vmem:[%s425] sm:$0xff]
        %v2136 = vld [vmem:[%s425 + $0x8] sm:$0xff]
        %v2137 = vld [vmem:[%s425 + $0x10] sm:$0xff]
        %v2138 = vld [vmem:[%s425 + $0x18] sm:$0xff]
        %v2139 = vld [vmem:[%s425 + $0x20] sm:$0xff]
        %v2140 = vld [vmem:[%s425 + $0x28] sm:$0xff]
        %v2141 = vld [vmem:[%s425 + $0x30] sm:$0xff]
        %v2142 = vld [vmem:[%s425 + $0x38] sm:$0xff]
        %v2143 = vld [vmem:[%s425 + $0x40] sm:$0xff]
        %v2144 = vld [vmem:[%s425 + $0x48] sm:$0xff]
        %v2145 = vld [vmem:[%s425 + $0x50] sm:$0xff]
        %v2146 = vld [vmem:[%s425 + $0x58] sm:$0xff]
        %v2147 = vld [vmem:[%s425 + $0x60] sm:$0xff]
        %v2148 = vld [vmem:[%s425 + $0x68] sm:$0xff]
        %v2149 = vld [vmem:[%s425 + $0x70] sm:$0xff]
        %v2150 = vld [vmem:[%s425 + $0x78] sm:$0xff]
        %v2151 = vld [vmem:[%s425 + $0x80] sm:$0xff]
        %v2152 = vld [vmem:[%s425 + $0x88] sm:$0xff]
        %v2153 = vld [vmem:[%s425 + $0x90] sm:$0xff]
        %v2154 = vld [vmem:[%s425 + $0x98] sm:$0xff]
        %v2155 = vld [vmem:[%s425 + $0xa0] sm:$0xff]
        %v2156 = vld [vmem:[%s425 + $0xa8] sm:$0xff]
        %v2157 = vld [vmem:[%s425 + $0xb0] sm:$0xff]
        %v2158 = vld [vmem:[%s425 + $0xb8] sm:$0xff]
        %v2159 = vld [vmem:[%s425 + $0xc0] sm:$0xff]
        %v2160 = vld [vmem:[%s425 + $0xc8] sm:$0xff]
        %v2161 = vld [vmem:[%s425 + $0xd0] sm:$0xff]
        %v2162 = vld [vmem:[%s425 + $0xd8] sm:$0xff]
        %v2163 = vld [vmem:[%s425 + $0xe0] sm:$0xff]
        %v2164 = vld [vmem:[%s425 + $0xe8] sm:$0xff]
        %v2165 = vld [vmem:[%s425 + $0xf0] sm:$0xff]
        %v2166 = vld [vmem:[%s425 + $0xf8] sm:$0xff]
        %v2167 = vld [vmem:[%s425 + $0x100] sm:$0xff]
        %v2168 = vld [vmem:[%s425 + $0x108] sm:$0xff]
        %v2169 = vld [vmem:[%s425 + $0x110] sm:$0xff]
        %v2170 = vld [vmem:[%s425 + $0x118] sm:$0xff]
        %v2171 = vld [vmem:[%s425 + $0x120] sm:$0xff]
        %v2172 = vld [vmem:[%s425 + $0x128] sm:$0xff]
        %v2173 = vld [vmem:[%s425 + $0x130] sm:$0xff]
        %v2174 = vld [vmem:[%s425 + $0x138] sm:$0xff]
        %v2175 = vld [vmem:[%s425 + $0x140] sm:$0xff]
        %v2176 = vld [vmem:[%s425 + $0x148] sm:$0xff]
        %v2177 = vld [vmem:[%s425 + $0x150] sm:$0xff]
        %v2178 = vld [vmem:[%s425 + $0x158] sm:$0xff]
        %v2179 = vld [vmem:[%s425 + $0x160] sm:$0xff]
        %v2180 = vld [vmem:[%s425 + $0x168] sm:$0xff]
        %v2181 = vld [vmem:[%s425 + $0x170] sm:$0xff]
        %v2182 = vld [vmem:[%s425 + $0x178] sm:$0xff]
        %v2183 = vld [vmem:[%s425 + $0x180] sm:$0xff]
        %v2184 = vld [vmem:[%s425 + $0x188] sm:$0xff]
        %v2185 = vld [vmem:[%s425 + $0x190] sm:$0xff]
        %v2186 = vld [vmem:[%s425 + $0x198] sm:$0xff]
        %v2187 = vld [vmem:[%s425 + $0x1a0] sm:$0xff]
        %v2188 = vld [vmem:[%s425 + $0x1a8] sm:$0xff]
        %v2189 = vld [vmem:[%s425 + $0x1b0] sm:$0xff]
        %v2190 = vld [vmem:[%s425 + $0x1b8] sm:$0xff]
        %v2191 = vld [vmem:[%s425 + $0x1c0] sm:$0xff]
        %v2192 = vld [vmem:[%s425 + $0x1c8] sm:$0xff]
        %v2193 = vld [vmem:[%s425 + $0x1d0] sm:$0xff]
        %v2194 = vld [vmem:[%s425 + $0x1d8] sm:$0xff]
        %v2195 = vld [vmem:[%s425 + $0x1e0] sm:$0xff]
        %v2196 = vld [vmem:[%s425 + $0x1e8] sm:$0xff]
        %v2197 = vld [vmem:[%s425 + $0x1f0] sm:$0xff]
        %v2198 = vld [vmem:[%s425 + $0x1f8] sm:$0xff]
        %v2199 = vld [vmem:[%s425 + $0x200] sm:$0xff]
        %v2200 = vld [vmem:[%s425 + $0x208] sm:$0xff]
        %v2201 = vld [vmem:[%s425 + $0x210] sm:$0xff]
        %v2202 = vld [vmem:[%s425 + $0x218] sm:$0xff]
        %v2203 = vld [vmem:[%s425 + $0x220] sm:$0xff]
        %v2204 = vld [vmem:[%s425 + $0x228] sm:$0xff]
        %v2205 = vld [vmem:[%s425 + $0x230] sm:$0xff]
        %v2206 = vld [vmem:[%s425 + $0x238] sm:$0xff]
        %v2207 = vld [vmem:[%s425 + $0x240] sm:$0xff]
        %v2208 = vld [vmem:[%s425 + $0x248] sm:$0xff]
        %v2209 = vld [vmem:[%s425 + $0x250] sm:$0xff]
        %v2210 = vld [vmem:[%s425 + $0x258] sm:$0xff]
        %v2211 = vld [vmem:[%s425 + $0x260] sm:$0xff]
        %v2212 = vld [vmem:[%s425 + $0x268] sm:$0xff]
        %v2213 = vld [vmem:[%s425 + $0x270] sm:$0xff]
        %v2214 = vld [vmem:[%s425 + $0x278] sm:$0xff]
        %v2215 = vld [vmem:[%s425 + $0x280] sm:$0xff]
        %v2216 = vld [vmem:[%s425 + $0x288] sm:$0xff]
        %v2217 = vld [vmem:[%s425 + $0x290] sm:$0xff]
        %v2218 = vld [vmem:[%s425 + $0x298] sm:$0xff]
        %v2219 = vld [vmem:[%s425 + $0x2a0] sm:$0xff]
        %v2220 = vld [vmem:[%s425 + $0x2a8] sm:$0xff]
        %v2221 = vld [vmem:[%s425 + $0x2b0] sm:$0xff]
        %v2222 = vld [vmem:[%s425 + $0x2b8] sm:$0xff]
        %v2223 = vld [vmem:[%s425 + $0x2c0] sm:$0xff]
        %v2224 = vld [vmem:[%s425 + $0x2c8] sm:$0xff]
        %v2225 = vld [vmem:[%s425 + $0x2d0] sm:$0xff]
        %v2226 = vld [vmem:[%s425 + $0x2d8] sm:$0xff]
        %v2227 = vld [vmem:[%s425 + $0x2e0] sm:$0xff]
        %v2228 = vld [vmem:[%s425 + $0x2e8] sm:$0xff]
        %v2229 = vld [vmem:[%s425 + $0x2f0] sm:$0xff]
        %v2230 = vld [vmem:[%s425 + $0x2f8] sm:$0xff]
        %v2231 = vld [vmem:[%s425 + $0x300] sm:$0xff]
        %v2232 = vld [vmem:[%s425 + $0x308] sm:$0xff]
        %v2233 = vld [vmem:[%s425 + $0x310] sm:$0xff]
        %v2234 = vld [vmem:[%s425 + $0x318] sm:$0xff]
        %v2235 = vld [vmem:[%s425 + $0x320] sm:$0xff]
        %v2236 = vld [vmem:[%s425 + $0x328] sm:$0xff]
        %v2237 = vld [vmem:[%s425 + $0x330] sm:$0xff]
        %v2238 = vld [vmem:[%s425 + $0x338] sm:$0xff]
        %v2239 = vld [vmem:[%s425 + $0x340] sm:$0xff]
        %v2240 = vld [vmem:[%s425 + $0x348] sm:$0xff]
        %v2241 = vld [vmem:[%s425 + $0x350] sm:$0xff]
        %v2242 = vld [vmem:[%s425 + $0x358] sm:$0xff]
        %v2243 = vld [vmem:[%s425 + $0x360] sm:$0xff]
        %v2244 = vld [vmem:[%s425 + $0x368] sm:$0xff]
        %v2245 = vld [vmem:[%s425 + $0x370] sm:$0xff]
        %v2246 = vld [vmem:[%s425 + $0x378] sm:$0xff]
        %v2247 = vld [vmem:[%s425 + $0x380] sm:$0xff]
        %v2248 = vld [vmem:[%s425 + $0x388] sm:$0xff]
        %v2249 = vld [vmem:[%s425 + $0x390] sm:$0xff]
        %v2250 = vld [vmem:[%s425 + $0x398] sm:$0xff]
        %v2251 = vld [vmem:[%s425 + $0x3a0] sm:$0xff]
        %v2252 = vld [vmem:[%s425 + $0x3a8] sm:$0xff]
        %v2253 = vld [vmem:[%s425 + $0x3b0] sm:$0xff]
        %v2254 = vld [vmem:[%s425 + $0x3b8] sm:$0xff]
        %v2255 = vld [vmem:[%s425 + $0x3c0] sm:$0xff]
        %v2256 = vld [vmem:[%s425 + $0x3c8] sm:$0xff]
        %v2257 = vld [vmem:[%s425 + $0x3d0] sm:$0xff]
        %v2258 = vld [vmem:[%s425 + $0x3d8] sm:$0xff]
        %v2259 = vld [vmem:[%s425 + $0x3e0] sm:$0xff]
        %v2260 = vld [vmem:[%s425 + $0x3e8] sm:$0xff]
        %v2261 = vld [vmem:[%s425 + $0x3f0] sm:$0xff]
        %v2262 = vld [vmem:[%s425 + $0x3f8] sm:$0xff]
        %v2391 = vunpack.c.l.b16 %v2135
        %v2392 = vunpack.c.h.b16 %v2135
        %v2393 = vunpack.c.l.b16 %v2136
        %v2394 = vunpack.c.h.b16 %v2136
        %v2395 = vunpack.c.l.b16 %v2137
        %v2396 = vunpack.c.h.b16 %v2137
        %v2397 = vunpack.c.l.b16 %v2138
        %v2398 = vunpack.c.h.b16 %v2138
        %v2399 = vunpack.c.l.b16 %v2139
        %v2400 = vunpack.c.h.b16 %v2139
        %v2401 = vunpack.c.l.b16 %v2140
        %v2402 = vunpack.c.h.b16 %v2140
        %v2403 = vunpack.c.l.b16 %v2141
        %v2404 = vunpack.c.h.b16 %v2141
        %v2405 = vunpack.c.l.b16 %v2142
        %v2406 = vunpack.c.h.b16 %v2142
        %v2407 = vunpack.c.l.b16 %v2143
        %v2408 = vunpack.c.h.b16 %v2143
        %v2409 = vunpack.c.l.b16 %v2144
        %v2410 = vunpack.c.h.b16 %v2144
        %v2411 = vunpack.c.l.b16 %v2145
        %v2412 = vunpack.c.h.b16 %v2145
        %v2413 = vunpack.c.l.b16 %v2146
        %v2414 = vunpack.c.h.b16 %v2146
        %v2415 = vunpack.c.l.b16 %v2147
        %v2416 = vunpack.c.h.b16 %v2147
        %v2417 = vunpack.c.l.b16 %v2148
        %v2418 = vunpack.c.h.b16 %v2148
        %v2419 = vunpack.c.l.b16 %v2149
        %v2420 = vunpack.c.h.b16 %v2149
        %v2421 = vunpack.c.l.b16 %v2150
        %v2422 = vunpack.c.h.b16 %v2150
        %v2423 = vunpack.c.l.b16 %v2151
        %v2424 = vunpack.c.h.b16 %v2151
        %v2425 = vunpack.c.l.b16 %v2152
        %v2426 = vunpack.c.h.b16 %v2152
        %v2427 = vunpack.c.l.b16 %v2153
        %v2428 = vunpack.c.h.b16 %v2153
        %v2429 = vunpack.c.l.b16 %v2154
        %v2430 = vunpack.c.h.b16 %v2154
        %v2431 = vunpack.c.l.b16 %v2155
        %v2432 = vunpack.c.h.b16 %v2155
        %v2433 = vunpack.c.l.b16 %v2156
        %v2434 = vunpack.c.h.b16 %v2156
        %v2435 = vunpack.c.l.b16 %v2157
        %v2436 = vunpack.c.h.b16 %v2157
        %v2437 = vunpack.c.l.b16 %v2158
        %v2438 = vunpack.c.h.b16 %v2158
        %v2439 = vunpack.c.l.b16 %v2159
        %v2440 = vunpack.c.h.b16 %v2159
        %v2441 = vunpack.c.l.b16 %v2160
        %v2442 = vunpack.c.h.b16 %v2160
        %v2443 = vunpack.c.l.b16 %v2161
        %v2444 = vunpack.c.h.b16 %v2161
        %v2445 = vunpack.c.l.b16 %v2162
        %v2446 = vunpack.c.h.b16 %v2162
        %v2447 = vunpack.c.l.b16 %v2163
        %v2448 = vunpack.c.h.b16 %v2163
        %v2449 = vunpack.c.l.b16 %v2164
        %v2450 = vunpack.c.h.b16 %v2164
        %v2451 = vunpack.c.l.b16 %v2165
        %v2452 = vunpack.c.h.b16 %v2165
        %v2453 = vunpack.c.l.b16 %v2166
        %v2454 = vunpack.c.h.b16 %v2166
        %v2455 = vunpack.c.l.b16 %v2167
        %v2456 = vunpack.c.h.b16 %v2167
        %v2457 = vunpack.c.l.b16 %v2168
        %v2458 = vunpack.c.h.b16 %v2168
        %v2459 = vunpack.c.l.b16 %v2169
        %v2460 = vunpack.c.h.b16 %v2169
        %v2461 = vunpack.c.l.b16 %v2170
        %v2462 = vunpack.c.h.b16 %v2170
        %v2463 = vunpack.c.l.b16 %v2171
        %v2464 = vunpack.c.h.b16 %v2171
        %v2465 = vunpack.c.l.b16 %v2172
        %v2466 = vunpack.c.h.b16 %v2172
        %v2467 = vunpack.c.l.b16 %v2173
        %v2468 = vunpack.c.h.b16 %v2173
        %v2469 = vunpack.c.l.b16 %v2174
        %v2470 = vunpack.c.h.b16 %v2174
        %v2471 = vunpack.c.l.b16 %v2175
        %v2472 = vunpack.c.h.b16 %v2175
        %v2473 = vunpack.c.l.b16 %v2176
        %v2474 = vunpack.c.h.b16 %v2176
        %v2475 = vunpack.c.l.b16 %v2177
        %v2476 = vunpack.c.h.b16 %v2177
        %v2477 = vunpack.c.l.b16 %v2178
        %v2478 = vunpack.c.h.b16 %v2178
        %v2479 = vunpack.c.l.b16 %v2179
        %v2480 = vunpack.c.h.b16 %v2179
        %v2481 = vunpack.c.l.b16 %v2180
        %v2482 = vunpack.c.h.b16 %v2180
        %v2483 = vunpack.c.l.b16 %v2181
        %v2484 = vunpack.c.h.b16 %v2181
        %v2485 = vunpack.c.l.b16 %v2182
        %v2486 = vunpack.c.h.b16 %v2182
        %v2487 = vunpack.c.l.b16 %v2183
        %v2488 = vunpack.c.h.b16 %v2183
        %v2489 = vunpack.c.l.b16 %v2184
        %v2490 = vunpack.c.h.b16 %v2184
        %v2491 = vunpack.c.l.b16 %v2185
        %v2492 = vunpack.c.h.b16 %v2185
        %v2493 = vunpack.c.l.b16 %v2186
        %v2494 = vunpack.c.h.b16 %v2186
        %v2495 = vunpack.c.l.b16 %v2187
        %v2496 = vunpack.c.h.b16 %v2187
        %v2497 = vunpack.c.l.b16 %v2188
        %v2498 = vunpack.c.h.b16 %v2188
        %v2499 = vunpack.c.l.b16 %v2189
        %v2500 = vunpack.c.h.b16 %v2189
        %v2501 = vunpack.c.l.b16 %v2190
        %v2502 = vunpack.c.h.b16 %v2190
        %v2503 = vunpack.c.l.b16 %v2191
        %v2504 = vunpack.c.h.b16 %v2191
        %v2505 = vunpack.c.l.b16 %v2192
        %v2506 = vunpack.c.h.b16 %v2192
        %v2507 = vunpack.c.l.b16 %v2193
        %v2508 = vunpack.c.h.b16 %v2193
        %v2509 = vunpack.c.l.b16 %v2194
        %v2510 = vunpack.c.h.b16 %v2194
        %v2511 = vunpack.c.l.b16 %v2195
        %v2512 = vunpack.c.h.b16 %v2195
        %v2513 = vunpack.c.l.b16 %v2196
        %v2514 = vunpack.c.h.b16 %v2196
        %v2515 = vunpack.c.l.b16 %v2197
        %v2516 = vunpack.c.h.b16 %v2197
        %v2517 = vunpack.c.l.b16 %v2198
        %v2518 = vunpack.c.h.b16 %v2198
        %v2519 = vunpack.c.l.b16 %v2199
        %v2520 = vunpack.c.h.b16 %v2199
        %v2521 = vunpack.c.l.b16 %v2200
        %v2522 = vunpack.c.h.b16 %v2200
        %v2523 = vunpack.c.l.b16 %v2201
        %v2524 = vunpack.c.h.b16 %v2201
        %v2525 = vunpack.c.l.b16 %v2202
        %v2526 = vunpack.c.h.b16 %v2202
        %v2527 = vunpack.c.l.b16 %v2203
        %v2528 = vunpack.c.h.b16 %v2203
        %v2529 = vunpack.c.l.b16 %v2204
        %v2530 = vunpack.c.h.b16 %v2204
        %v2531 = vunpack.c.l.b16 %v2205
        %v2532 = vunpack.c.h.b16 %v2205
        %v2533 = vunpack.c.l.b16 %v2206
        %v2534 = vunpack.c.h.b16 %v2206
        %v2535 = vunpack.c.l.b16 %v2207
        %v2536 = vunpack.c.h.b16 %v2207
        %v2537 = vunpack.c.l.b16 %v2208
        %v2538 = vunpack.c.h.b16 %v2208
        %v2539 = vunpack.c.l.b16 %v2209
        %v2540 = vunpack.c.h.b16 %v2209
        %v2541 = vunpack.c.l.b16 %v2210
        %v2542 = vunpack.c.h.b16 %v2210
        %v2543 = vunpack.c.l.b16 %v2211
        %v2544 = vunpack.c.h.b16 %v2211
        %v2545 = vunpack.c.l.b16 %v2212
        %v2546 = vunpack.c.h.b16 %v2212
        %v2547 = vunpack.c.l.b16 %v2213
        %v2548 = vunpack.c.h.b16 %v2213
        %v2549 = vunpack.c.l.b16 %v2214
        %v2550 = vunpack.c.h.b16 %v2214
        %v2551 = vunpack.c.l.b16 %v2215
        %v2552 = vunpack.c.h.b16 %v2215
        %v2553 = vunpack.c.l.b16 %v2216
        %v2554 = vunpack.c.h.b16 %v2216
        %v2555 = vunpack.c.l.b16 %v2217
        %v2556 = vunpack.c.h.b16 %v2217
        %v2557 = vunpack.c.l.b16 %v2218
        %v2558 = vunpack.c.h.b16 %v2218
        %v2559 = vunpack.c.l.b16 %v2219
        %v2560 = vunpack.c.h.b16 %v2219
        %v2561 = vunpack.c.l.b16 %v2220
        %v2562 = vunpack.c.h.b16 %v2220
        %v2563 = vunpack.c.l.b16 %v2221
        %v2564 = vunpack.c.h.b16 %v2221
        %v2565 = vunpack.c.l.b16 %v2222
        %v2566 = vunpack.c.h.b16 %v2222
        %v2567 = vunpack.c.l.b16 %v2223
        %v2568 = vunpack.c.h.b16 %v2223
        %v2569 = vunpack.c.l.b16 %v2224
        %v2570 = vunpack.c.h.b16 %v2224
        %v2571 = vunpack.c.l.b16 %v2225
        %v2572 = vunpack.c.h.b16 %v2225
        %v2573 = vunpack.c.l.b16 %v2226
        %v2574 = vunpack.c.h.b16 %v2226
        %v2575 = vunpack.c.l.b16 %v2227
        %v2576 = vunpack.c.h.b16 %v2227
        %v2577 = vunpack.c.l.b16 %v2228
        %v2578 = vunpack.c.h.b16 %v2228
        %v2579 = vunpack.c.l.b16 %v2229
        %v2580 = vunpack.c.h.b16 %v2229
        %v2581 = vunpack.c.l.b16 %v2230
        %v2582 = vunpack.c.h.b16 %v2230
        %v2583 = vunpack.c.l.b16 %v2231
        %v2584 = vunpack.c.h.b16 %v2231
        %v2585 = vunpack.c.l.b16 %v2232
        %v2586 = vunpack.c.h.b16 %v2232
        %v2587 = vunpack.c.l.b16 %v2233
        %v2588 = vunpack.c.h.b16 %v2233
        %v2589 = vunpack.c.l.b16 %v2234
        %v2590 = vunpack.c.h.b16 %v2234
        %v2591 = vunpack.c.l.b16 %v2235
        %v2592 = vunpack.c.h.b16 %v2235
        %v2593 = vunpack.c.l.b16 %v2236
        %v2594 = vunpack.c.h.b16 %v2236
        %v2595 = vunpack.c.l.b16 %v2237
        %v2596 = vunpack.c.h.b16 %v2237
        %v2597 = vunpack.c.l.b16 %v2238
        %v2598 = vunpack.c.h.b16 %v2238
        %v2599 = vunpack.c.l.b16 %v2239
        %v2600 = vunpack.c.h.b16 %v2239
        %v2601 = vunpack.c.l.b16 %v2240
        %v2602 = vunpack.c.h.b16 %v2240
        %v2603 = vunpack.c.l.b16 %v2241
        %v2604 = vunpack.c.h.b16 %v2241
        %v2605 = vunpack.c.l.b16 %v2242
        %v2606 = vunpack.c.h.b16 %v2242
        %v2607 = vunpack.c.l.b16 %v2243
        %v2608 = vunpack.c.h.b16 %v2243
        %v2609 = vunpack.c.l.b16 %v2244
        %v2610 = vunpack.c.h.b16 %v2244
        %v2611 = vunpack.c.l.b16 %v2245
        %v2612 = vunpack.c.h.b16 %v2245
        %v2613 = vunpack.c.l.b16 %v2246
        %v2614 = vunpack.c.h.b16 %v2246
        %v2615 = vunpack.c.l.b16 %v2247
        %v2616 = vunpack.c.h.b16 %v2247
        %v2617 = vunpack.c.l.b16 %v2248
        %v2618 = vunpack.c.h.b16 %v2248
        %v2619 = vunpack.c.l.b16 %v2249
        %v2620 = vunpack.c.h.b16 %v2249
        %v2621 = vunpack.c.l.b16 %v2250
        %v2622 = vunpack.c.h.b16 %v2250
        %v2623 = vunpack.c.l.b16 %v2251
        %v2624 = vunpack.c.h.b16 %v2251
        %v2625 = vunpack.c.l.b16 %v2252
        %v2626 = vunpack.c.h.b16 %v2252
        %v2627 = vunpack.c.l.b16 %v2253
        %v2628 = vunpack.c.h.b16 %v2253
        %v2629 = vunpack.c.l.b16 %v2254
        %v2630 = vunpack.c.h.b16 %v2254
        %v2631 = vunpack.c.l.b16 %v2255
        %v2632 = vunpack.c.h.b16 %v2255
        %v2633 = vunpack.c.l.b16 %v2256
        %v2634 = vunpack.c.h.b16 %v2256
        %v2635 = vunpack.c.l.b16 %v2257
        %v2636 = vunpack.c.h.b16 %v2257
        %v2637 = vunpack.c.l.b16 %v2258
        %v2638 = vunpack.c.h.b16 %v2258
        %v2639 = vunpack.c.l.b16 %v2259
        %v2640 = vunpack.c.h.b16 %v2259
        %v2641 = vunpack.c.l.b16 %v2260
        %v2642 = vunpack.c.h.b16 %v2260
        %v2643 = vunpack.c.l.b16 %v2261
        %v2644 = vunpack.c.h.b16 %v2261
        %v2645 = vunpack.c.l.b16 %v2262
        %v2646 = vunpack.c.h.b16 %v2262
        %v2647 = vpack.c.b16 %v2393, %v2391
        %v2648 = vpack.c.b16 %v2394, %v2392
        %v2649 = vpack.c.b16 %v2397, %v2395
        %v2650 = vpack.c.b16 %v2398, %v2396
        %v2651 = vpack.c.b16 %v2401, %v2399
        %v2652 = vpack.c.b16 %v2402, %v2400
        %v2653 = vpack.c.b16 %v2405, %v2403
        %v2654 = vpack.c.b16 %v2406, %v2404
        %v2655 = vpack.c.b16 %v2409, %v2407
        %v2656 = vpack.c.b16 %v2410, %v2408
        %v2657 = vpack.c.b16 %v2413, %v2411
        %v2658 = vpack.c.b16 %v2414, %v2412
        %v2659 = vpack.c.b16 %v2417, %v2415
        %v2660 = vpack.c.b16 %v2418, %v2416
        %v2661 = vpack.c.b16 %v2421, %v2419
        %v2662 = vpack.c.b16 %v2422, %v2420
        %v2663 = vpack.c.b16 %v2425, %v2423
        %v2664 = vpack.c.b16 %v2426, %v2424
        %v2665 = vpack.c.b16 %v2429, %v2427
        %v2666 = vpack.c.b16 %v2430, %v2428
        %v2667 = vpack.c.b16 %v2433, %v2431
        %v2668 = vpack.c.b16 %v2434, %v2432
        %v2669 = vpack.c.b16 %v2437, %v2435
        %v2670 = vpack.c.b16 %v2438, %v2436
        %v2671 = vpack.c.b16 %v2441, %v2439
        %v2672 = vpack.c.b16 %v2442, %v2440
        %v2673 = vpack.c.b16 %v2445, %v2443
        %v2674 = vpack.c.b16 %v2446, %v2444
        %v2675 = vpack.c.b16 %v2449, %v2447
        %v2676 = vpack.c.b16 %v2450, %v2448
        %v2677 = vpack.c.b16 %v2453, %v2451
        %v2678 = vpack.c.b16 %v2454, %v2452
        %v2679 = vpack.c.b16 %v2457, %v2455
        %v2680 = vpack.c.b16 %v2458, %v2456
        %v2681 = vpack.c.b16 %v2461, %v2459
        %v2682 = vpack.c.b16 %v2462, %v2460
        %v2683 = vpack.c.b16 %v2465, %v2463
        %v2684 = vpack.c.b16 %v2466, %v2464
        %v2685 = vpack.c.b16 %v2469, %v2467
        %v2686 = vpack.c.b16 %v2470, %v2468
        %v2687 = vpack.c.b16 %v2473, %v2471
        %v2688 = vpack.c.b16 %v2474, %v2472
        %v2689 = vpack.c.b16 %v2477, %v2475
        %v2690 = vpack.c.b16 %v2478, %v2476
        %v2691 = vpack.c.b16 %v2481, %v2479
        %v2692 = vpack.c.b16 %v2482, %v2480
        %v2693 = vpack.c.b16 %v2485, %v2483
        %v2694 = vpack.c.b16 %v2486, %v2484
        %v2695 = vpack.c.b16 %v2489, %v2487
        %v2696 = vpack.c.b16 %v2490, %v2488
        %v2697 = vpack.c.b16 %v2493, %v2491
        %v2698 = vpack.c.b16 %v2494, %v2492
        %v2699 = vpack.c.b16 %v2497, %v2495
        %v2700 = vpack.c.b16 %v2498, %v2496
        %v2701 = vpack.c.b16 %v2501, %v2499
        %v2702 = vpack.c.b16 %v2502, %v2500
        %v2703 = vpack.c.b16 %v2505, %v2503
        %v2704 = vpack.c.b16 %v2506, %v2504
        %v2705 = vpack.c.b16 %v2509, %v2507
        %v2706 = vpack.c.b16 %v2510, %v2508
        %v2707 = vpack.c.b16 %v2513, %v2511
        %v2708 = vpack.c.b16 %v2514, %v2512
        %v2709 = vpack.c.b16 %v2517, %v2515
        %v2710 = vpack.c.b16 %v2518, %v2516
        %v2711 = vpack.c.b16 %v2521, %v2519
        %v2712 = vpack.c.b16 %v2522, %v2520
        %v2713 = vpack.c.b16 %v2525, %v2523
        %v2714 = vpack.c.b16 %v2526, %v2524
        %v2715 = vpack.c.b16 %v2529, %v2527
        %v2716 = vpack.c.b16 %v2530, %v2528
        %v2717 = vpack.c.b16 %v2533, %v2531
        %v2718 = vpack.c.b16 %v2534, %v2532
        %v2719 = vpack.c.b16 %v2537, %v2535
        %v2720 = vpack.c.b16 %v2538, %v2536
        %v2721 = vpack.c.b16 %v2541, %v2539
        %v2722 = vpack.c.b16 %v2542, %v2540
        %v2723 = vpack.c.b16 %v2545, %v2543
        %v2724 = vpack.c.b16 %v2546, %v2544
        %v2725 = vpack.c.b16 %v2549, %v2547
        %v2726 = vpack.c.b16 %v2550, %v2548
        %v2727 = vpack.c.b16 %v2553, %v2551
        %v2728 = vpack.c.b16 %v2554, %v2552
        %v2729 = vpack.c.b16 %v2557, %v2555
        %v2730 = vpack.c.b16 %v2558, %v2556
        %v2731 = vpack.c.b16 %v2561, %v2559
        %v2732 = vpack.c.b16 %v2562, %v2560
        %v2733 = vpack.c.b16 %v2565, %v2563
        %v2734 = vpack.c.b16 %v2566, %v2564
        %v2735 = vpack.c.b16 %v2569, %v2567
        %v2736 = vpack.c.b16 %v2570, %v2568
        %v2737 = vpack.c.b16 %v2573, %v2571
        %v2738 = vpack.c.b16 %v2574, %v2572
        %v2739 = vpack.c.b16 %v2577, %v2575
        %v2740 = vpack.c.b16 %v2578, %v2576
        %v2741 = vpack.c.b16 %v2581, %v2579
        %v2742 = vpack.c.b16 %v2582, %v2580
        %v2743 = vpack.c.b16 %v2585, %v2583
        %v2744 = vpack.c.b16 %v2586, %v2584
        %v2745 = vpack.c.b16 %v2589, %v2587
        %v2746 = vpack.c.b16 %v2590, %v2588
        %v2747 = vpack.c.b16 %v2593, %v2591
        %v2748 = vpack.c.b16 %v2594, %v2592
        %v2749 = vpack.c.b16 %v2597, %v2595
        %v2750 = vpack.c.b16 %v2598, %v2596
        %v2751 = vpack.c.b16 %v2601, %v2599
        %v2752 = vpack.c.b16 %v2602, %v2600
        %v2753 = vpack.c.b16 %v2605, %v2603
        %v2754 = vpack.c.b16 %v2606, %v2604
        %v2755 = vpack.c.b16 %v2609, %v2607
        %v2756 = vpack.c.b16 %v2610, %v2608
        %v2757 = vpack.c.b16 %v2613, %v2611
        %v2758 = vpack.c.b16 %v2614, %v2612
        %v2759 = vpack.c.b16 %v2617, %v2615
        %v2760 = vpack.c.b16 %v2618, %v2616
        %v2761 = vpack.c.b16 %v2621, %v2619
        %v2762 = vpack.c.b16 %v2622, %v2620
        %v2763 = vpack.c.b16 %v2625, %v2623
        %v2764 = vpack.c.b16 %v2626, %v2624
        %v2765 = vpack.c.b16 %v2629, %v2627
        %v2766 = vpack.c.b16 %v2630, %v2628
        %v2767 = vpack.c.b16 %v2633, %v2631
        %v2768 = vpack.c.b16 %v2634, %v2632
        %v2769 = vpack.c.b16 %v2637, %v2635
        %v2770 = vpack.c.b16 %v2638, %v2636
        %v2771 = vpack.c.b16 %v2641, %v2639
        %v2772 = vpack.c.b16 %v2642, %v2640
        %v2773 = vpack.c.b16 %v2645, %v2643
        %v2774 = vpack.c.b16 %v2646, %v2644
        %2903 = vmatprep.subr.bf16.mxu0 %v2662
        %2904 = vmatpush1.bf16.msra.mxu0 %v2661
        %2905 = vmatprep.subr.bf16.mxu0 %v2660
        %2906 = vmatpush1.bf16.msra.mxu0 %v2659
        %2907 = vmatprep.subr.bf16.mxu0 %v2658
        %2908 = vmatpush1.bf16.msra.mxu0 %v2657
        %2909 = vmatprep.subr.bf16.mxu0 %v2656
        %2910 = vmatpush1.bf16.msra.mxu0 %v2655
        %2911 = vmatprep.subr.bf16.mxu0 %v2654
        %2912 = vmatpush1.bf16.msra.mxu0 %v2653
        %2913 = vmatprep.subr.bf16.mxu0 %v2652
        %2914 = vmatpush1.bf16.msra.mxu0 %v2651
        %2915 = vmatprep.subr.bf16.mxu0 %v2650
        %2916 = vmatpush1.bf16.msra.mxu0 %v2649
        %2917 = vmatprep.subr.bf16.mxu0 %v2648
        %2918 = vmatpush1.bf16.msra.mxu0 %v2647
        %2919 = vmatprep.subr.bf16.mxu0 %v2678
        %2920 = vmatpush2.bf16.msra.mxu0 %v2677
        %2921 = vmatprep.subr.bf16.mxu0 %v2676
        %2922 = vmatpush2.bf16.msra.mxu0 %v2675
        %2923 = vmatprep.subr.bf16.mxu0 %v2674
        %2924 = vmatpush2.bf16.msra.mxu0 %v2673
        %2925 = vmatprep.subr.bf16.mxu0 %v2672
        %2926 = vmatpush2.bf16.msra.mxu0 %v2671
        %2927 = vmatprep.subr.bf16.mxu0 %v2670
        %2928 = vmatpush2.bf16.msra.mxu0 %v2669
        %2929 = vmatprep.subr.bf16.mxu0 %v2668
        %2930 = vmatpush2.bf16.msra.mxu0 %v2667
        %2931 = vmatprep.subr.bf16.mxu0 %v2666
        %2932 = vmatpush2.bf16.msra.mxu0 %v2665
        %2933 = vmatprep.subr.bf16.mxu0 %v2664
        %2934 = vmatpush2.bf16.msra.mxu0 %v2663
        %2935 = vmatprep.mubr.bf16.mxu0 %v2124
        %2936 = vmatmul.mubr.bf16.gmra.mxu0 %v2123
        %v2937 = vpop.f32.mrf.mxu0
        %v2938 = vadd.f32 0.0, %v2937
        %v2939 = vpop.f32.mrf.mxu0
        %v2940 = vadd.f32 0.0, %v2939
        %v2941 = vpop.f32.mrf.mxu0
        %v2942 = vadd.f32 0.0, %v2941
        %v2943 = vpop.f32.mrf.mxu0
        %v2944 = vadd.f32 0.0, %v2943
        %2945 = vdwg.mxu0
        %2946 = vmatprep.subr.bf16.mxu0 %v2694
        %2947 = vmatpush1.bf16.msra.mxu0 %v2693
        %2948 = vmatprep.subr.bf16.mxu0 %v2692
        %2949 = vmatpush1.bf16.msra.mxu0 %v2691
        %2950 = vmatprep.subr.bf16.mxu0 %v2690
        %2951 = vmatpush1.bf16.msra.mxu0 %v2689
        %2952 = vmatprep.subr.bf16.mxu0 %v2688
        %2953 = vmatpush1.bf16.msra.mxu0 %v2687
        %2954 = vmatprep.subr.bf16.mxu0 %v2686
        %2955 = vmatpush1.bf16.msra.mxu0 %v2685
        %2956 = vmatprep.subr.bf16.mxu0 %v2684
        %2957 = vmatpush1.bf16.msra.mxu0 %v2683
        %2958 = vmatprep.subr.bf16.mxu0 %v2682
        %2959 = vmatpush1.bf16.msra.mxu0 %v2681
        %2960 = vmatprep.subr.bf16.mxu0 %v2680
        %2961 = vmatpush1.bf16.msra.mxu0 %v2679
        %2962 = vmatprep.subr.bf16.mxu0 %v2710
        %2963 = vmatpush2.bf16.msra.mxu0 %v2709
        %2964 = vmatprep.subr.bf16.mxu0 %v2708
        %2965 = vmatpush2.bf16.msra.mxu0 %v2707
        %2966 = vmatprep.subr.bf16.mxu0 %v2706
        %2967 = vmatpush2.bf16.msra.mxu0 %v2705
        %2968 = vmatprep.subr.bf16.mxu0 %v2704
        %2969 = vmatpush2.bf16.msra.mxu0 %v2703
        %2970 = vmatprep.subr.bf16.mxu0 %v2702
        %2971 = vmatpush2.bf16.msra.mxu0 %v2701
        %2972 = vmatprep.subr.bf16.mxu0 %v2700
        %2973 = vmatpush2.bf16.msra.mxu0 %v2699
        %2974 = vmatprep.subr.bf16.mxu0 %v2698
        %2975 = vmatpush2.bf16.msra.mxu0 %v2697
        %2976 = vmatprep.subr.bf16.mxu0 %v2696
        %2977 = vmatpush2.bf16.msra.mxu0 %v2695
        %2978 = vmatprep.mubr.bf16.mxu0 %v2126
        %2979 = vmatmul.mubr.bf16.gmra.mxu0 %v2125
        %v2980 = vpop.f32.mrf.mxu0
        %v2981 = vadd.f32 %v2938, %v2980
        %v2982 = vpop.f32.mrf.mxu0
        %v2983 = vadd.f32 %v2940, %v2982
        %v2984 = vpop.f32.mrf.mxu0
        %v2985 = vadd.f32 %v2942, %v2984
        %v2986 = vpop.f32.mrf.mxu0
        %v2987 = vadd.f32 %v2944, %v2986
        %2988 = vdwg.mxu0
        %2989 = vmatprep.subr.bf16.mxu0 %v2726
        %2990 = vmatpush1.bf16.msra.mxu0 %v2725
        %2991 = vmatprep.subr.bf16.mxu0 %v2724
        %2992 = vmatpush1.bf16.msra.mxu0 %v2723
        %2993 = vmatprep.subr.bf16.mxu0 %v2722
        %2994 = vmatpush1.bf16.msra.mxu0 %v2721
        %2995 = vmatprep.subr.bf16.mxu0 %v2720
        %2996 = vmatpush1.bf16.msra.mxu0 %v2719
        %2997 = vmatprep.subr.bf16.mxu0 %v2718
        %2998 = vmatpush1.bf16.msra.mxu0 %v2717
        %2999 = vmatprep.subr.bf16.mxu0 %v2716
        %3000 = vmatpush1.bf16.msra.mxu0 %v2715
        %3001 = vmatprep.subr.bf16.mxu0 %v2714
        %3002 = vmatpush1.bf16.msra.mxu0 %v2713
        %3003 = vmatprep.subr.bf16.mxu0 %v2712
        %3004 = vmatpush1.bf16.msra.mxu0 %v2711
        %3005 = vmatprep.subr.bf16.mxu0 %v2742
        %3006 = vmatpush2.bf16.msra.mxu0 %v2741
        %3007 = vmatprep.subr.bf16.mxu0 %v2740
        %3008 = vmatpush2.bf16.msra.mxu0 %v2739
        %3009 = vmatprep.subr.bf16.mxu0 %v2738
        %3010 = vmatpush2.bf16.msra.mxu0 %v2737
        %3011 = vmatprep.subr.bf16.mxu0 %v2736
        %3012 = vmatpush2.bf16.msra.mxu0 %v2735
        %3013 = vmatprep.subr.bf16.mxu0 %v2734
        %3014 = vmatpush2.bf16.msra.mxu0 %v2733
        %3015 = vmatprep.subr.bf16.mxu0 %v2732
        %3016 = vmatpush2.bf16.msra.mxu0 %v2731
        %3017 = vmatprep.subr.bf16.mxu0 %v2730
        %3018 = vmatpush2.bf16.msra.mxu0 %v2729
        %3019 = vmatprep.subr.bf16.mxu0 %v2728
        %3020 = vmatpush2.bf16.msra.mxu0 %v2727
        %3021 = vmatprep.mubr.bf16.mxu0 %v2128
        %3022 = vmatmul.mubr.bf16.gmra.mxu0 %v2127
        %v3023 = vpop.f32.mrf.mxu0
        %v3024 = vadd.f32 %v2981, %v3023
        %v3025 = vpop.f32.mrf.mxu0
        %v3026 = vadd.f32 %v2983, %v3025
        %v3027 = vpop.f32.mrf.mxu0
        %v3028 = vadd.f32 %v2985, %v3027
        %v3029 = vpop.f32.mrf.mxu0
        %v3030 = vadd.f32 %v2987, %v3029
        %3031 = vdwg.mxu0
        %3032 = vmatprep.subr.bf16.mxu0 %v2758
        %3033 = vmatpush1.bf16.msra.mxu0 %v2757
        %3034 = vmatprep.subr.bf16.mxu0 %v2756
        %3035 = vmatpush1.bf16.msra.mxu0 %v2755
        %3036 = vmatprep.subr.bf16.mxu0 %v2754
        %3037 = vmatpush1.bf16.msra.mxu0 %v2753
        %3038 = vmatprep.subr.bf16.mxu0 %v2752
        %3039 = vmatpush1.bf16.msra.mxu0 %v2751
        %3040 = vmatprep.subr.bf16.mxu0 %v2750
        %3041 = vmatpush1.bf16.msra.mxu0 %v2749
        %3042 = vmatprep.subr.bf16.mxu0 %v2748
        %3043 = vmatpush1.bf16.msra.mxu0 %v2747
        %3044 = vmatprep.subr.bf16.mxu0 %v2746
        %3045 = vmatpush1.bf16.msra.mxu0 %v2745
        %3046 = vmatprep.subr.bf16.mxu0 %v2744
        %3047 = vmatpush1.bf16.msra.mxu0 %v2743
        %3048 = vmatprep.subr.bf16.mxu0 %v2774
        %3049 = vmatpush2.bf16.msra.mxu0 %v2773
        %3050 = vmatprep.subr.bf16.mxu0 %v2772
        %3051 = vmatpush2.bf16.msra.mxu0 %v2771
        %3052 = vmatprep.subr.bf16.mxu0 %v2770
        %3053 = vmatpush2.bf16.msra.mxu0 %v2769
        %3054 = vmatprep.subr.bf16.mxu0 %v2768
        %3055 = vmatpush2.bf16.msra.mxu0 %v2767
        %3056 = vmatprep.subr.bf16.mxu0 %v2766
        %3057 = vmatpush2.bf16.msra.mxu0 %v2765
        %3058 = vmatprep.subr.bf16.mxu0 %v2764
        %3059 = vmatpush2.bf16.msra.mxu0 %v2763
        %3060 = vmatprep.subr.bf16.mxu0 %v2762
        %3061 = vmatpush2.bf16.msra.mxu0 %v2761
        %3062 = vmatprep.subr.bf16.mxu0 %v2760
        %3063 = vmatpush2.bf16.msra.mxu0 %v2759
        %3064 = vmatprep.mubr.bf16.mxu0 %v2130
        %3065 = vmatmul.mubr.bf16.gmra.mxu0 %v2129
        %v3066 = vpop.f32.mrf.mxu0
        %v3067 = vadd.f32 %v3024, %v3066
        %v3068 = vpop.f32.mrf.mxu0
        %v3069 = vadd.f32 %v3026, %v3068
        %v3070 = vpop.f32.mrf.mxu0
        %v3071 = vadd.f32 %v3028, %v3070
        %v3072 = vpop.f32.mrf.mxu0
        %v3073 = vadd.f32 %v3030, %v3072
        %3074 = vdwg.mxu0
        %v3075 = vadd.f32 %v2131, %v3067
        %v3076 = vadd.f32 %v2132, %v3069
        %v3077 = vadd.f32 %v2133, %v3071
        %v3078 = vadd.f32 %v2134, %v3073
        %3079 = vst [vmem:[#allocation4] sm:$0xff] %v3075
        %vm3080 = vcmask 793600
        %3081 = vst.msk [vmem:[#allocation4 + $0x8] sm:$0xff] %vm3080, %v3076
        %3082 = vst [vmem:[#allocation4 + $0x10] sm:$0xff] %v3077
        %3083 = vst.msk [vmem:[#allocation4 + $0x18] sm:$0xff] %vm3080, %v3078
        %p3084 = scmp.eq.s32.totalorder %s28, 8
        // Predicated region
        $region93: #{fwd.1} parent=67 // pred_check
          %p3085 = pneg %p3084
        $region94: #{fwd.1} parent=67 // pred_check_branch
          %3087 = sbr.rel (%p3085) target = $region96
        $region95: #{fwd.1} parent=67 // pred_region
          %v3088 = vld [vmem:[%s6 + $0x20] sm:$0xff]
          %v3089 = vld [vmem:[%s6 + $0x28] sm:$0xff]
          %v3090 = vld [vmem:[%s6 + $0x30] sm:$0xff]
          %v3091 = vld [vmem:[%s6 + $0x38] sm:$0xff]
          %v3092 = vld [vmem:[%s6 + $0x40] sm:$0xff]
          %v3093 = vld [vmem:[%s6 + $0x48] sm:$0xff]
          %v3094 = vld [vmem:[%s6 + $0x50] sm:$0xff]
          %v3095 = vld [vmem:[%s6 + $0x58] sm:$0xff]
          %v3096 = vld [vmem:[#allocation4] sm:$0xff]
          %v3097 = vld [vmem:[#allocation4 + $0x8] sm:$0xff]
          %v3098 = vld [vmem:[#allocation4 + $0x10] sm:$0xff]
          %v3099 = vld [vmem:[#allocation4 + $0x18] sm:$0xff]
          %3101 = vset.pattern.permute.xlu0 0
          %3102 = vperm.xlu0 %3101, %v3088
          %v3103 = vpop.permute.xlu0 %3102
          %3106 = vset.pattern.permute.xlu0 0
          %3107 = vperm.xlu0 %3106, %v3089
          %v3108 = vpop.permute.xlu0 %3107
          %v3110 = vadd.f32 %v3096, %v3103
          %v3111 = vadd.f32 %v3097, %v3103
          %v3112 = vadd.f32 %v3098, %v3108
          %v3113 = vadd.f32 %v3099, %v3108
          %v3114 = vpack.c.bf16 %v3112, %v3110
          %v3115 = vpack.c.bf16 %v3113, %v3111
          %v3116 = vld [vmem:[#allocation7] sm:$0xf]
          %v3117 = vld [vmem:[#allocation7 + $0x4] sm:$0xf]
          %v3118 = vld [vmem:[#allocation7 + $0x8] sm:$0xf]
          %v3119 = vld [vmem:[#allocation7 + $0xc] sm:$0xf]
          %v3120 = vld [vmem:[#allocation7 + $0x10] sm:$0xf]
          %v3121 = vld [vmem:[#allocation7 + $0x14] sm:$0xf]
          %v3122 = vld [vmem:[#allocation7 + $0x18] sm:$0xf]
          %v3123 = vld [vmem:[#allocation7 + $0x1c] sm:$0xf]
          %v3124 = vld [vmem:[#allocation7 + $0x20] sm:$0xf]
          %v3125 = vld [vmem:[#allocation7 + $0x24] sm:$0xf]
          %v3126 = vld [vmem:[#allocation7 + $0x28] sm:$0xf]
          %v3127 = vld [vmem:[#allocation7 + $0x2c] sm:$0xf]
          %v3128 = vld [vmem:[#allocation7 + $0x30] sm:$0xf]
          %v3129 = vld [vmem:[#allocation7 + $0x34] sm:$0xf]
          %v3130 = vld [vmem:[#allocation7 + $0x38] sm:$0xf]
          %v3131 = vld [vmem:[#allocation7 + $0x3c] sm:$0xf]
          %v3132 = vld [vmem:[#allocation7 + $0x40] sm:$0xf]
          %v3133 = vld [vmem:[#allocation7 + $0x44] sm:$0xf]
          %v3134 = vld [vmem:[#allocation7 + $0x48] sm:$0xf]
          %v3135 = vld [vmem:[#allocation7 + $0x4c] sm:$0xf]
          %v3136 = vld [vmem:[#allocation7 + $0x50] sm:$0xf]
          %v3137 = vld [vmem:[#allocation7 + $0x54] sm:$0xf]
          %v3138 = vld [vmem:[#allocation7 + $0x58] sm:$0xf]
          %v3139 = vld [vmem:[#allocation7 + $0x5c] sm:$0xf]
          %v3140 = vld [vmem:[#allocation7 + $0x60] sm:$0xf]
          %v3141 = vld [vmem:[#allocation7 + $0x64] sm:$0xf]
          %v3142 = vld [vmem:[#allocation7 + $0x68] sm:$0xf]
          %v3143 = vld [vmem:[#allocation7 + $0x6c] sm:$0xf]
          %v3144 = vld [vmem:[#allocation7 + $0x70] sm:$0x1]
          %v3174 = vunpack.c.l.b16 %v3116
          %v3175 = vunpack.c.l.b16 %v3117
          %v3176 = vunpack.c.l.b16 %v3118
          %v3177 = vunpack.c.l.b16 %v3119
          %v3178 = vunpack.c.l.b16 %v3120
          %v3179 = vunpack.c.l.b16 %v3121
          %v3180 = vunpack.c.l.b16 %v3122
          %v3181 = vunpack.c.l.b16 %v3123
          %v3182 = vunpack.c.l.b16 %v3124
          %v3183 = vunpack.c.l.b16 %v3125
          %v3184 = vunpack.c.l.b16 %v3126
          %v3185 = vunpack.c.l.b16 %v3127
          %v3186 = vunpack.c.l.b16 %v3128
          %v3187 = vunpack.c.l.b16 %v3129
          %v3188 = vunpack.c.l.b16 %v3130
          %v3189 = vunpack.c.l.b16 %v3131
          %v3190 = vunpack.c.l.b16 %v3132
          %v3191 = vunpack.c.l.b16 %v3133
          %v3192 = vunpack.c.l.b16 %v3134
          %v3193 = vunpack.c.l.b16 %v3135
          %v3194 = vunpack.c.l.b16 %v3136
          %v3195 = vunpack.c.l.b16 %v3137
          %v3196 = vunpack.c.l.b16 %v3138
          %v3197 = vunpack.c.l.b16 %v3139
          %v3198 = vunpack.c.l.b16 %v3140
          %v3199 = vunpack.c.l.b16 %v3141
          %v3200 = vunpack.c.l.b16 %v3142
          %v3201 = vunpack.c.l.b16 %v3143
          %v3202 = vunpack.c.l.b16 %v3144
          %v3203 = vpack.c.b16 %v3175, %v3174
          %v3204 = vpack.c.b16 %v3177, %v3176
          %v3205 = vpack.c.b16 %v3179, %v3178
          %v3206 = vpack.c.b16 %v3181, %v3180
          %v3207 = vpack.c.b16 %v3183, %v3182
          %v3208 = vpack.c.b16 %v3185, %v3184
          %v3209 = vpack.c.b16 %v3187, %v3186
          %v3210 = vpack.c.b16 %v3189, %v3188
          %v3211 = vpack.c.b16 %v3191, %v3190
          %v3212 = vpack.c.b16 %v3193, %v3192
          %v3213 = vpack.c.b16 %v3195, %v3194
          %v3214 = vpack.c.b16 %v3197, %v3196
          %v3215 = vpack.c.b16 %v3199, %v3198
          %v3216 = vpack.c.b16 %v3201, %v3200
          %v3217 = vpack.c.b16 %v3202, %v3202
          %v3233 = vsel %vm3080, %v3115, 0
          %vm3235 = vcmask 1040384
          %v3236 = vsel 0, 4294967295, 65535
          %v3237 = vsel %vm3235, %v3236, 0
          %v3239 = vand.u32 %v3217, %v3237
          %3241 = vmatprep.subr.bf16.mxu0 0
          %3242 = vmatpush1.bf16.msra.mxu0 %v3210
          %3243 = vmatprep.subr.bf16.mxu0 0
          %3244 = vmatpush1.bf16.msra.mxu0 %v3209
          %3245 = vmatprep.subr.bf16.mxu0 0
          %3246 = vmatpush1.bf16.msra.mxu0 %v3208
          %3247 = vmatprep.subr.bf16.mxu0 0
          %3248 = vmatpush1.bf16.msra.mxu0 %v3207
          %3249 = vmatprep.subr.bf16.mxu0 0
          %3250 = vmatpush1.bf16.msra.mxu0 %v3206
          %3251 = vmatprep.subr.bf16.mxu0 0
          %3252 = vmatpush1.bf16.msra.mxu0 %v3205
          %3253 = vmatprep.subr.bf16.mxu0 0
          %3254 = vmatpush1.bf16.msra.mxu0 %v3204
          %3255 = vmatprep.subr.bf16.mxu0 0
          %3256 = vmatpush1.bf16.msra.mxu0 %v3203
          %3257 = vmatprep.subr.bf16.mxu0 0
          %3258 = vmatpush2.bf16.msra.mxu0 0
          %3259 = vmatprep.subr.bf16.mxu0 0
          %3260 = vmatpush2.bf16.msra.mxu0 %v3239
          %3261 = vmatprep.subr.bf16.mxu0 0
          %3262 = vmatpush2.bf16.msra.mxu0 %v3216
          %3263 = vmatprep.subr.bf16.mxu0 0
          %3264 = vmatpush2.bf16.msra.mxu0 %v3215
          %3265 = vmatprep.subr.bf16.mxu0 0
          %3266 = vmatpush2.bf16.msra.mxu0 %v3214
          %3267 = vmatprep.subr.bf16.mxu0 0
          %3268 = vmatpush2.bf16.msra.mxu0 %v3213
          %3269 = vmatprep.subr.bf16.mxu0 0
          %3270 = vmatpush2.bf16.msra.mxu0 %v3212
          %3271 = vmatprep.subr.bf16.mxu0 0
          %3272 = vmatpush2.bf16.msra.mxu0 %v3211
          %3273 = vmatprep.mubr.bf16.mxu0 %v3233
          %3274 = vmatmul.mubr.bf16.gmra.mxu0 %v3114
          %v3275 = vpop.f32.mrf.mxu0
          %v3276 = vadd.f32 0.0, %v3275
          %v3277 = vpop.f32.mrf.mxu0
          %v3278 = vpop.f32.mrf.mxu0
          %v3279 = vadd.f32 0.0, %v3278
          %v3280 = vpop.f32.mrf.mxu0
          %3281 = vdwg.mxu0
          %s3282 = scalar_lea.vmem [#allocation7], 116
          %v3283 = vld [vmem:[%s3282] sm:$0xf]
          %v3284 = vld [vmem:[%s3282 + $0x4] sm:$0xf]
          %v3285 = vld [vmem:[%s3282 + $0x8] sm:$0xf]
          %v3286 = vld [vmem:[%s3282 + $0xc] sm:$0xf]
          %v3287 = vld [vmem:[%s3282 + $0x10] sm:$0xf]
          %v3288 = vld [vmem:[%s3282 + $0x14] sm:$0xf]
          %v3289 = vld [vmem:[%s3282 + $0x18] sm:$0xf]
          %v3290 = vld [vmem:[%s3282 + $0x1c] sm:$0xf]
          %v3291 = vld [vmem:[%s3282 + $0x20] sm:$0xf]
          %v3292 = vld [vmem:[%s3282 + $0x24] sm:$0xf]
          %v3293 = vld [vmem:[%s3282 + $0x28] sm:$0xf]
          %v3294 = vld [vmem:[%s3282 + $0x2c] sm:$0xf]
          %v3295 = vld [vmem:[%s3282 + $0x30] sm:$0xf]
          %v3296 = vld [vmem:[%s3282 + $0x34] sm:$0xf]
          %v3297 = vld [vmem:[%s3282 + $0x38] sm:$0xf]
          %v3298 = vld [vmem:[%s3282 + $0x3c] sm:$0xf]
          %v3299 = vld [vmem:[%s3282 + $0x40] sm:$0xf]
          %v3300 = vld [vmem:[%s3282 + $0x44] sm:$0xf]
          %v3301 = vld [vmem:[%s3282 + $0x48] sm:$0xf]
          %v3302 = vld [vmem:[%s3282 + $0x4c] sm:$0xf]
          %v3303 = vld [vmem:[%s3282 + $0x50] sm:$0xf]
          %v3304 = vld [vmem:[%s3282 + $0x54] sm:$0xf]
          %v3305 = vld [vmem:[%s3282 + $0x58] sm:$0xf]
          %v3306 = vld [vmem:[%s3282 + $0x5c] sm:$0xf]
          %v3307 = vld [vmem:[%s3282 + $0x60] sm:$0xf]
          %v3308 = vld [vmem:[%s3282 + $0x64] sm:$0xf]
          %v3309 = vld [vmem:[%s3282 + $0x68] sm:$0xf]
          %v3310 = vld [vmem:[%s3282 + $0x6c] sm:$0xf]
          %v3311 = vld [vmem:[%s3282 + $0x70] sm:$0x1]
          %v3341 = vunpack.c.l.b16 %v3283
          %v3342 = vunpack.c.l.b16 %v3284
          %v3343 = vunpack.c.l.b16 %v3285
          %v3344 = vunpack.c.l.b16 %v3286
          %v3345 = vunpack.c.l.b16 %v3287
          %v3346 = vunpack.c.l.b16 %v3288
          %v3347 = vunpack.c.l.b16 %v3289
          %v3348 = vunpack.c.l.b16 %v3290
          %v3349 = vunpack.c.l.b16 %v3291
          %v3350 = vunpack.c.l.b16 %v3292
          %v3351 = vunpack.c.l.b16 %v3293
          %v3352 = vunpack.c.l.b16 %v3294
          %v3353 = vunpack.c.l.b16 %v3295
          %v3354 = vunpack.c.l.b16 %v3296
          %v3355 = vunpack.c.l.b16 %v3297
          %v3356 = vunpack.c.l.b16 %v3298
          %v3357 = vunpack.c.l.b16 %v3299
          %v3358 = vunpack.c.l.b16 %v3300
          %v3359 = vunpack.c.l.b16 %v3301
          %v3360 = vunpack.c.l.b16 %v3302
          %v3361 = vunpack.c.l.b16 %v3303
          %v3362 = vunpack.c.l.b16 %v3304
          %v3363 = vunpack.c.l.b16 %v3305
          %v3364 = vunpack.c.l.b16 %v3306
          %v3365 = vunpack.c.l.b16 %v3307
          %v3366 = vunpack.c.l.b16 %v3308
          %v3367 = vunpack.c.l.b16 %v3309
          %v3368 = vunpack.c.l.b16 %v3310
          %v3369 = vunpack.c.l.b16 %v3311
          %v3370 = vpack.c.b16 %v3342, %v3341
          %v3371 = vpack.c.b16 %v3344, %v3343
          %v3372 = vpack.c.b16 %v3346, %v3345
          %v3373 = vpack.c.b16 %v3348, %v3347
          %v3374 = vpack.c.b16 %v3350, %v3349
          %v3375 = vpack.c.b16 %v3352, %v3351
          %v3376 = vpack.c.b16 %v3354, %v3353
          %v3377 = vpack.c.b16 %v3356, %v3355
          %v3378 = vpack.c.b16 %v3358, %v3357
          %v3379 = vpack.c.b16 %v3360, %v3359
          %v3380 = vpack.c.b16 %v3362, %v3361
          %v3381 = vpack.c.b16 %v3364, %v3363
          %v3382 = vpack.c.b16 %v3366, %v3365
          %v3383 = vpack.c.b16 %v3368, %v3367
          %v3384 = vpack.c.b16 %v3369, %v3369
          %v3400 = vand.u32 %v3384, %v3237
          %3402 = vmatprep.subr.bf16.mxu0 0
          %3403 = vmatpush1.bf16.msra.mxu0 %v3377
          %3404 = vmatprep.subr.bf16.mxu0 0
          %3405 = vmatpush1.bf16.msra.mxu0 %v3376
          %3406 = vmatprep.subr.bf16.mxu0 0
          %3407 = vmatpush1.bf16.msra.mxu0 %v3375
          %3408 = vmatprep.subr.bf16.mxu0 0
          %3409 = vmatpush1.bf16.msra.mxu0 %v3374
          %3410 = vmatprep.subr.bf16.mxu0 0
          %3411 = vmatpush1.bf16.msra.mxu0 %v3373
          %3412 = vmatprep.subr.bf16.mxu0 0
          %3413 = vmatpush1.bf16.msra.mxu0 %v3372
          %3414 = vmatprep.subr.bf16.mxu0 0
          %3415 = vmatpush1.bf16.msra.mxu0 %v3371
          %3416 = vmatprep.subr.bf16.mxu0 0
          %3417 = vmatpush1.bf16.msra.mxu0 %v3370
          %3418 = vmatprep.subr.bf16.mxu0 0
          %3419 = vmatpush2.bf16.msra.mxu0 0
          %3420 = vmatprep.subr.bf16.mxu0 0
          %3421 = vmatpush2.bf16.msra.mxu0 %v3400
          %3422 = vmatprep.subr.bf16.mxu0 0
          %3423 = vmatpush2.bf16.msra.mxu0 %v3383
          %3424 = vmatprep.subr.bf16.mxu0 0
          %3425 = vmatpush2.bf16.msra.mxu0 %v3382
          %3426 = vmatprep.subr.bf16.mxu0 0
          %3427 = vmatpush2.bf16.msra.mxu0 %v3381
          %3428 = vmatprep.subr.bf16.mxu0 0
          %3429 = vmatpush2.bf16.msra.mxu0 %v3380
          %3430 = vmatprep.subr.bf16.mxu0 0
          %3431 = vmatpush2.bf16.msra.mxu0 %v3379
          %3432 = vmatprep.subr.bf16.mxu0 0
          %3433 = vmatpush2.bf16.msra.mxu0 %v3378
          %3434 = vmatprep.mubr.bf16.mxu0 %v3233
          %3435 = vmatmul.mubr.bf16.gmra.mxu0 %v3114
          %v3436 = vpop.f32.mrf.mxu0
          %v3437 = vadd.f32 0.0, %v3436
          %v3438 = vpop.f32.mrf.mxu0
          %v3439 = vpop.f32.mrf.mxu0
          %v3440 = vadd.f32 0.0, %v3439
          %v3441 = vpop.f32.mrf.mxu0
          %3442 = vdwg.mxu0
          %v3443 = vmax.f32 %v3276, %v3437
          %v3444 = vmax.f32 %v3279, %v3440
          %s3445 = scalar_lea.vmem [#allocation7], 232
          %v3446 = vld [vmem:[%s3445] sm:$0xf]
          %v3447 = vld [vmem:[%s3445 + $0x4] sm:$0xf]
          %v3448 = vld [vmem:[%s3445 + $0x8] sm:$0xf]
          %v3449 = vld [vmem:[%s3445 + $0xc] sm:$0xf]
          %v3450 = vld [vmem:[%s3445 + $0x10] sm:$0xf]
          %v3451 = vld [vmem:[%s3445 + $0x14] sm:$0xf]
          %v3452 = vld [vmem:[%s3445 + $0x18] sm:$0xf]
          %v3453 = vld [vmem:[%s3445 + $0x1c] sm:$0xf]
          %v3454 = vld [vmem:[%s3445 + $0x20] sm:$0xf]
          %v3455 = vld [vmem:[%s3445 + $0x24] sm:$0xf]
          %v3456 = vld [vmem:[%s3445 + $0x28] sm:$0xf]
          %v3457 = vld [vmem:[%s3445 + $0x2c] sm:$0xf]
          %v3458 = vld [vmem:[%s3445 + $0x30] sm:$0xf]
          %v3459 = vld [vmem:[%s3445 + $0x34] sm:$0xf]
          %v3460 = vld [vmem:[%s3445 + $0x38] sm:$0xf]
          %v3461 = vld [vmem:[%s3445 + $0x3c] sm:$0xf]
          %v3462 = vld [vmem:[%s3445 + $0x40] sm:$0xf]
          %v3463 = vld [vmem:[%s3445 + $0x44] sm:$0xf]
          %v3464 = vld [vmem:[%s3445 + $0x48] sm:$0xf]
          %v3465 = vld [vmem:[%s3445 + $0x4c] sm:$0xf]
          %v3466 = vld [vmem:[%s3445 + $0x50] sm:$0xf]
          %v3467 = vld [vmem:[%s3445 + $0x54] sm:$0xf]
          %v3468 = vld [vmem:[%s3445 + $0x58] sm:$0xf]
          %v3469 = vld [vmem:[%s3445 + $0x5c] sm:$0xf]
          %v3470 = vld [vmem:[%s3445 + $0x60] sm:$0xf]
          %v3471 = vld [vmem:[%s3445 + $0x64] sm:$0xf]
          %v3472 = vld [vmem:[%s3445 + $0x68] sm:$0xf]
          %v3473 = vld [vmem:[%s3445 + $0x6c] sm:$0xf]
          %v3474 = vld [vmem:[%s3445 + $0x70] sm:$0x1]
          %v3504 = vunpack.c.l.b16 %v3446
          %v3505 = vunpack.c.l.b16 %v3447
          %v3506 = vunpack.c.l.b16 %v3448
          %v3507 = vunpack.c.l.b16 %v3449
          %v3508 = vunpack.c.l.b16 %v3450
          %v3509 = vunpack.c.l.b16 %v3451
          %v3510 = vunpack.c.l.b16 %v3452
          %v3511 = vunpack.c.l.b16 %v3453
          %v3512 = vunpack.c.l.b16 %v3454
          %v3513 = vunpack.c.l.b16 %v3455
          %v3514 = vunpack.c.l.b16 %v3456
          %v3515 = vunpack.c.l.b16 %v3457
          %v3516 = vunpack.c.l.b16 %v3458
          %v3517 = vunpack.c.l.b16 %v3459
          %v3518 = vunpack.c.l.b16 %v3460
          %v3519 = vunpack.c.l.b16 %v3461
          %v3520 = vunpack.c.l.b16 %v3462
          %v3521 = vunpack.c.l.b16 %v3463
          %v3522 = vunpack.c.l.b16 %v3464
          %v3523 = vunpack.c.l.b16 %v3465
          %v3524 = vunpack.c.l.b16 %v3466
          %v3525 = vunpack.c.l.b16 %v3467
          %v3526 = vunpack.c.l.b16 %v3468
          %v3527 = vunpack.c.l.b16 %v3469
          %v3528 = vunpack.c.l.b16 %v3470
          %v3529 = vunpack.c.l.b16 %v3471
          %v3530 = vunpack.c.l.b16 %v3472
          %v3531 = vunpack.c.l.b16 %v3473
          %v3532 = vunpack.c.l.b16 %v3474
          %v3533 = vpack.c.b16 %v3505, %v3504
          %v3534 = vpack.c.b16 %v3507, %v3506
          %v3535 = vpack.c.b16 %v3509, %v3508
          %v3536 = vpack.c.b16 %v3511, %v3510
          %v3537 = vpack.c.b16 %v3513, %v3512
          %v3538 = vpack.c.b16 %v3515, %v3514
          %v3539 = vpack.c.b16 %v3517, %v3516
          %v3540 = vpack.c.b16 %v3519, %v3518
          %v3541 = vpack.c.b16 %v3521, %v3520
          %v3542 = vpack.c.b16 %v3523, %v3522
          %v3543 = vpack.c.b16 %v3525, %v3524
          %v3544 = vpack.c.b16 %v3527, %v3526
          %v3545 = vpack.c.b16 %v3529, %v3528
          %v3546 = vpack.c.b16 %v3531, %v3530
          %v3547 = vpack.c.b16 %v3532, %v3532
          %v3563 = vand.u32 %v3547, %v3237
          %3565 = vmatprep.subr.bf16.mxu0 0
          %3566 = vmatpush1.bf16.msra.mxu0 %v3540
          %3567 = vmatprep.subr.bf16.mxu0 0
          %3568 = vmatpush1.bf16.msra.mxu0 %v3539
          %3569 = vmatprep.subr.bf16.mxu0 0
          %3570 = vmatpush1.bf16.msra.mxu0 %v3538
          %3571 = vmatprep.subr.bf16.mxu0 0
          %3572 = vmatpush1.bf16.msra.mxu0 %v3537
          %3573 = vmatprep.subr.bf16.mxu0 0
          %3574 = vmatpush1.bf16.msra.mxu0 %v3536
          %3575 = vmatprep.subr.bf16.mxu0 0
          %3576 = vmatpush1.bf16.msra.mxu0 %v3535
          %3577 = vmatprep.subr.bf16.mxu0 0
          %3578 = vmatpush1.bf16.msra.mxu0 %v3534
          %3579 = vmatprep.subr.bf16.mxu0 0
          %3580 = vmatpush1.bf16.msra.mxu0 %v3533
          %3581 = vmatprep.subr.bf16.mxu0 0
          %3582 = vmatpush2.bf16.msra.mxu0 0
          %3583 = vmatprep.subr.bf16.mxu0 0
          %3584 = vmatpush2.bf16.msra.mxu0 %v3563
          %3585 = vmatprep.subr.bf16.mxu0 0
          %3586 = vmatpush2.bf16.msra.mxu0 %v3546
          %3587 = vmatprep.subr.bf16.mxu0 0
          %3588 = vmatpush2.bf16.msra.mxu0 %v3545
          %3589 = vmatprep.subr.bf16.mxu0 0
          %3590 = vmatpush2.bf16.msra.mxu0 %v3544
          %3591 = vmatprep.subr.bf16.mxu0 0
          %3592 = vmatpush2.bf16.msra.mxu0 %v3543
          %3593 = vmatprep.subr.bf16.mxu0 0
          %3594 = vmatpush2.bf16.msra.mxu0 %v3542
          %3595 = vmatprep.subr.bf16.mxu0 0
          %3596 = vmatpush2.bf16.msra.mxu0 %v3541
          %3597 = vmatprep.mubr.bf16.mxu0 %v3233
          %3598 = vmatmul.mubr.bf16.gmra.mxu0 %v3114
          %v3599 = vpop.f32.mrf.mxu0
          %v3600 = vadd.f32 0.0, %v3599
          %v3601 = vpop.f32.mrf.mxu0
          %v3602 = vpop.f32.mrf.mxu0
          %v3603 = vadd.f32 0.0, %v3602
          %v3604 = vpop.f32.mrf.mxu0
          %3605 = vdwg.mxu0
          %v3606 = vmax.f32 %v3443, %v3600
          %v3607 = vmax.f32 %v3444, %v3603
          %s3608 = scalar_lea.vmem [#allocation7], 348
          %v3609 = vld [vmem:[%s3608] sm:$0xf]
          %v3610 = vld [vmem:[%s3608 + $0x4] sm:$0xf]
          %v3611 = vld [vmem:[%s3608 + $0x8] sm:$0xf]
          %v3612 = vld [vmem:[%s3608 + $0xc] sm:$0xf]
          %v3613 = vld [vmem:[%s3608 + $0x10] sm:$0xf]
          %v3614 = vld [vmem:[%s3608 + $0x14] sm:$0xf]
          %v3615 = vld [vmem:[%s3608 + $0x18] sm:$0xf]
          %v3616 = vld [vmem:[%s3608 + $0x1c] sm:$0xf]
          %v3617 = vld [vmem:[%s3608 + $0x20] sm:$0xf]
          %v3618 = vld [vmem:[%s3608 + $0x24] sm:$0xf]
          %v3619 = vld [vmem:[%s3608 + $0x28] sm:$0xf]
          %v3620 = vld [vmem:[%s3608 + $0x2c] sm:$0xf]
          %v3621 = vld [vmem:[%s3608 + $0x30] sm:$0xf]
          %v3622 = vld [vmem:[%s3608 + $0x34] sm:$0xf]
          %v3623 = vld [vmem:[%s3608 + $0x38] sm:$0xf]
          %v3624 = vld [vmem:[%s3608 + $0x3c] sm:$0xf]
          %v3625 = vld [vmem:[%s3608 + $0x40] sm:$0xf]
          %v3626 = vld [vmem:[%s3608 + $0x44] sm:$0xf]
          %v3627 = vld [vmem:[%s3608 + $0x48] sm:$0xf]
          %v3628 = vld [vmem:[%s3608 + $0x4c] sm:$0xf]
          %v3629 = vld [vmem:[%s3608 + $0x50] sm:$0xf]
          %v3630 = vld [vmem:[%s3608 + $0x54] sm:$0xf]
          %v3631 = vld [vmem:[%s3608 + $0x58] sm:$0xf]
          %v3632 = vld [vmem:[%s3608 + $0x5c] sm:$0xf]
          %v3633 = vld [vmem:[%s3608 + $0x60] sm:$0xf]
          %v3634 = vld [vmem:[%s3608 + $0x64] sm:$0xf]
          %v3635 = vld [vmem:[%s3608 + $0x68] sm:$0xf]
          %v3636 = vld [vmem:[%s3608 + $0x6c] sm:$0xf]
          %v3637 = vld [vmem:[%s3608 + $0x70] sm:$0x1]
          %v3667 = vunpack.c.l.b16 %v3609
          %v3668 = vunpack.c.l.b16 %v3610
          %v3669 = vunpack.c.l.b16 %v3611
          %v3670 = vunpack.c.l.b16 %v3612
          %v3671 = vunpack.c.l.b16 %v3613
          %v3672 = vunpack.c.l.b16 %v3614
          %v3673 = vunpack.c.l.b16 %v3615
          %v3674 = vunpack.c.l.b16 %v3616
          %v3675 = vunpack.c.l.b16 %v3617
          %v3676 = vunpack.c.l.b16 %v3618
          %v3677 = vunpack.c.l.b16 %v3619
          %v3678 = vunpack.c.l.b16 %v3620
          %v3679 = vunpack.c.l.b16 %v3621
          %v3680 = vunpack.c.l.b16 %v3622
          %v3681 = vunpack.c.l.b16 %v3623
          %v3682 = vunpack.c.l.b16 %v3624
          %v3683 = vunpack.c.l.b16 %v3625
          %v3684 = vunpack.c.l.b16 %v3626
          %v3685 = vunpack.c.l.b16 %v3627
          %v3686 = vunpack.c.l.b16 %v3628
          %v3687 = vunpack.c.l.b16 %v3629
          %v3688 = vunpack.c.l.b16 %v3630
          %v3689 = vunpack.c.l.b16 %v3631
          %v3690 = vunpack.c.l.b16 %v3632
          %v3691 = vunpack.c.l.b16 %v3633
          %v3692 = vunpack.c.l.b16 %v3634
          %v3693 = vunpack.c.l.b16 %v3635
          %v3694 = vunpack.c.l.b16 %v3636
          %v3695 = vunpack.c.l.b16 %v3637
          %v3696 = vpack.c.b16 %v3668, %v3667
          %v3697 = vpack.c.b16 %v3670, %v3669
          %v3698 = vpack.c.b16 %v3672, %v3671
          %v3699 = vpack.c.b16 %v3674, %v3673
          %v3700 = vpack.c.b16 %v3676, %v3675
          %v3701 = vpack.c.b16 %v3678, %v3677
          %v3702 = vpack.c.b16 %v3680, %v3679
          %v3703 = vpack.c.b16 %v3682, %v3681
          %v3704 = vpack.c.b16 %v3684, %v3683
          %v3705 = vpack.c.b16 %v3686, %v3685
          %v3706 = vpack.c.b16 %v3688, %v3687
          %v3707 = vpack.c.b16 %v3690, %v3689
          %v3708 = vpack.c.b16 %v3692, %v3691
          %v3709 = vpack.c.b16 %v3694, %v3693
          %v3710 = vpack.c.b16 %v3695, %v3695
          %v3726 = vand.u32 %v3710, %v3237
          %3728 = vmatprep.subr.bf16.mxu0 0
          %3729 = vmatpush1.bf16.msra.mxu0 %v3703
          %3730 = vmatprep.subr.bf16.mxu0 0
          %3731 = vmatpush1.bf16.msra.mxu0 %v3702
          %3732 = vmatprep.subr.bf16.mxu0 0
          %3733 = vmatpush1.bf16.msra.mxu0 %v3701
          %3734 = vmatprep.subr.bf16.mxu0 0
          %3735 = vmatpush1.bf16.msra.mxu0 %v3700
          %3736 = vmatprep.subr.bf16.mxu0 0
          %3737 = vmatpush1.bf16.msra.mxu0 %v3699
          %3738 = vmatprep.subr.bf16.mxu0 0
          %3739 = vmatpush1.bf16.msra.mxu0 %v3698
          %3740 = vmatprep.subr.bf16.mxu0 0
          %3741 = vmatpush1.bf16.msra.mxu0 %v3697
          %3742 = vmatprep.subr.bf16.mxu0 0
          %3743 = vmatpush1.bf16.msra.mxu0 %v3696
          %3744 = vmatprep.subr.bf16.mxu0 0
          %3745 = vmatpush2.bf16.msra.mxu0 0
          %3746 = vmatprep.subr.bf16.mxu0 0
          %3747 = vmatpush2.bf16.msra.mxu0 %v3726
          %3748 = vmatprep.subr.bf16.mxu0 0
          %3749 = vmatpush2.bf16.msra.mxu0 %v3709
          %3750 = vmatprep.subr.bf16.mxu0 0
          %3751 = vmatpush2.bf16.msra.mxu0 %v3708
          %3752 = vmatprep.subr.bf16.mxu0 0
          %3753 = vmatpush2.bf16.msra.mxu0 %v3707
          %3754 = vmatprep.subr.bf16.mxu0 0
          %3755 = vmatpush2.bf16.msra.mxu0 %v3706
          %3756 = vmatprep.subr.bf16.mxu0 0
          %3757 = vmatpush2.bf16.msra.mxu0 %v3705
          %3758 = vmatprep.subr.bf16.mxu0 0
          %3759 = vmatpush2.bf16.msra.mxu0 %v3704
          %3760 = vmatprep.mubr.bf16.mxu0 %v3233
          %3761 = vmatmul.mubr.bf16.gmra.mxu0 %v3114
          %v3762 = vpop.f32.mrf.mxu0
          %v3763 = vadd.f32 0.0, %v3762
          %v3764 = vpop.f32.mrf.mxu0
          %v3765 = vpop.f32.mrf.mxu0
          %v3766 = vadd.f32 0.0, %v3765
          %v3767 = vpop.f32.mrf.mxu0
          %3768 = vdwg.mxu0
          %v3769 = vmax.f32 %v3606, %v3763
          %v3770 = vmax.f32 %v3607, %v3766
          %s3771 = scalar_lea.vmem [#allocation7], 464
          %v3772 = vld [vmem:[%s3771] sm:$0xf]
          %v3773 = vld [vmem:[%s3771 + $0x4] sm:$0xf]
          %v3774 = vld [vmem:[%s3771 + $0x8] sm:$0xf]
          %v3775 = vld [vmem:[%s3771 + $0xc] sm:$0xf]
          %v3776 = vld [vmem:[%s3771 + $0x10] sm:$0xf]
          %v3777 = vld [vmem:[%s3771 + $0x14] sm:$0xf]
          %v3778 = vld [vmem:[%s3771 + $0x18] sm:$0xf]
          %v3779 = vld [vmem:[%s3771 + $0x1c] sm:$0xf]
          %v3780 = vld [vmem:[%s3771 + $0x20] sm:$0xf]
          %v3781 = vld [vmem:[%s3771 + $0x24] sm:$0xf]
          %v3782 = vld [vmem:[%s3771 + $0x28] sm:$0xf]
          %v3783 = vld [vmem:[%s3771 + $0x2c] sm:$0xf]
          %v3784 = vld [vmem:[%s3771 + $0x30] sm:$0xf]
          %v3785 = vld [vmem:[%s3771 + $0x34] sm:$0xf]
          %v3786 = vld [vmem:[%s3771 + $0x38] sm:$0xf]
          %v3787 = vld [vmem:[%s3771 + $0x3c] sm:$0xf]
          %v3788 = vld [vmem:[%s3771 + $0x40] sm:$0xf]
          %v3789 = vld [vmem:[%s3771 + $0x44] sm:$0xf]
          %v3790 = vld [vmem:[%s3771 + $0x48] sm:$0xf]
          %v3791 = vld [vmem:[%s3771 + $0x4c] sm:$0xf]
          %v3792 = vld [vmem:[%s3771 + $0x50] sm:$0xf]
          %v3793 = vld [vmem:[%s3771 + $0x54] sm:$0xf]
          %v3794 = vld [vmem:[%s3771 + $0x58] sm:$0xf]
          %v3795 = vld [vmem:[%s3771 + $0x5c] sm:$0xf]
          %v3796 = vld [vmem:[%s3771 + $0x60] sm:$0xf]
          %v3797 = vld [vmem:[%s3771 + $0x64] sm:$0xf]
          %v3798 = vld [vmem:[%s3771 + $0x68] sm:$0xf]
          %v3799 = vld [vmem:[%s3771 + $0x6c] sm:$0xf]
          %v3800 = vld [vmem:[%s3771 + $0x70] sm:$0x1]
          %v3830 = vunpack.c.l.b16 %v3772
          %v3831 = vunpack.c.l.b16 %v3773
          %v3832 = vunpack.c.l.b16 %v3774
          %v3833 = vunpack.c.l.b16 %v3775
          %v3834 = vunpack.c.l.b16 %v3776
          %v3835 = vunpack.c.l.b16 %v3777
          %v3836 = vunpack.c.l.b16 %v3778
          %v3837 = vunpack.c.l.b16 %v3779
          %v3838 = vunpack.c.l.b16 %v3780
          %v3839 = vunpack.c.l.b16 %v3781
          %v3840 = vunpack.c.l.b16 %v3782
          %v3841 = vunpack.c.l.b16 %v3783
          %v3842 = vunpack.c.l.b16 %v3784
          %v3843 = vunpack.c.l.b16 %v3785
          %v3844 = vunpack.c.l.b16 %v3786
          %v3845 = vunpack.c.l.b16 %v3787
          %v3846 = vunpack.c.l.b16 %v3788
          %v3847 = vunpack.c.l.b16 %v3789
          %v3848 = vunpack.c.l.b16 %v3790
          %v3849 = vunpack.c.l.b16 %v3791
          %v3850 = vunpack.c.l.b16 %v3792
          %v3851 = vunpack.c.l.b16 %v3793
          %v3852 = vunpack.c.l.b16 %v3794
          %v3853 = vunpack.c.l.b16 %v3795
          %v3854 = vunpack.c.l.b16 %v3796
          %v3855 = vunpack.c.l.b16 %v3797
          %v3856 = vunpack.c.l.b16 %v3798
          %v3857 = vunpack.c.l.b16 %v3799
          %v3858 = vunpack.c.l.b16 %v3800
          %v3859 = vpack.c.b16 %v3831, %v3830
          %v3860 = vpack.c.b16 %v3833, %v3832
          %v3861 = vpack.c.b16 %v3835, %v3834
          %v3862 = vpack.c.b16 %v3837, %v3836
          %v3863 = vpack.c.b16 %v3839, %v3838
          %v3864 = vpack.c.b16 %v3841, %v3840
          %v3865 = vpack.c.b16 %v3843, %v3842
          %v3866 = vpack.c.b16 %v3845, %v3844
          %v3867 = vpack.c.b16 %v3847, %v3846
          %v3868 = vpack.c.b16 %v3849, %v3848
          %v3869 = vpack.c.b16 %v3851, %v3850
          %v3870 = vpack.c.b16 %v3853, %v3852
          %v3871 = vpack.c.b16 %v3855, %v3854
          %v3872 = vpack.c.b16 %v3857, %v3856
          %v3873 = vpack.c.b16 %v3858, %v3858
          %v3889 = vand.u32 %v3873, %v3237
          %3891 = vmatprep.subr.bf16.mxu0 0
          %3892 = vmatpush1.bf16.msra.mxu0 %v3866
          %3893 = vmatprep.subr.bf16.mxu0 0
          %3894 = vmatpush1.bf16.msra.mxu0 %v3865
          %3895 = vmatprep.subr.bf16.mxu0 0
          %3896 = vmatpush1.bf16.msra.mxu0 %v3864
          %3897 = vmatprep.subr.bf16.mxu0 0
          %3898 = vmatpush1.bf16.msra.mxu0 %v3863
          %3899 = vmatprep.subr.bf16.mxu0 0
          %3900 = vmatpush1.bf16.msra.mxu0 %v3862
          %3901 = vmatprep.subr.bf16.mxu0 0
          %3902 = vmatpush1.bf16.msra.mxu0 %v3861
          %3903 = vmatprep.subr.bf16.mxu0 0
          %3904 = vmatpush1.bf16.msra.mxu0 %v3860
          %3905 = vmatprep.subr.bf16.mxu0 0
          %3906 = vmatpush1.bf16.msra.mxu0 %v3859
          %3907 = vmatprep.subr.bf16.mxu0 0
          %3908 = vmatpush2.bf16.msra.mxu0 0
          %3909 = vmatprep.subr.bf16.mxu0 0
          %3910 = vmatpush2.bf16.msra.mxu0 %v3889
          %3911 = vmatprep.subr.bf16.mxu0 0
          %3912 = vmatpush2.bf16.msra.mxu0 %v3872
          %3913 = vmatprep.subr.bf16.mxu0 0
          %3914 = vmatpush2.bf16.msra.mxu0 %v3871
          %3915 = vmatprep.subr.bf16.mxu0 0
          %3916 = vmatpush2.bf16.msra.mxu0 %v3870
          %3917 = vmatprep.subr.bf16.mxu0 0
          %3918 = vmatpush2.bf16.msra.mxu0 %v3869
          %3919 = vmatprep.subr.bf16.mxu0 0
          %3920 = vmatpush2.bf16.msra.mxu0 %v3868
          %3921 = vmatprep.subr.bf16.mxu0 0
          %3922 = vmatpush2.bf16.msra.mxu0 %v3867
          %3923 = vmatprep.mubr.bf16.mxu0 %v3233
          %3924 = vmatmul.mubr.bf16.gmra.mxu0 %v3114
          %v3925 = vpop.f32.mrf.mxu0
          %v3926 = vadd.f32 0.0, %v3925
          %v3927 = vpop.f32.mrf.mxu0
          %v3928 = vpop.f32.mrf.mxu0
          %v3929 = vadd.f32 0.0, %v3928
          %v3930 = vpop.f32.mrf.mxu0
          %3931 = vdwg.mxu0
          %v3932 = vmax.f32 %v3769, %v3926
          %v3933 = vmax.f32 %v3770, %v3929
          %s3934 = scalar_lea.vmem [#allocation7], 580
          %v3935 = vld [vmem:[%s3934] sm:$0xf]
          %v3936 = vld [vmem:[%s3934 + $0x4] sm:$0xf]
          %v3937 = vld [vmem:[%s3934 + $0x8] sm:$0xf]
          %v3938 = vld [vmem:[%s3934 + $0xc] sm:$0xf]
          %v3939 = vld [vmem:[%s3934 + $0x10] sm:$0xf]
          %v3940 = vld [vmem:[%s3934 + $0x14] sm:$0xf]
          %v3941 = vld [vmem:[%s3934 + $0x18] sm:$0xf]
          %v3942 = vld [vmem:[%s3934 + $0x1c] sm:$0xf]
          %v3943 = vld [vmem:[%s3934 + $0x20] sm:$0xf]
          %v3944 = vld [vmem:[%s3934 + $0x24] sm:$0xf]
          %v3945 = vld [vmem:[%s3934 + $0x28] sm:$0xf]
          %v3946 = vld [vmem:[%s3934 + $0x2c] sm:$0xf]
          %v3947 = vld [vmem:[%s3934 + $0x30] sm:$0xf]
          %v3948 = vld [vmem:[%s3934 + $0x34] sm:$0xf]
          %v3949 = vld [vmem:[%s3934 + $0x38] sm:$0xf]
          %v3950 = vld [vmem:[%s3934 + $0x3c] sm:$0xf]
          %v3951 = vld [vmem:[%s3934 + $0x40] sm:$0xf]
          %v3952 = vld [vmem:[%s3934 + $0x44] sm:$0xf]
          %v3953 = vld [vmem:[%s3934 + $0x48] sm:$0xf]
          %v3954 = vld [vmem:[%s3934 + $0x4c] sm:$0xf]
          %v3955 = vld [vmem:[%s3934 + $0x50] sm:$0xf]
          %v3956 = vld [vmem:[%s3934 + $0x54] sm:$0xf]
          %v3957 = vld [vmem:[%s3934 + $0x58] sm:$0xf]
          %v3958 = vld [vmem:[%s3934 + $0x5c] sm:$0xf]
          %v3959 = vld [vmem:[%s3934 + $0x60] sm:$0xf]
          %v3960 = vld [vmem:[%s3934 + $0x64] sm:$0xf]
          %v3961 = vld [vmem:[%s3934 + $0x68] sm:$0xf]
          %v3962 = vld [vmem:[%s3934 + $0x6c] sm:$0xf]
          %v3963 = vld [vmem:[%s3934 + $0x70] sm:$0x1]
          %v3993 = vunpack.c.l.b16 %v3935
          %v3994 = vunpack.c.l.b16 %v3936
          %v3995 = vunpack.c.l.b16 %v3937
          %v3996 = vunpack.c.l.b16 %v3938
          %v3997 = vunpack.c.l.b16 %v3939
          %v3998 = vunpack.c.l.b16 %v3940
          %v3999 = vunpack.c.l.b16 %v3941
          %v4000 = vunpack.c.l.b16 %v3942
          %v4001 = vunpack.c.l.b16 %v3943
          %v4002 = vunpack.c.l.b16 %v3944
          %v4003 = vunpack.c.l.b16 %v3945
          %v4004 = vunpack.c.l.b16 %v3946
          %v4005 = vunpack.c.l.b16 %v3947
          %v4006 = vunpack.c.l.b16 %v3948
          %v4007 = vunpack.c.l.b16 %v3949
          %v4008 = vunpack.c.l.b16 %v3950
          %v4009 = vunpack.c.l.b16 %v3951
          %v4010 = vunpack.c.l.b16 %v3952
          %v4011 = vunpack.c.l.b16 %v3953
          %v4012 = vunpack.c.l.b16 %v3954
          %v4013 = vunpack.c.l.b16 %v3955
          %v4014 = vunpack.c.l.b16 %v3956
          %v4015 = vunpack.c.l.b16 %v3957
          %v4016 = vunpack.c.l.b16 %v3958
          %v4017 = vunpack.c.l.b16 %v3959
          %v4018 = vunpack.c.l.b16 %v3960
          %v4019 = vunpack.c.l.b16 %v3961
          %v4020 = vunpack.c.l.b16 %v3962
          %v4021 = vunpack.c.l.b16 %v3963
          %v4022 = vpack.c.b16 %v3994, %v3993
          %v4023 = vpack.c.b16 %v3996, %v3995
          %v4024 = vpack.c.b16 %v3998, %v3997
          %v4025 = vpack.c.b16 %v4000, %v3999
          %v4026 = vpack.c.b16 %v4002, %v4001
          %v4027 = vpack.c.b16 %v4004, %v4003
          %v4028 = vpack.c.b16 %v4006, %v4005
          %v4029 = vpack.c.b16 %v4008, %v4007
          %v4030 = vpack.c.b16 %v4010, %v4009
          %v4031 = vpack.c.b16 %v4012, %v4011
          %v4032 = vpack.c.b16 %v4014, %v4013
          %v4033 = vpack.c.b16 %v4016, %v4015
          %v4034 = vpack.c.b16 %v4018, %v4017
          %v4035 = vpack.c.b16 %v4020, %v4019
          %v4036 = vpack.c.b16 %v4021, %v4021
          %v4052 = vand.u32 %v4036, %v3237
          %4054 = vmatprep.subr.bf16.mxu0 0
          %4055 = vmatpush1.bf16.msra.mxu0 %v4029
          %4056 = vmatprep.subr.bf16.mxu0 0
          %4057 = vmatpush1.bf16.msra.mxu0 %v4028
          %4058 = vmatprep.subr.bf16.mxu0 0
          %4059 = vmatpush1.bf16.msra.mxu0 %v4027
          %4060 = vmatprep.subr.bf16.mxu0 0
          %4061 = vmatpush1.bf16.msra.mxu0 %v4026
          %4062 = vmatprep.subr.bf16.mxu0 0
          %4063 = vmatpush1.bf16.msra.mxu0 %v4025
          %4064 = vmatprep.subr.bf16.mxu0 0
          %4065 = vmatpush1.bf16.msra.mxu0 %v4024
          %4066 = vmatprep.subr.bf16.mxu0 0
          %4067 = vmatpush1.bf16.msra.mxu0 %v4023
          %4068 = vmatprep.subr.bf16.mxu0 0
          %4069 = vmatpush1.bf16.msra.mxu0 %v4022
          %4070 = vmatprep.subr.bf16.mxu0 0
          %4071 = vmatpush2.bf16.msra.mxu0 0
          %4072 = vmatprep.subr.bf16.mxu0 0
          %4073 = vmatpush2.bf16.msra.mxu0 %v4052
          %4074 = vmatprep.subr.bf16.mxu0 0
          %4075 = vmatpush2.bf16.msra.mxu0 %v4035
          %4076 = vmatprep.subr.bf16.mxu0 0
          %4077 = vmatpush2.bf16.msra.mxu0 %v4034
          %4078 = vmatprep.subr.bf16.mxu0 0
          %4079 = vmatpush2.bf16.msra.mxu0 %v4033
          %4080 = vmatprep.subr.bf16.mxu0 0
          %4081 = vmatpush2.bf16.msra.mxu0 %v4032
          %4082 = vmatprep.subr.bf16.mxu0 0
          %4083 = vmatpush2.bf16.msra.mxu0 %v4031
          %4084 = vmatprep.subr.bf16.mxu0 0
          %4085 = vmatpush2.bf16.msra.mxu0 %v4030
          %4086 = vmatprep.mubr.bf16.mxu0 %v3233
          %4087 = vmatmul.mubr.bf16.gmra.mxu0 %v3114
          %v4088 = vpop.f32.mrf.mxu0
          %v4089 = vadd.f32 0.0, %v4088
          %v4090 = vpop.f32.mrf.mxu0
          %v4091 = vpop.f32.mrf.mxu0
          %v4092 = vadd.f32 0.0, %v4091
          %v4093 = vpop.f32.mrf.mxu0
          %4094 = vdwg.mxu0
          %v4095 = vmax.f32 %v3932, %v4089
          %v4096 = vmax.f32 %v3933, %v4092
          %s4097 = scalar_lea.vmem [#allocation7], 696
          %v4098 = vld [vmem:[%s4097] sm:$0xf]
          %v4099 = vld [vmem:[%s4097 + $0x4] sm:$0xf]
          %v4100 = vld [vmem:[%s4097 + $0x8] sm:$0xf]
          %v4101 = vld [vmem:[%s4097 + $0xc] sm:$0xf]
          %v4102 = vld [vmem:[%s4097 + $0x10] sm:$0xf]
          %v4103 = vld [vmem:[%s4097 + $0x14] sm:$0xf]
          %v4104 = vld [vmem:[%s4097 + $0x18] sm:$0xf]
          %v4105 = vld [vmem:[%s4097 + $0x1c] sm:$0xf]
          %v4106 = vld [vmem:[%s4097 + $0x20] sm:$0xf]
          %v4107 = vld [vmem:[%s4097 + $0x24] sm:$0xf]
          %v4108 = vld [vmem:[%s4097 + $0x28] sm:$0xf]
          %v4109 = vld [vmem:[%s4097 + $0x2c] sm:$0xf]
          %v4110 = vld [vmem:[%s4097 + $0x30] sm:$0xf]
          %v4111 = vld [vmem:[%s4097 + $0x34] sm:$0xf]
          %v4112 = vld [vmem:[%s4097 + $0x38] sm:$0xf]
          %v4113 = vld [vmem:[%s4097 + $0x3c] sm:$0xf]
          %v4114 = vld [vmem:[%s4097 + $0x40] sm:$0xf]
          %v4115 = vld [vmem:[%s4097 + $0x44] sm:$0xf]
          %v4116 = vld [vmem:[%s4097 + $0x48] sm:$0xf]
          %v4117 = vld [vmem:[%s4097 + $0x4c] sm:$0xf]
          %v4118 = vld [vmem:[%s4097 + $0x50] sm:$0xf]
          %v4119 = vld [vmem:[%s4097 + $0x54] sm:$0xf]
          %v4120 = vld [vmem:[%s4097 + $0x58] sm:$0xf]
          %v4121 = vld [vmem:[%s4097 + $0x5c] sm:$0xf]
          %v4122 = vld [vmem:[%s4097 + $0x60] sm:$0xf]
          %v4123 = vld [vmem:[%s4097 + $0x64] sm:$0xf]
          %v4124 = vld [vmem:[%s4097 + $0x68] sm:$0xf]
          %v4125 = vld [vmem:[%s4097 + $0x6c] sm:$0xf]
          %v4126 = vld [vmem:[%s4097 + $0x70] sm:$0x1]
          %v4156 = vunpack.c.l.b16 %v4098
          %v4157 = vunpack.c.l.b16 %v4099
          %v4158 = vunpack.c.l.b16 %v4100
          %v4159 = vunpack.c.l.b16 %v4101
          %v4160 = vunpack.c.l.b16 %v4102
          %v4161 = vunpack.c.l.b16 %v4103
          %v4162 = vunpack.c.l.b16 %v4104
          %v4163 = vunpack.c.l.b16 %v4105
          %v4164 = vunpack.c.l.b16 %v4106
          %v4165 = vunpack.c.l.b16 %v4107
          %v4166 = vunpack.c.l.b16 %v4108
          %v4167 = vunpack.c.l.b16 %v4109
          %v4168 = vunpack.c.l.b16 %v4110
          %v4169 = vunpack.c.l.b16 %v4111
          %v4170 = vunpack.c.l.b16 %v4112
          %v4171 = vunpack.c.l.b16 %v4113
          %v4172 = vunpack.c.l.b16 %v4114
          %v4173 = vunpack.c.l.b16 %v4115
          %v4174 = vunpack.c.l.b16 %v4116
          %v4175 = vunpack.c.l.b16 %v4117
          %v4176 = vunpack.c.l.b16 %v4118
          %v4177 = vunpack.c.l.b16 %v4119
          %v4178 = vunpack.c.l.b16 %v4120
          %v4179 = vunpack.c.l.b16 %v4121
          %v4180 = vunpack.c.l.b16 %v4122
          %v4181 = vunpack.c.l.b16 %v4123
          %v4182 = vunpack.c.l.b16 %v4124
          %v4183 = vunpack.c.l.b16 %v4125
          %v4184 = vunpack.c.l.b16 %v4126
          %v4185 = vpack.c.b16 %v4157, %v4156
          %v4186 = vpack.c.b16 %v4159, %v4158
          %v4187 = vpack.c.b16 %v4161, %v4160
          %v4188 = vpack.c.b16 %v4163, %v4162
          %v4189 = vpack.c.b16 %v4165, %v4164
          %v4190 = vpack.c.b16 %v4167, %v4166
          %v4191 = vpack.c.b16 %v4169, %v4168
          %v4192 = vpack.c.b16 %v4171, %v4170
          %v4193 = vpack.c.b16 %v4173, %v4172
          %v4194 = vpack.c.b16 %v4175, %v4174
          %v4195 = vpack.c.b16 %v4177, %v4176
          %v4196 = vpack.c.b16 %v4179, %v4178
          %v4197 = vpack.c.b16 %v4181, %v4180
          %v4198 = vpack.c.b16 %v4183, %v4182
          %v4199 = vpack.c.b16 %v4184, %v4184
          %v4215 = vand.u32 %v4199, %v3237
          %4217 = vmatprep.subr.bf16.mxu0 0
          %4218 = vmatpush1.bf16.msra.mxu0 %v4192
          %4219 = vmatprep.subr.bf16.mxu0 0
          %4220 = vmatpush1.bf16.msra.mxu0 %v4191
          %4221 = vmatprep.subr.bf16.mxu0 0
          %4222 = vmatpush1.bf16.msra.mxu0 %v4190
          %4223 = vmatprep.subr.bf16.mxu0 0
          %4224 = vmatpush1.bf16.msra.mxu0 %v4189
          %4225 = vmatprep.subr.bf16.mxu0 0
          %4226 = vmatpush1.bf16.msra.mxu0 %v4188
          %4227 = vmatprep.subr.bf16.mxu0 0
          %4228 = vmatpush1.bf16.msra.mxu0 %v4187
          %4229 = vmatprep.subr.bf16.mxu0 0
          %4230 = vmatpush1.bf16.msra.mxu0 %v4186
          %4231 = vmatprep.subr.bf16.mxu0 0
          %4232 = vmatpush1.bf16.msra.mxu0 %v4185
          %4233 = vmatprep.subr.bf16.mxu0 0
          %4234 = vmatpush2.bf16.msra.mxu0 0
          %4235 = vmatprep.subr.bf16.mxu0 0
          %4236 = vmatpush2.bf16.msra.mxu0 %v4215
          %4237 = vmatprep.subr.bf16.mxu0 0
          %4238 = vmatpush2.bf16.msra.mxu0 %v4198
          %4239 = vmatprep.subr.bf16.mxu0 0
          %4240 = vmatpush2.bf16.msra.mxu0 %v4197
          %4241 = vmatprep.subr.bf16.mxu0 0
          %4242 = vmatpush2.bf16.msra.mxu0 %v4196
          %4243 = vmatprep.subr.bf16.mxu0 0
          %4244 = vmatpush2.bf16.msra.mxu0 %v4195
          %4245 = vmatprep.subr.bf16.mxu0 0
          %4246 = vmatpush2.bf16.msra.mxu0 %v4194
          %4247 = vmatprep.subr.bf16.mxu0 0
          %4248 = vmatpush2.bf16.msra.mxu0 %v4193
          %4249 = vmatprep.mubr.bf16.mxu0 %v3233
          %4250 = vmatmul.mubr.bf16.gmra.mxu0 %v3114
          %v4251 = vpop.f32.mrf.mxu0
          %v4252 = vadd.f32 0.0, %v4251
          %v4253 = vpop.f32.mrf.mxu0
          %v4254 = vpop.f32.mrf.mxu0
          %v4255 = vadd.f32 0.0, %v4254
          %v4256 = vpop.f32.mrf.mxu0
          %4257 = vdwg.mxu0
          %v4258 = vmax.f32 %v4095, %v4252
          %v4259 = vmax.f32 %v4096, %v4255
          %v4260 = vpack.c.bf16 %v4259, %v4258
          %v4261 = vld [vmem:[#allocation9] sm:$0xf]
          %v4262 = vld [vmem:[#allocation9 + $0x4] sm:$0xf]
          %v4263 = vld [vmem:[#allocation9 + $0x8] sm:$0xf]
          %v4264 = vld [vmem:[#allocation9 + $0xc] sm:$0xf]
          %v4265 = vld [vmem:[#allocation9 + $0x10] sm:$0xf]
          %v4266 = vld [vmem:[#allocation9 + $0x14] sm:$0x7]
          %v4273 = vunpack.c.l.b16 %v4261
          %v4274 = vunpack.c.l.b16 %v4262
          %v4275 = vunpack.c.l.b16 %v4263
          %v4276 = vunpack.c.l.b16 %v4264
          %v4277 = vunpack.c.l.b16 %v4265
          %v4278 = vunpack.c.l.b16 %v4266
          %v4279 = vpack.c.b16 %v4274, %v4273
          %v4280 = vpack.c.b16 %v4276, %v4275
          %v4281 = vpack.c.b16 %v4278, %v4277
          %vm4284 = vcmask 367616
          %v4286 = vsel %vm4284, %v4260, 0
          %vm4288 = vcmask 1045504
          %vm4289 = vcmask 1046528
          %v4290 = vsel %vm4288, 4294967295, 65535
          %v4291 = vsel %vm4289, %v4290, 0
          %v4293 = vand.u32 %v4281, %v4291
          %4295 = vmatprep.subr.bf16.mxu0 0
          %4296 = vmatpush1.bf16.msra.mxu0 0
          %4297 = vmatprep.subr.bf16.mxu0 0
          %4298 = vmatpush1.bf16.msra.mxu0 0
          %4299 = vmatprep.subr.bf16.mxu0 0
          %4300 = vmatpush1.bf16.msra.mxu0 0
          %4301 = vmatprep.subr.bf16.mxu0 0
          %4302 = vmatpush1.bf16.msra.mxu0 0
          %4303 = vmatprep.subr.bf16.mxu0 0
          %4304 = vmatpush1.bf16.msra.mxu0 0
          %4305 = vmatprep.subr.bf16.mxu0 0
          %4306 = vmatpush1.bf16.msra.mxu0 %v4293
          %4307 = vmatprep.subr.bf16.mxu0 0
          %4308 = vmatpush1.bf16.msra.mxu0 %v4280
          %4309 = vmatprep.subr.bf16.mxu0 0
          %4310 = vmatpush1.bf16.msra.mxu0 %v4279
          %4311 = vmatprep.subr.bf16.mxu0 0
          %4312 = vmatpush2.bf16.msra.mxu0 0
          %4313 = vmatprep.subr.bf16.mxu0 0
          %4314 = vmatpush2.bf16.msra.mxu0 0
          %4315 = vmatprep.subr.bf16.mxu0 0
          %4316 = vmatpush2.bf16.msra.mxu0 0
          %4317 = vmatprep.subr.bf16.mxu0 0
          %4318 = vmatpush2.bf16.msra.mxu0 0
          %4319 = vmatprep.subr.bf16.mxu0 0
          %4320 = vmatpush2.bf16.msra.mxu0 0
          %4321 = vmatprep.subr.bf16.mxu0 0
          %4322 = vmatpush2.bf16.msra.mxu0 0
          %4323 = vmatprep.subr.bf16.mxu0 0
          %4324 = vmatpush2.bf16.msra.mxu0 0
          %4325 = vmatprep.subr.bf16.mxu0 0
          %4326 = vmatpush2.bf16.msra.mxu0 0
          %4327 = vmatprep.mubr.bf16.mxu0 0
          %4328 = vmatmul.mubr.bf16.gmra.mxu0 %v4286
          %v4329 = vpop.f32.mrf.mxu0
          %v4330 = vadd.f32 0.0, %v4329
          %v4331 = vpop.f32.mrf.mxu0
          %v4332 = vpop.f32.mrf.mxu0
          %v4333 = vadd.f32 0.0, %v4332
          %v4334 = vpop.f32.mrf.mxu0
          %4335 = vdwg.mxu0
          %s4336 = scalar_lea.vmem [#allocation9], 24
          %v4337 = vld [vmem:[%s4336] sm:$0xf]
          %v4338 = vld [vmem:[%s4336 + $0x4] sm:$0xf]
          %v4339 = vld [vmem:[%s4336 + $0x8] sm:$0xf]
          %v4340 = vld [vmem:[%s4336 + $0xc] sm:$0xf]
          %v4341 = vld [vmem:[%s4336 + $0x10] sm:$0xf]
          %v4342 = vld [vmem:[%s4336 + $0x14] sm:$0x7]
          %v4349 = vunpack.c.l.b16 %v4337
          %v4350 = vunpack.c.l.b16 %v4338
          %v4351 = vunpack.c.l.b16 %v4339
          %v4352 = vunpack.c.l.b16 %v4340
          %v4353 = vunpack.c.l.b16 %v4341
          %v4354 = vunpack.c.l.b16 %v4342
          %v4355 = vpack.c.b16 %v4350, %v4349
          %v4356 = vpack.c.b16 %v4352, %v4351
          %v4357 = vpack.c.b16 %v4354, %v4353
          %v4361 = vand.u32 %v4357, %v4291
          %4363 = vmatprep.subr.bf16.mxu0 0
          %4364 = vmatpush1.bf16.msra.mxu0 0
          %4365 = vmatprep.subr.bf16.mxu0 0
          %4366 = vmatpush1.bf16.msra.mxu0 0
          %4367 = vmatprep.subr.bf16.mxu0 0
          %4368 = vmatpush1.bf16.msra.mxu0 0
          %4369 = vmatprep.subr.bf16.mxu0 0
          %4370 = vmatpush1.bf16.msra.mxu0 0
          %4371 = vmatprep.subr.bf16.mxu0 0
          %4372 = vmatpush1.bf16.msra.mxu0 0
          %4373 = vmatprep.subr.bf16.mxu0 0
          %4374 = vmatpush1.bf16.msra.mxu0 %v4361
          %4375 = vmatprep.subr.bf16.mxu0 0
          %4376 = vmatpush1.bf16.msra.mxu0 %v4356
          %4377 = vmatprep.subr.bf16.mxu0 0
          %4378 = vmatpush1.bf16.msra.mxu0 %v4355
          %4379 = vmatprep.subr.bf16.mxu0 0
          %4380 = vmatpush2.bf16.msra.mxu0 0
          %4381 = vmatprep.subr.bf16.mxu0 0
          %4382 = vmatpush2.bf16.msra.mxu0 0
          %4383 = vmatprep.subr.bf16.mxu0 0
          %4384 = vmatpush2.bf16.msra.mxu0 0
          %4385 = vmatprep.subr.bf16.mxu0 0
          %4386 = vmatpush2.bf16.msra.mxu0 0
          %4387 = vmatprep.subr.bf16.mxu0 0
          %4388 = vmatpush2.bf16.msra.mxu0 0
          %4389 = vmatprep.subr.bf16.mxu0 0
          %4390 = vmatpush2.bf16.msra.mxu0 0
          %4391 = vmatprep.subr.bf16.mxu0 0
          %4392 = vmatpush2.bf16.msra.mxu0 0
          %4393 = vmatprep.subr.bf16.mxu0 0
          %4394 = vmatpush2.bf16.msra.mxu0 0
          %4395 = vmatprep.mubr.bf16.mxu0 0
          %4396 = vmatmul.mubr.bf16.gmra.mxu0 %v4286
          %v4397 = vpop.f32.mrf.mxu0
          %v4398 = vadd.f32 0.0, %v4397
          %v4399 = vpop.f32.mrf.mxu0
          %v4400 = vpop.f32.mrf.mxu0
          %v4401 = vadd.f32 0.0, %v4400
          %v4402 = vpop.f32.mrf.mxu0
          %4403 = vdwg.mxu0
          %v4404 = vmax.f32 %v4330, %v4398
          %v4405 = vmax.f32 %v4333, %v4401
          %s4406 = scalar_lea.vmem [#allocation9], 48
          %v4407 = vld [vmem:[%s4406] sm:$0xf]
          %v4408 = vld [vmem:[%s4406 + $0x4] sm:$0xf]
          %v4409 = vld [vmem:[%s4406 + $0x8] sm:$0xf]
          %v4410 = vld [vmem:[%s4406 + $0xc] sm:$0xf]
          %v4411 = vld [vmem:[%s4406 + $0x10] sm:$0xf]
          %v4412 = vld [vmem:[%s4406 + $0x14] sm:$0x7]
          %v4419 = vunpack.c.l.b16 %v4407
          %v4420 = vunpack.c.l.b16 %v4408
          %v4421 = vunpack.c.l.b16 %v4409
          %v4422 = vunpack.c.l.b16 %v4410
          %v4423 = vunpack.c.l.b16 %v4411
          %v4424 = vunpack.c.l.b16 %v4412
          %v4425 = vpack.c.b16 %v4420, %v4419
          %v4426 = vpack.c.b16 %v4422, %v4421
          %v4427 = vpack.c.b16 %v4424, %v4423
          %v4431 = vand.u32 %v4427, %v4291
          %4433 = vmatprep.subr.bf16.mxu0 0
          %4434 = vmatpush1.bf16.msra.mxu0 0
          %4435 = vmatprep.subr.bf16.mxu0 0
          %4436 = vmatpush1.bf16.msra.mxu0 0
          %4437 = vmatprep.subr.bf16.mxu0 0
          %4438 = vmatpush1.bf16.msra.mxu0 0
          %4439 = vmatprep.subr.bf16.mxu0 0
          %4440 = vmatpush1.bf16.msra.mxu0 0
          %4441 = vmatprep.subr.bf16.mxu0 0
          %4442 = vmatpush1.bf16.msra.mxu0 0
          %4443 = vmatprep.subr.bf16.mxu0 0
          %4444 = vmatpush1.bf16.msra.mxu0 %v4431
          %4445 = vmatprep.subr.bf16.mxu0 0
          %4446 = vmatpush1.bf16.msra.mxu0 %v4426
          %4447 = vmatprep.subr.bf16.mxu0 0
          %4448 = vmatpush1.bf16.msra.mxu0 %v4425
          %4449 = vmatprep.subr.bf16.mxu0 0
          %4450 = vmatpush2.bf16.msra.mxu0 0
          %4451 = vmatprep.subr.bf16.mxu0 0
          %4452 = vmatpush2.bf16.msra.mxu0 0
          %4453 = vmatprep.subr.bf16.mxu0 0
          %4454 = vmatpush2.bf16.msra.mxu0 0
          %4455 = vmatprep.subr.bf16.mxu0 0
          %4456 = vmatpush2.bf16.msra.mxu0 0
          %4457 = vmatprep.subr.bf16.mxu0 0
          %4458 = vmatpush2.bf16.msra.mxu0 0
          %4459 = vmatprep.subr.bf16.mxu0 0
          %4460 = vmatpush2.bf16.msra.mxu0 0
          %4461 = vmatprep.subr.bf16.mxu0 0
          %4462 = vmatpush2.bf16.msra.mxu0 0
          %4463 = vmatprep.subr.bf16.mxu0 0
          %4464 = vmatpush2.bf16.msra.mxu0 0
          %4465 = vmatprep.mubr.bf16.mxu0 0
          %4466 = vmatmul.mubr.bf16.gmra.mxu0 %v4286
          %v4467 = vpop.f32.mrf.mxu0
          %v4468 = vadd.f32 0.0, %v4467
          %v4469 = vpop.f32.mrf.mxu0
          %v4470 = vpop.f32.mrf.mxu0
          %v4471 = vadd.f32 0.0, %v4470
          %v4472 = vpop.f32.mrf.mxu0
          %4473 = vdwg.mxu0
          %v4474 = vmax.f32 %v4404, %v4468
          %v4475 = vmax.f32 %v4405, %v4471
          %s4476 = scalar_lea.vmem [#allocation9], 72
          %v4477 = vld [vmem:[%s4476] sm:$0xf]
          %v4478 = vld [vmem:[%s4476 + $0x4] sm:$0xf]
          %v4479 = vld [vmem:[%s4476 + $0x8] sm:$0xf]
          %v4480 = vld [vmem:[%s4476 + $0xc] sm:$0xf]
          %v4481 = vld [vmem:[%s4476 + $0x10] sm:$0xf]
          %v4482 = vld [vmem:[%s4476 + $0x14] sm:$0x7]
          %v4489 = vunpack.c.l.b16 %v4477
          %v4490 = vunpack.c.l.b16 %v4478
          %v4491 = vunpack.c.l.b16 %v4479
          %v4492 = vunpack.c.l.b16 %v4480
          %v4493 = vunpack.c.l.b16 %v4481
          %v4494 = vunpack.c.l.b16 %v4482
          %v4495 = vpack.c.b16 %v4490, %v4489
          %v4496 = vpack.c.b16 %v4492, %v4491
          %v4497 = vpack.c.b16 %v4494, %v4493
          %v4501 = vand.u32 %v4497, %v4291
          %4503 = vmatprep.subr.bf16.mxu0 0
          %4504 = vmatpush1.bf16.msra.mxu0 0
          %4505 = vmatprep.subr.bf16.mxu0 0
          %4506 = vmatpush1.bf16.msra.mxu0 0
          %4507 = vmatprep.subr.bf16.mxu0 0
          %4508 = vmatpush1.bf16.msra.mxu0 0
          %4509 = vmatprep.subr.bf16.mxu0 0
          %4510 = vmatpush1.bf16.msra.mxu0 0
          %4511 = vmatprep.subr.bf16.mxu0 0
          %4512 = vmatpush1.bf16.msra.mxu0 0
          %4513 = vmatprep.subr.bf16.mxu0 0
          %4514 = vmatpush1.bf16.msra.mxu0 %v4501
          %4515 = vmatprep.subr.bf16.mxu0 0
          %4516 = vmatpush1.bf16.msra.mxu0 %v4496
          %4517 = vmatprep.subr.bf16.mxu0 0
          %4518 = vmatpush1.bf16.msra.mxu0 %v4495
          %4519 = vmatprep.subr.bf16.mxu0 0
          %4520 = vmatpush2.bf16.msra.mxu0 0
          %4521 = vmatprep.subr.bf16.mxu0 0
          %4522 = vmatpush2.bf16.msra.mxu0 0
          %4523 = vmatprep.subr.bf16.mxu0 0
          %4524 = vmatpush2.bf16.msra.mxu0 0
          %4525 = vmatprep.subr.bf16.mxu0 0
          %4526 = vmatpush2.bf16.msra.mxu0 0
          %4527 = vmatprep.subr.bf16.mxu0 0
          %4528 = vmatpush2.bf16.msra.mxu0 0
          %4529 = vmatprep.subr.bf16.mxu0 0
          %4530 = vmatpush2.bf16.msra.mxu0 0
          %4531 = vmatprep.subr.bf16.mxu0 0
          %4532 = vmatpush2.bf16.msra.mxu0 0
          %4533 = vmatprep.subr.bf16.mxu0 0
          %4534 = vmatpush2.bf16.msra.mxu0 0
          %4535 = vmatprep.mubr.bf16.mxu0 0
          %4536 = vmatmul.mubr.bf16.gmra.mxu0 %v4286
          %v4537 = vpop.f32.mrf.mxu0
          %v4538 = vadd.f32 0.0, %v4537
          %v4539 = vpop.f32.mrf.mxu0
          %v4540 = vpop.f32.mrf.mxu0
          %v4541 = vadd.f32 0.0, %v4540
          %v4542 = vpop.f32.mrf.mxu0
          %4543 = vdwg.mxu0
          %v4544 = vmax.f32 %v4474, %v4538
          %v4545 = vmax.f32 %v4475, %v4541
          %s4546 = scalar_lea.vmem [#allocation9], 96
          %v4547 = vld [vmem:[%s4546] sm:$0xf]
          %v4548 = vld [vmem:[%s4546 + $0x4] sm:$0xf]
          %v4549 = vld [vmem:[%s4546 + $0x8] sm:$0xf]
          %v4550 = vld [vmem:[%s4546 + $0xc] sm:$0xf]
          %v4551 = vld [vmem:[%s4546 + $0x10] sm:$0xf]
          %v4552 = vld [vmem:[%s4546 + $0x14] sm:$0x7]
          %v4559 = vunpack.c.l.b16 %v4547
          %v4560 = vunpack.c.l.b16 %v4548
          %v4561 = vunpack.c.l.b16 %v4549
          %v4562 = vunpack.c.l.b16 %v4550
          %v4563 = vunpack.c.l.b16 %v4551
          %v4564 = vunpack.c.l.b16 %v4552
          %v4565 = vpack.c.b16 %v4560, %v4559
          %v4566 = vpack.c.b16 %v4562, %v4561
          %v4567 = vpack.c.b16 %v4564, %v4563
          %v4571 = vand.u32 %v4567, %v4291
          %4573 = vmatprep.subr.bf16.mxu0 0
          %4574 = vmatpush1.bf16.msra.mxu0 0
          %4575 = vmatprep.subr.bf16.mxu0 0
          %4576 = vmatpush1.bf16.msra.mxu0 0
          %4577 = vmatprep.subr.bf16.mxu0 0
          %4578 = vmatpush1.bf16.msra.mxu0 0
          %4579 = vmatprep.subr.bf16.mxu0 0
          %4580 = vmatpush1.bf16.msra.mxu0 0
          %4581 = vmatprep.subr.bf16.mxu0 0
          %4582 = vmatpush1.bf16.msra.mxu0 0
          %4583 = vmatprep.subr.bf16.mxu0 0
          %4584 = vmatpush1.bf16.msra.mxu0 %v4571
          %4585 = vmatprep.subr.bf16.mxu0 0
          %4586 = vmatpush1.bf16.msra.mxu0 %v4566
          %4587 = vmatprep.subr.bf16.mxu0 0
          %4588 = vmatpush1.bf16.msra.mxu0 %v4565
          %4589 = vmatprep.subr.bf16.mxu0 0
          %4590 = vmatpush2.bf16.msra.mxu0 0
          %4591 = vmatprep.subr.bf16.mxu0 0
          %4592 = vmatpush2.bf16.msra.mxu0 0
          %4593 = vmatprep.subr.bf16.mxu0 0
          %4594 = vmatpush2.bf16.msra.mxu0 0
          %4595 = vmatprep.subr.bf16.mxu0 0
          %4596 = vmatpush2.bf16.msra.mxu0 0
          %4597 = vmatprep.subr.bf16.mxu0 0
          %4598 = vmatpush2.bf16.msra.mxu0 0
          %4599 = vmatprep.subr.bf16.mxu0 0
          %4600 = vmatpush2.bf16.msra.mxu0 0
          %4601 = vmatprep.subr.bf16.mxu0 0
          %4602 = vmatpush2.bf16.msra.mxu0 0
          %4603 = vmatprep.subr.bf16.mxu0 0
          %4604 = vmatpush2.bf16.msra.mxu0 0
          %4605 = vmatprep.mubr.bf16.mxu0 0
          %4606 = vmatmul.mubr.bf16.gmra.mxu0 %v4286
          %v4607 = vpop.f32.mrf.mxu0
          %v4608 = vadd.f32 0.0, %v4607
          %v4609 = vpop.f32.mrf.mxu0
          %v4610 = vpop.f32.mrf.mxu0
          %v4611 = vadd.f32 0.0, %v4610
          %v4612 = vpop.f32.mrf.mxu0
          %4613 = vdwg.mxu0
          %v4614 = vmax.f32 %v4544, %v4608
          %v4615 = vmax.f32 %v4545, %v4611
          %s4616 = scalar_lea.vmem [#allocation9], 120
          %v4617 = vld [vmem:[%s4616] sm:$0xf]
          %v4618 = vld [vmem:[%s4616 + $0x4] sm:$0xf]
          %v4619 = vld [vmem:[%s4616 + $0x8] sm:$0xf]
          %v4620 = vld [vmem:[%s4616 + $0xc] sm:$0xf]
          %v4621 = vld [vmem:[%s4616 + $0x10] sm:$0xf]
          %v4622 = vld [vmem:[%s4616 + $0x14] sm:$0x7]
          %v4629 = vunpack.c.l.b16 %v4617
          %v4630 = vunpack.c.l.b16 %v4618
          %v4631 = vunpack.c.l.b16 %v4619
          %v4632 = vunpack.c.l.b16 %v4620
          %v4633 = vunpack.c.l.b16 %v4621
          %v4634 = vunpack.c.l.b16 %v4622
          %v4635 = vpack.c.b16 %v4630, %v4629
          %v4636 = vpack.c.b16 %v4632, %v4631
          %v4637 = vpack.c.b16 %v4634, %v4633
          %v4641 = vand.u32 %v4637, %v4291
          %4643 = vmatprep.subr.bf16.mxu0 0
          %4644 = vmatpush1.bf16.msra.mxu0 0
          %4645 = vmatprep.subr.bf16.mxu0 0
          %4646 = vmatpush1.bf16.msra.mxu0 0
          %4647 = vmatprep.subr.bf16.mxu0 0
          %4648 = vmatpush1.bf16.msra.mxu0 0
          %4649 = vmatprep.subr.bf16.mxu0 0
          %4650 = vmatpush1.bf16.msra.mxu0 0
          %4651 = vmatprep.subr.bf16.mxu0 0
          %4652 = vmatpush1.bf16.msra.mxu0 0
          %4653 = vmatprep.subr.bf16.mxu0 0
          %4654 = vmatpush1.bf16.msra.mxu0 %v4641
          %4655 = vmatprep.subr.bf16.mxu0 0
          %4656 = vmatpush1.bf16.msra.mxu0 %v4636
          %4657 = vmatprep.subr.bf16.mxu0 0
          %4658 = vmatpush1.bf16.msra.mxu0 %v4635
          %4659 = vmatprep.subr.bf16.mxu0 0
          %4660 = vmatpush2.bf16.msra.mxu0 0
          %4661 = vmatprep.subr.bf16.mxu0 0
          %4662 = vmatpush2.bf16.msra.mxu0 0
          %4663 = vmatprep.subr.bf16.mxu0 0
          %4664 = vmatpush2.bf16.msra.mxu0 0
          %4665 = vmatprep.subr.bf16.mxu0 0
          %4666 = vmatpush2.bf16.msra.mxu0 0
          %4667 = vmatprep.subr.bf16.mxu0 0
          %4668 = vmatpush2.bf16.msra.mxu0 0
          %4669 = vmatprep.subr.bf16.mxu0 0
          %4670 = vmatpush2.bf16.msra.mxu0 0
          %4671 = vmatprep.subr.bf16.mxu0 0
          %4672 = vmatpush2.bf16.msra.mxu0 0
          %4673 = vmatprep.subr.bf16.mxu0 0
          %4674 = vmatpush2.bf16.msra.mxu0 0
          %4675 = vmatprep.mubr.bf16.mxu0 0
          %4676 = vmatmul.mubr.bf16.gmra.mxu0 %v4286
          %v4677 = vpop.f32.mrf.mxu0
          %v4678 = vadd.f32 0.0, %v4677
          %v4679 = vpop.f32.mrf.mxu0
          %v4680 = vpop.f32.mrf.mxu0
          %v4681 = vadd.f32 0.0, %v4680
          %v4682 = vpop.f32.mrf.mxu0
          %4683 = vdwg.mxu0
          %v4684 = vmax.f32 %v4614, %v4678
          %v4685 = vmax.f32 %v4615, %v4681
          %s4686 = scalar_lea.vmem [#allocation9], 144
          %v4687 = vld [vmem:[%s4686] sm:$0xf]
          %v4688 = vld [vmem:[%s4686 + $0x4] sm:$0xf]
          %v4689 = vld [vmem:[%s4686 + $0x8] sm:$0xf]
          %v4690 = vld [vmem:[%s4686 + $0xc] sm:$0xf]
          %v4691 = vld [vmem:[%s4686 + $0x10] sm:$0xf]
          %v4692 = vld [vmem:[%s4686 + $0x14] sm:$0x7]
          %v4699 = vunpack.c.l.b16 %v4687
          %v4700 = vunpack.c.l.b16 %v4688
          %v4701 = vunpack.c.l.b16 %v4689
          %v4702 = vunpack.c.l.b16 %v4690
          %v4703 = vunpack.c.l.b16 %v4691
          %v4704 = vunpack.c.l.b16 %v4692
          %v4705 = vpack.c.b16 %v4700, %v4699
          %v4706 = vpack.c.b16 %v4702, %v4701
          %v4707 = vpack.c.b16 %v4704, %v4703
          %v4711 = vand.u32 %v4707, %v4291
          %4713 = vmatprep.subr.bf16.mxu0 0
          %4714 = vmatpush1.bf16.msra.mxu0 0
          %4715 = vmatprep.subr.bf16.mxu0 0
          %4716 = vmatpush1.bf16.msra.mxu0 0
          %4717 = vmatprep.subr.bf16.mxu0 0
          %4718 = vmatpush1.bf16.msra.mxu0 0
          %4719 = vmatprep.subr.bf16.mxu0 0
          %4720 = vmatpush1.bf16.msra.mxu0 0
          %4721 = vmatprep.subr.bf16.mxu0 0
          %4722 = vmatpush1.bf16.msra.mxu0 0
          %4723 = vmatprep.subr.bf16.mxu0 0
          %4724 = vmatpush1.bf16.msra.mxu0 %v4711
          %4725 = vmatprep.subr.bf16.mxu0 0
          %4726 = vmatpush1.bf16.msra.mxu0 %v4706
          %4727 = vmatprep.subr.bf16.mxu0 0
          %4728 = vmatpush1.bf16.msra.mxu0 %v4705
          %4729 = vmatprep.subr.bf16.mxu0 0
          %4730 = vmatpush2.bf16.msra.mxu0 0
          %4731 = vmatprep.subr.bf16.mxu0 0
          %4732 = vmatpush2.bf16.msra.mxu0 0
          %4733 = vmatprep.subr.bf16.mxu0 0
          %4734 = vmatpush2.bf16.msra.mxu0 0
          %4735 = vmatprep.subr.bf16.mxu0 0
          %4736 = vmatpush2.bf16.msra.mxu0 0
          %4737 = vmatprep.subr.bf16.mxu0 0
          %4738 = vmatpush2.bf16.msra.mxu0 0
          %4739 = vmatprep.subr.bf16.mxu0 0
          %4740 = vmatpush2.bf16.msra.mxu0 0
          %4741 = vmatprep.subr.bf16.mxu0 0
          %4742 = vmatpush2.bf16.msra.mxu0 0
          %4743 = vmatprep.subr.bf16.mxu0 0
          %4744 = vmatpush2.bf16.msra.mxu0 0
          %4745 = vmatprep.mubr.bf16.mxu0 0
          %4746 = vmatmul.mubr.bf16.gmra.mxu0 %v4286
          %v4747 = vpop.f32.mrf.mxu0
          %v4748 = vadd.f32 0.0, %v4747
          %v4749 = vpop.f32.mrf.mxu0
          %v4750 = vpop.f32.mrf.mxu0
          %v4751 = vadd.f32 0.0, %v4750
          %v4752 = vpop.f32.mrf.mxu0
          %4753 = vdwg.mxu0
          %v4754 = vmax.f32 %v4684, %v4748
          %v4755 = vmax.f32 %v4685, %v4751
          %v4756 = vld [vmem:[%s4] sm:$0xff]
          %v4757 = vld [vmem:[%s4 + $0x8] sm:$0xff]
          %v4758 = vld [vmem:[%s4 + $0x10] sm:$0xff]
          %v4759 = vld [vmem:[%s4 + $0x18] sm:$0xff]
          %v4760 = vld [vmem:[%s4 + $0x20] sm:$0xff]
          %v4761 = vld [vmem:[%s4 + $0x28] sm:$0xff]
          %v4762 = vld [vmem:[%s4 + $0x30] sm:$0xff]
          %v4763 = vld [vmem:[%s4 + $0x38] sm:$0xff]
          %v4764 = vld [vmem:[%s4 + $0x40] sm:$0xff]
          %v4765 = vld [vmem:[%s4 + $0x48] sm:$0xff]
          %v4766 = vld [vmem:[%s4 + $0x50] sm:$0xff]
          %v4767 = vld [vmem:[%s4 + $0x58] sm:$0xff]
          %v4768 = vld [vmem:[%s4 + $0x60] sm:$0xff]
          %v4769 = vld [vmem:[%s4 + $0x68] sm:$0xff]
          %v4770 = vld [vmem:[%s4 + $0x70] sm:$0xff]
          %v4771 = vld [vmem:[%s4 + $0x78] sm:$0xff]
          %v4772 = vld [vmem:[%s4 + $0x80] sm:$0xff]
          %v4773 = vld [vmem:[%s4 + $0x88] sm:$0xff]
          %vm4774 = vcmask 130048
          %v4776 = vsel %vm4774, %v4756, 0
          %v4779 = vsel %vm4774, %v4757, 0
          %v4782 = vsel %vm4774, %v4758, 0
          %v4785 = vsel %vm4774, %v4759, 0
          %v4788 = vsel %vm4774, %v4760, 0
          %v4791 = vsel %vm4774, %v4761, 0
          %v4794 = vsel %vm4774, %v4762, 0
          %v4797 = vsel %vm4774, %v4763, 0
          %v4800 = vsel %vm4774, %v4764, 0
          %v4803 = vsel %vm4774, %v4765, 0
          %v4806 = vsel %vm4774, %v4766, 0
          %v4809 = vsel %vm4774, %v4767, 0
          %v4812 = vsel %vm4774, %v4768, 0
          %v4815 = vsel %vm4774, %v4769, 0
          %v4818 = vsel %vm4774, %v4770, 0
          %v4821 = vsel %vm4774, %v4771, 0
          %v4824 = vsel %vm4774, %v4772, 0
          %v4827 = vsel %vm4774, %v4773, 0
          %4829 = vmatprep.subr.mxu0 0.0
          %4830 = vmatpush1.msra.mxu0 0.0
          %4831 = vmatprep.subr.mxu0 0.0
          %4832 = vmatpush1.msra.mxu0 0.0
          %4833 = vmatprep.subr.mxu0 0.0
          %4834 = vmatpush1.msra.mxu0 0.0
          %4835 = vmatprep.subr.mxu0 0.0
          %4836 = vmatpush1.msra.mxu0 0.0
          %4837 = vmatprep.subr.mxu0 0.0
          %4838 = vmatpush1.msra.mxu0 0.0
          %4839 = vmatprep.subr.mxu0 0.0
          %4840 = vmatpush1.msra.mxu0 0.0
          %4841 = vmatprep.subr.mxu0 0.0
          %4842 = vmatpush1.msra.mxu0 0.0
          %4843 = vmatprep.subr.mxu0 0.0
          %4844 = vmatpush1.msra.mxu0 0.0
          %4845 = vmatprep.subr.mxu0 0.0
          %4846 = vmatpush1.msra.mxu0 0.0
          %4847 = vmatprep.subr.mxu0 0.0
          %4848 = vmatpush1.msra.mxu0 0.0
          %4849 = vmatprep.subr.mxu0 0.0
          %4850 = vmatpush1.msra.mxu0 0.0
          %4851 = vmatprep.subr.mxu0 0.0
          %4852 = vmatpush1.msra.mxu0 0.0
          %4853 = vmatprep.subr.mxu0 0.0
          %4854 = vmatpush1.msra.mxu0 0.0
          %4855 = vmatprep.subr.mxu0 0.0
          %4856 = vmatpush1.msra.mxu0 0.0
          %4857 = vmatprep.subr.mxu0 0.0
          %4858 = vmatpush1.msra.mxu0 %v4755
          %4859 = vmatprep.subr.mxu0 0.0
          %4860 = vmatpush1.msra.mxu0 %v4754
          %4861 = vmatprep.subr.mxu0 0.0
          %4862 = vmatpush2.msra.mxu0 0.0
          %4863 = vmatprep.subr.mxu0 0.0
          %4864 = vmatpush2.msra.mxu0 0.0
          %4865 = vmatprep.subr.mxu0 0.0
          %4866 = vmatpush2.msra.mxu0 0.0
          %4867 = vmatprep.subr.mxu0 0.0
          %4868 = vmatpush2.msra.mxu0 0.0
          %4869 = vmatprep.subr.mxu0 0.0
          %4870 = vmatpush2.msra.mxu0 0.0
          %4871 = vmatprep.subr.mxu0 0.0
          %4872 = vmatpush2.msra.mxu0 0.0
          %4873 = vmatprep.subr.mxu0 0.0
          %4874 = vmatpush2.msra.mxu0 0.0
          %4875 = vmatprep.subr.mxu0 0.0
          %4876 = vmatpush2.msra.mxu0 0.0
          %4877 = vmatprep.subr.mxu0 0.0
          %4878 = vmatpush2.msra.mxu0 0.0
          %4879 = vmatprep.subr.mxu0 0.0
          %4880 = vmatpush2.msra.mxu0 0.0
          %4881 = vmatprep.subr.mxu0 0.0
          %4882 = vmatpush2.msra.mxu0 0.0
          %4883 = vmatprep.subr.mxu0 0.0
          %4884 = vmatpush2.msra.mxu0 0.0
          %4885 = vmatprep.subr.mxu0 0.0
          %4886 = vmatpush2.msra.mxu0 0.0
          %4887 = vmatprep.subr.mxu0 0.0
          %4888 = vmatpush2.msra.mxu0 0.0
          %4889 = vmatprep.subr.mxu0 0.0
          %4890 = vmatpush2.msra.mxu0 0.0
          %4891 = vmatprep.subr.mxu0 0.0
          %4892 = vmatpush2.msra.mxu0 0.0
          %4893 = vmatprep.mubr.f32.mxu0 0.0
          %4894 = vmatmul.mubr.f32.gmra.mxu0 %v4776
          %v4895 = vpop.f32.mrf.mxu0
          %v4896 = vadd.f32 0.0, %v4895
          %v4897 = vpop.f32.mrf.mxu0
          %4898 = vmatprep.mubr.f32.mxu0 0.0
          %4899 = vmatmul.mubr.f32.gmra.mxu0 %v4779
          %v4900 = vpop.f32.mrf.mxu0
          %v4901 = vadd.f32 0.0, %v4900
          %v4902 = vpop.f32.mrf.mxu0
          %4903 = vmatprep.mubr.f32.mxu0 0.0
          %4904 = vmatmul.mubr.f32.gmra.mxu0 %v4782
          %v4905 = vpop.f32.mrf.mxu0
          %v4906 = vadd.f32 0.0, %v4905
          %v4907 = vpop.f32.mrf.mxu0
          %4908 = vmatprep.mubr.f32.mxu0 0.0
          %4909 = vmatmul.mubr.f32.gmra.mxu0 %v4785
          %v4910 = vpop.f32.mrf.mxu0
          %v4911 = vadd.f32 0.0, %v4910
          %v4912 = vpop.f32.mrf.mxu0
          %4913 = vmatprep.mubr.f32.mxu0 0.0
          %4914 = vmatmul.mubr.f32.gmra.mxu0 %v4788
          %v4915 = vpop.f32.mrf.mxu0
          %v4916 = vadd.f32 0.0, %v4915
          %v4917 = vpop.f32.mrf.mxu0
          %4918 = vmatprep.mubr.f32.mxu0 0.0
          %4919 = vmatmul.mubr.f32.gmra.mxu0 %v4791
          %v4920 = vpop.f32.mrf.mxu0
          %v4921 = vadd.f32 0.0, %v4920
          %v4922 = vpop.f32.mrf.mxu0
          %4923 = vmatprep.mubr.f32.mxu0 0.0
          %4924 = vmatmul.mubr.f32.gmra.mxu0 %v4794
          %v4925 = vpop.f32.mrf.mxu0
          %v4926 = vadd.f32 0.0, %v4925
          %v4927 = vpop.f32.mrf.mxu0
          %4928 = vmatprep.mubr.f32.mxu0 0.0
          %4929 = vmatmul.mubr.f32.gmra.mxu0 %v4797
          %v4930 = vpop.f32.mrf.mxu0
          %v4931 = vadd.f32 0.0, %v4930
          %v4932 = vpop.f32.mrf.mxu0
          %4933 = vmatprep.mubr.f32.mxu0 0.0
          %4934 = vmatmul.mubr.f32.gmra.mxu0 %v4800
          %v4935 = vpop.f32.mrf.mxu0
          %v4936 = vadd.f32 0.0, %v4935
          %v4937 = vpop.f32.mrf.mxu0
          %4938 = vmatprep.mubr.f32.mxu0 0.0
          %4939 = vmatmul.mubr.f32.gmra.mxu0 %v4803
          %v4940 = vpop.f32.mrf.mxu0
          %v4941 = vadd.f32 0.0, %v4940
          %v4942 = vpop.f32.mrf.mxu0
          %4943 = vmatprep.mubr.f32.mxu0 0.0
          %4944 = vmatmul.mubr.f32.gmra.mxu0 %v4806
          %v4945 = vpop.f32.mrf.mxu0
          %v4946 = vadd.f32 0.0, %v4945
          %v4947 = vpop.f32.mrf.mxu0
          %4948 = vmatprep.mubr.f32.mxu0 0.0
          %4949 = vmatmul.mubr.f32.gmra.mxu0 %v4809
          %v4950 = vpop.f32.mrf.mxu0
          %v4951 = vadd.f32 0.0, %v4950
          %v4952 = vpop.f32.mrf.mxu0
          %4953 = vmatprep.mubr.f32.mxu0 0.0
          %4954 = vmatmul.mubr.f32.gmra.mxu0 %v4812
          %v4955 = vpop.f32.mrf.mxu0
          %v4956 = vadd.f32 0.0, %v4955
          %v4957 = vpop.f32.mrf.mxu0
          %4958 = vmatprep.mubr.f32.mxu0 0.0
          %4959 = vmatmul.mubr.f32.gmra.mxu0 %v4815
          %v4960 = vpop.f32.mrf.mxu0
          %v4961 = vadd.f32 0.0, %v4960
          %v4962 = vpop.f32.mrf.mxu0
          %4963 = vmatprep.mubr.f32.mxu0 0.0
          %4964 = vmatmul.mubr.f32.gmra.mxu0 %v4818
          %v4965 = vpop.f32.mrf.mxu0
          %v4966 = vadd.f32 0.0, %v4965
          %v4967 = vpop.f32.mrf.mxu0
          %4968 = vmatprep.mubr.f32.mxu0 0.0
          %4969 = vmatmul.mubr.f32.gmra.mxu0 %v4821
          %v4970 = vpop.f32.mrf.mxu0
          %v4971 = vadd.f32 0.0, %v4970
          %v4972 = vpop.f32.mrf.mxu0
          %4973 = vmatprep.mubr.f32.mxu0 0.0
          %4974 = vmatmul.mubr.f32.gmra.mxu0 %v4824
          %v4975 = vpop.f32.mrf.mxu0
          %v4976 = vadd.f32 0.0, %v4975
          %v4977 = vpop.f32.mrf.mxu0
          %4978 = vmatprep.mubr.f32.mxu0 0.0
          %4979 = vmatmul.mubr.f32.gmra.mxu0 %v4827
          %v4980 = vpop.f32.mrf.mxu0
          %v4981 = vadd.f32 0.0, %v4980
          %v4982 = vpop.f32.mrf.mxu0
          %4983 = vdwg.mxu0
          %v4984 = vld [vmem:[#allocation10] sm:$0xff]
          %v4985 = vld [vmem:[#allocation10 + $0x8] sm:$0x1]
          %s4986 = scalar_lea.vmem [#allocation10], 16
          %v4987 = vld [vmem:[%s4986] sm:$0xff]
          %v4988 = vld [vmem:[%s4986 + $0x8] sm:$0x1]
          %vm4989 = vcmask 72704
          %v4991 = vsel %vm4989, %v4906, 0
          %v4994 = vsel %vm4989, %v4911, 0
          %v4997 = vsel %vm3235, %v4988, 0
          %4999 = vmatprep.subr.mxu0 0.0
          %5000 = vmatpush1.msra.mxu0 0.0
          %5001 = vmatprep.subr.mxu0 0.0
          %5002 = vmatpush1.msra.mxu0 0.0
          %5003 = vmatprep.subr.mxu0 0.0
          %5004 = vmatpush1.msra.mxu0 0.0
          %5005 = vmatprep.subr.mxu0 0.0
          %5006 = vmatpush1.msra.mxu0 0.0
          %5007 = vmatprep.subr.mxu0 0.0
          %5008 = vmatpush1.msra.mxu0 0.0
          %5009 = vmatprep.subr.mxu0 0.0
          %5010 = vmatpush1.msra.mxu0 0.0
          %5011 = vmatprep.subr.mxu0 0.0
          %5012 = vmatpush1.msra.mxu0 0.0
          %5013 = vmatprep.subr.mxu0 0.0
          %5014 = vmatpush1.msra.mxu0 0.0
          %5015 = vmatprep.subr.mxu0 0.0
          %5016 = vmatpush1.msra.mxu0 0.0
          %5017 = vmatprep.subr.mxu0 0.0
          %5018 = vmatpush1.msra.mxu0 0.0
          %5019 = vmatprep.subr.mxu0 0.0
          %5020 = vmatpush1.msra.mxu0 0.0
          %5021 = vmatprep.subr.mxu0 0.0
          %5022 = vmatpush1.msra.mxu0 0.0
          %5023 = vmatprep.subr.mxu0 0.0
          %5024 = vmatpush1.msra.mxu0 0.0
          %5025 = vmatprep.subr.mxu0 0.0
          %5026 = vmatpush1.msra.mxu0 0.0
          %5027 = vmatprep.subr.mxu0 0.0
          %5028 = vmatpush1.msra.mxu0 %v4997
          %5029 = vmatprep.subr.mxu0 0.0
          %5030 = vmatpush1.msra.mxu0 %v4987
          %5031 = vmatprep.subr.mxu0 0.0
          %5032 = vmatpush2.msra.mxu0 0.0
          %5033 = vmatprep.subr.mxu0 0.0
          %5034 = vmatpush2.msra.mxu0 0.0
          %5035 = vmatprep.subr.mxu0 0.0
          %5036 = vmatpush2.msra.mxu0 0.0
          %5037 = vmatprep.subr.mxu0 0.0
          %5038 = vmatpush2.msra.mxu0 0.0
          %5039 = vmatprep.subr.mxu0 0.0
          %5040 = vmatpush2.msra.mxu0 0.0
          %5041 = vmatprep.subr.mxu0 0.0
          %5042 = vmatpush2.msra.mxu0 0.0
          %5043 = vmatprep.subr.mxu0 0.0
          %5044 = vmatpush2.msra.mxu0 0.0
          %5045 = vmatprep.subr.mxu0 0.0
          %5046 = vmatpush2.msra.mxu0 0.0
          %5047 = vmatprep.subr.mxu0 0.0
          %5048 = vmatpush2.msra.mxu0 0.0
          %5049 = vmatprep.subr.mxu0 0.0
          %5050 = vmatpush2.msra.mxu0 0.0
          %5051 = vmatprep.subr.mxu0 0.0
          %5052 = vmatpush2.msra.mxu0 0.0
          %5053 = vmatprep.subr.mxu0 0.0
          %5054 = vmatpush2.msra.mxu0 0.0
          %5055 = vmatprep.subr.mxu0 0.0
          %5056 = vmatpush2.msra.mxu0 0.0
          %5057 = vmatprep.subr.mxu0 0.0
          %5058 = vmatpush2.msra.mxu0 0.0
          %5059 = vmatprep.subr.mxu0 0.0
          %5060 = vmatpush2.msra.mxu0 0.0
          %5061 = vmatprep.subr.mxu0 0.0
          %5062 = vmatpush2.msra.mxu0 0.0
          %5063 = vmatprep.mubr.f32.mxu0 0.0
          %5064 = vmatmul.mubr.f32.gmra.mxu0 %v4991
          %v5065 = vpop.f32.mrf.mxu0
          %v5066 = vadd.f32 0.0, %v5065
          %v5067 = vpop.f32.mrf.mxu0
          %5068 = vmatprep.mubr.f32.mxu0 0.0
          %5069 = vmatmul.mubr.f32.gmra.mxu0 %v4994
          %v5070 = vpop.f32.mrf.mxu0
          %v5071 = vadd.f32 0.0, %v5070
          %v5072 = vpop.f32.mrf.mxu0
          %5073 = vdwg.mxu0
          %v5075 = vsel %vm4989, %v4896, 0
          %v5078 = vsel %vm4989, %v4901, 0
          %v5081 = vsel %vm3235, %v4985, 0
          %5083 = vmatprep.subr.mxu0 0.0
          %5084 = vmatpush1.msra.mxu0 0.0
          %5085 = vmatprep.subr.mxu0 0.0
          %5086 = vmatpush1.msra.mxu0 0.0
          %5087 = vmatprep.subr.mxu0 0.0
          %5088 = vmatpush1.msra.mxu0 0.0
          %5089 = vmatprep.subr.mxu0 0.0
          %5090 = vmatpush1.msra.mxu0 0.0
          %5091 = vmatprep.subr.mxu0 0.0
          %5092 = vmatpush1.msra.mxu0 0.0
          %5093 = vmatprep.subr.mxu0 0.0
          %5094 = vmatpush1.msra.mxu0 0.0
          %5095 = vmatprep.subr.mxu0 0.0
          %5096 = vmatpush1.msra.mxu0 0.0
          %5097 = vmatprep.subr.mxu0 0.0
          %5098 = vmatpush1.msra.mxu0 0.0
          %5099 = vmatprep.subr.mxu0 0.0
          %5100 = vmatpush1.msra.mxu0 0.0
          %5101 = vmatprep.subr.mxu0 0.0
          %5102 = vmatpush1.msra.mxu0 0.0
          %5103 = vmatprep.subr.mxu0 0.0
          %5104 = vmatpush1.msra.mxu0 0.0
          %5105 = vmatprep.subr.mxu0 0.0
          %5106 = vmatpush1.msra.mxu0 0.0
          %5107 = vmatprep.subr.mxu0 0.0
          %5108 = vmatpush1.msra.mxu0 0.0
          %5109 = vmatprep.subr.mxu0 0.0
          %5110 = vmatpush1.msra.mxu0 0.0
          %5111 = vmatprep.subr.mxu0 0.0
          %5112 = vmatpush1.msra.mxu0 %v5081
          %5113 = vmatprep.subr.mxu0 0.0
          %5114 = vmatpush1.msra.mxu0 %v4984
          %5115 = vmatprep.subr.mxu0 0.0
          %5116 = vmatpush2.msra.mxu0 0.0
          %5117 = vmatprep.subr.mxu0 0.0
          %5118 = vmatpush2.msra.mxu0 0.0
          %5119 = vmatprep.subr.mxu0 0.0
          %5120 = vmatpush2.msra.mxu0 0.0
          %5121 = vmatprep.subr.mxu0 0.0
          %5122 = vmatpush2.msra.mxu0 0.0
          %5123 = vmatprep.subr.mxu0 0.0
          %5124 = vmatpush2.msra.mxu0 0.0
          %5125 = vmatprep.subr.mxu0 0.0
          %5126 = vmatpush2.msra.mxu0 0.0
          %5127 = vmatprep.subr.mxu0 0.0
          %5128 = vmatpush2.msra.mxu0 0.0
          %5129 = vmatprep.subr.mxu0 0.0
          %5130 = vmatpush2.msra.mxu0 0.0
          %5131 = vmatprep.subr.mxu0 0.0
          %5132 = vmatpush2.msra.mxu0 0.0
          %5133 = vmatprep.subr.mxu0 0.0
          %5134 = vmatpush2.msra.mxu0 0.0
          %5135 = vmatprep.subr.mxu0 0.0
          %5136 = vmatpush2.msra.mxu0 0.0
          %5137 = vmatprep.subr.mxu0 0.0
          %5138 = vmatpush2.msra.mxu0 0.0
          %5139 = vmatprep.subr.mxu0 0.0
          %5140 = vmatpush2.msra.mxu0 0.0
          %5141 = vmatprep.subr.mxu0 0.0
          %5142 = vmatpush2.msra.mxu0 0.0
          %5143 = vmatprep.subr.mxu0 0.0
          %5144 = vmatpush2.msra.mxu0 0.0
          %5145 = vmatprep.subr.mxu0 0.0
          %5146 = vmatpush2.msra.mxu0 0.0
          %5147 = vmatprep.mubr.f32.mxu0 0.0
          %5148 = vmatmul.mubr.f32.gmra.mxu0 %v5075
          %v5149 = vpop.f32.mrf.mxu0
          %v5150 = vadd.f32 %v5066, %v5149
          %v5151 = vpop.f32.mrf.mxu0
          %5152 = vmatprep.mubr.f32.mxu0 0.0
          %5153 = vmatmul.mubr.f32.gmra.mxu0 %v5078
          %v5154 = vpop.f32.mrf.mxu0
          %v5155 = vadd.f32 %v5071, %v5154
          %v5156 = vpop.f32.mrf.mxu0
          %5157 = vdwg.mxu0
          %s5158 = scalar_lea.vmem [#allocation10], 32
          %v5159 = vld [vmem:[%s5158] sm:$0xff]
          %v5160 = vld [vmem:[%s5158 + $0x8] sm:$0x1]
          %v5162 = vsel %vm4989, %v4916, 0
          %v5165 = vsel %vm4989, %v4921, 0
          %v5168 = vsel %vm3235, %v5160, 0
          %5170 = vmatprep.subr.mxu0 0.0
          %5171 = vmatpush1.msra.mxu0 0.0
          %5172 = vmatprep.subr.mxu0 0.0
          %5173 = vmatpush1.msra.mxu0 0.0
          %5174 = vmatprep.subr.mxu0 0.0
          %5175 = vmatpush1.msra.mxu0 0.0
          %5176 = vmatprep.subr.mxu0 0.0
          %5177 = vmatpush1.msra.mxu0 0.0
          %5178 = vmatprep.subr.mxu0 0.0
          %5179 = vmatpush1.msra.mxu0 0.0
          %5180 = vmatprep.subr.mxu0 0.0
          %5181 = vmatpush1.msra.mxu0 0.0
          %5182 = vmatprep.subr.mxu0 0.0
          %5183 = vmatpush1.msra.mxu0 0.0
          %5184 = vmatprep.subr.mxu0 0.0
          %5185 = vmatpush1.msra.mxu0 0.0
          %5186 = vmatprep.subr.mxu0 0.0
          %5187 = vmatpush1.msra.mxu0 0.0
          %5188 = vmatprep.subr.mxu0 0.0
          %5189 = vmatpush1.msra.mxu0 0.0
          %5190 = vmatprep.subr.mxu0 0.0
          %5191 = vmatpush1.msra.mxu0 0.0
          %5192 = vmatprep.subr.mxu0 0.0
          %5193 = vmatpush1.msra.mxu0 0.0
          %5194 = vmatprep.subr.mxu0 0.0
          %5195 = vmatpush1.msra.mxu0 0.0
          %5196 = vmatprep.subr.mxu0 0.0
          %5197 = vmatpush1.msra.mxu0 0.0
          %5198 = vmatprep.subr.mxu0 0.0
          %5199 = vmatpush1.msra.mxu0 %v5168
          %5200 = vmatprep.subr.mxu0 0.0
          %5201 = vmatpush1.msra.mxu0 %v5159
          %5202 = vmatprep.subr.mxu0 0.0
          %5203 = vmatpush2.msra.mxu0 0.0
          %5204 = vmatprep.subr.mxu0 0.0
          %5205 = vmatpush2.msra.mxu0 0.0
          %5206 = vmatprep.subr.mxu0 0.0
          %5207 = vmatpush2.msra.mxu0 0.0
          %5208 = vmatprep.subr.mxu0 0.0
          %5209 = vmatpush2.msra.mxu0 0.0
          %5210 = vmatprep.subr.mxu0 0.0
          %5211 = vmatpush2.msra.mxu0 0.0
          %5212 = vmatprep.subr.mxu0 0.0
          %5213 = vmatpush2.msra.mxu0 0.0
          %5214 = vmatprep.subr.mxu0 0.0
          %5215 = vmatpush2.msra.mxu0 0.0
          %5216 = vmatprep.subr.mxu0 0.0
          %5217 = vmatpush2.msra.mxu0 0.0
          %5218 = vmatprep.subr.mxu0 0.0
          %5219 = vmatpush2.msra.mxu0 0.0
          %5220 = vmatprep.subr.mxu0 0.0
          %5221 = vmatpush2.msra.mxu0 0.0
          %5222 = vmatprep.subr.mxu0 0.0
          %5223 = vmatpush2.msra.mxu0 0.0
          %5224 = vmatprep.subr.mxu0 0.0
          %5225 = vmatpush2.msra.mxu0 0.0
          %5226 = vmatprep.subr.mxu0 0.0
          %5227 = vmatpush2.msra.mxu0 0.0
          %5228 = vmatprep.subr.mxu0 0.0
          %5229 = vmatpush2.msra.mxu0 0.0
          %5230 = vmatprep.subr.mxu0 0.0
          %5231 = vmatpush2.msra.mxu0 0.0
          %5232 = vmatprep.subr.mxu0 0.0
          %5233 = vmatpush2.msra.mxu0 0.0
          %5234 = vmatprep.mubr.f32.mxu0 0.0
          %5235 = vmatmul.mubr.f32.gmra.mxu0 %v5162
          %v5236 = vpop.f32.mrf.mxu0
          %v5237 = vadd.f32 0.0, %v5236
          %v5238 = vpop.f32.mrf.mxu0
          %5239 = vmatprep.mubr.f32.mxu0 0.0
          %5240 = vmatmul.mubr.f32.gmra.mxu0 %v5165
          %v5241 = vpop.f32.mrf.mxu0
          %v5242 = vadd.f32 0.0, %v5241
          %v5243 = vpop.f32.mrf.mxu0
          %5244 = vdwg.mxu0
          %v5245 = vadd.f32 %v5150, %v5237
          %v5246 = vadd.f32 %v5155, %v5242
          %s5247 = scalar_lea.vmem [#allocation10], 48
          %v5248 = vld [vmem:[%s5247] sm:$0xff]
          %v5249 = vld [vmem:[%s5247 + $0x8] sm:$0x1]
          %v5251 = vsel %vm4989, %v4926, 0
          %v5254 = vsel %vm4989, %v4931, 0
          %v5257 = vsel %vm3235, %v5249, 0
          %5259 = vmatprep.subr.mxu0 0.0
          %5260 = vmatpush1.msra.mxu0 0.0
          %5261 = vmatprep.subr.mxu0 0.0
          %5262 = vmatpush1.msra.mxu0 0.0
          %5263 = vmatprep.subr.mxu0 0.0
          %5264 = vmatpush1.msra.mxu0 0.0
          %5265 = vmatprep.subr.mxu0 0.0
          %5266 = vmatpush1.msra.mxu0 0.0
          %5267 = vmatprep.subr.mxu0 0.0
          %5268 = vmatpush1.msra.mxu0 0.0
          %5269 = vmatprep.subr.mxu0 0.0
          %5270 = vmatpush1.msra.mxu0 0.0
          %5271 = vmatprep.subr.mxu0 0.0
          %5272 = vmatpush1.msra.mxu0 0.0
          %5273 = vmatprep.subr.mxu0 0.0
          %5274 = vmatpush1.msra.mxu0 0.0
          %5275 = vmatprep.subr.mxu0 0.0
          %5276 = vmatpush1.msra.mxu0 0.0
          %5277 = vmatprep.subr.mxu0 0.0
          %5278 = vmatpush1.msra.mxu0 0.0
          %5279 = vmatprep.subr.mxu0 0.0
          %5280 = vmatpush1.msra.mxu0 0.0
          %5281 = vmatprep.subr.mxu0 0.0
          %5282 = vmatpush1.msra.mxu0 0.0
          %5283 = vmatprep.subr.mxu0 0.0
          %5284 = vmatpush1.msra.mxu0 0.0
          %5285 = vmatprep.subr.mxu0 0.0
          %5286 = vmatpush1.msra.mxu0 0.0
          %5287 = vmatprep.subr.mxu0 0.0
          %5288 = vmatpush1.msra.mxu0 %v5257
          %5289 = vmatprep.subr.mxu0 0.0
          %5290 = vmatpush1.msra.mxu0 %v5248
          %5291 = vmatprep.subr.mxu0 0.0
          %5292 = vmatpush2.msra.mxu0 0.0
          %5293 = vmatprep.subr.mxu0 0.0
          %5294 = vmatpush2.msra.mxu0 0.0
          %5295 = vmatprep.subr.mxu0 0.0
          %5296 = vmatpush2.msra.mxu0 0.0
          %5297 = vmatprep.subr.mxu0 0.0
          %5298 = vmatpush2.msra.mxu0 0.0
          %5299 = vmatprep.subr.mxu0 0.0
          %5300 = vmatpush2.msra.mxu0 0.0
          %5301 = vmatprep.subr.mxu0 0.0
          %5302 = vmatpush2.msra.mxu0 0.0
          %5303 = vmatprep.subr.mxu0 0.0
          %5304 = vmatpush2.msra.mxu0 0.0
          %5305 = vmatprep.subr.mxu0 0.0
          %5306 = vmatpush2.msra.mxu0 0.0
          %5307 = vmatprep.subr.mxu0 0.0
          %5308 = vmatpush2.msra.mxu0 0.0
          %5309 = vmatprep.subr.mxu0 0.0
          %5310 = vmatpush2.msra.mxu0 0.0
          %5311 = vmatprep.subr.mxu0 0.0
          %5312 = vmatpush2.msra.mxu0 0.0
          %5313 = vmatprep.subr.mxu0 0.0
          %5314 = vmatpush2.msra.mxu0 0.0
          %5315 = vmatprep.subr.mxu0 0.0
          %5316 = vmatpush2.msra.mxu0 0.0
          %5317 = vmatprep.subr.mxu0 0.0
          %5318 = vmatpush2.msra.mxu0 0.0
          %5319 = vmatprep.subr.mxu0 0.0
          %5320 = vmatpush2.msra.mxu0 0.0
          %5321 = vmatprep.subr.mxu0 0.0
          %5322 = vmatpush2.msra.mxu0 0.0
          %5323 = vmatprep.mubr.f32.mxu0 0.0
          %5324 = vmatmul.mubr.f32.gmra.mxu0 %v5251
          %v5325 = vpop.f32.mrf.mxu0
          %v5326 = vadd.f32 0.0, %v5325
          %v5327 = vpop.f32.mrf.mxu0
          %5328 = vmatprep.mubr.f32.mxu0 0.0
          %5329 = vmatmul.mubr.f32.gmra.mxu0 %v5254
          %v5330 = vpop.f32.mrf.mxu0
          %v5331 = vadd.f32 0.0, %v5330
          %v5332 = vpop.f32.mrf.mxu0
          %5333 = vdwg.mxu0
          %v5334 = vadd.f32 %v5245, %v5326
          %v5335 = vadd.f32 %v5246, %v5331
          %s5336 = scalar_lea.vmem [#allocation10], 64
          %v5337 = vld [vmem:[%s5336] sm:$0xff]
          %v5338 = vld [vmem:[%s5336 + $0x8] sm:$0x1]
          %v5340 = vsel %vm4989, %v4936, 0
          %v5343 = vsel %vm4989, %v4941, 0
          %v5346 = vsel %vm3235, %v5338, 0
          %5348 = vmatprep.subr.mxu0 0.0
          %5349 = vmatpush1.msra.mxu0 0.0
          %5350 = vmatprep.subr.mxu0 0.0
          %5351 = vmatpush1.msra.mxu0 0.0
          %5352 = vmatprep.subr.mxu0 0.0
          %5353 = vmatpush1.msra.mxu0 0.0
          %5354 = vmatprep.subr.mxu0 0.0
          %5355 = vmatpush1.msra.mxu0 0.0
          %5356 = vmatprep.subr.mxu0 0.0
          %5357 = vmatpush1.msra.mxu0 0.0
          %5358 = vmatprep.subr.mxu0 0.0
          %5359 = vmatpush1.msra.mxu0 0.0
          %5360 = vmatprep.subr.mxu0 0.0
          %5361 = vmatpush1.msra.mxu0 0.0
          %5362 = vmatprep.subr.mxu0 0.0
          %5363 = vmatpush1.msra.mxu0 0.0
          %5364 = vmatprep.subr.mxu0 0.0
          %5365 = vmatpush1.msra.mxu0 0.0
          %5366 = vmatprep.subr.mxu0 0.0
          %5367 = vmatpush1.msra.mxu0 0.0
          %5368 = vmatprep.subr.mxu0 0.0
          %5369 = vmatpush1.msra.mxu0 0.0
          %5370 = vmatprep.subr.mxu0 0.0
          %5371 = vmatpush1.msra.mxu0 0.0
          %5372 = vmatprep.subr.mxu0 0.0
          %5373 = vmatpush1.msra.mxu0 0.0
          %5374 = vmatprep.subr.mxu0 0.0
          %5375 = vmatpush1.msra.mxu0 0.0
          %5376 = vmatprep.subr.mxu0 0.0
          %5377 = vmatpush1.msra.mxu0 %v5346
          %5378 = vmatprep.subr.mxu0 0.0
          %5379 = vmatpush1.msra.mxu0 %v5337
          %5380 = vmatprep.subr.mxu0 0.0
          %5381 = vmatpush2.msra.mxu0 0.0
          %5382 = vmatprep.subr.mxu0 0.0
          %5383 = vmatpush2.msra.mxu0 0.0
          %5384 = vmatprep.subr.mxu0 0.0
          %5385 = vmatpush2.msra.mxu0 0.0
          %5386 = vmatprep.subr.mxu0 0.0
          %5387 = vmatpush2.msra.mxu0 0.0
          %5388 = vmatprep.subr.mxu0 0.0
          %5389 = vmatpush2.msra.mxu0 0.0
          %5390 = vmatprep.subr.mxu0 0.0
          %5391 = vmatpush2.msra.mxu0 0.0
          %5392 = vmatprep.subr.mxu0 0.0
          %5393 = vmatpush2.msra.mxu0 0.0
          %5394 = vmatprep.subr.mxu0 0.0
          %5395 = vmatpush2.msra.mxu0 0.0
          %5396 = vmatprep.subr.mxu0 0.0
          %5397 = vmatpush2.msra.mxu0 0.0
          %5398 = vmatprep.subr.mxu0 0.0
          %5399 = vmatpush2.msra.mxu0 0.0
          %5400 = vmatprep.subr.mxu0 0.0
          %5401 = vmatpush2.msra.mxu0 0.0
          %5402 = vmatprep.subr.mxu0 0.0
          %5403 = vmatpush2.msra.mxu0 0.0
          %5404 = vmatprep.subr.mxu0 0.0
          %5405 = vmatpush2.msra.mxu0 0.0
          %5406 = vmatprep.subr.mxu0 0.0
          %5407 = vmatpush2.msra.mxu0 0.0
          %5408 = vmatprep.subr.mxu0 0.0
          %5409 = vmatpush2.msra.mxu0 0.0
          %5410 = vmatprep.subr.mxu0 0.0
          %5411 = vmatpush2.msra.mxu0 0.0
          %5412 = vmatprep.mubr.f32.mxu0 0.0
          %5413 = vmatmul.mubr.f32.gmra.mxu0 %v5340
          %v5414 = vpop.f32.mrf.mxu0
          %v5415 = vadd.f32 0.0, %v5414
          %v5416 = vpop.f32.mrf.mxu0
          %5417 = vmatprep.mubr.f32.mxu0 0.0
          %5418 = vmatmul.mubr.f32.gmra.mxu0 %v5343
          %v5419 = vpop.f32.mrf.mxu0
          %v5420 = vadd.f32 0.0, %v5419
          %v5421 = vpop.f32.mrf.mxu0
          %5422 = vdwg.mxu0
          %v5423 = vadd.f32 %v5334, %v5415
          %v5424 = vadd.f32 %v5335, %v5420
          %s5425 = scalar_lea.vmem [#allocation10], 80
          %v5426 = vld [vmem:[%s5425] sm:$0xff]
          %v5427 = vld [vmem:[%s5425 + $0x8] sm:$0x1]
          %v5429 = vsel %vm4989, %v4946, 0
          %v5432 = vsel %vm4989, %v4951, 0
          %v5435 = vsel %vm3235, %v5427, 0
          %5437 = vmatprep.subr.mxu0 0.0
          %5438 = vmatpush1.msra.mxu0 0.0
          %5439 = vmatprep.subr.mxu0 0.0
          %5440 = vmatpush1.msra.mxu0 0.0
          %5441 = vmatprep.subr.mxu0 0.0
          %5442 = vmatpush1.msra.mxu0 0.0
          %5443 = vmatprep.subr.mxu0 0.0
          %5444 = vmatpush1.msra.mxu0 0.0
          %5445 = vmatprep.subr.mxu0 0.0
          %5446 = vmatpush1.msra.mxu0 0.0
          %5447 = vmatprep.subr.mxu0 0.0
          %5448 = vmatpush1.msra.mxu0 0.0
          %5449 = vmatprep.subr.mxu0 0.0
          %5450 = vmatpush1.msra.mxu0 0.0
          %5451 = vmatprep.subr.mxu0 0.0
          %5452 = vmatpush1.msra.mxu0 0.0
          %5453 = vmatprep.subr.mxu0 0.0
          %5454 = vmatpush1.msra.mxu0 0.0
          %5455 = vmatprep.subr.mxu0 0.0
          %5456 = vmatpush1.msra.mxu0 0.0
          %5457 = vmatprep.subr.mxu0 0.0
          %5458 = vmatpush1.msra.mxu0 0.0
          %5459 = vmatprep.subr.mxu0 0.0
          %5460 = vmatpush1.msra.mxu0 0.0
          %5461 = vmatprep.subr.mxu0 0.0
          %5462 = vmatpush1.msra.mxu0 0.0
          %5463 = vmatprep.subr.mxu0 0.0
          %5464 = vmatpush1.msra.mxu0 0.0
          %5465 = vmatprep.subr.mxu0 0.0
          %5466 = vmatpush1.msra.mxu0 %v5435
          %5467 = vmatprep.subr.mxu0 0.0
          %5468 = vmatpush1.msra.mxu0 %v5426
          %5469 = vmatprep.subr.mxu0 0.0
          %5470 = vmatpush2.msra.mxu0 0.0
          %5471 = vmatprep.subr.mxu0 0.0
          %5472 = vmatpush2.msra.mxu0 0.0
          %5473 = vmatprep.subr.mxu0 0.0
          %5474 = vmatpush2.msra.mxu0 0.0
          %5475 = vmatprep.subr.mxu0 0.0
          %5476 = vmatpush2.msra.mxu0 0.0
          %5477 = vmatprep.subr.mxu0 0.0
          %5478 = vmatpush2.msra.mxu0 0.0
          %5479 = vmatprep.subr.mxu0 0.0
          %5480 = vmatpush2.msra.mxu0 0.0
          %5481 = vmatprep.subr.mxu0 0.0
          %5482 = vmatpush2.msra.mxu0 0.0
          %5483 = vmatprep.subr.mxu0 0.0
          %5484 = vmatpush2.msra.mxu0 0.0
          %5485 = vmatprep.subr.mxu0 0.0
          %5486 = vmatpush2.msra.mxu0 0.0
          %5487 = vmatprep.subr.mxu0 0.0
          %5488 = vmatpush2.msra.mxu0 0.0
          %5489 = vmatprep.subr.mxu0 0.0
          %5490 = vmatpush2.msra.mxu0 0.0
          %5491 = vmatprep.subr.mxu0 0.0
          %5492 = vmatpush2.msra.mxu0 0.0
          %5493 = vmatprep.subr.mxu0 0.0
          %5494 = vmatpush2.msra.mxu0 0.0
          %5495 = vmatprep.subr.mxu0 0.0
          %5496 = vmatpush2.msra.mxu0 0.0
          %5497 = vmatprep.subr.mxu0 0.0
          %5498 = vmatpush2.msra.mxu0 0.0
          %5499 = vmatprep.subr.mxu0 0.0
          %5500 = vmatpush2.msra.mxu0 0.0
          %5501 = vmatprep.mubr.f32.mxu0 0.0
          %5502 = vmatmul.mubr.f32.gmra.mxu0 %v5429
          %v5503 = vpop.f32.mrf.mxu0
          %v5504 = vadd.f32 0.0, %v5503
          %v5505 = vpop.f32.mrf.mxu0
          %5506 = vmatprep.mubr.f32.mxu0 0.0
          %5507 = vmatmul.mubr.f32.gmra.mxu0 %v5432
          %v5508 = vpop.f32.mrf.mxu0
          %v5509 = vadd.f32 0.0, %v5508
          %v5510 = vpop.f32.mrf.mxu0
          %5511 = vdwg.mxu0
          %v5512 = vadd.f32 %v5423, %v5504
          %v5513 = vadd.f32 %v5424, %v5509
          %s5514 = scalar_lea.vmem [#allocation10], 96
          %v5515 = vld [vmem:[%s5514] sm:$0xff]
          %v5516 = vld [vmem:[%s5514 + $0x8] sm:$0x1]
          %v5518 = vsel %vm4989, %v4956, 0
          %v5521 = vsel %vm4989, %v4961, 0
          %v5524 = vsel %vm3235, %v5516, 0
          %5526 = vmatprep.subr.mxu0 0.0
          %5527 = vmatpush1.msra.mxu0 0.0
          %5528 = vmatprep.subr.mxu0 0.0
          %5529 = vmatpush1.msra.mxu0 0.0
          %5530 = vmatprep.subr.mxu0 0.0
          %5531 = vmatpush1.msra.mxu0 0.0
          %5532 = vmatprep.subr.mxu0 0.0
          %5533 = vmatpush1.msra.mxu0 0.0
          %5534 = vmatprep.subr.mxu0 0.0
          %5535 = vmatpush1.msra.mxu0 0.0
          %5536 = vmatprep.subr.mxu0 0.0
          %5537 = vmatpush1.msra.mxu0 0.0
          %5538 = vmatprep.subr.mxu0 0.0
          %5539 = vmatpush1.msra.mxu0 0.0
          %5540 = vmatprep.subr.mxu0 0.0
          %5541 = vmatpush1.msra.mxu0 0.0
          %5542 = vmatprep.subr.mxu0 0.0
          %5543 = vmatpush1.msra.mxu0 0.0
          %5544 = vmatprep.subr.mxu0 0.0
          %5545 = vmatpush1.msra.mxu0 0.0
          %5546 = vmatprep.subr.mxu0 0.0
          %5547 = vmatpush1.msra.mxu0 0.0
          %5548 = vmatprep.subr.mxu0 0.0
          %5549 = vmatpush1.msra.mxu0 0.0
          %5550 = vmatprep.subr.mxu0 0.0
          %5551 = vmatpush1.msra.mxu0 0.0
          %5552 = vmatprep.subr.mxu0 0.0
          %5553 = vmatpush1.msra.mxu0 0.0
          %5554 = vmatprep.subr.mxu0 0.0
          %5555 = vmatpush1.msra.mxu0 %v5524
          %5556 = vmatprep.subr.mxu0 0.0
          %5557 = vmatpush1.msra.mxu0 %v5515
          %5558 = vmatprep.subr.mxu0 0.0
          %5559 = vmatpush2.msra.mxu0 0.0
          %5560 = vmatprep.subr.mxu0 0.0
          %5561 = vmatpush2.msra.mxu0 0.0
          %5562 = vmatprep.subr.mxu0 0.0
          %5563 = vmatpush2.msra.mxu0 0.0
          %5564 = vmatprep.subr.mxu0 0.0
          %5565 = vmatpush2.msra.mxu0 0.0
          %5566 = vmatprep.subr.mxu0 0.0
          %5567 = vmatpush2.msra.mxu0 0.0
          %5568 = vmatprep.subr.mxu0 0.0
          %5569 = vmatpush2.msra.mxu0 0.0
          %5570 = vmatprep.subr.mxu0 0.0
          %5571 = vmatpush2.msra.mxu0 0.0
          %5572 = vmatprep.subr.mxu0 0.0
          %5573 = vmatpush2.msra.mxu0 0.0
          %5574 = vmatprep.subr.mxu0 0.0
          %5575 = vmatpush2.msra.mxu0 0.0
          %5576 = vmatprep.subr.mxu0 0.0
          %5577 = vmatpush2.msra.mxu0 0.0
          %5578 = vmatprep.subr.mxu0 0.0
          %5579 = vmatpush2.msra.mxu0 0.0
          %5580 = vmatprep.subr.mxu0 0.0
          %5581 = vmatpush2.msra.mxu0 0.0
          %5582 = vmatprep.subr.mxu0 0.0
          %5583 = vmatpush2.msra.mxu0 0.0
          %5584 = vmatprep.subr.mxu0 0.0
          %5585 = vmatpush2.msra.mxu0 0.0
          %5586 = vmatprep.subr.mxu0 0.0
          %5587 = vmatpush2.msra.mxu0 0.0
          %5588 = vmatprep.subr.mxu0 0.0
          %5589 = vmatpush2.msra.mxu0 0.0
          %5590 = vmatprep.mubr.f32.mxu0 0.0
          %5591 = vmatmul.mubr.f32.gmra.mxu0 %v5518
          %v5592 = vpop.f32.mrf.mxu0
          %v5593 = vadd.f32 0.0, %v5592
          %v5594 = vpop.f32.mrf.mxu0
          %5595 = vmatprep.mubr.f32.mxu0 0.0
          %5596 = vmatmul.mubr.f32.gmra.mxu0 %v5521
          %v5597 = vpop.f32.mrf.mxu0
          %v5598 = vadd.f32 0.0, %v5597
          %v5599 = vpop.f32.mrf.mxu0
          %5600 = vdwg.mxu0
          %v5601 = vadd.f32 %v5512, %v5593
          %v5602 = vadd.f32 %v5513, %v5598
          %s5603 = scalar_lea.vmem [#allocation10], 112
          %v5604 = vld [vmem:[%s5603] sm:$0xff]
          %v5605 = vld [vmem:[%s5603 + $0x8] sm:$0x1]
          %v5607 = vsel %vm4989, %v4966, 0
          %v5610 = vsel %vm4989, %v4971, 0
          %v5613 = vsel %vm3235, %v5605, 0
          %5615 = vmatprep.subr.mxu0 0.0
          %5616 = vmatpush1.msra.mxu0 0.0
          %5617 = vmatprep.subr.mxu0 0.0
          %5618 = vmatpush1.msra.mxu0 0.0
          %5619 = vmatprep.subr.mxu0 0.0
          %5620 = vmatpush1.msra.mxu0 0.0
          %5621 = vmatprep.subr.mxu0 0.0
          %5622 = vmatpush1.msra.mxu0 0.0
          %5623 = vmatprep.subr.mxu0 0.0
          %5624 = vmatpush1.msra.mxu0 0.0
          %5625 = vmatprep.subr.mxu0 0.0
          %5626 = vmatpush1.msra.mxu0 0.0
          %5627 = vmatprep.subr.mxu0 0.0
          %5628 = vmatpush1.msra.mxu0 0.0
          %5629 = vmatprep.subr.mxu0 0.0
          %5630 = vmatpush1.msra.mxu0 0.0
          %5631 = vmatprep.subr.mxu0 0.0
          %5632 = vmatpush1.msra.mxu0 0.0
          %5633 = vmatprep.subr.mxu0 0.0
          %5634 = vmatpush1.msra.mxu0 0.0
          %5635 = vmatprep.subr.mxu0 0.0
          %5636 = vmatpush1.msra.mxu0 0.0
          %5637 = vmatprep.subr.mxu0 0.0
          %5638 = vmatpush1.msra.mxu0 0.0
          %5639 = vmatprep.subr.mxu0 0.0
          %5640 = vmatpush1.msra.mxu0 0.0
          %5641 = vmatprep.subr.mxu0 0.0
          %5642 = vmatpush1.msra.mxu0 0.0
          %5643 = vmatprep.subr.mxu0 0.0
          %5644 = vmatpush1.msra.mxu0 %v5613
          %5645 = vmatprep.subr.mxu0 0.0
          %5646 = vmatpush1.msra.mxu0 %v5604
          %5647 = vmatprep.subr.mxu0 0.0
          %5648 = vmatpush2.msra.mxu0 0.0
          %5649 = vmatprep.subr.mxu0 0.0
          %5650 = vmatpush2.msra.mxu0 0.0
          %5651 = vmatprep.subr.mxu0 0.0
          %5652 = vmatpush2.msra.mxu0 0.0
          %5653 = vmatprep.subr.mxu0 0.0
          %5654 = vmatpush2.msra.mxu0 0.0
          %5655 = vmatprep.subr.mxu0 0.0
          %5656 = vmatpush2.msra.mxu0 0.0
          %5657 = vmatprep.subr.mxu0 0.0
          %5658 = vmatpush2.msra.mxu0 0.0
          %5659 = vmatprep.subr.mxu0 0.0
          %5660 = vmatpush2.msra.mxu0 0.0
          %5661 = vmatprep.subr.mxu0 0.0
          %5662 = vmatpush2.msra.mxu0 0.0
          %5663 = vmatprep.subr.mxu0 0.0
          %5664 = vmatpush2.msra.mxu0 0.0
          %5665 = vmatprep.subr.mxu0 0.0
          %5666 = vmatpush2.msra.mxu0 0.0
          %5667 = vmatprep.subr.mxu0 0.0
          %5668 = vmatpush2.msra.mxu0 0.0
          %5669 = vmatprep.subr.mxu0 0.0
          %5670 = vmatpush2.msra.mxu0 0.0
          %5671 = vmatprep.subr.mxu0 0.0
          %5672 = vmatpush2.msra.mxu0 0.0
          %5673 = vmatprep.subr.mxu0 0.0
          %5674 = vmatpush2.msra.mxu0 0.0
          %5675 = vmatprep.subr.mxu0 0.0
          %5676 = vmatpush2.msra.mxu0 0.0
          %5677 = vmatprep.subr.mxu0 0.0
          %5678 = vmatpush2.msra.mxu0 0.0
          %5679 = vmatprep.mubr.f32.mxu0 0.0
          %5680 = vmatmul.mubr.f32.gmra.mxu0 %v5607
          %v5681 = vpop.f32.mrf.mxu0
          %v5682 = vadd.f32 0.0, %v5681
          %v5683 = vpop.f32.mrf.mxu0
          %5684 = vmatprep.mubr.f32.mxu0 0.0
          %5685 = vmatmul.mubr.f32.gmra.mxu0 %v5610
          %v5686 = vpop.f32.mrf.mxu0
          %v5687 = vadd.f32 0.0, %v5686
          %v5688 = vpop.f32.mrf.mxu0
          %5689 = vdwg.mxu0
          %v5690 = vadd.f32 %v5601, %v5682
          %v5691 = vadd.f32 %v5602, %v5687
          %s5692 = scalar_lea.vmem [#allocation10], 128
          %v5693 = vld [vmem:[%s5692] sm:$0xff]
          %v5694 = vld [vmem:[%s5692 + $0x8] sm:$0x1]
          %v5696 = vsel %vm4989, %v4976, 0
          %v5699 = vsel %vm4989, %v4981, 0
          %v5702 = vsel %vm3235, %v5694, 0
          %5704 = vmatprep.subr.mxu0 0.0
          %5705 = vmatpush1.msra.mxu0 0.0
          %5706 = vmatprep.subr.mxu0 0.0
          %5707 = vmatpush1.msra.mxu0 0.0
          %5708 = vmatprep.subr.mxu0 0.0
          %5709 = vmatpush1.msra.mxu0 0.0
          %5710 = vmatprep.subr.mxu0 0.0
          %5711 = vmatpush1.msra.mxu0 0.0
          %5712 = vmatprep.subr.mxu0 0.0
          %5713 = vmatpush1.msra.mxu0 0.0
          %5714 = vmatprep.subr.mxu0 0.0
          %5715 = vmatpush1.msra.mxu0 0.0
          %5716 = vmatprep.subr.mxu0 0.0
          %5717 = vmatpush1.msra.mxu0 0.0
          %5718 = vmatprep.subr.mxu0 0.0
          %5719 = vmatpush1.msra.mxu0 0.0
          %5720 = vmatprep.subr.mxu0 0.0
          %5721 = vmatpush1.msra.mxu0 0.0
          %5722 = vmatprep.subr.mxu0 0.0
          %5723 = vmatpush1.msra.mxu0 0.0
          %5724 = vmatprep.subr.mxu0 0.0
          %5725 = vmatpush1.msra.mxu0 0.0
          %5726 = vmatprep.subr.mxu0 0.0
          %5727 = vmatpush1.msra.mxu0 0.0
          %5728 = vmatprep.subr.mxu0 0.0
          %5729 = vmatpush1.msra.mxu0 0.0
          %5730 = vmatprep.subr.mxu0 0.0
          %5731 = vmatpush1.msra.mxu0 0.0
          %5732 = vmatprep.subr.mxu0 0.0
          %5733 = vmatpush1.msra.mxu0 %v5702
          %5734 = vmatprep.subr.mxu0 0.0
          %5735 = vmatpush1.msra.mxu0 %v5693
          %5736 = vmatprep.subr.mxu0 0.0
          %5737 = vmatpush2.msra.mxu0 0.0
          %5738 = vmatprep.subr.mxu0 0.0
          %5739 = vmatpush2.msra.mxu0 0.0
          %5740 = vmatprep.subr.mxu0 0.0
          %5741 = vmatpush2.msra.mxu0 0.0
          %5742 = vmatprep.subr.mxu0 0.0
          %5743 = vmatpush2.msra.mxu0 0.0
          %5744 = vmatprep.subr.mxu0 0.0
          %5745 = vmatpush2.msra.mxu0 0.0
          %5746 = vmatprep.subr.mxu0 0.0
          %5747 = vmatpush2.msra.mxu0 0.0
          %5748 = vmatprep.subr.mxu0 0.0
          %5749 = vmatpush2.msra.mxu0 0.0
          %5750 = vmatprep.subr.mxu0 0.0
          %5751 = vmatpush2.msra.mxu0 0.0
          %5752 = vmatprep.subr.mxu0 0.0
          %5753 = vmatpush2.msra.mxu0 0.0
          %5754 = vmatprep.subr.mxu0 0.0
          %5755 = vmatpush2.msra.mxu0 0.0
          %5756 = vmatprep.subr.mxu0 0.0
          %5757 = vmatpush2.msra.mxu0 0.0
          %5758 = vmatprep.subr.mxu0 0.0
          %5759 = vmatpush2.msra.mxu0 0.0
          %5760 = vmatprep.subr.mxu0 0.0
          %5761 = vmatpush2.msra.mxu0 0.0
          %5762 = vmatprep.subr.mxu0 0.0
          %5763 = vmatpush2.msra.mxu0 0.0
          %5764 = vmatprep.subr.mxu0 0.0
          %5765 = vmatpush2.msra.mxu0 0.0
          %5766 = vmatprep.subr.mxu0 0.0
          %5767 = vmatpush2.msra.mxu0 0.0
          %5768 = vmatprep.mubr.f32.mxu0 0.0
          %5769 = vmatmul.mubr.f32.gmra.mxu0 %v5696
          %v5770 = vpop.f32.mrf.mxu0
          %v5771 = vadd.f32 0.0, %v5770
          %v5772 = vpop.f32.mrf.mxu0
          %5773 = vmatprep.mubr.f32.mxu0 0.0
          %5774 = vmatmul.mubr.f32.gmra.mxu0 %v5699
          %v5775 = vpop.f32.mrf.mxu0
          %v5776 = vadd.f32 0.0, %v5775
          %v5777 = vpop.f32.mrf.mxu0
          %5778 = vdwg.mxu0
          %v5779 = vadd.f32 %v5690, %v5771
          %v5780 = vadd.f32 %v5691, %v5776
          %5782 = vset.pattern.permute.xlu0 0
          %5783 = vperm.xlu0 %5782, %v3090
          %v5784 = vpop.permute.xlu0 %5783
          %5787 = vset.pattern.permute.xlu0 0
          %5788 = vperm.xlu0 %5787, %v3091
          %v5789 = vpop.permute.xlu0 %5788
          %v5791 = vadd.f32 %v5779, %v5784
          %v5792 = vadd.f32 %v5780, %v5789
          %v5793 = vld [vmem:[#allocation12] sm:$0xff]
          %v5794 = vld [vmem:[#allocation12 + $0x8] sm:$0xff]
          %v5795 = vld [vmem:[#allocation12 + $0x10] sm:$0xff]
          %v5796 = vld [vmem:[#allocation12 + $0x18] sm:$0xff]
          %v5797 = vld [vmem:[#allocation12 + $0x20] sm:$0xff]
          %v5798 = vld [vmem:[#allocation12 + $0x28] sm:$0xff]
          %v5799 = vld [vmem:[#allocation12 + $0x30] sm:$0xff]
          %v5800 = vld [vmem:[#allocation12 + $0x38] sm:$0xff]
          %v5801 = vld [vmem:[#allocation12 + $0x40] sm:$0x1]
          %v5802 = vld [vmem:[#allocation12 + $0x48] sm:$0x1]
          %v5803 = vld [vmem:[#allocation12 + $0x50] sm:$0x1]
          %v5804 = vld [vmem:[#allocation12 + $0x58] sm:$0x1]
          %v5805 = vld [vmem:[#allocation12 + $0x60] sm:$0x1]
          %v5806 = vld [vmem:[#allocation12 + $0x68] sm:$0x1]
          %v5807 = vld [vmem:[#allocation12 + $0x70] sm:$0x1]
          %v5808 = vld [vmem:[#allocation12 + $0x78] sm:$0x1]
          %v5809 = vld [vmem:[%s5] sm:$0xff]
          %v5810 = vld [vmem:[%s5 + $0x8] sm:$0xff]
          %v5811 = vld [vmem:[%s5 + $0x10] sm:$0xff]
          %v5812 = vld [vmem:[%s5 + $0x18] sm:$0xff]
          %v5813 = vld [vmem:[#allocation2] sm:$0xff]
          %v5814 = vld [vmem:[#allocation2 + $0x8] sm:$0xff]
          %v5815 = vld [vmem:[#allocation2 + $0x10] sm:$0xff]
          %v5816 = vld [vmem:[#allocation2 + $0x18] sm:$0xff]
          %v5817 = vld [vmem:[#allocation2 + $0x20] sm:$0xff]
          %v5818 = vld [vmem:[#allocation2 + $0x28] sm:$0xff]
          %v5819 = vld [vmem:[#allocation2 + $0x30] sm:$0xff]
          %v5820 = vld [vmem:[#allocation2 + $0x38] sm:$0xff]
          %v5821 = vld [vmem:[#allocation2 + $0x40] sm:$0xff]
          %v5822 = vld [vmem:[#allocation2 + $0x48] sm:$0xff]
          %v5823 = vld [vmem:[#allocation2 + $0x50] sm:$0xff]
          %v5824 = vld [vmem:[#allocation2 + $0x58] sm:$0xff]
          %v5825 = vld [vmem:[#allocation2 + $0x60] sm:$0xff]
          %v5826 = vld [vmem:[#allocation2 + $0x68] sm:$0xff]
          %v5827 = vld [vmem:[#allocation2 + $0x70] sm:$0xff]
          %v5828 = vld [vmem:[#allocation2 + $0x78] sm:$0xff]
          %v5830 = vsel %vm4989, %v5791, 0
          %v5833 = vsel %vm4989, %v5792, 0
          %v5836 = vsel %vm3235, %v5801, 0
          %v5839 = vsel %vm3235, %v5802, 0
          %v5842 = vsel %vm3235, %v5803, 0
          %v5845 = vsel %vm3235, %v5804, 0
          %v5848 = vsel %vm3235, %v5805, 0
          %v5851 = vsel %vm3235, %v5806, 0
          %v5854 = vsel %vm3235, %v5807, 0
          %v5857 = vsel %vm3235, %v5808, 0
          %5859 = vmatprep.subr.mxu0 0.0
          %5860 = vmatpush1.msra.mxu0 0.0
          %5861 = vmatprep.subr.mxu0 0.0
          %5862 = vmatpush1.msra.mxu0 0.0
          %5863 = vmatprep.subr.mxu0 0.0
          %5864 = vmatpush1.msra.mxu0 0.0
          %5865 = vmatprep.subr.mxu0 0.0
          %5866 = vmatpush1.msra.mxu0 0.0
          %5867 = vmatprep.subr.mxu0 0.0
          %5868 = vmatpush1.msra.mxu0 0.0
          %5869 = vmatprep.subr.mxu0 0.0
          %5870 = vmatpush1.msra.mxu0 0.0
          %5871 = vmatprep.subr.mxu0 0.0
          %5872 = vmatpush1.msra.mxu0 0.0
          %5873 = vmatprep.subr.mxu0 0.0
          %5874 = vmatpush1.msra.mxu0 0.0
          %5875 = vmatprep.subr.mxu0 0.0
          %5876 = vmatpush1.msra.mxu0 0.0
          %5877 = vmatprep.subr.mxu0 0.0
          %5878 = vmatpush1.msra.mxu0 0.0
          %5879 = vmatprep.subr.mxu0 0.0
          %5880 = vmatpush1.msra.mxu0 0.0
          %5881 = vmatprep.subr.mxu0 0.0
          %5882 = vmatpush1.msra.mxu0 0.0
          %5883 = vmatprep.subr.mxu0 0.0
          %5884 = vmatpush1.msra.mxu0 0.0
          %5885 = vmatprep.subr.mxu0 0.0
          %5886 = vmatpush1.msra.mxu0 0.0
          %5887 = vmatprep.subr.mxu0 %v5839
          %5888 = vmatpush1.msra.mxu0 %v5836
          %5889 = vmatprep.subr.mxu0 %v5794
          %5890 = vmatpush1.msra.mxu0 %v5793
          %5891 = vmatprep.subr.mxu0 0.0
          %5892 = vmatpush2.msra.mxu0 0.0
          %5893 = vmatprep.subr.mxu0 0.0
          %5894 = vmatpush2.msra.mxu0 0.0
          %5895 = vmatprep.subr.mxu0 0.0
          %5896 = vmatpush2.msra.mxu0 0.0
          %5897 = vmatprep.subr.mxu0 0.0
          %5898 = vmatpush2.msra.mxu0 0.0
          %5899 = vmatprep.subr.mxu0 0.0
          %5900 = vmatpush2.msra.mxu0 0.0
          %5901 = vmatprep.subr.mxu0 0.0
          %5902 = vmatpush2.msra.mxu0 0.0
          %5903 = vmatprep.subr.mxu0 0.0
          %5904 = vmatpush2.msra.mxu0 0.0
          %5905 = vmatprep.subr.mxu0 0.0
          %5906 = vmatpush2.msra.mxu0 0.0
          %5907 = vmatprep.subr.mxu0 0.0
          %5908 = vmatpush2.msra.mxu0 0.0
          %5909 = vmatprep.subr.mxu0 0.0
          %5910 = vmatpush2.msra.mxu0 0.0
          %5911 = vmatprep.subr.mxu0 0.0
          %5912 = vmatpush2.msra.mxu0 0.0
          %5913 = vmatprep.subr.mxu0 0.0
          %5914 = vmatpush2.msra.mxu0 0.0
          %5915 = vmatprep.subr.mxu0 0.0
          %5916 = vmatpush2.msra.mxu0 0.0
          %5917 = vmatprep.subr.mxu0 0.0
          %5918 = vmatpush2.msra.mxu0 0.0
          %5919 = vmatprep.subr.mxu0 0.0
          %5920 = vmatpush2.msra.mxu0 0.0
          %5921 = vmatprep.subr.mxu0 0.0
          %5922 = vmatpush2.msra.mxu0 0.0
          %5923 = vmatprep.mubr.f32.mxu0 0.0
          %5924 = vmatmul.mubr.f32.gmra.mxu0 %v5830
          %v5925 = vpop.f32.mrf.mxu0
          %v5926 = vadd.f32 %v5813, %v5925
          %v5927 = vpop.f32.mrf.mxu0
          %v5928 = vadd.f32 %v5814, %v5927
          %5929 = vmatprep.mubr.f32.mxu0 0.0
          %5930 = vmatmul.mubr.f32.gmra.mxu0 %v5833
          %v5931 = vpop.f32.mrf.mxu0
          %v5932 = vadd.f32 %v5821, %v5931
          %v5933 = vpop.f32.mrf.mxu0
          %v5934 = vadd.f32 %v5822, %v5933
          %5935 = vdwg.mxu0
          %5936 = vmatprep.subr.mxu0 0.0
          %5937 = vmatpush1.msra.mxu0 0.0
          %5938 = vmatprep.subr.mxu0 0.0
          %5939 = vmatpush1.msra.mxu0 0.0
          %5940 = vmatprep.subr.mxu0 0.0
          %5941 = vmatpush1.msra.mxu0 0.0
          %5942 = vmatprep.subr.mxu0 0.0
          %5943 = vmatpush1.msra.mxu0 0.0
          %5944 = vmatprep.subr.mxu0 0.0
          %5945 = vmatpush1.msra.mxu0 0.0
          %5946 = vmatprep.subr.mxu0 0.0
          %5947 = vmatpush1.msra.mxu0 0.0
          %5948 = vmatprep.subr.mxu0 0.0
          %5949 = vmatpush1.msra.mxu0 0.0
          %5950 = vmatprep.subr.mxu0 0.0
          %5951 = vmatpush1.msra.mxu0 0.0
          %5952 = vmatprep.subr.mxu0 0.0
          %5953 = vmatpush1.msra.mxu0 0.0
          %5954 = vmatprep.subr.mxu0 0.0
          %5955 = vmatpush1.msra.mxu0 0.0
          %5956 = vmatprep.subr.mxu0 0.0
          %5957 = vmatpush1.msra.mxu0 0.0
          %5958 = vmatprep.subr.mxu0 0.0
          %5959 = vmatpush1.msra.mxu0 0.0
          %5960 = vmatprep.subr.mxu0 0.0
          %5961 = vmatpush1.msra.mxu0 0.0
          %5962 = vmatprep.subr.mxu0 0.0
          %5963 = vmatpush1.msra.mxu0 0.0
          %5964 = vmatprep.subr.mxu0 %v5845
          %5965 = vmatpush1.msra.mxu0 %v5842
          %5966 = vmatprep.subr.mxu0 %v5796
          %5967 = vmatpush1.msra.mxu0 %v5795
          %5968 = vmatprep.subr.mxu0 0.0
          %5969 = vmatpush2.msra.mxu0 0.0
          %5970 = vmatprep.subr.mxu0 0.0
          %5971 = vmatpush2.msra.mxu0 0.0
          %5972 = vmatprep.subr.mxu0 0.0
          %5973 = vmatpush2.msra.mxu0 0.0
          %5974 = vmatprep.subr.mxu0 0.0
          %5975 = vmatpush2.msra.mxu0 0.0
          %5976 = vmatprep.subr.mxu0 0.0
          %5977 = vmatpush2.msra.mxu0 0.0
          %5978 = vmatprep.subr.mxu0 0.0
          %5979 = vmatpush2.msra.mxu0 0.0
          %5980 = vmatprep.subr.mxu0 0.0
          %5981 = vmatpush2.msra.mxu0 0.0
          %5982 = vmatprep.subr.mxu0 0.0
          %5983 = vmatpush2.msra.mxu0 0.0
          %5984 = vmatprep.subr.mxu0 0.0
          %5985 = vmatpush2.msra.mxu0 0.0
          %5986 = vmatprep.subr.mxu0 0.0
          %5987 = vmatpush2.msra.mxu0 0.0
          %5988 = vmatprep.subr.mxu0 0.0
          %5989 = vmatpush2.msra.mxu0 0.0
          %5990 = vmatprep.subr.mxu0 0.0
          %5991 = vmatpush2.msra.mxu0 0.0
          %5992 = vmatprep.subr.mxu0 0.0
          %5993 = vmatpush2.msra.mxu0 0.0
          %5994 = vmatprep.subr.mxu0 0.0
          %5995 = vmatpush2.msra.mxu0 0.0
          %5996 = vmatprep.subr.mxu0 0.0
          %5997 = vmatpush2.msra.mxu0 0.0
          %5998 = vmatprep.subr.mxu0 0.0
          %5999 = vmatpush2.msra.mxu0 0.0
          %6000 = vmatprep.mubr.f32.mxu0 0.0
          %6001 = vmatmul.mubr.f32.gmra.mxu0 %v5830
          %v6002 = vpop.f32.mrf.mxu0
          %v6003 = vadd.f32 %v5815, %v6002
          %v6004 = vpop.f32.mrf.mxu0
          %v6005 = vadd.f32 %v5816, %v6004
          %6006 = vmatprep.mubr.f32.mxu0 0.0
          %6007 = vmatmul.mubr.f32.gmra.mxu0 %v5833
          %v6008 = vpop.f32.mrf.mxu0
          %v6009 = vadd.f32 %v5823, %v6008
          %v6010 = vpop.f32.mrf.mxu0
          %v6011 = vadd.f32 %v5824, %v6010
          %6012 = vdwg.mxu0
          %6013 = vmatprep.subr.mxu0 0.0
          %6014 = vmatpush1.msra.mxu0 0.0
          %6015 = vmatprep.subr.mxu0 0.0
          %6016 = vmatpush1.msra.mxu0 0.0
          %6017 = vmatprep.subr.mxu0 0.0
          %6018 = vmatpush1.msra.mxu0 0.0
          %6019 = vmatprep.subr.mxu0 0.0
          %6020 = vmatpush1.msra.mxu0 0.0
          %6021 = vmatprep.subr.mxu0 0.0
          %6022 = vmatpush1.msra.mxu0 0.0
          %6023 = vmatprep.subr.mxu0 0.0
          %6024 = vmatpush1.msra.mxu0 0.0
          %6025 = vmatprep.subr.mxu0 0.0
          %6026 = vmatpush1.msra.mxu0 0.0
          %6027 = vmatprep.subr.mxu0 0.0
          %6028 = vmatpush1.msra.mxu0 0.0
          %6029 = vmatprep.subr.mxu0 0.0
          %6030 = vmatpush1.msra.mxu0 0.0
          %6031 = vmatprep.subr.mxu0 0.0
          %6032 = vmatpush1.msra.mxu0 0.0
          %6033 = vmatprep.subr.mxu0 0.0
          %6034 = vmatpush1.msra.mxu0 0.0
          %6035 = vmatprep.subr.mxu0 0.0
          %6036 = vmatpush1.msra.mxu0 0.0
          %6037 = vmatprep.subr.mxu0 0.0
          %6038 = vmatpush1.msra.mxu0 0.0
          %6039 = vmatprep.subr.mxu0 0.0
          %6040 = vmatpush1.msra.mxu0 0.0
          %6041 = vmatprep.subr.mxu0 %v5851
          %6042 = vmatpush1.msra.mxu0 %v5848
          %6043 = vmatprep.subr.mxu0 %v5798
          %6044 = vmatpush1.msra.mxu0 %v5797
          %6045 = vmatprep.subr.mxu0 0.0
          %6046 = vmatpush2.msra.mxu0 0.0
          %6047 = vmatprep.subr.mxu0 0.0
          %6048 = vmatpush2.msra.mxu0 0.0
          %6049 = vmatprep.subr.mxu0 0.0
          %6050 = vmatpush2.msra.mxu0 0.0
          %6051 = vmatprep.subr.mxu0 0.0
          %6052 = vmatpush2.msra.mxu0 0.0
          %6053 = vmatprep.subr.mxu0 0.0
          %6054 = vmatpush2.msra.mxu0 0.0
          %6055 = vmatprep.subr.mxu0 0.0
          %6056 = vmatpush2.msra.mxu0 0.0
          %6057 = vmatprep.subr.mxu0 0.0
          %6058 = vmatpush2.msra.mxu0 0.0
          %6059 = vmatprep.subr.mxu0 0.0
          %6060 = vmatpush2.msra.mxu0 0.0
          %6061 = vmatprep.subr.mxu0 0.0
          %6062 = vmatpush2.msra.mxu0 0.0
          %6063 = vmatprep.subr.mxu0 0.0
          %6064 = vmatpush2.msra.mxu0 0.0
          %6065 = vmatprep.subr.mxu0 0.0
          %6066 = vmatpush2.msra.mxu0 0.0
          %6067 = vmatprep.subr.mxu0 0.0
          %6068 = vmatpush2.msra.mxu0 0.0
          %6069 = vmatprep.subr.mxu0 0.0
          %6070 = vmatpush2.msra.mxu0 0.0
          %6071 = vmatprep.subr.mxu0 0.0
          %6072 = vmatpush2.msra.mxu0 0.0
          %6073 = vmatprep.subr.mxu0 0.0
          %6074 = vmatpush2.msra.mxu0 0.0
          %6075 = vmatprep.subr.mxu0 0.0
          %6076 = vmatpush2.msra.mxu0 0.0
          %6077 = vmatprep.mubr.f32.mxu0 0.0
          %6078 = vmatmul.mubr.f32.gmra.mxu0 %v5830
          %v6079 = vpop.f32.mrf.mxu0
          %v6080 = vadd.f32 %v5817, %v6079
          %v6081 = vpop.f32.mrf.mxu0
          %v6082 = vadd.f32 %v5818, %v6081
          %6083 = vmatprep.mubr.f32.mxu0 0.0
          %6084 = vmatmul.mubr.f32.gmra.mxu0 %v5833
          %v6085 = vpop.f32.mrf.mxu0
          %v6086 = vadd.f32 %v5825, %v6085
          %v6087 = vpop.f32.mrf.mxu0
          %v6088 = vadd.f32 %v5826, %v6087
          %6089 = vdwg.mxu0
          %6090 = vmatprep.subr.mxu0 0.0
          %6091 = vmatpush1.msra.mxu0 0.0
          %6092 = vmatprep.subr.mxu0 0.0
          %6093 = vmatpush1.msra.mxu0 0.0
          %6094 = vmatprep.subr.mxu0 0.0
          %6095 = vmatpush1.msra.mxu0 0.0
          %6096 = vmatprep.subr.mxu0 0.0
          %6097 = vmatpush1.msra.mxu0 0.0
          %6098 = vmatprep.subr.mxu0 0.0
          %6099 = vmatpush1.msra.mxu0 0.0
          %6100 = vmatprep.subr.mxu0 0.0
          %6101 = vmatpush1.msra.mxu0 0.0
          %6102 = vmatprep.subr.mxu0 0.0
          %6103 = vmatpush1.msra.mxu0 0.0
          %6104 = vmatprep.subr.mxu0 0.0
          %6105 = vmatpush1.msra.mxu0 0.0
          %6106 = vmatprep.subr.mxu0 0.0
          %6107 = vmatpush1.msra.mxu0 0.0
          %6108 = vmatprep.subr.mxu0 0.0
          %6109 = vmatpush1.msra.mxu0 0.0
          %6110 = vmatprep.subr.mxu0 0.0
          %6111 = vmatpush1.msra.mxu0 0.0
          %6112 = vmatprep.subr.mxu0 0.0
          %6113 = vmatpush1.msra.mxu0 0.0
          %6114 = vmatprep.subr.mxu0 0.0
          %6115 = vmatpush1.msra.mxu0 0.0
          %6116 = vmatprep.subr.mxu0 0.0
          %6117 = vmatpush1.msra.mxu0 0.0
          %6118 = vmatprep.subr.mxu0 %v5857
          %6119 = vmatpush1.msra.mxu0 %v5854
          %6120 = vmatprep.subr.mxu0 %v5800
          %6121 = vmatpush1.msra.mxu0 %v5799
          %6122 = vmatprep.subr.mxu0 0.0
          %6123 = vmatpush2.msra.mxu0 0.0
          %6124 = vmatprep.subr.mxu0 0.0
          %6125 = vmatpush2.msra.mxu0 0.0
          %6126 = vmatprep.subr.mxu0 0.0
          %6127 = vmatpush2.msra.mxu0 0.0
          %6128 = vmatprep.subr.mxu0 0.0
          %6129 = vmatpush2.msra.mxu0 0.0
          %6130 = vmatprep.subr.mxu0 0.0
          %6131 = vmatpush2.msra.mxu0 0.0
          %6132 = vmatprep.subr.mxu0 0.0
          %6133 = vmatpush2.msra.mxu0 0.0
          %6134 = vmatprep.subr.mxu0 0.0
          %6135 = vmatpush2.msra.mxu0 0.0
          %6136 = vmatprep.subr.mxu0 0.0
          %6137 = vmatpush2.msra.mxu0 0.0
          %6138 = vmatprep.subr.mxu0 0.0
          %6139 = vmatpush2.msra.mxu0 0.0
          %6140 = vmatprep.subr.mxu0 0.0
          %6141 = vmatpush2.msra.mxu0 0.0
          %6142 = vmatprep.subr.mxu0 0.0
          %6143 = vmatpush2.msra.mxu0 0.0
          %6144 = vmatprep.subr.mxu0 0.0
          %6145 = vmatpush2.msra.mxu0 0.0
          %6146 = vmatprep.subr.mxu0 0.0
          %6147 = vmatpush2.msra.mxu0 0.0
          %6148 = vmatprep.subr.mxu0 0.0
          %6149 = vmatpush2.msra.mxu0 0.0
          %6150 = vmatprep.subr.mxu0 0.0
          %6151 = vmatpush2.msra.mxu0 0.0
          %6152 = vmatprep.subr.mxu0 0.0
          %6153 = vmatpush2.msra.mxu0 0.0
          %6154 = vmatprep.mubr.f32.mxu0 0.0
          %6155 = vmatmul.mubr.f32.gmra.mxu0 %v5830
          %v6156 = vpop.f32.mrf.mxu0
          %v6157 = vadd.f32 %v5819, %v6156
          %v6158 = vpop.f32.mrf.mxu0
          %v6159 = vadd.f32 %v5820, %v6158
          %6160 = vmatprep.mubr.f32.mxu0 0.0
          %6161 = vmatmul.mubr.f32.gmra.mxu0 %v5833
          %v6162 = vpop.f32.mrf.mxu0
          %v6163 = vadd.f32 %v5827, %v6162
          %v6164 = vpop.f32.mrf.mxu0
          %v6165 = vadd.f32 %v5828, %v6164
          %6166 = vdwg.mxu0
          %6168 = vset.pattern.permute.xlu0 0
          %6169 = vperm.xlu0 %6168, %v3092
          %v6170 = vpop.permute.xlu0 %6169
          %6173 = vset.pattern.permute.xlu0 0
          %6174 = vperm.xlu0 %6173, %v3093
          %v6175 = vpop.permute.xlu0 %6174
          %6178 = vset.pattern.permute.xlu0 0
          %6179 = vperm.xlu0 %6178, %v3094
          %v6180 = vpop.permute.xlu0 %6179
          %6183 = vset.pattern.permute.xlu0 0
          %6184 = vperm.xlu0 %6183, %v3095
          %v6185 = vpop.permute.xlu0 %6184
          %v6188 = vsel %vm4774, %v5809, 0
          %v6191 = vsel %vm4774, %v5810, 0
          %v6194 = vsel %vm4774, %v5811, 0
          %v6197 = vsel %vm4774, %v5812, 0
          %6199 = vmatprep.subr.mxu0 0.0
          %6200 = vmatpush1.msra.mxu0 0.0
          %6201 = vmatprep.subr.mxu0 0.0
          %6202 = vmatpush1.msra.mxu0 0.0
          %6203 = vmatprep.subr.mxu0 0.0
          %6204 = vmatpush1.msra.mxu0 0.0
          %6205 = vmatprep.subr.mxu0 0.0
          %6206 = vmatpush1.msra.mxu0 0.0
          %6207 = vmatprep.subr.mxu0 0.0
          %6208 = vmatpush1.msra.mxu0 0.0
          %6209 = vmatprep.subr.mxu0 0.0
          %6210 = vmatpush1.msra.mxu0 0.0
          %6211 = vmatprep.subr.mxu0 0.0
          %6212 = vmatpush1.msra.mxu0 0.0
          %6213 = vmatprep.subr.mxu0 0.0
          %6214 = vmatpush1.msra.mxu0 0.0
          %6215 = vmatprep.subr.mxu0 0.0
          %6216 = vmatpush1.msra.mxu0 0.0
          %6217 = vmatprep.subr.mxu0 0.0
          %6218 = vmatpush1.msra.mxu0 0.0
          %6219 = vmatprep.subr.mxu0 0.0
          %6220 = vmatpush1.msra.mxu0 0.0
          %6221 = vmatprep.subr.mxu0 0.0
          %6222 = vmatpush1.msra.mxu0 0.0
          %6223 = vmatprep.subr.mxu0 0.0
          %6224 = vmatpush1.msra.mxu0 0.0
          %6225 = vmatprep.subr.mxu0 0.0
          %6226 = vmatpush1.msra.mxu0 0.0
          %6227 = vmatprep.subr.mxu0 %v5934
          %6228 = vmatpush1.msra.mxu0 %v5932
          %6229 = vmatprep.subr.mxu0 %v5928
          %6230 = vmatpush1.msra.mxu0 %v5926
          %6231 = vmatprep.subr.mxu0 0.0
          %6232 = vmatpush2.msra.mxu0 0.0
          %6233 = vmatprep.subr.mxu0 0.0
          %6234 = vmatpush2.msra.mxu0 0.0
          %6235 = vmatprep.subr.mxu0 0.0
          %6236 = vmatpush2.msra.mxu0 0.0
          %6237 = vmatprep.subr.mxu0 0.0
          %6238 = vmatpush2.msra.mxu0 0.0
          %6239 = vmatprep.subr.mxu0 0.0
          %6240 = vmatpush2.msra.mxu0 0.0
          %6241 = vmatprep.subr.mxu0 0.0
          %6242 = vmatpush2.msra.mxu0 0.0
          %6243 = vmatprep.subr.mxu0 0.0
          %6244 = vmatpush2.msra.mxu0 0.0
          %6245 = vmatprep.subr.mxu0 0.0
          %6246 = vmatpush2.msra.mxu0 0.0
          %6247 = vmatprep.subr.mxu0 0.0
          %6248 = vmatpush2.msra.mxu0 0.0
          %6249 = vmatprep.subr.mxu0 0.0
          %6250 = vmatpush2.msra.mxu0 0.0
          %6251 = vmatprep.subr.mxu0 0.0
          %6252 = vmatpush2.msra.mxu0 0.0
          %6253 = vmatprep.subr.mxu0 0.0
          %6254 = vmatpush2.msra.mxu0 0.0
          %6255 = vmatprep.subr.mxu0 0.0
          %6256 = vmatpush2.msra.mxu0 0.0
          %6257 = vmatprep.subr.mxu0 0.0
          %6258 = vmatpush2.msra.mxu0 0.0
          %6259 = vmatprep.subr.mxu0 0.0
          %6260 = vmatpush2.msra.mxu0 0.0
          %6261 = vmatprep.subr.mxu0 0.0
          %6262 = vmatpush2.msra.mxu0 0.0
          %6263 = vmatprep.mubr.f32.mxu0 0.0
          %6264 = vmatmul.mubr.f32.gmra.mxu0 %v6188
          %v6265 = vpop.f32.mrf.mxu0
          %v6266 = vadd.f32 %v6170, %v6265
          %v6267 = vpop.f32.mrf.mxu0
          %v6268 = vadd.f32 %v6170, %v6267
          %6269 = vmatprep.mubr.f32.mxu0 0.0
          %6270 = vmatmul.mubr.f32.gmra.mxu0 %v6191
          %v6271 = vpop.f32.mrf.mxu0
          %v6272 = vadd.f32 %v6175, %v6271
          %v6273 = vpop.f32.mrf.mxu0
          %v6274 = vadd.f32 %v6175, %v6273
          %6275 = vmatprep.mubr.f32.mxu0 0.0
          %6276 = vmatmul.mubr.f32.gmra.mxu0 %v6194
          %v6277 = vpop.f32.mrf.mxu0
          %v6278 = vadd.f32 %v6180, %v6277
          %v6279 = vpop.f32.mrf.mxu0
          %v6280 = vadd.f32 %v6180, %v6279
          %6281 = vmatprep.mubr.f32.mxu0 0.0
          %6282 = vmatmul.mubr.f32.gmra.mxu0 %v6197
          %v6283 = vpop.f32.mrf.mxu0
          %v6284 = vadd.f32 %v6185, %v6283
          %v6285 = vpop.f32.mrf.mxu0
          %v6286 = vadd.f32 %v6185, %v6285
          %6287 = vdwg.mxu0
          %6288 = vmatprep.subr.mxu0 0.0
          %6289 = vmatpush1.msra.mxu0 0.0
          %6290 = vmatprep.subr.mxu0 0.0
          %6291 = vmatpush1.msra.mxu0 0.0
          %6292 = vmatprep.subr.mxu0 0.0
          %6293 = vmatpush1.msra.mxu0 0.0
          %6294 = vmatprep.subr.mxu0 0.0
          %6295 = vmatpush1.msra.mxu0 0.0
          %6296 = vmatprep.subr.mxu0 0.0
          %6297 = vmatpush1.msra.mxu0 0.0
          %6298 = vmatprep.subr.mxu0 0.0
          %6299 = vmatpush1.msra.mxu0 0.0
          %6300 = vmatprep.subr.mxu0 0.0
          %6301 = vmatpush1.msra.mxu0 0.0
          %6302 = vmatprep.subr.mxu0 0.0
          %6303 = vmatpush1.msra.mxu0 0.0
          %6304 = vmatprep.subr.mxu0 0.0
          %6305 = vmatpush1.msra.mxu0 0.0
          %6306 = vmatprep.subr.mxu0 0.0
          %6307 = vmatpush1.msra.mxu0 0.0
          %6308 = vmatprep.subr.mxu0 0.0
          %6309 = vmatpush1.msra.mxu0 0.0
          %6310 = vmatprep.subr.mxu0 0.0
          %6311 = vmatpush1.msra.mxu0 0.0
          %6312 = vmatprep.subr.mxu0 0.0
          %6313 = vmatpush1.msra.mxu0 0.0
          %6314 = vmatprep.subr.mxu0 0.0
          %6315 = vmatpush1.msra.mxu0 0.0
          %6316 = vmatprep.subr.mxu0 %v6011
          %6317 = vmatpush1.msra.mxu0 %v6009
          %6318 = vmatprep.subr.mxu0 %v6005
          %6319 = vmatpush1.msra.mxu0 %v6003
          %6320 = vmatprep.subr.mxu0 0.0
          %6321 = vmatpush2.msra.mxu0 0.0
          %6322 = vmatprep.subr.mxu0 0.0
          %6323 = vmatpush2.msra.mxu0 0.0
          %6324 = vmatprep.subr.mxu0 0.0
          %6325 = vmatpush2.msra.mxu0 0.0
          %6326 = vmatprep.subr.mxu0 0.0
          %6327 = vmatpush2.msra.mxu0 0.0
          %6328 = vmatprep.subr.mxu0 0.0
          %6329 = vmatpush2.msra.mxu0 0.0
          %6330 = vmatprep.subr.mxu0 0.0
          %6331 = vmatpush2.msra.mxu0 0.0
          %6332 = vmatprep.subr.mxu0 0.0
          %6333 = vmatpush2.msra.mxu0 0.0
          %6334 = vmatprep.subr.mxu0 0.0
          %6335 = vmatpush2.msra.mxu0 0.0
          %6336 = vmatprep.subr.mxu0 0.0
          %6337 = vmatpush2.msra.mxu0 0.0
          %6338 = vmatprep.subr.mxu0 0.0
          %6339 = vmatpush2.msra.mxu0 0.0
          %6340 = vmatprep.subr.mxu0 0.0
          %6341 = vmatpush2.msra.mxu0 0.0
          %6342 = vmatprep.subr.mxu0 0.0
          %6343 = vmatpush2.msra.mxu0 0.0
          %6344 = vmatprep.subr.mxu0 0.0
          %6345 = vmatpush2.msra.mxu0 0.0
          %6346 = vmatprep.subr.mxu0 0.0
          %6347 = vmatpush2.msra.mxu0 0.0
          %6348 = vmatprep.subr.mxu0 0.0
          %6349 = vmatpush2.msra.mxu0 0.0
          %6350 = vmatprep.subr.mxu0 0.0
          %6351 = vmatpush2.msra.mxu0 0.0
          %6352 = vmatprep.mubr.f32.mxu0 0.0
          %6353 = vmatmul.mubr.f32.gmra.mxu0 %v6188
          %v6354 = vpop.f32.mrf.mxu0
          %v6355 = vadd.f32 %v6170, %v6354
          %v6356 = vpop.f32.mrf.mxu0
          %v6357 = vadd.f32 %v6170, %v6356
          %6358 = vmatprep.mubr.f32.mxu0 0.0
          %6359 = vmatmul.mubr.f32.gmra.mxu0 %v6191
          %v6360 = vpop.f32.mrf.mxu0
          %v6361 = vadd.f32 %v6175, %v6360
          %v6362 = vpop.f32.mrf.mxu0
          %v6363 = vadd.f32 %v6175, %v6362
          %6364 = vmatprep.mubr.f32.mxu0 0.0
          %6365 = vmatmul.mubr.f32.gmra.mxu0 %v6194
          %v6366 = vpop.f32.mrf.mxu0
          %v6367 = vadd.f32 %v6180, %v6366
          %v6368 = vpop.f32.mrf.mxu0
          %v6369 = vadd.f32 %v6180, %v6368
          %6370 = vmatprep.mubr.f32.mxu0 0.0
          %6371 = vmatmul.mubr.f32.gmra.mxu0 %v6197
          %v6372 = vpop.f32.mrf.mxu0
          %v6373 = vadd.f32 %v6185, %v6372
          %v6374 = vpop.f32.mrf.mxu0
          %v6375 = vadd.f32 %v6185, %v6374
          %6376 = vdwg.mxu0
          %6377 = vmatprep.subr.mxu0 0.0
          %6378 = vmatpush1.msra.mxu0 0.0
          %6379 = vmatprep.subr.mxu0 0.0
          %6380 = vmatpush1.msra.mxu0 0.0
          %6381 = vmatprep.subr.mxu0 0.0
          %6382 = vmatpush1.msra.mxu0 0.0
          %6383 = vmatprep.subr.mxu0 0.0
          %6384 = vmatpush1.msra.mxu0 0.0
          %6385 = vmatprep.subr.mxu0 0.0
          %6386 = vmatpush1.msra.mxu0 0.0
          %6387 = vmatprep.subr.mxu0 0.0
          %6388 = vmatpush1.msra.mxu0 0.0
          %6389 = vmatprep.subr.mxu0 0.0
          %6390 = vmatpush1.msra.mxu0 0.0
          %6391 = vmatprep.subr.mxu0 0.0
          %6392 = vmatpush1.msra.mxu0 0.0
          %6393 = vmatprep.subr.mxu0 0.0
          %6394 = vmatpush1.msra.mxu0 0.0
          %6395 = vmatprep.subr.mxu0 0.0
          %6396 = vmatpush1.msra.mxu0 0.0
          %6397 = vmatprep.subr.mxu0 0.0
          %6398 = vmatpush1.msra.mxu0 0.0
          %6399 = vmatprep.subr.mxu0 0.0
          %6400 = vmatpush1.msra.mxu0 0.0
          %6401 = vmatprep.subr.mxu0 0.0
          %6402 = vmatpush1.msra.mxu0 0.0
          %6403 = vmatprep.subr.mxu0 0.0
          %6404 = vmatpush1.msra.mxu0 0.0
          %6405 = vmatprep.subr.mxu0 %v6088
          %6406 = vmatpush1.msra.mxu0 %v6086
          %6407 = vmatprep.subr.mxu0 %v6082
          %6408 = vmatpush1.msra.mxu0 %v6080
          %6409 = vmatprep.subr.mxu0 0.0
          %6410 = vmatpush2.msra.mxu0 0.0
          %6411 = vmatprep.subr.mxu0 0.0
          %6412 = vmatpush2.msra.mxu0 0.0
          %6413 = vmatprep.subr.mxu0 0.0
          %6414 = vmatpush2.msra.mxu0 0.0
          %6415 = vmatprep.subr.mxu0 0.0
          %6416 = vmatpush2.msra.mxu0 0.0
          %6417 = vmatprep.subr.mxu0 0.0
          %6418 = vmatpush2.msra.mxu0 0.0
          %6419 = vmatprep.subr.mxu0 0.0
          %6420 = vmatpush2.msra.mxu0 0.0
          %6421 = vmatprep.subr.mxu0 0.0
          %6422 = vmatpush2.msra.mxu0 0.0
          %6423 = vmatprep.subr.mxu0 0.0
          %6424 = vmatpush2.msra.mxu0 0.0
          %6425 = vmatprep.subr.mxu0 0.0
          %6426 = vmatpush2.msra.mxu0 0.0
          %6427 = vmatprep.subr.mxu0 0.0
          %6428 = vmatpush2.msra.mxu0 0.0
          %6429 = vmatprep.subr.mxu0 0.0
          %6430 = vmatpush2.msra.mxu0 0.0
          %6431 = vmatprep.subr.mxu0 0.0
          %6432 = vmatpush2.msra.mxu0 0.0
          %6433 = vmatprep.subr.mxu0 0.0
          %6434 = vmatpush2.msra.mxu0 0.0
          %6435 = vmatprep.subr.mxu0 0.0
          %6436 = vmatpush2.msra.mxu0 0.0
          %6437 = vmatprep.subr.mxu0 0.0
          %6438 = vmatpush2.msra.mxu0 0.0
          %6439 = vmatprep.subr.mxu0 0.0
          %6440 = vmatpush2.msra.mxu0 0.0
          %6441 = vmatprep.mubr.f32.mxu0 0.0
          %6442 = vmatmul.mubr.f32.gmra.mxu0 %v6188
          %v6443 = vpop.f32.mrf.mxu0
          %v6444 = vadd.f32 %v6170, %v6443
          %v6445 = vpop.f32.mrf.mxu0
          %v6446 = vadd.f32 %v6170, %v6445
          %6447 = vmatprep.mubr.f32.mxu0 0.0
          %6448 = vmatmul.mubr.f32.gmra.mxu0 %v6191
          %v6449 = vpop.f32.mrf.mxu0
          %v6450 = vadd.f32 %v6175, %v6449
          %v6451 = vpop.f32.mrf.mxu0
          %v6452 = vadd.f32 %v6175, %v6451
          %6453 = vmatprep.mubr.f32.mxu0 0.0
          %6454 = vmatmul.mubr.f32.gmra.mxu0 %v6194
          %v6455 = vpop.f32.mrf.mxu0
          %v6456 = vadd.f32 %v6180, %v6455
          %v6457 = vpop.f32.mrf.mxu0
          %v6458 = vadd.f32 %v6180, %v6457
          %6459 = vmatprep.mubr.f32.mxu0 0.0
          %6460 = vmatmul.mubr.f32.gmra.mxu0 %v6197
          %v6461 = vpop.f32.mrf.mxu0
          %v6462 = vadd.f32 %v6185, %v6461
          %v6463 = vpop.f32.mrf.mxu0
          %v6464 = vadd.f32 %v6185, %v6463
          %6465 = vdwg.mxu0
          %6466 = vmatprep.subr.mxu0 0.0
          %6467 = vmatpush1.msra.mxu0 0.0
          %6468 = vmatprep.subr.mxu0 0.0
          %6469 = vmatpush1.msra.mxu0 0.0
          %6470 = vmatprep.subr.mxu0 0.0
          %6471 = vmatpush1.msra.mxu0 0.0
          %6472 = vmatprep.subr.mxu0 0.0
          %6473 = vmatpush1.msra.mxu0 0.0
          %6474 = vmatprep.subr.mxu0 0.0
          %6475 = vmatpush1.msra.mxu0 0.0
          %6476 = vmatprep.subr.mxu0 0.0
          %6477 = vmatpush1.msra.mxu0 0.0
          %6478 = vmatprep.subr.mxu0 0.0
          %6479 = vmatpush1.msra.mxu0 0.0
          %6480 = vmatprep.subr.mxu0 0.0
          %6481 = vmatpush1.msra.mxu0 0.0
          %6482 = vmatprep.subr.mxu0 0.0
          %6483 = vmatpush1.msra.mxu0 0.0
          %6484 = vmatprep.subr.mxu0 0.0
          %6485 = vmatpush1.msra.mxu0 0.0
          %6486 = vmatprep.subr.mxu0 0.0
          %6487 = vmatpush1.msra.mxu0 0.0
          %6488 = vmatprep.subr.mxu0 0.0
          %6489 = vmatpush1.msra.mxu0 0.0
          %6490 = vmatprep.subr.mxu0 0.0
          %6491 = vmatpush1.msra.mxu0 0.0
          %6492 = vmatprep.subr.mxu0 0.0
          %6493 = vmatpush1.msra.mxu0 0.0
          %6494 = vmatprep.subr.mxu0 %v6165
          %6495 = vmatpush1.msra.mxu0 %v6163
          %6496 = vmatprep.subr.mxu0 %v6159
          %6497 = vmatpush1.msra.mxu0 %v6157
          %6498 = vmatprep.subr.mxu0 0.0
          %6499 = vmatpush2.msra.mxu0 0.0
          %6500 = vmatprep.subr.mxu0 0.0
          %6501 = vmatpush2.msra.mxu0 0.0
          %6502 = vmatprep.subr.mxu0 0.0
          %6503 = vmatpush2.msra.mxu0 0.0
          %6504 = vmatprep.subr.mxu0 0.0
          %6505 = vmatpush2.msra.mxu0 0.0
          %6506 = vmatprep.subr.mxu0 0.0
          %6507 = vmatpush2.msra.mxu0 0.0
          %6508 = vmatprep.subr.mxu0 0.0
          %6509 = vmatpush2.msra.mxu0 0.0
          %6510 = vmatprep.subr.mxu0 0.0
          %6511 = vmatpush2.msra.mxu0 0.0
          %6512 = vmatprep.subr.mxu0 0.0
          %6513 = vmatpush2.msra.mxu0 0.0
          %6514 = vmatprep.subr.mxu0 0.0
          %6515 = vmatpush2.msra.mxu0 0.0
          %6516 = vmatprep.subr.mxu0 0.0
          %6517 = vmatpush2.msra.mxu0 0.0
          %6518 = vmatprep.subr.mxu0 0.0
          %6519 = vmatpush2.msra.mxu0 0.0
          %6520 = vmatprep.subr.mxu0 0.0
          %6521 = vmatpush2.msra.mxu0 0.0
          %6522 = vmatprep.subr.mxu0 0.0
          %6523 = vmatpush2.msra.mxu0 0.0
          %6524 = vmatprep.subr.mxu0 0.0
          %6525 = vmatpush2.msra.mxu0 0.0
          %6526 = vmatprep.subr.mxu0 0.0
          %6527 = vmatpush2.msra.mxu0 0.0
          %6528 = vmatprep.subr.mxu0 0.0
          %6529 = vmatpush2.msra.mxu0 0.0
          %6530 = vmatprep.mubr.f32.mxu0 0.0
          %6531 = vmatmul.mubr.f32.gmra.mxu0 %v6188
          %v6532 = vpop.f32.mrf.mxu0
          %v6533 = vadd.f32 %v6170, %v6532
          %v6534 = vpop.f32.mrf.mxu0
          %v6535 = vadd.f32 %v6170, %v6534
          %6536 = vmatprep.mubr.f32.mxu0 0.0
          %6537 = vmatmul.mubr.f32.gmra.mxu0 %v6191
          %v6538 = vpop.f32.mrf.mxu0
          %v6539 = vadd.f32 %v6175, %v6538
          %v6540 = vpop.f32.mrf.mxu0
          %v6541 = vadd.f32 %v6175, %v6540
          %6542 = vmatprep.mubr.f32.mxu0 0.0
          %6543 = vmatmul.mubr.f32.gmra.mxu0 %v6194
          %v6544 = vpop.f32.mrf.mxu0
          %v6545 = vadd.f32 %v6180, %v6544
          %v6546 = vpop.f32.mrf.mxu0
          %v6547 = vadd.f32 %v6180, %v6546
          %6548 = vmatprep.mubr.f32.mxu0 0.0
          %6549 = vmatmul.mubr.f32.gmra.mxu0 %v6197
          %v6550 = vpop.f32.mrf.mxu0
          %v6551 = vadd.f32 %v6185, %v6550
          %v6552 = vpop.f32.mrf.mxu0
          %v6553 = vadd.f32 %v6185, %v6552
          %6554 = vdwg.mxu0
          %v6555 = vld [vmem:[%s0] sm:$0xff]
          %v6556 = vld [vmem:[%s0 + $0x8] sm:$0xff]
          %v6557 = vld [vmem:[%s0 + $0x10] sm:$0xff]
          %v6558 = vld [vmem:[%s0 + $0x18] sm:$0xff]
          %v6559 = vld [vmem:[%s0 + $0x20] sm:$0xff]
          %v6560 = vld [vmem:[%s0 + $0x28] sm:$0xff]
          %v6561 = vld [vmem:[%s0 + $0x30] sm:$0xff]
          %v6562 = vld [vmem:[%s0 + $0x38] sm:$0xff]
          %v6563 = vld [vmem:[%s0 + $0x40] sm:$0xff]
          %v6564 = vld [vmem:[%s0 + $0x48] sm:$0xff]
          %v6565 = vld [vmem:[%s0 + $0x50] sm:$0xff]
          %v6566 = vld [vmem:[%s0 + $0x58] sm:$0xff]
          %v6567 = vld [vmem:[%s0 + $0x60] sm:$0xff]
          %v6568 = vld [vmem:[%s0 + $0x68] sm:$0xff]
          %v6569 = vld [vmem:[%s0 + $0x70] sm:$0xff]
          %v6570 = vld [vmem:[%s0 + $0x78] sm:$0xff]
          %v6571 = vld [vmem:[%s0 + $0x80] sm:$0xff]
          %v6572 = vld [vmem:[%s0 + $0x88] sm:$0xff]
          %v6573 = vld [vmem:[%s0 + $0x90] sm:$0xff]
          %v6574 = vld [vmem:[%s0 + $0x98] sm:$0xff]
          %v6575 = vld [vmem:[%s0 + $0xa0] sm:$0xff]
          %v6576 = vld [vmem:[%s0 + $0xa8] sm:$0xff]
          %v6577 = vld [vmem:[%s0 + $0xb0] sm:$0xff]
          %v6578 = vld [vmem:[%s0 + $0xb8] sm:$0xff]
          %v6579 = vld [vmem:[%s0 + $0xc0] sm:$0xff]
          %v6580 = vld [vmem:[%s0 + $0xc8] sm:$0xff]
          %v6581 = vld [vmem:[%s0 + $0xd0] sm:$0xff]
          %v6582 = vld [vmem:[%s0 + $0xd8] sm:$0xff]
          %v6583 = vld [vmem:[%s0 + $0xe0] sm:$0xff]
          %v6584 = vld [vmem:[%s0 + $0xe8] sm:$0xff]
          %v6585 = vld [vmem:[%s0 + $0xf0] sm:$0xff]
          %v6586 = vld [vmem:[%s0 + $0xf8] sm:$0xff]
          %v6587 = vxor.u32 %v6266, 2147483648
          %v6588 = vxor.u32 %v6268, 2147483648
          %v6589 = vxor.u32 %v6355, 2147483648
          %v6590 = vxor.u32 %v6357, 2147483648
          %v6591 = vxor.u32 %v6444, 2147483648
          %v6592 = vxor.u32 %v6446, 2147483648
          %v6593 = vxor.u32 %v6533, 2147483648
          %v6594 = vxor.u32 %v6535, 2147483648
          %v6595 = vxor.u32 %v6272, 2147483648
          %v6596 = vxor.u32 %v6274, 2147483648
          %v6597 = vxor.u32 %v6361, 2147483648
          %v6598 = vxor.u32 %v6363, 2147483648
          %v6599 = vxor.u32 %v6450, 2147483648
          %v6600 = vxor.u32 %v6452, 2147483648
          %v6601 = vxor.u32 %v6539, 2147483648
          %v6602 = vxor.u32 %v6541, 2147483648
          %v6603 = vxor.u32 %v6278, 2147483648
          %v6604 = vxor.u32 %v6280, 2147483648
          %v6605 = vxor.u32 %v6367, 2147483648
          %v6606 = vxor.u32 %v6369, 2147483648
          %v6607 = vxor.u32 %v6456, 2147483648
          %v6608 = vxor.u32 %v6458, 2147483648
          %v6609 = vxor.u32 %v6545, 2147483648
          %v6610 = vxor.u32 %v6547, 2147483648
          %v6611 = vxor.u32 %v6284, 2147483648
          %v6612 = vxor.u32 %v6286, 2147483648
          %v6613 = vxor.u32 %v6373, 2147483648
          %v6614 = vxor.u32 %v6375, 2147483648
          %v6615 = vxor.u32 %v6462, 2147483648
          %v6616 = vxor.u32 %v6464, 2147483648
          %v6617 = vxor.u32 %v6551, 2147483648
          %v6618 = vxor.u32 %v6553, 2147483648
          %v6619 = vmul.f32 %v6587, 1.442695
          %v6620 = vpow.pop %v6619
          %v6621 = vmul.f32 %v6588, 1.442695
          %v6622 = vpow.pop %v6621
          %v6623 = vmul.f32 %v6589, 1.442695
          %v6624 = vpow.pop %v6623
          %v6625 = vmul.f32 %v6590, 1.442695
          %v6626 = vpow.pop %v6625
          %v6627 = vmul.f32 %v6591, 1.442695
          %v6628 = vpow.pop %v6627
          %v6629 = vmul.f32 %v6592, 1.442695
          %v6630 = vpow.pop %v6629
          %v6631 = vmul.f32 %v6593, 1.442695
          %v6632 = vpow.pop %v6631
          %v6633 = vmul.f32 %v6594, 1.442695
          %v6634 = vpow.pop %v6633
          %v6635 = vmul.f32 %v6595, 1.442695
          %v6636 = vpow.pop %v6635
          %v6637 = vmul.f32 %v6596, 1.442695
          %v6638 = vpow.pop %v6637
          %v6639 = vmul.f32 %v6597, 1.442695
          %v6640 = vpow.pop %v6639
          %v6641 = vmul.f32 %v6598, 1.442695
          %v6642 = vpow.pop %v6641
          %v6643 = vmul.f32 %v6599, 1.442695
          %v6644 = vpow.pop %v6643
          %v6645 = vmul.f32 %v6600, 1.442695
          %v6646 = vpow.pop %v6645
          %v6647 = vmul.f32 %v6601, 1.442695
          %v6648 = vpow.pop %v6647
          %v6649 = vmul.f32 %v6602, 1.442695
          %v6650 = vpow.pop %v6649
          %v6651 = vmul.f32 %v6603, 1.442695
          %v6652 = vpow.pop %v6651
          %v6653 = vmul.f32 %v6604, 1.442695
          %v6654 = vpow.pop %v6653
          %v6655 = vmul.f32 %v6605, 1.442695
          %v6656 = vpow.pop %v6655
          %v6657 = vmul.f32 %v6606, 1.442695
          %v6658 = vpow.pop %v6657
          %v6659 = vmul.f32 %v6607, 1.442695
          %v6660 = vpow.pop %v6659
          %v6661 = vmul.f32 %v6608, 1.442695
          %v6662 = vpow.pop %v6661
          %v6663 = vmul.f32 %v6609, 1.442695
          %v6664 = vpow.pop %v6663
          %v6665 = vmul.f32 %v6610, 1.442695
          %v6666 = vpow.pop %v6665
          %v6667 = vmul.f32 %v6611, 1.442695
          %v6668 = vpow.pop %v6667
          %v6669 = vmul.f32 %v6612, 1.442695
          %v6670 = vpow.pop %v6669
          %v6671 = vmul.f32 %v6613, 1.442695
          %v6672 = vpow.pop %v6671
          %v6673 = vmul.f32 %v6614, 1.442695
          %v6674 = vpow.pop %v6673
          %v6675 = vmul.f32 %v6615, 1.442695
          %v6676 = vpow.pop %v6675
          %v6677 = vmul.f32 %v6616, 1.442695
          %v6678 = vpow.pop %v6677
          %v6679 = vmul.f32 %v6617, 1.442695
          %v6680 = vpow.pop %v6679
          %v6681 = vmul.f32 %v6618, 1.442695
          %v6682 = vpow.pop %v6681
          %v6683 = vadd.f32 %v6620, 1.0
          %v6684 = vadd.f32 %v6622, 1.0
          %v6685 = vadd.f32 %v6624, 1.0
          %v6686 = vadd.f32 %v6626, 1.0
          %v6687 = vadd.f32 %v6628, 1.0
          %v6688 = vadd.f32 %v6630, 1.0
          %v6689 = vadd.f32 %v6632, 1.0
          %v6690 = vadd.f32 %v6634, 1.0
          %v6691 = vadd.f32 %v6636, 1.0
          %v6692 = vadd.f32 %v6638, 1.0
          %v6693 = vadd.f32 %v6640, 1.0
          %v6694 = vadd.f32 %v6642, 1.0
          %v6695 = vadd.f32 %v6644, 1.0
          %v6696 = vadd.f32 %v6646, 1.0
          %v6697 = vadd.f32 %v6648, 1.0
          %v6698 = vadd.f32 %v6650, 1.0
          %v6699 = vadd.f32 %v6652, 1.0
          %v6700 = vadd.f32 %v6654, 1.0
          %v6701 = vadd.f32 %v6656, 1.0
          %v6702 = vadd.f32 %v6658, 1.0
          %v6703 = vadd.f32 %v6660, 1.0
          %v6704 = vadd.f32 %v6662, 1.0
          %v6705 = vadd.f32 %v6664, 1.0
          %v6706 = vadd.f32 %v6666, 1.0
          %v6707 = vadd.f32 %v6668, 1.0
          %v6708 = vadd.f32 %v6670, 1.0
          %v6709 = vadd.f32 %v6672, 1.0
          %v6710 = vadd.f32 %v6674, 1.0
          %v6711 = vadd.f32 %v6676, 1.0
          %v6712 = vadd.f32 %v6678, 1.0
          %v6713 = vadd.f32 %v6680, 1.0
          %v6714 = vadd.f32 %v6682, 1.0
          %v6715 = vrcp.pop %v6683
          %v6716 = vmul.f32 1.0, %v6715
          %v6717 = vrcp.pop %v6684
          %v6718 = vmul.f32 1.0, %v6717
          %v6719 = vrcp.pop %v6685
          %v6720 = vmul.f32 1.0, %v6719
          %v6721 = vrcp.pop %v6686
          %v6722 = vmul.f32 1.0, %v6721
          %v6723 = vrcp.pop %v6687
          %v6724 = vmul.f32 1.0, %v6723
          %v6725 = vrcp.pop %v6688
          %v6726 = vmul.f32 1.0, %v6725
          %v6727 = vrcp.pop %v6689
          %v6728 = vmul.f32 1.0, %v6727
          %v6729 = vrcp.pop %v6690
          %v6730 = vmul.f32 1.0, %v6729
          %v6731 = vrcp.pop %v6691
          %v6732 = vmul.f32 1.0, %v6731
          %v6733 = vrcp.pop %v6692
          %v6734 = vmul.f32 1.0, %v6733
          %v6735 = vrcp.pop %v6693
          %v6736 = vmul.f32 1.0, %v6735
          %v6737 = vrcp.pop %v6694
          %v6738 = vmul.f32 1.0, %v6737
          %v6739 = vrcp.pop %v6695
          %v6740 = vmul.f32 1.0, %v6739
          %v6741 = vrcp.pop %v6696
          %v6742 = vmul.f32 1.0, %v6741
          %v6743 = vrcp.pop %v6697
          %v6744 = vmul.f32 1.0, %v6743
          %v6745 = vrcp.pop %v6698
          %v6746 = vmul.f32 1.0, %v6745
          %v6747 = vrcp.pop %v6699
          %v6748 = vmul.f32 1.0, %v6747
          %v6749 = vrcp.pop %v6700
          %v6750 = vmul.f32 1.0, %v6749
          %v6751 = vrcp.pop %v6701
          %v6752 = vmul.f32 1.0, %v6751
          %v6753 = vrcp.pop %v6702
          %v6754 = vmul.f32 1.0, %v6753
          %v6755 = vrcp.pop %v6703
          %v6756 = vmul.f32 1.0, %v6755
          %v6757 = vrcp.pop %v6704
          %v6758 = vmul.f32 1.0, %v6757
          %v6759 = vrcp.pop %v6705
          %v6760 = vmul.f32 1.0, %v6759
          %v6761 = vrcp.pop %v6706
          %v6762 = vmul.f32 1.0, %v6761
          %v6763 = vrcp.pop %v6707
          %v6764 = vmul.f32 1.0, %v6763
          %v6765 = vrcp.pop %v6708
          %v6766 = vmul.f32 1.0, %v6765
          %v6767 = vrcp.pop %v6709
          %v6768 = vmul.f32 1.0, %v6767
          %v6769 = vrcp.pop %v6710
          %v6770 = vmul.f32 1.0, %v6769
          %v6771 = vrcp.pop %v6711
          %v6772 = vmul.f32 1.0, %v6771
          %v6773 = vrcp.pop %v6712
          %v6774 = vmul.f32 1.0, %v6773
          %v6775 = vrcp.pop %v6713
          %v6776 = vmul.f32 1.0, %v6775
          %v6777 = vrcp.pop %v6714
          %v6778 = vmul.f32 1.0, %v6777
          %v6779 = vmul.f32 %v6555, %v6716
          %v6780 = vmul.f32 %v6556, %v6718
          %v6781 = vmul.f32 %v6557, %v6720
          %v6782 = vmul.f32 %v6558, %v6722
          %v6783 = vmul.f32 %v6559, %v6724
          %v6784 = vmul.f32 %v6560, %v6726
          %v6785 = vmul.f32 %v6561, %v6728
          %v6786 = vmul.f32 %v6562, %v6730
          %v6787 = vmul.f32 %v6563, %v6732
          %v6788 = vmul.f32 %v6564, %v6734
          %v6789 = vmul.f32 %v6565, %v6736
          %v6790 = vmul.f32 %v6566, %v6738
          %v6791 = vmul.f32 %v6567, %v6740
          %v6792 = vmul.f32 %v6568, %v6742
          %v6793 = vmul.f32 %v6569, %v6744
          %v6794 = vmul.f32 %v6570, %v6746
          %v6795 = vmul.f32 %v6571, %v6748
          %v6796 = vmul.f32 %v6572, %v6750
          %v6797 = vmul.f32 %v6573, %v6752
          %v6798 = vmul.f32 %v6574, %v6754
          %v6799 = vmul.f32 %v6575, %v6756
          %v6800 = vmul.f32 %v6576, %v6758
          %v6801 = vmul.f32 %v6577, %v6760
          %v6802 = vmul.f32 %v6578, %v6762
          %v6803 = vmul.f32 %v6579, %v6764
          %v6804 = vmul.f32 %v6580, %v6766
          %v6805 = vmul.f32 %v6581, %v6768
          %v6806 = vmul.f32 %v6582, %v6770
          %v6807 = vmul.f32 %v6583, %v6772
          %v6808 = vmul.f32 %v6584, %v6774
          %v6809 = vmul.f32 %v6585, %v6776
          %v6810 = vmul.f32 %v6586, %v6778
          %6811 = vst [vmem:[%s12] sm:$0xff] %v6779
          %6812 = vst [vmem:[%s12 + $0x8] sm:$0xff] %v6780
          %6813 = vst [vmem:[%s12 + $0x10] sm:$0xff] %v6781
          %6814 = vst [vmem:[%s12 + $0x18] sm:$0xff] %v6782
          %6815 = vst [vmem:[%s12 + $0x20] sm:$0xff] %v6783
          %6816 = vst [vmem:[%s12 + $0x28] sm:$0xff] %v6784
          %6817 = vst [vmem:[%s12 + $0x30] sm:$0xff] %v6785
          %6818 = vst [vmem:[%s12 + $0x38] sm:$0xff] %v6786
          %6819 = vst [vmem:[%s12 + $0x40] sm:$0xff] %v6787
          %6820 = vst [vmem:[%s12 + $0x48] sm:$0xff] %v6788
          %6821 = vst [vmem:[%s12 + $0x50] sm:$0xff] %v6789
          %6822 = vst [vmem:[%s12 + $0x58] sm:$0xff] %v6790
          %6823 = vst [vmem:[%s12 + $0x60] sm:$0xff] %v6791
          %6824 = vst [vmem:[%s12 + $0x68] sm:$0xff] %v6792
          %6825 = vst [vmem:[%s12 + $0x70] sm:$0xff] %v6793
          %6826 = vst [vmem:[%s12 + $0x78] sm:$0xff] %v6794
          %6827 = vst [vmem:[%s12 + $0x80] sm:$0xff] %v6795
          %6828 = vst [vmem:[%s12 + $0x88] sm:$0xff] %v6796
          %6829 = vst [vmem:[%s12 + $0x90] sm:$0xff] %v6797
          %6830 = vst [vmem:[%s12 + $0x98] sm:$0xff] %v6798
          %6831 = vst [vmem:[%s12 + $0xa0] sm:$0xff] %v6799
          %6832 = vst [vmem:[%s12 + $0xa8] sm:$0xff] %v6800
          %6833 = vst [vmem:[%s12 + $0xb0] sm:$0xff] %v6801
          %6834 = vst [vmem:[%s12 + $0xb8] sm:$0xff] %v6802
          %6835 = vst [vmem:[%s12 + $0xc0] sm:$0xff] %v6803
          %6836 = vst [vmem:[%s12 + $0xc8] sm:$0xff] %v6804
          %6837 = vst [vmem:[%s12 + $0xd0] sm:$0xff] %v6805
          %6838 = vst [vmem:[%s12 + $0xd8] sm:$0xff] %v6806
          %6839 = vst [vmem:[%s12 + $0xe0] sm:$0xff] %v6807
          %6840 = vst [vmem:[%s12 + $0xe8] sm:$0xff] %v6808
          %6841 = vst [vmem:[%s12 + $0xf0] sm:$0xff] %v6809
          %6842 = vst [vmem:[%s12 + $0xf8] sm:$0xff] %v6810
        $region96: #{fwd.1} parent=67 // pred_fallthru
          _
        // Predicated region
        $region97: #{fwd.1} parent=67 // pred_check
          %p6843 = pneg %p298
        $region98: #{fwd.1} parent=67 // pred_check_branch
          %6845 = sbr.rel (%p6843) target = $region100
        $region99: #{fwd.1} parent=67 // pred_region
          _
        $region100: #{fwd.1} parent=67 // pred_fallthru
          _
        // Predicated region
        $region101: #{fwd.1} parent=67 // pred_check
          %p6846 = pneg %p298
        $region102: #{fwd.1} parent=67 // pred_check_branch
          %6848 = sbr.rel (%p6846) target = $region104
        $region103: #{fwd.1} parent=67 // pred_region
          _
        $region104: #{fwd.1} parent=67 // pred_fallthru
          _
      $region68: #{fwd.1} parent=5 // pred_fallthru
        _
      %p6849 = scmp.le.s32.totalorder 2, %s23
      // Predicated region
      $region105: #{fwd.1} parent=5 // pred_check
        %p6850 = pneg %p6849
      $region106: #{fwd.1} parent=5 // pred_check_branch
        %6852 = sbr.rel (%p6850) target = $region108
      $region107: #{fwd.1} parent=5 // pred_region
        %s6853 = ssub.s32 %s23, 2
      $region108: #{fwd.1} parent=5 // pred_fallthru
        _
    $region6: #{fwd.1} parent=1 // loop_footer
      %s27 = sadd.s32 1, %s23
    $region7: #{fwd.1} parent=1 // loop_footer_branch
      %22 = sbr.rel target = $region3
    $region8: #{fwd.1} parent=1 // loop_exit
      _
    %6854 = vsyncpa [#allocation6], 1
    %s6855 = scalar_lea.sflag [#allocation6], 1
    %6856 = vsyncpa %s6855, 1
    %6857 = vsyncpa [#allocation8], 1
    %6858 = vsyncpa [#allocation11], 1

</llo_original>
